<compile_context>
chip_gen: v6e
topology: v6e:2x2x1
jax: 0.10.0
libtpu: 0.0.40
codegen_flags: <defaults>
</compile_context>

<pallas_src>
import functools
import math

import jax
import jax.numpy as jnp
from jax.experimental import pallas as pl
from jax.experimental.pallas import tpu as pltpu

OUT_PAD = 128  # output_dim (12) zero-padded to a full lane tile -> unmasked vst


def _round_up(a, m):
    return (a + m - 1) // m * m


def _embedding_kernel(*refs, num_hidden_layers):
    """refs = (x, y, [w_h, b_h]*num_hidden_layers, w_fold, wq1_y, b_fold, wq2, bq2, out)."""
    idx = 0
    x_ref = refs[idx]; idx += 1
    y_ref = refs[idx]; idx += 1
    out_ref = refs[-1]

    # netE hidden stack: Linear + ReLU, in f32 with f32 accumulation.
    h = x_ref[...]
    for _ in range(num_hidden_layers):
        w = refs[idx][...]
        b = refs[idx + 1][...]
        idx += 2
        h = jnp.maximum(jnp.dot(h, w, preferred_element_type=jnp.float32) + b, 0.0)

    # netQ layer 1 over concat([emb, y]) with the last netE Linear folded in:
    #   emb @ Wq1_emb == h @ (W_emb @ Wq1_emb)   (no nonlinearity between them).
    w_fold = refs[idx][...]      # (hidden, 10)
    wq1_y = refs[idx + 1][...]   # (input_dim2, 10)
    b_fold = refs[idx + 2][...]  # (1, 10)
    idx += 3
    q = jnp.tanh(jnp.dot(h, w_fold, preferred_element_type=jnp.float32)
                 + jnp.dot(y_ref[...], wq1_y, preferred_element_type=jnp.float32)
                 + b_fold)       # self.act (Tanh) in f32

    # netQ layer 2: Linear(10, output_dim), zero-padded to 128 lanes.
    wq2 = refs[idx][...]
    bq2 = refs[idx + 1][...]
    out = jnp.dot(q, wq2, preferred_element_type=jnp.float32) + bq2
    out_ref[...] = out.astype(out_ref.dtype)   # bf16 writeback (dominant HBM stream)


def _fold_params(params):
    """Fold the last netE Linear into netQ layer 1's emb-part (exact in f32)."""
    e_hidden, (w_emb, b_emb), (wq1_emb, wq1_y, bq1), (wq2, bq2) = params
    w_fold = w_emb @ wq1_emb          # (hidden, 10)
    b_fold = b_emb @ wq1_emb + bq1    # (1, 10)
    return e_hidden, (w_fold, wq1_y, b_fold), (wq2, bq2)


def embedding_forward(x, y, params, output_dim, *, tile_b=2048):
    """x: (..., input_dim1)-flattenable, y: (..., input_dim2)-flattenable."""
    e_hidden, (w_fold, wq1_y, b_fold), (wq2, bq2) = _fold_params(params)
    input_dim1 = e_hidden[0][0].shape[0]
    input_dim2 = wq1_y.shape[0]
    hidden_dim = e_hidden[0][0].shape[1]
    out_pad = wq2.shape[1]

    x2 = x.reshape(-1, input_dim1)   # x.view(-1, input_dim1)
    y2 = y.reshape(-1, input_dim2)   # y.view(-1, input_dim2)
    batch = x2.shape[0]

    # Whole batch in one grid step when it fits; otherwise 2048-row tiles
    # (VMEM per row, double-buffered in/out + intermediates, is ~1.2 KB).
    tile_b = min(tile_b, _round_up(batch, 8))
    b_pad = _round_up(batch, tile_b)
    if b_pad != batch:
        x2 = jnp.pad(x2, ((0, b_pad - batch), (0, 0)))
        y2 = jnp.pad(y2, ((0, b_pad - batch), (0, 0)))
    n_tiles = b_pad // tile_b

    flat_inputs = [x2, y2]
    for (w, b) in e_hidden:
        flat_inputs += [w, b]
    flat_inputs += [w_fold, wq1_y, b_fold, wq2, bq2]

    def batch_spec(feat):
        return pl.BlockSpec((tile_b, feat), lambda i: (i, 0))

    def resident_spec(arr):
        # Constant index_map -> same block every grid step -> fetched once, stays in VMEM.
        # (Weights total only ~10 KB after folding; pl.Buffered(1) not worth the risk.)
        return pl.BlockSpec(arr.shape, lambda i: (0, 0))

    in_specs = [batch_spec(input_dim1), batch_spec(input_dim2)]
    in_specs += [resident_spec(a) for a in flat_inputs[2:]]
    out_specs = pl.BlockSpec((tile_b, out_pad), lambda i: (i, 0))

    # Advisory cost estimate for the XLA scheduler.
    depth = len(e_hidden) - 1
    flops_per_row = 2 * (input_dim1 * hidden_dim + depth * hidden_dim * hidden_dim
                         + hidden_dim * 10 + input_dim2 * 10 + 10 * out_pad)
    weight_bytes = sum(int(a.size) * a.dtype.itemsize for a in flat_inputs[2:])
    cost = pl.CostEstimate(
        flops=int(flops_per_row * b_pad),
        transcendentals=int(10 * b_pad),
        bytes_accessed=int(b_pad * (input_dim1 + input_dim2) * 4
                           + b_pad * out_pad * 2 + weight_bytes),
    )

    kernel = functools.partial(_embedding_kernel, num_hidden_layers=len(e_hidden))
    out_padded = pl.pallas_call(
        kernel,
        out_shape=jax.ShapeDtypeStruct((b_pad, out_pad), jnp.bfloat16),
        grid=(n_tiles,),
        in_specs=in_specs,
        out_specs=out_specs,
        compiler_params=pltpu.CompilerParams(
            dimension_semantics=("parallel",),   # batch axis is fully parallel
        ),
        cost_estimate=cost,
    )(*flat_inputs)

    # TODO(synk): downstream consumers could take the padded bf16 slab directly and
    # skip this trailing slice.
    return out_padded[:batch, :output_dim]


def init_params(key, input_dim1, input_dim2, hidden_dim, depth, emb_dim, output_dim,
                out_pad=OUT_PAD):
    """Deterministic parameter init matching the module's layer shapes.

    Weights stored as (in_features, out_features).  Only netQ layer 2 is zero-padded
    (output_dim -> out_pad lanes); padding columns must stay zero for exactness.
    """
    def linear(k, fan_in, fan_out):
        kw, kb = jax.random.split(k)
        lim = 1.0 / math.sqrt(fan_in)
        w = jax.random.uniform(kw, (fan_in, fan_out), jnp.float32, -lim, lim)
        b = jax.random.uniform(kb, (1, fan_out), jnp.float32, -lim, lim)
        return w, b

    keys = jax.random.split(key, depth + 4)
    e_hidden = [linear(keys[0], input_dim1, hidden_dim)]           # Linear + ReLU
    for d in range(depth):
        e_hidden.append(linear(keys[1 + d], hidden_dim, hidden_dim))  # Linear + ReLU
    w_emb, b_emb = linear(keys[1 + depth], hidden_dim, emb_dim)    # Linear (no ReLU)

    # netQ layer 1: Linear(emb_dim + input_dim2, 10) split to match concat([emb, y]).
    wq1, bq1 = linear(keys[2 + depth], emb_dim + input_dim2, 10)
    wq1_emb = wq1[:emb_dim, :]
    wq1_y = wq1[emb_dim:, :]

    wq2, bq2 = linear(keys[3 + depth], 10, output_dim)
    wq2 = jnp.pad(wq2, ((0, 0), (0, out_pad - output_dim)))        # pad 12 -> 128
    bq2 = jnp.pad(bq2, ((0, 0), (0, out_pad - output_dim)))
    # The post-kernel slice is exact only if the padded columns stay zero.
    assert bool(jnp.all(wq2[:, output_dim:] == 0))
    assert bool(jnp.all(bq2[:, output_dim:] == 0))

    return e_hidden, (w_emb, b_emb), (wq1_emb, wq1_y, bq1), (wq2, bq2)


def reference_forward(x, y, params, output_dim):
    """Pure-JAX f32 reference (unfolded, exactly mirrors the PyTorch module)."""
    e_hidden, (w_emb, b_emb), (wq1_emb, wq1_y, bq1), (wq2, bq2) = params
    input_dim1 = e_hidden[0][0].shape[0]
    input_dim2 = wq1_y.shape[0]
    h = x.reshape(-1, input_dim1).astype(jnp.float32)
    yv = y.reshape(-1, input_dim2).astype(jnp.float32)
    for (w, b) in e_hidden:
        h = jnp.maximum(h @ w + b, 0.0)
    emb = h @ w_emb + b_emb
    q = jnp.tanh(emb @ wq1_emb + yv @ wq1_y + bq1)
    out = q @ wq2 + bq2
    return out[:, :output_dim]


if __name__ == "__main__":
    # Module hyperparameters (experiment='depth', task='rotations', i=2, act=Tanh)
    input_dim1, input_dim2, hidden_dim = 32, 16, 32
    depth_i = 2
    emb_dim = input_dim2 * 10 + 10 * 1     # 170
    output_dim = 12                        # 'rotations'
    batch = 1024                           # small, fills MXU/lane tiles; grid=(1,)

    key = jax.random.PRNGKey(0)
    kx, ky, kp = jax.random.split(key, 3)
    x = jax.random.normal(kx, (batch, input_dim1), jnp.float32)
    y = jax.random.normal(ky, (batch, input_dim2), jnp.float32)

    params = init_params(kp, input_dim1, input_dim2, hidden_dim,
                         depth_i, emb_dim, output_dim)

    out = embedding_forward(x, y, params, output_dim)
    out = jax.block_until_ready(out)

    ref = reference_forward(x, y, params, output_dim)
    assert out.shape == (batch, output_dim)
    # f32 compute inside the kernel; only the final store is bf16 (~0.4% rounding).
    assert jnp.allclose(out.astype(jnp.float32), ref, atol=1e-2, rtol=1e-2), \
        float(jnp.max(jnp.abs(out.astype(jnp.float32) - ref)))

    print("KERNEL_OK")
</pallas_src>

<mosaic_0001>
module attributes {stable_mosaic.version = 11 : i64} {
  func.func @_embedding_kernel(%arg0: i32, %arg1: memref<1024x32xf32, #tpu.memory_space<vmem>>, %arg2: memref<1024x16xf32, #tpu.memory_space<vmem>>, %arg3: memref<32x32xf32, #tpu.memory_space<vmem>>, %arg4: memref<1x32xf32, #tpu.memory_space<vmem>>, %arg5: memref<32x32xf32, #tpu.memory_space<vmem>>, %arg6: memref<1x32xf32, #tpu.memory_space<vmem>>, %arg7: memref<32x32xf32, #tpu.memory_space<vmem>>, %arg8: memref<1x32xf32, #tpu.memory_space<vmem>>, %arg9: memref<32x10xf32, #tpu.memory_space<vmem>>, %arg10: memref<16x10xf32, #tpu.memory_space<vmem>>, %arg11: memref<1x10xf32, #tpu.memory_space<vmem>>, %arg12: memref<10x128xf32, #tpu.memory_space<vmem>>, %arg13: memref<1x128xf32, #tpu.memory_space<vmem>>, %arg14: memref<1024x128xbf16, #tpu.memory_space<vmem>>) attributes {dimension_semantics = [#tpu.dimension_semantics<parallel>], iteration_bounds = array<i64: 1>, scalar_prefetch = 0 : i64, scratch_operands = 0 : i64, tpu.core_type = #tpu.core_type<tc>, window_params = [{transform_indices = @transform_0, window_bounds = array<i64: 1024, 32>}, {transform_indices = @transform_1, window_bounds = array<i64: 1024, 16>}, {pipeline_mode = #tpu.pipeline_mode<synchronous>, transform_indices = @transform_2, window_bounds = array<i64: 32, 32>}, {pipeline_mode = #tpu.pipeline_mode<synchronous>, transform_indices = @transform_3, window_bounds = array<i64: 1, 32>}, {pipeline_mode = #tpu.pipeline_mode<synchronous>, transform_indices = @transform_4, window_bounds = array<i64: 32, 32>}, {pipeline_mode = #tpu.pipeline_mode<synchronous>, transform_indices = @transform_5, window_bounds = array<i64: 1, 32>}, {pipeline_mode = #tpu.pipeline_mode<synchronous>, transform_indices = @transform_6, window_bounds = array<i64: 32, 32>}, {pipeline_mode = #tpu.pipeline_mode<synchronous>, transform_indices = @transform_7, window_bounds = array<i64: 1, 32>}, {pipeline_mode = #tpu.pipeline_mode<synchronous>, transform_indices = @transform_8, window_bounds = array<i64: 32, 10>}, {pipeline_mode = #tpu.pipeline_mode<synchronous>, transform_indices = @transform_9, window_bounds = array<i64: 16, 10>}, {pipeline_mode = #tpu.pipeline_mode<synchronous>, transform_indices = @transform_10, window_bounds = array<i64: 1, 10>}, {pipeline_mode = #tpu.pipeline_mode<synchronous>, transform_indices = @transform_11, window_bounds = array<i64: 10, 128>}, {pipeline_mode = #tpu.pipeline_mode<synchronous>, transform_indices = @transform_12, window_bounds = array<i64: 1, 128>}, {transform_indices = @transform_13, window_bounds = array<i64: 1024, 128>}]} {
    %c0 = arith.constant 0 : index
    %c0_0 = arith.constant 0 : index
    %0 = vector.load %arg1[%c0, %c0_0] : memref<1024x32xf32, #tpu.memory_space<vmem>>, vector<1024x32xf32>
    %c0_1 = arith.constant 0 : index
    %c0_2 = arith.constant 0 : index
    %1 = vector.load %arg3[%c0_1, %c0_2] : memref<32x32xf32, #tpu.memory_space<vmem>>, vector<32x32xf32>
    %c0_3 = arith.constant 0 : index
    %c0_4 = arith.constant 0 : index
    %2 = vector.load %arg4[%c0_3, %c0_4] : memref<1x32xf32, #tpu.memory_space<vmem>>, vector<1x32xf32>
    %cst = arith.constant dense<0.000000e+00> : vector<1024x32xf32>
    %3 = tpu.matmul %0, %1, %cst {dimension_numbers = #tpu.dot_dimension_numbers<[1], [0], [0], [1], [0, 0, 1, 1], [], []>} : vector<1024x32xf32>, vector<32x32xf32>, vector<1024x32xf32> -> vector<1024x32xf32>
    %4 = vector.broadcast %2 : vector<1x32xf32> to vector<1024x32xf32>
    %5 = arith.addf %3, %4 : vector<1024x32xf32>
    %cst_5 = arith.constant 0.000000e+00 : f32
    %6 = vector.broadcast %cst_5 : f32 to vector<1024x32xf32>
    %7 = arith.maximumf %5, %6 : vector<1024x32xf32>
    %c0_6 = arith.constant 0 : index
    %c0_7 = arith.constant 0 : index
    %8 = vector.load %arg5[%c0_6, %c0_7] : memref<32x32xf32, #tpu.memory_space<vmem>>, vector<32x32xf32>
    %c0_8 = arith.constant 0 : index
    %c0_9 = arith.constant 0 : index
    %9 = vector.load %arg6[%c0_8, %c0_9] : memref<1x32xf32, #tpu.memory_space<vmem>>, vector<1x32xf32>
    %cst_10 = arith.constant dense<0.000000e+00> : vector<1024x32xf32>
    %10 = tpu.matmul %7, %8, %cst_10 {dimension_numbers = #tpu.dot_dimension_numbers<[1], [0], [0], [1], [0, 0, 1, 1], [], []>} : vector<1024x32xf32>, vector<32x32xf32>, vector<1024x32xf32> -> vector<1024x32xf32>
    %11 = vector.broadcast %9 : vector<1x32xf32> to vector<1024x32xf32>
    %12 = arith.addf %10, %11 : vector<1024x32xf32>
    %cst_11 = arith.constant 0.000000e+00 : f32
    %13 = vector.broadcast %cst_11 : f32 to vector<1024x32xf32>
    %14 = arith.maximumf %12, %13 : vector<1024x32xf32>
    %c0_12 = arith.constant 0 : index
    %c0_13 = arith.constant 0 : index
    %15 = vector.load %arg7[%c0_12, %c0_13] : memref<32x32xf32, #tpu.memory_space<vmem>>, vector<32x32xf32>
    %c0_14 = arith.constant 0 : index
    %c0_15 = arith.constant 0 : index
    %16 = vector.load %arg8[%c0_14, %c0_15] : memref<1x32xf32, #tpu.memory_space<vmem>>, vector<1x32xf32>
    %cst_16 = arith.constant dense<0.000000e+00> : vector<1024x32xf32>
    %17 = tpu.matmul %14, %15, %cst_16 {dimension_numbers = #tpu.dot_dimension_numbers<[1], [0], [0], [1], [0, 0, 1, 1], [], []>} : vector<1024x32xf32>, vector<32x32xf32>, vector<1024x32xf32> -> vector<1024x32xf32>
    %18 = vector.broadcast %16 : vector<1x32xf32> to vector<1024x32xf32>
    %19 = arith.addf %17, %18 : vector<1024x32xf32>
    %cst_17 = arith.constant 0.000000e+00 : f32
    %20 = vector.broadcast %cst_17 : f32 to vector<1024x32xf32>
    %21 = arith.maximumf %19, %20 : vector<1024x32xf32>
    %c0_18 = arith.constant 0 : index
    %c0_19 = arith.constant 0 : index
    %22 = vector.load %arg9[%c0_18, %c0_19] : memref<32x10xf32, #tpu.memory_space<vmem>>, vector<32x10xf32>
    %c0_20 = arith.constant 0 : index
    %c0_21 = arith.constant 0 : index
    %23 = vector.load %arg10[%c0_20, %c0_21] : memref<16x10xf32, #tpu.memory_space<vmem>>, vector<16x10xf32>
    %c0_22 = arith.constant 0 : index
    %c0_23 = arith.constant 0 : index
    %24 = vector.load %arg11[%c0_22, %c0_23] : memref<1x10xf32, #tpu.memory_space<vmem>>, vector<1x10xf32>
    %cst_24 = arith.constant dense<0.000000e+00> : vector<1024x10xf32>
    %25 = tpu.matmul %21, %22, %cst_24 {dimension_numbers = #tpu.dot_dimension_numbers<[1], [0], [0], [1], [0, 0, 1, 1], [], []>} : vector<1024x32xf32>, vector<32x10xf32>, vector<1024x10xf32> -> vector<1024x10xf32>
    %c0_25 = arith.constant 0 : index
    %c0_26 = arith.constant 0 : index
    %26 = vector.load %arg2[%c0_25, %c0_26] : memref<1024x16xf32, #tpu.memory_space<vmem>>, vector<1024x16xf32>
    %cst_27 = arith.constant dense<0.000000e+00> : vector<1024x10xf32>
    %27 = tpu.matmul %26, %23, %cst_27 {dimension_numbers = #tpu.dot_dimension_numbers<[1], [0], [0], [1], [0, 0, 1, 1], [], []>} : vector<1024x16xf32>, vector<16x10xf32>, vector<1024x10xf32> -> vector<1024x10xf32>
    %28 = arith.addf %25, %27 : vector<1024x10xf32>
    %29 = vector.broadcast %24 : vector<1x10xf32> to vector<1024x10xf32>
    %30 = arith.addf %28, %29 : vector<1024x10xf32>
    %31 = math.tanh %30 : vector<1024x10xf32>
    %c0_28 = arith.constant 0 : index
    %c0_29 = arith.constant 0 : index
    %32 = vector.load %arg12[%c0_28, %c0_29] : memref<10x128xf32, #tpu.memory_space<vmem>>, vector<10x128xf32>
    %c0_30 = arith.constant 0 : index
    %c0_31 = arith.constant 0 : index
    %33 = vector.load %arg13[%c0_30, %c0_31] : memref<1x128xf32, #tpu.memory_space<vmem>>, vector<1x128xf32>
    %cst_32 = arith.constant dense<0.000000e+00> : vector<1024x128xf32>
    %34 = tpu.matmul %31, %32, %cst_32 {dimension_numbers = #tpu.dot_dimension_numbers<[1], [0], [0], [1], [0, 0, 1, 1], [], []>} : vector<1024x10xf32>, vector<10x128xf32>, vector<1024x128xf32> -> vector<1024x128xf32>
    %35 = vector.broadcast %33 : vector<1x128xf32> to vector<1024x128xf32>
    %36 = arith.addf %34, %35 : vector<1024x128xf32>
    %37 = arith.truncf %36 : vector<1024x128xf32> to vector<1024x128xbf16>
    %c0_33 = arith.constant 0 : index
    %c0_34 = arith.constant 0 : index
    %38 = vector.load %arg14[%c0_33, %c0_34] : memref<1024x128xbf16, #tpu.memory_space<vmem>>, vector<1024x128xbf16>
    tpu.vector_store %arg14[%c0_33, %c0_34], %37 {strides = array<i32>} : memref<1024x128xbf16, #tpu.memory_space<vmem>>, vector<1024x128xbf16>,
    return
  }
  func.func @transform_0(%arg0: i32) -> (i32, i32) {
    %c0_i32 = arith.constant 0 : i32
    %c0_i32_0 = arith.constant 0 : i32
    return %arg0, %c0_i32 : i32, i32
  }
  func.func @transform_1(%arg0: i32) -> (i32, i32) {
    %c0_i32 = arith.constant 0 : i32
    %c0_i32_0 = arith.constant 0 : i32
    return %arg0, %c0_i32 : i32, i32
  }
  func.func @transform_2(%arg0: i32) -> (i32, i32) {
    %c0_i32 = arith.constant 0 : i32
    %c0_i32_0 = arith.constant 0 : i32
    %c0_i32_1 = arith.constant 0 : i32
    return %c0_i32, %c0_i32_0 : i32, i32
  }
  func.func @transform_3(%arg0: i32) -> (i32, i32) {
    %c0_i32 = arith.constant 0 : i32
    %c0_i32_0 = arith.constant 0 : i32
    %c0_i32_1 = arith.constant 0 : i32
    return %c0_i32, %c0_i32_0 : i32, i32
  }
  func.func @transform_4(%arg0: i32) -> (i32, i32) {
    %c0_i32 = arith.constant 0 : i32
    %c0_i32_0 = arith.constant 0 : i32
    %c0_i32_1 = arith.constant 0 : i32
    return %c0_i32, %c0_i32_0 : i32, i32
  }
  func.func @transform_5(%arg0: i32) -> (i32, i32) {
    %c0_i32 = arith.constant 0 : i32
    %c0_i32_0 = arith.constant 0 : i32
    %c0_i32_1 = arith.constant 0 : i32
    return %c0_i32, %c0_i32_0 : i32, i32
  }
  func.func @transform_6(%arg0: i32) -> (i32, i32) {
    %c0_i32 = arith.constant 0 : i32
    %c0_i32_0 = arith.constant 0 : i32
    %c0_i32_1 = arith.constant 0 : i32
    return %c0_i32, %c0_i32_0 : i32, i32
  }
  func.func @transform_7(%arg0: i32) -> (i32, i32) {
    %c0_i32 = arith.constant 0 : i32
    %c0_i32_0 = arith.constant 0 : i32
    %c0_i32_1 = arith.constant 0 : i32
    return %c0_i32, %c0_i32_0 : i32, i32
  }
  func.func @transform_8(%arg0: i32) -> (i32, i32) {
    %c0_i32 = arith.constant 0 : i32
    %c0_i32_0 = arith.constant 0 : i32
    %c0_i32_1 = arith.constant 0 : i32
    return %c0_i32, %c0_i32_0 : i32, i32
  }
  func.func @transform_9(%arg0: i32) -> (i32, i32) {
    %c0_i32 = arith.constant 0 : i32
    %c0_i32_0 = arith.constant 0 : i32
    %c0_i32_1 = arith.constant 0 : i32
    return %c0_i32, %c0_i32_0 : i32, i32
  }
  func.func @transform_10(%arg0: i32) -> (i32, i32) {
    %c0_i32 = arith.constant 0 : i32
    %c0_i32_0 = arith.constant 0 : i32
    %c0_i32_1 = arith.constant 0 : i32
    return %c0_i32, %c0_i32_0 : i32, i32
  }
  func.func @transform_11(%arg0: i32) -> (i32, i32) {
    %c0_i32 = arith.constant 0 : i32
    %c0_i32_0 = arith.constant 0 : i32
    %c0_i32_1 = arith.constant 0 : i32
    return %c0_i32, %c0_i32_0 : i32, i32
  }
  func.func @transform_12(%arg0: i32) -> (i32, i32) {
    %c0_i32 = arith.constant 0 : i32
    %c0_i32_0 = arith.constant 0 : i32
    %c0_i32_1 = arith.constant 0 : i32
    return %c0_i32, %c0_i32_0 : i32, i32
  }
  func.func @transform_13(%arg0: i32) -> (i32, i32) {
    %c0_i32 = arith.constant 0 : i32
    %c0_i32_0 = arith.constant 0 : i32
    return %arg0, %c0_i32 : i32, i32
  }
}

</mosaic_0001>

<llo_original>
// kernel: tpu_custom_call.1
$region0: #{tpu_custom_call.1}
  #allocation0 [shape = 'u32[]', space=smem, size = 0x4, offset = 0x4, fixed_abs, tag = 'smem constant byte address 0x4 - core index']
  #allocation1 [shape = 'u32[144,128]{1,0:T(1,128)}', space=vmem, size = 0x12000, scoped, tag = 'internal scratch']
  %s0 = inlined_call_operand.vmem [shape: f32[1024,32], index: 0, kind: input, shape index: {}]
  %s1 = inlined_call_operand.vmem [shape: f32[1024,16], index: 1, kind: input, shape index: {}]
  %s2 = inlined_call_operand.vmem [shape: f32[32,32], index: 2, kind: input, shape index: {}]
  %s3 = inlined_call_operand.vmem [shape: f32[1,32], index: 3, kind: input, shape index: {}]
  %s4 = inlined_call_operand.vmem [shape: f32[32,32], index: 4, kind: input, shape index: {}]
  %s5 = inlined_call_operand.vmem [shape: f32[1,32], index: 5, kind: input, shape index: {}]
  %s6 = inlined_call_operand.vmem [shape: f32[32,32], index: 6, kind: input, shape index: {}]
  %s7 = inlined_call_operand.vmem [shape: f32[1,32], index: 7, kind: input, shape index: {}]
  %s8 = inlined_call_operand.vmem [shape: f32[32,10], index: 8, kind: input, shape index: {}]
  %s9 = inlined_call_operand.vmem [shape: f32[16,10], index: 9, kind: input, shape index: {}]
  %s10 = inlined_call_operand.vmem [shape: f32[1,10], index: 10, kind: input, shape index: {}]
  %s11 = inlined_call_operand.vmem [shape: f32[10,128], index: 11, kind: input, shape index: {}]
  %s12 = inlined_call_operand.vmem [shape: f32[1,128], index: 12, kind: input, shape index: {}]
  %s13 = inlined_call_operand.hbm [shape: bf16[1024,128], index: 13, kind: output, shape index: {}]
  %s14 = sld [smem:[#allocation0]]
  $region62: #{tpu_custom_call.1} parent=0
    _
  %s16 = ssub.s32 1, %s14
  %s17 = scalar_select 0, %s16, %s14
  $region1: #{tpu_custom_call.1} parent=0
    #allocation2 [shape = 'u8[262144]{0}', space=vmem, size = 0x40000, scoped, tag = 'output window, operand 0, single buffered']
    #allocation3 [shape = 's32[1]{0}', space=sflag, size = 0x4, scoped, tag = 'scoped memory for tpu_custom_call.1']
    %18 = vsyncpa [#allocation3], 0
    // Predicated region
    $region2: #{tpu_custom_call.1} parent=1 // pred_check
      _
    $region3: #{tpu_custom_call.1} parent=1 // pred_check_branch
      %20 = sbr.rel (0) target = $region5
    $region4: #{tpu_custom_call.1} parent=1 // pred_region
      _
    $region5: #{tpu_custom_call.1} parent=1 // pred_fallthru
      _
    // Predicated region
    $region6: #{tpu_custom_call.1} parent=1 // pred_check
      _
    $region7: #{tpu_custom_call.1} parent=1 // pred_check_branch
      %22 = sbr.rel (0) target = $region9
    $region8: #{tpu_custom_call.1} parent=1 // pred_region
      _
    $region9: #{tpu_custom_call.1} parent=1 // pred_fallthru
      _
    // Predicated region
    $region10: #{tpu_custom_call.1} parent=1 // pred_check
      _
    $region11: #{tpu_custom_call.1} parent=1 // pred_check_branch
      %24 = sbr.rel (0) target = $region13
    $region12: #{tpu_custom_call.1} parent=1 // pred_region
      _
    $region13: #{tpu_custom_call.1} parent=1 // pred_fallthru
      _
    // Predicated region
    $region14: #{tpu_custom_call.1} parent=1 // pred_check
      _
    $region15: #{tpu_custom_call.1} parent=1 // pred_check_branch
      %26 = sbr.rel (0) target = $region17
    $region16: #{tpu_custom_call.1} parent=1 // pred_region
      _
    $region17: #{tpu_custom_call.1} parent=1 // pred_fallthru
      _
    // Predicated region
    $region18: #{tpu_custom_call.1} parent=1 // pred_check
      _
    $region19: #{tpu_custom_call.1} parent=1 // pred_check_branch
      %28 = sbr.rel (0) target = $region21
    $region20: #{tpu_custom_call.1} parent=1 // pred_region
      _
    $region21: #{tpu_custom_call.1} parent=1 // pred_fallthru
      _
    // Predicated region
    $region22: #{tpu_custom_call.1} parent=1 // pred_check
      _
    $region23: #{tpu_custom_call.1} parent=1 // pred_check_branch
      %30 = sbr.rel (0) target = $region25
    $region24: #{tpu_custom_call.1} parent=1 // pred_region
      _
    $region25: #{tpu_custom_call.1} parent=1 // pred_fallthru
      _
    // Predicated region
    $region26: #{tpu_custom_call.1} parent=1 // pred_check
      _
    $region27: #{tpu_custom_call.1} parent=1 // pred_check_branch
      %32 = sbr.rel (0) target = $region29
    $region28: #{tpu_custom_call.1} parent=1 // pred_region
      _
    $region29: #{tpu_custom_call.1} parent=1 // pred_fallthru
      _
    // Predicated region
    $region30: #{tpu_custom_call.1} parent=1 // pred_check
      _
    $region31: #{tpu_custom_call.1} parent=1 // pred_check_branch
      %34 = sbr.rel (0) target = $region33
    $region32: #{tpu_custom_call.1} parent=1 // pred_region
      _
    $region33: #{tpu_custom_call.1} parent=1 // pred_fallthru
      _
    // Predicated region
    $region34: #{tpu_custom_call.1} parent=1 // pred_check
      _
    $region35: #{tpu_custom_call.1} parent=1 // pred_check_branch
      %36 = sbr.rel (0) target = $region37
    $region36: #{tpu_custom_call.1} parent=1 // pred_region
      _
    $region37: #{tpu_custom_call.1} parent=1 // pred_fallthru
      _
    // Predicated region
    $region38: #{tpu_custom_call.1} parent=1 // pred_check
      _
    $region39: #{tpu_custom_call.1} parent=1 // pred_check_branch
      %38 = sbr.rel (0) target = $region41
    $region40: #{tpu_custom_call.1} parent=1 // pred_region
      _
    $region41: #{tpu_custom_call.1} parent=1 // pred_fallthru
      _
    // Predicated region
    $region42: #{tpu_custom_call.1} parent=1 // pred_check
      _
    $region43: #{tpu_custom_call.1} parent=1 // pred_check_branch
      %40 = sbr.rel (0) target = $region45
    $region44: #{tpu_custom_call.1} parent=1 // pred_region
      _
    $region45: #{tpu_custom_call.1} parent=1 // pred_fallthru
      _
    // Predicated region
    $region46: #{tpu_custom_call.1} parent=1 // pred_check
      _
    $region47: #{tpu_custom_call.1} parent=1 // pred_check_branch
      %42 = sbr.rel (0) target = $region49
    $region48: #{tpu_custom_call.1} parent=1 // pred_region
      _
    $region49: #{tpu_custom_call.1} parent=1 // pred_fallthru
      _
    // Predicated region
    $region50: #{tpu_custom_call.1} parent=1 // pred_check
      _
    $region51: #{tpu_custom_call.1} parent=1 // pred_check_branch
      %44 = sbr.rel (0) target = $region53
    $region52: #{tpu_custom_call.1} parent=1 // pred_region
      _
    $region53: #{tpu_custom_call.1} parent=1 // pred_fallthru
      _
    %v45 = vld [vmem:[%s0] sm:$0xff]
    %v46 = vld [vmem:[%s0 + $0x8] sm:$0xff]
    %v47 = vld [vmem:[%s0 + $0x10] sm:$0xff]
    %v48 = vld [vmem:[%s0 + $0x18] sm:$0xff]
    %v49 = vld [vmem:[%s0 + $0x20] sm:$0xff]
    %v50 = vld [vmem:[%s0 + $0x28] sm:$0xff]
    %v51 = vld [vmem:[%s0 + $0x30] sm:$0xff]
    %v52 = vld [vmem:[%s0 + $0x38] sm:$0xff]
    %v53 = vld [vmem:[%s0 + $0x40] sm:$0xff]
    %v54 = vld [vmem:[%s0 + $0x48] sm:$0xff]
    %v55 = vld [vmem:[%s0 + $0x50] sm:$0xff]
    %v56 = vld [vmem:[%s0 + $0x58] sm:$0xff]
    %v57 = vld [vmem:[%s0 + $0x60] sm:$0xff]
    %v58 = vld [vmem:[%s0 + $0x68] sm:$0xff]
    %v59 = vld [vmem:[%s0 + $0x70] sm:$0xff]
    %v60 = vld [vmem:[%s0 + $0x78] sm:$0xff]
    %v61 = vld [vmem:[%s0 + $0x80] sm:$0xff]
    %v62 = vld [vmem:[%s0 + $0x88] sm:$0xff]
    %v63 = vld [vmem:[%s0 + $0x90] sm:$0xff]
    %v64 = vld [vmem:[%s0 + $0x98] sm:$0xff]
    %v65 = vld [vmem:[%s0 + $0xa0] sm:$0xff]
    %v66 = vld [vmem:[%s0 + $0xa8] sm:$0xff]
    %v67 = vld [vmem:[%s0 + $0xb0] sm:$0xff]
    %v68 = vld [vmem:[%s0 + $0xb8] sm:$0xff]
    %v69 = vld [vmem:[%s0 + $0xc0] sm:$0xff]
    %v70 = vld [vmem:[%s0 + $0xc8] sm:$0xff]
    %v71 = vld [vmem:[%s0 + $0xd0] sm:$0xff]
    %v72 = vld [vmem:[%s0 + $0xd8] sm:$0xff]
    %v73 = vld [vmem:[%s0 + $0xe0] sm:$0xff]
    %v74 = vld [vmem:[%s0 + $0xe8] sm:$0xff]
    %v75 = vld [vmem:[%s0 + $0xf0] sm:$0xff]
    %v76 = vld [vmem:[%s0 + $0xf8] sm:$0xff]
    %v77 = vld [vmem:[%s0 + $0x100] sm:$0xff]
    %v78 = vld [vmem:[%s0 + $0x108] sm:$0xff]
    %v79 = vld [vmem:[%s0 + $0x110] sm:$0xff]
    %v80 = vld [vmem:[%s0 + $0x118] sm:$0xff]
    %v81 = vld [vmem:[%s0 + $0x120] sm:$0xff]
    %v82 = vld [vmem:[%s0 + $0x128] sm:$0xff]
    %v83 = vld [vmem:[%s0 + $0x130] sm:$0xff]
    %v84 = vld [vmem:[%s0 + $0x138] sm:$0xff]
    %v85 = vld [vmem:[%s0 + $0x140] sm:$0xff]
    %v86 = vld [vmem:[%s0 + $0x148] sm:$0xff]
    %v87 = vld [vmem:[%s0 + $0x150] sm:$0xff]
    %v88 = vld [vmem:[%s0 + $0x158] sm:$0xff]
    %v89 = vld [vmem:[%s0 + $0x160] sm:$0xff]
    %v90 = vld [vmem:[%s0 + $0x168] sm:$0xff]
    %v91 = vld [vmem:[%s0 + $0x170] sm:$0xff]
    %v92 = vld [vmem:[%s0 + $0x178] sm:$0xff]
    %v93 = vld [vmem:[%s0 + $0x180] sm:$0xff]
    %v94 = vld [vmem:[%s0 + $0x188] sm:$0xff]
    %v95 = vld [vmem:[%s0 + $0x190] sm:$0xff]
    %v96 = vld [vmem:[%s0 + $0x198] sm:$0xff]
    %v97 = vld [vmem:[%s0 + $0x1a0] sm:$0xff]
    %v98 = vld [vmem:[%s0 + $0x1a8] sm:$0xff]
    %v99 = vld [vmem:[%s0 + $0x1b0] sm:$0xff]
    %v100 = vld [vmem:[%s0 + $0x1b8] sm:$0xff]
    %v101 = vld [vmem:[%s0 + $0x1c0] sm:$0xff]
    %v102 = vld [vmem:[%s0 + $0x1c8] sm:$0xff]
    %v103 = vld [vmem:[%s0 + $0x1d0] sm:$0xff]
    %v104 = vld [vmem:[%s0 + $0x1d8] sm:$0xff]
    %v105 = vld [vmem:[%s0 + $0x1e0] sm:$0xff]
    %v106 = vld [vmem:[%s0 + $0x1e8] sm:$0xff]
    %v107 = vld [vmem:[%s0 + $0x1f0] sm:$0xff]
    %v108 = vld [vmem:[%s0 + $0x1f8] sm:$0xff]
    %v109 = vld [vmem:[%s0 + $0x200] sm:$0xff]
    %v110 = vld [vmem:[%s0 + $0x208] sm:$0xff]
    %v111 = vld [vmem:[%s0 + $0x210] sm:$0xff]
    %v112 = vld [vmem:[%s0 + $0x218] sm:$0xff]
    %v113 = vld [vmem:[%s0 + $0x220] sm:$0xff]
    %v114 = vld [vmem:[%s0 + $0x228] sm:$0xff]
    %v115 = vld [vmem:[%s0 + $0x230] sm:$0xff]
    %v116 = vld [vmem:[%s0 + $0x238] sm:$0xff]
    %v117 = vld [vmem:[%s0 + $0x240] sm:$0xff]
    %v118 = vld [vmem:[%s0 + $0x248] sm:$0xff]
    %v119 = vld [vmem:[%s0 + $0x250] sm:$0xff]
    %v120 = vld [vmem:[%s0 + $0x258] sm:$0xff]
    %v121 = vld [vmem:[%s0 + $0x260] sm:$0xff]
    %v122 = vld [vmem:[%s0 + $0x268] sm:$0xff]
    %v123 = vld [vmem:[%s0 + $0x270] sm:$0xff]
    %v124 = vld [vmem:[%s0 + $0x278] sm:$0xff]
    %v125 = vld [vmem:[%s0 + $0x280] sm:$0xff]
    %v126 = vld [vmem:[%s0 + $0x288] sm:$0xff]
    %v127 = vld [vmem:[%s0 + $0x290] sm:$0xff]
    %v128 = vld [vmem:[%s0 + $0x298] sm:$0xff]
    %v129 = vld [vmem:[%s0 + $0x2a0] sm:$0xff]
    %v130 = vld [vmem:[%s0 + $0x2a8] sm:$0xff]
    %v131 = vld [vmem:[%s0 + $0x2b0] sm:$0xff]
    %v132 = vld [vmem:[%s0 + $0x2b8] sm:$0xff]
    %v133 = vld [vmem:[%s0 + $0x2c0] sm:$0xff]
    %v134 = vld [vmem:[%s0 + $0x2c8] sm:$0xff]
    %v135 = vld [vmem:[%s0 + $0x2d0] sm:$0xff]
    %v136 = vld [vmem:[%s0 + $0x2d8] sm:$0xff]
    %v137 = vld [vmem:[%s0 + $0x2e0] sm:$0xff]
    %v138 = vld [vmem:[%s0 + $0x2e8] sm:$0xff]
    %v139 = vld [vmem:[%s0 + $0x2f0] sm:$0xff]
    %v140 = vld [vmem:[%s0 + $0x2f8] sm:$0xff]
    %v141 = vld [vmem:[%s0 + $0x300] sm:$0xff]
    %v142 = vld [vmem:[%s0 + $0x308] sm:$0xff]
    %v143 = vld [vmem:[%s0 + $0x310] sm:$0xff]
    %v144 = vld [vmem:[%s0 + $0x318] sm:$0xff]
    %v145 = vld [vmem:[%s0 + $0x320] sm:$0xff]
    %v146 = vld [vmem:[%s0 + $0x328] sm:$0xff]
    %v147 = vld [vmem:[%s0 + $0x330] sm:$0xff]
    %v148 = vld [vmem:[%s0 + $0x338] sm:$0xff]
    %v149 = vld [vmem:[%s0 + $0x340] sm:$0xff]
    %v150 = vld [vmem:[%s0 + $0x348] sm:$0xff]
    %v151 = vld [vmem:[%s0 + $0x350] sm:$0xff]
    %v152 = vld [vmem:[%s0 + $0x358] sm:$0xff]
    %v153 = vld [vmem:[%s0 + $0x360] sm:$0xff]
    %v154 = vld [vmem:[%s0 + $0x368] sm:$0xff]
    %v155 = vld [vmem:[%s0 + $0x370] sm:$0xff]
    %v156 = vld [vmem:[%s0 + $0x378] sm:$0xff]
    %v157 = vld [vmem:[%s0 + $0x380] sm:$0xff]
    %v158 = vld [vmem:[%s0 + $0x388] sm:$0xff]
    %v159 = vld [vmem:[%s0 + $0x390] sm:$0xff]
    %v160 = vld [vmem:[%s0 + $0x398] sm:$0xff]
    %v161 = vld [vmem:[%s0 + $0x3a0] sm:$0xff]
    %v162 = vld [vmem:[%s0 + $0x3a8] sm:$0xff]
    %v163 = vld [vmem:[%s0 + $0x3b0] sm:$0xff]
    %v164 = vld [vmem:[%s0 + $0x3b8] sm:$0xff]
    %v165 = vld [vmem:[%s0 + $0x3c0] sm:$0xff]
    %v166 = vld [vmem:[%s0 + $0x3c8] sm:$0xff]
    %v167 = vld [vmem:[%s0 + $0x3d0] sm:$0xff]
    %v168 = vld [vmem:[%s0 + $0x3d8] sm:$0xff]
    %v169 = vld [vmem:[%s0 + $0x3e0] sm:$0xff]
    %v170 = vld [vmem:[%s0 + $0x3e8] sm:$0xff]
    %v171 = vld [vmem:[%s0 + $0x3f0] sm:$0xff]
    %v172 = vld [vmem:[%s0 + $0x3f8] sm:$0xff]
    %v173 = vld [vmem:[%s2] sm:$0xff]
    %v174 = vld [vmem:[%s2 + $0x8] sm:$0xff]
    %v175 = vld [vmem:[%s2 + $0x10] sm:$0xff]
    %v176 = vld [vmem:[%s2 + $0x18] sm:$0xff]
    %v177 = vld [vmem:[%s3] sm:$0x1]
    %v179 = vlaneseq
    %v180 = vshrl.u32 %v179, 7
    %v181 = vsub.s32 0, %v180
    %v182 = vrot.slane %v177, %v181
    %vm184 = vcmask 261120
    %v186 = vsel %vm184, %v45, 0
    %v189 = vsel %vm184, %v46, 0
    %v192 = vsel %vm184, %v47, 0
    %v195 = vsel %vm184, %v48, 0
    %v198 = vsel %vm184, %v49, 0
    %v201 = vsel %vm184, %v50, 0
    %v204 = vsel %vm184, %v51, 0
    %v207 = vsel %vm184, %v52, 0
    %v210 = vsel %vm184, %v53, 0
    %v213 = vsel %vm184, %v54, 0
    %v216 = vsel %vm184, %v55, 0
    %v219 = vsel %vm184, %v56, 0
    %v222 = vsel %vm184, %v57, 0
    %v225 = vsel %vm184, %v58, 0
    %v228 = vsel %vm184, %v59, 0
    %v231 = vsel %vm184, %v60, 0
    %v234 = vsel %vm184, %v61, 0
    %v237 = vsel %vm184, %v62, 0
    %v240 = vsel %vm184, %v63, 0
    %v243 = vsel %vm184, %v64, 0
    %v246 = vsel %vm184, %v65, 0
    %v249 = vsel %vm184, %v66, 0
    %v252 = vsel %vm184, %v67, 0
    %v255 = vsel %vm184, %v68, 0
    %v258 = vsel %vm184, %v69, 0
    %v261 = vsel %vm184, %v70, 0
    %v264 = vsel %vm184, %v71, 0
    %v267 = vsel %vm184, %v72, 0
    %v270 = vsel %vm184, %v73, 0
    %v273 = vsel %vm184, %v74, 0
    %v276 = vsel %vm184, %v75, 0
    %v279 = vsel %vm184, %v76, 0
    %v282 = vsel %vm184, %v77, 0
    %v285 = vsel %vm184, %v78, 0
    %v288 = vsel %vm184, %v79, 0
    %v291 = vsel %vm184, %v80, 0
    %v294 = vsel %vm184, %v81, 0
    %v297 = vsel %vm184, %v82, 0
    %v300 = vsel %vm184, %v83, 0
    %v303 = vsel %vm184, %v84, 0
    %v306 = vsel %vm184, %v85, 0
    %v309 = vsel %vm184, %v86, 0
    %v312 = vsel %vm184, %v87, 0
    %v315 = vsel %vm184, %v88, 0
    %v318 = vsel %vm184, %v89, 0
    %v321 = vsel %vm184, %v90, 0
    %v324 = vsel %vm184, %v91, 0
    %v327 = vsel %vm184, %v92, 0
    %v330 = vsel %vm184, %v93, 0
    %v333 = vsel %vm184, %v94, 0
    %v336 = vsel %vm184, %v95, 0
    %v339 = vsel %vm184, %v96, 0
    %v342 = vsel %vm184, %v97, 0
    %v345 = vsel %vm184, %v98, 0
    %v348 = vsel %vm184, %v99, 0
    %v351 = vsel %vm184, %v100, 0
    %v354 = vsel %vm184, %v101, 0
    %v357 = vsel %vm184, %v102, 0
    %v360 = vsel %vm184, %v103, 0
    %v363 = vsel %vm184, %v104, 0
    %v366 = vsel %vm184, %v105, 0
    %v369 = vsel %vm184, %v106, 0
    %v372 = vsel %vm184, %v107, 0
    %v375 = vsel %vm184, %v108, 0
    %v378 = vsel %vm184, %v109, 0
    %v381 = vsel %vm184, %v110, 0
    %v384 = vsel %vm184, %v111, 0
    %v387 = vsel %vm184, %v112, 0
    %v390 = vsel %vm184, %v113, 0
    %v393 = vsel %vm184, %v114, 0
    %v396 = vsel %vm184, %v115, 0
    %v399 = vsel %vm184, %v116, 0
    %v402 = vsel %vm184, %v117, 0
    %v405 = vsel %vm184, %v118, 0
    %v408 = vsel %vm184, %v119, 0
    %v411 = vsel %vm184, %v120, 0
    %v414 = vsel %vm184, %v121, 0
    %v417 = vsel %vm184, %v122, 0
    %v420 = vsel %vm184, %v123, 0
    %v423 = vsel %vm184, %v124, 0
    %v426 = vsel %vm184, %v125, 0
    %v429 = vsel %vm184, %v126, 0
    %v432 = vsel %vm184, %v127, 0
    %v435 = vsel %vm184, %v128, 0
    %v438 = vsel %vm184, %v129, 0
    %v441 = vsel %vm184, %v130, 0
    %v444 = vsel %vm184, %v131, 0
    %v447 = vsel %vm184, %v132, 0
    %v450 = vsel %vm184, %v133, 0
    %v453 = vsel %vm184, %v134, 0
    %v456 = vsel %vm184, %v135, 0
    %v459 = vsel %vm184, %v136, 0
    %v462 = vsel %vm184, %v137, 0
    %v465 = vsel %vm184, %v138, 0
    %v468 = vsel %vm184, %v139, 0
    %v471 = vsel %vm184, %v140, 0
    %v474 = vsel %vm184, %v141, 0
    %v477 = vsel %vm184, %v142, 0
    %v480 = vsel %vm184, %v143, 0
    %v483 = vsel %vm184, %v144, 0
    %v486 = vsel %vm184, %v145, 0
    %v489 = vsel %vm184, %v146, 0
    %v492 = vsel %vm184, %v147, 0
    %v495 = vsel %vm184, %v148, 0
    %v498 = vsel %vm184, %v149, 0
    %v501 = vsel %vm184, %v150, 0
    %v504 = vsel %vm184, %v151, 0
    %v507 = vsel %vm184, %v152, 0
    %v510 = vsel %vm184, %v153, 0
    %v513 = vsel %vm184, %v154, 0
    %v516 = vsel %vm184, %v155, 0
    %v519 = vsel %vm184, %v156, 0
    %v522 = vsel %vm184, %v157, 0
    %v525 = vsel %vm184, %v158, 0
    %v528 = vsel %vm184, %v159, 0
    %v531 = vsel %vm184, %v160, 0
    %v534 = vsel %vm184, %v161, 0
    %v537 = vsel %vm184, %v162, 0
    %v540 = vsel %vm184, %v163, 0
    %v543 = vsel %vm184, %v164, 0
    %v546 = vsel %vm184, %v165, 0
    %v549 = vsel %vm184, %v166, 0
    %v552 = vsel %vm184, %v167, 0
    %v555 = vsel %vm184, %v168, 0
    %v558 = vsel %vm184, %v169, 0
    %v561 = vsel %vm184, %v170, 0
    %v564 = vsel %vm184, %v171, 0
    %v567 = vsel %vm184, %v172, 0
    %569 = vmatprep.subr.mxu0 0.0
    %570 = vmatpush1.msra.mxu0 0.0
    %571 = vmatprep.subr.mxu0 0.0
    %572 = vmatpush1.msra.mxu0 0.0
    %573 = vmatprep.subr.mxu0 0.0
    %574 = vmatpush1.msra.mxu0 0.0
    %575 = vmatprep.subr.mxu0 0.0
    %576 = vmatpush1.msra.mxu0 0.0
    %577 = vmatprep.subr.mxu0 0.0
    %578 = vmatpush1.msra.mxu0 0.0
    %579 = vmatprep.subr.mxu0 0.0
    %580 = vmatpush1.msra.mxu0 0.0
    %581 = vmatprep.subr.mxu0 0.0
    %582 = vmatpush1.msra.mxu0 0.0
    %583 = vmatprep.subr.mxu0 0.0
    %584 = vmatpush1.msra.mxu0 0.0
    %585 = vmatprep.subr.mxu0 0.0
    %586 = vmatpush1.msra.mxu0 0.0
    %587 = vmatprep.subr.mxu0 0.0
    %588 = vmatpush1.msra.mxu0 0.0
    %589 = vmatprep.subr.mxu0 0.0
    %590 = vmatpush1.msra.mxu0 0.0
    %591 = vmatprep.subr.mxu0 0.0
    %592 = vmatpush1.msra.mxu0 0.0
    %593 = vmatprep.subr.mxu0 0.0
    %594 = vmatpush1.msra.mxu0 %v176
    %595 = vmatprep.subr.mxu0 0.0
    %596 = vmatpush1.msra.mxu0 %v175
    %597 = vmatprep.subr.mxu0 0.0
    %598 = vmatpush1.msra.mxu0 %v174
    %599 = vmatprep.subr.mxu0 0.0
    %600 = vmatpush1.msra.mxu0 %v173
    %601 = vmatprep.subr.mxu0 0.0
    %602 = vmatpush2.msra.mxu0 0.0
    %603 = vmatprep.subr.mxu0 0.0
    %604 = vmatpush2.msra.mxu0 0.0
    %605 = vmatprep.subr.mxu0 0.0
    %606 = vmatpush2.msra.mxu0 0.0
    %607 = vmatprep.subr.mxu0 0.0
    %608 = vmatpush2.msra.mxu0 0.0
    %609 = vmatprep.subr.mxu0 0.0
    %610 = vmatpush2.msra.mxu0 0.0
    %611 = vmatprep.subr.mxu0 0.0
    %612 = vmatpush2.msra.mxu0 0.0
    %613 = vmatprep.subr.mxu0 0.0
    %614 = vmatpush2.msra.mxu0 0.0
    %615 = vmatprep.subr.mxu0 0.0
    %616 = vmatpush2.msra.mxu0 0.0
    %617 = vmatprep.subr.mxu0 0.0
    %618 = vmatpush2.msra.mxu0 0.0
    %619 = vmatprep.subr.mxu0 0.0
    %620 = vmatpush2.msra.mxu0 0.0
    %621 = vmatprep.subr.mxu0 0.0
    %622 = vmatpush2.msra.mxu0 0.0
    %623 = vmatprep.subr.mxu0 0.0
    %624 = vmatpush2.msra.mxu0 0.0
    %625 = vmatprep.subr.mxu0 0.0
    %626 = vmatpush2.msra.mxu0 0.0
    %627 = vmatprep.subr.mxu0 0.0
    %628 = vmatpush2.msra.mxu0 0.0
    %629 = vmatprep.subr.mxu0 0.0
    %630 = vmatpush2.msra.mxu0 0.0
    %631 = vmatprep.subr.mxu0 0.0
    %632 = vmatpush2.msra.mxu0 0.0
    %633 = vmatprep.mubr.f32.mxu0 0.0
    %634 = vmatmul.mubr.f32.gmra.mxu0 %v186
    %v635 = vpop.f32.mrf.mxu0
    %v636 = vadd.f32 %v182, %v635
    %v637 = vpop.f32.mrf.mxu0
    %638 = vmatprep.mubr.f32.mxu0 0.0
    %639 = vmatmul.mubr.f32.gmra.mxu0 %v189
    %v640 = vpop.f32.mrf.mxu0
    %v641 = vadd.f32 %v182, %v640
    %v642 = vpop.f32.mrf.mxu0
    %643 = vmatprep.mubr.f32.mxu0 0.0
    %644 = vmatmul.mubr.f32.gmra.mxu0 %v192
    %v645 = vpop.f32.mrf.mxu0
    %v646 = vadd.f32 %v182, %v645
    %v647 = vpop.f32.mrf.mxu0
    %648 = vmatprep.mubr.f32.mxu0 0.0
    %649 = vmatmul.mubr.f32.gmra.mxu0 %v195
    %v650 = vpop.f32.mrf.mxu0
    %v651 = vadd.f32 %v182, %v650
    %v652 = vpop.f32.mrf.mxu0
    %653 = vmatprep.mubr.f32.mxu0 0.0
    %654 = vmatmul.mubr.f32.gmra.mxu0 %v198
    %v655 = vpop.f32.mrf.mxu0
    %v656 = vadd.f32 %v182, %v655
    %v657 = vpop.f32.mrf.mxu0
    %658 = vmatprep.mubr.f32.mxu0 0.0
    %659 = vmatmul.mubr.f32.gmra.mxu0 %v201
    %v660 = vpop.f32.mrf.mxu0
    %v661 = vadd.f32 %v182, %v660
    %v662 = vpop.f32.mrf.mxu0
    %663 = vmatprep.mubr.f32.mxu0 0.0
    %664 = vmatmul.mubr.f32.gmra.mxu0 %v204
    %v665 = vpop.f32.mrf.mxu0
    %v666 = vadd.f32 %v182, %v665
    %v667 = vpop.f32.mrf.mxu0
    %668 = vmatprep.mubr.f32.mxu0 0.0
    %669 = vmatmul.mubr.f32.gmra.mxu0 %v207
    %v670 = vpop.f32.mrf.mxu0
    %v671 = vadd.f32 %v182, %v670
    %v672 = vpop.f32.mrf.mxu0
    %673 = vmatprep.mubr.f32.mxu0 0.0
    %674 = vmatmul.mubr.f32.gmra.mxu0 %v210
    %v675 = vpop.f32.mrf.mxu0
    %v676 = vadd.f32 %v182, %v675
    %v677 = vpop.f32.mrf.mxu0
    %678 = vmatprep.mubr.f32.mxu0 0.0
    %679 = vmatmul.mubr.f32.gmra.mxu0 %v213
    %v680 = vpop.f32.mrf.mxu0
    %v681 = vadd.f32 %v182, %v680
    %v682 = vpop.f32.mrf.mxu0
    %683 = vmatprep.mubr.f32.mxu0 0.0
    %684 = vmatmul.mubr.f32.gmra.mxu0 %v216
    %v685 = vpop.f32.mrf.mxu0
    %v686 = vadd.f32 %v182, %v685
    %v687 = vpop.f32.mrf.mxu0
    %688 = vmatprep.mubr.f32.mxu0 0.0
    %689 = vmatmul.mubr.f32.gmra.mxu0 %v219
    %v690 = vpop.f32.mrf.mxu0
    %v691 = vadd.f32 %v182, %v690
    %v692 = vpop.f32.mrf.mxu0
    %693 = vmatprep.mubr.f32.mxu0 0.0
    %694 = vmatmul.mubr.f32.gmra.mxu0 %v222
    %v695 = vpop.f32.mrf.mxu0
    %v696 = vadd.f32 %v182, %v695
    %v697 = vpop.f32.mrf.mxu0
    %698 = vmatprep.mubr.f32.mxu0 0.0
    %699 = vmatmul.mubr.f32.gmra.mxu0 %v225
    %v700 = vpop.f32.mrf.mxu0
    %v701 = vadd.f32 %v182, %v700
    %v702 = vpop.f32.mrf.mxu0
    %703 = vmatprep.mubr.f32.mxu0 0.0
    %704 = vmatmul.mubr.f32.gmra.mxu0 %v228
    %v705 = vpop.f32.mrf.mxu0
    %v706 = vadd.f32 %v182, %v705
    %v707 = vpop.f32.mrf.mxu0
    %708 = vmatprep.mubr.f32.mxu0 0.0
    %709 = vmatmul.mubr.f32.gmra.mxu0 %v231
    %v710 = vpop.f32.mrf.mxu0
    %v711 = vadd.f32 %v182, %v710
    %v712 = vpop.f32.mrf.mxu0
    %713 = vmatprep.mubr.f32.mxu0 0.0
    %714 = vmatmul.mubr.f32.gmra.mxu0 %v234
    %v715 = vpop.f32.mrf.mxu0
    %v716 = vadd.f32 %v182, %v715
    %v717 = vpop.f32.mrf.mxu0
    %718 = vmatprep.mubr.f32.mxu0 0.0
    %719 = vmatmul.mubr.f32.gmra.mxu0 %v237
    %v720 = vpop.f32.mrf.mxu0
    %v721 = vadd.f32 %v182, %v720
    %v722 = vpop.f32.mrf.mxu0
    %723 = vmatprep.mubr.f32.mxu0 0.0
    %724 = vmatmul.mubr.f32.gmra.mxu0 %v240
    %v725 = vpop.f32.mrf.mxu0
    %v726 = vadd.f32 %v182, %v725
    %v727 = vpop.f32.mrf.mxu0
    %728 = vmatprep.mubr.f32.mxu0 0.0
    %729 = vmatmul.mubr.f32.gmra.mxu0 %v243
    %v730 = vpop.f32.mrf.mxu0
    %v731 = vadd.f32 %v182, %v730
    %v732 = vpop.f32.mrf.mxu0
    %733 = vmatprep.mubr.f32.mxu0 0.0
    %734 = vmatmul.mubr.f32.gmra.mxu0 %v246
    %v735 = vpop.f32.mrf.mxu0
    %v736 = vadd.f32 %v182, %v735
    %v737 = vpop.f32.mrf.mxu0
    %738 = vmatprep.mubr.f32.mxu0 0.0
    %739 = vmatmul.mubr.f32.gmra.mxu0 %v249
    %v740 = vpop.f32.mrf.mxu0
    %v741 = vadd.f32 %v182, %v740
    %v742 = vpop.f32.mrf.mxu0
    %743 = vmatprep.mubr.f32.mxu0 0.0
    %744 = vmatmul.mubr.f32.gmra.mxu0 %v252
    %v745 = vpop.f32.mrf.mxu0
    %v746 = vadd.f32 %v182, %v745
    %v747 = vpop.f32.mrf.mxu0
    %748 = vmatprep.mubr.f32.mxu0 0.0
    %749 = vmatmul.mubr.f32.gmra.mxu0 %v255
    %v750 = vpop.f32.mrf.mxu0
    %v751 = vadd.f32 %v182, %v750
    %v752 = vpop.f32.mrf.mxu0
    %753 = vmatprep.mubr.f32.mxu0 0.0
    %754 = vmatmul.mubr.f32.gmra.mxu0 %v258
    %v755 = vpop.f32.mrf.mxu0
    %v756 = vadd.f32 %v182, %v755
    %v757 = vpop.f32.mrf.mxu0
    %758 = vmatprep.mubr.f32.mxu0 0.0
    %759 = vmatmul.mubr.f32.gmra.mxu0 %v261
    %v760 = vpop.f32.mrf.mxu0
    %v761 = vadd.f32 %v182, %v760
    %v762 = vpop.f32.mrf.mxu0
    %763 = vmatprep.mubr.f32.mxu0 0.0
    %764 = vmatmul.mubr.f32.gmra.mxu0 %v264
    %v765 = vpop.f32.mrf.mxu0
    %v766 = vadd.f32 %v182, %v765
    %v767 = vpop.f32.mrf.mxu0
    %768 = vmatprep.mubr.f32.mxu0 0.0
    %769 = vmatmul.mubr.f32.gmra.mxu0 %v267
    %v770 = vpop.f32.mrf.mxu0
    %v771 = vadd.f32 %v182, %v770
    %v772 = vpop.f32.mrf.mxu0
    %773 = vmatprep.mubr.f32.mxu0 0.0
    %774 = vmatmul.mubr.f32.gmra.mxu0 %v270
    %v775 = vpop.f32.mrf.mxu0
    %v776 = vadd.f32 %v182, %v775
    %v777 = vpop.f32.mrf.mxu0
    %778 = vmatprep.mubr.f32.mxu0 0.0
    %779 = vmatmul.mubr.f32.gmra.mxu0 %v273
    %v780 = vpop.f32.mrf.mxu0
    %v781 = vadd.f32 %v182, %v780
    %v782 = vpop.f32.mrf.mxu0
    %783 = vmatprep.mubr.f32.mxu0 0.0
    %784 = vmatmul.mubr.f32.gmra.mxu0 %v276
    %v785 = vpop.f32.mrf.mxu0
    %v786 = vadd.f32 %v182, %v785
    %v787 = vpop.f32.mrf.mxu0
    %788 = vmatprep.mubr.f32.mxu0 0.0
    %789 = vmatmul.mubr.f32.gmra.mxu0 %v279
    %v790 = vpop.f32.mrf.mxu0
    %v791 = vadd.f32 %v182, %v790
    %v792 = vpop.f32.mrf.mxu0
    %793 = vmatprep.mubr.f32.mxu0 0.0
    %794 = vmatmul.mubr.f32.gmra.mxu0 %v282
    %v795 = vpop.f32.mrf.mxu0
    %v796 = vadd.f32 %v182, %v795
    %v797 = vpop.f32.mrf.mxu0
    %798 = vmatprep.mubr.f32.mxu0 0.0
    %799 = vmatmul.mubr.f32.gmra.mxu0 %v285
    %v800 = vpop.f32.mrf.mxu0
    %v801 = vadd.f32 %v182, %v800
    %v802 = vpop.f32.mrf.mxu0
    %803 = vmatprep.mubr.f32.mxu0 0.0
    %804 = vmatmul.mubr.f32.gmra.mxu0 %v288
    %v805 = vpop.f32.mrf.mxu0
    %v806 = vadd.f32 %v182, %v805
    %v807 = vpop.f32.mrf.mxu0
    %808 = vmatprep.mubr.f32.mxu0 0.0
    %809 = vmatmul.mubr.f32.gmra.mxu0 %v291
    %v810 = vpop.f32.mrf.mxu0
    %v811 = vadd.f32 %v182, %v810
    %v812 = vpop.f32.mrf.mxu0
    %813 = vmatprep.mubr.f32.mxu0 0.0
    %814 = vmatmul.mubr.f32.gmra.mxu0 %v294
    %v815 = vpop.f32.mrf.mxu0
    %v816 = vadd.f32 %v182, %v815
    %v817 = vpop.f32.mrf.mxu0
    %818 = vmatprep.mubr.f32.mxu0 0.0
    %819 = vmatmul.mubr.f32.gmra.mxu0 %v297
    %v820 = vpop.f32.mrf.mxu0
    %v821 = vadd.f32 %v182, %v820
    %v822 = vpop.f32.mrf.mxu0
    %823 = vmatprep.mubr.f32.mxu0 0.0
    %824 = vmatmul.mubr.f32.gmra.mxu0 %v300
    %v825 = vpop.f32.mrf.mxu0
    %v826 = vadd.f32 %v182, %v825
    %v827 = vpop.f32.mrf.mxu0
    %828 = vmatprep.mubr.f32.mxu0 0.0
    %829 = vmatmul.mubr.f32.gmra.mxu0 %v303
    %v830 = vpop.f32.mrf.mxu0
    %v831 = vadd.f32 %v182, %v830
    %v832 = vpop.f32.mrf.mxu0
    %833 = vmatprep.mubr.f32.mxu0 0.0
    %834 = vmatmul.mubr.f32.gmra.mxu0 %v306
    %v835 = vpop.f32.mrf.mxu0
    %v836 = vadd.f32 %v182, %v835
    %v837 = vpop.f32.mrf.mxu0
    %838 = vmatprep.mubr.f32.mxu0 0.0
    %839 = vmatmul.mubr.f32.gmra.mxu0 %v309
    %v840 = vpop.f32.mrf.mxu0
    %v841 = vadd.f32 %v182, %v840
    %v842 = vpop.f32.mrf.mxu0
    %843 = vmatprep.mubr.f32.mxu0 0.0
    %844 = vmatmul.mubr.f32.gmra.mxu0 %v312
    %v845 = vpop.f32.mrf.mxu0
    %v846 = vadd.f32 %v182, %v845
    %v847 = vpop.f32.mrf.mxu0
    %848 = vmatprep.mubr.f32.mxu0 0.0
    %849 = vmatmul.mubr.f32.gmra.mxu0 %v315
    %v850 = vpop.f32.mrf.mxu0
    %v851 = vadd.f32 %v182, %v850
    %v852 = vpop.f32.mrf.mxu0
    %853 = vmatprep.mubr.f32.mxu0 0.0
    %854 = vmatmul.mubr.f32.gmra.mxu0 %v318
    %v855 = vpop.f32.mrf.mxu0
    %v856 = vadd.f32 %v182, %v855
    %v857 = vpop.f32.mrf.mxu0
    %858 = vmatprep.mubr.f32.mxu0 0.0
    %859 = vmatmul.mubr.f32.gmra.mxu0 %v321
    %v860 = vpop.f32.mrf.mxu0
    %v861 = vadd.f32 %v182, %v860
    %v862 = vpop.f32.mrf.mxu0
    %863 = vmatprep.mubr.f32.mxu0 0.0
    %864 = vmatmul.mubr.f32.gmra.mxu0 %v324
    %v865 = vpop.f32.mrf.mxu0
    %v866 = vadd.f32 %v182, %v865
    %v867 = vpop.f32.mrf.mxu0
    %868 = vmatprep.mubr.f32.mxu0 0.0
    %869 = vmatmul.mubr.f32.gmra.mxu0 %v327
    %v870 = vpop.f32.mrf.mxu0
    %v871 = vadd.f32 %v182, %v870
    %v872 = vpop.f32.mrf.mxu0
    %873 = vmatprep.mubr.f32.mxu0 0.0
    %874 = vmatmul.mubr.f32.gmra.mxu0 %v330
    %v875 = vpop.f32.mrf.mxu0
    %v876 = vadd.f32 %v182, %v875
    %v877 = vpop.f32.mrf.mxu0
    %878 = vmatprep.mubr.f32.mxu0 0.0
    %879 = vmatmul.mubr.f32.gmra.mxu0 %v333
    %v880 = vpop.f32.mrf.mxu0
    %v881 = vadd.f32 %v182, %v880
    %v882 = vpop.f32.mrf.mxu0
    %883 = vmatprep.mubr.f32.mxu0 0.0
    %884 = vmatmul.mubr.f32.gmra.mxu0 %v336
    %v885 = vpop.f32.mrf.mxu0
    %v886 = vadd.f32 %v182, %v885
    %v887 = vpop.f32.mrf.mxu0
    %888 = vmatprep.mubr.f32.mxu0 0.0
    %889 = vmatmul.mubr.f32.gmra.mxu0 %v339
    %v890 = vpop.f32.mrf.mxu0
    %v891 = vadd.f32 %v182, %v890
    %v892 = vpop.f32.mrf.mxu0
    %893 = vmatprep.mubr.f32.mxu0 0.0
    %894 = vmatmul.mubr.f32.gmra.mxu0 %v342
    %v895 = vpop.f32.mrf.mxu0
    %v896 = vadd.f32 %v182, %v895
    %v897 = vpop.f32.mrf.mxu0
    %898 = vmatprep.mubr.f32.mxu0 0.0
    %899 = vmatmul.mubr.f32.gmra.mxu0 %v345
    %v900 = vpop.f32.mrf.mxu0
    %v901 = vadd.f32 %v182, %v900
    %v902 = vpop.f32.mrf.mxu0
    %903 = vmatprep.mubr.f32.mxu0 0.0
    %904 = vmatmul.mubr.f32.gmra.mxu0 %v348
    %v905 = vpop.f32.mrf.mxu0
    %v906 = vadd.f32 %v182, %v905
    %v907 = vpop.f32.mrf.mxu0
    %908 = vmatprep.mubr.f32.mxu0 0.0
    %909 = vmatmul.mubr.f32.gmra.mxu0 %v351
    %v910 = vpop.f32.mrf.mxu0
    %v911 = vadd.f32 %v182, %v910
    %v912 = vpop.f32.mrf.mxu0
    %913 = vmatprep.mubr.f32.mxu0 0.0
    %914 = vmatmul.mubr.f32.gmra.mxu0 %v354
    %v915 = vpop.f32.mrf.mxu0
    %v916 = vadd.f32 %v182, %v915
    %v917 = vpop.f32.mrf.mxu0
    %918 = vmatprep.mubr.f32.mxu0 0.0
    %919 = vmatmul.mubr.f32.gmra.mxu0 %v357
    %v920 = vpop.f32.mrf.mxu0
    %v921 = vadd.f32 %v182, %v920
    %v922 = vpop.f32.mrf.mxu0
    %923 = vmatprep.mubr.f32.mxu0 0.0
    %924 = vmatmul.mubr.f32.gmra.mxu0 %v360
    %v925 = vpop.f32.mrf.mxu0
    %v926 = vadd.f32 %v182, %v925
    %v927 = vpop.f32.mrf.mxu0
    %928 = vmatprep.mubr.f32.mxu0 0.0
    %929 = vmatmul.mubr.f32.gmra.mxu0 %v363
    %v930 = vpop.f32.mrf.mxu0
    %v931 = vadd.f32 %v182, %v930
    %v932 = vpop.f32.mrf.mxu0
    %933 = vmatprep.mubr.f32.mxu0 0.0
    %934 = vmatmul.mubr.f32.gmra.mxu0 %v366
    %v935 = vpop.f32.mrf.mxu0
    %v936 = vadd.f32 %v182, %v935
    %v937 = vpop.f32.mrf.mxu0
    %938 = vmatprep.mubr.f32.mxu0 0.0
    %939 = vmatmul.mubr.f32.gmra.mxu0 %v369
    %v940 = vpop.f32.mrf.mxu0
    %v941 = vadd.f32 %v182, %v940
    %v942 = vpop.f32.mrf.mxu0
    %943 = vmatprep.mubr.f32.mxu0 0.0
    %944 = vmatmul.mubr.f32.gmra.mxu0 %v372
    %v945 = vpop.f32.mrf.mxu0
    %v946 = vadd.f32 %v182, %v945
    %v947 = vpop.f32.mrf.mxu0
    %948 = vmatprep.mubr.f32.mxu0 0.0
    %949 = vmatmul.mubr.f32.gmra.mxu0 %v375
    %v950 = vpop.f32.mrf.mxu0
    %v951 = vadd.f32 %v182, %v950
    %v952 = vpop.f32.mrf.mxu0
    %953 = vmatprep.mubr.f32.mxu0 0.0
    %954 = vmatmul.mubr.f32.gmra.mxu0 %v378
    %v955 = vpop.f32.mrf.mxu0
    %v956 = vadd.f32 %v182, %v955
    %v957 = vpop.f32.mrf.mxu0
    %958 = vmatprep.mubr.f32.mxu0 0.0
    %959 = vmatmul.mubr.f32.gmra.mxu0 %v381
    %v960 = vpop.f32.mrf.mxu0
    %v961 = vadd.f32 %v182, %v960
    %v962 = vpop.f32.mrf.mxu0
    %963 = vmatprep.mubr.f32.mxu0 0.0
    %964 = vmatmul.mubr.f32.gmra.mxu0 %v384
    %v965 = vpop.f32.mrf.mxu0
    %v966 = vadd.f32 %v182, %v965
    %v967 = vpop.f32.mrf.mxu0
    %968 = vmatprep.mubr.f32.mxu0 0.0
    %969 = vmatmul.mubr.f32.gmra.mxu0 %v387
    %v970 = vpop.f32.mrf.mxu0
    %v971 = vadd.f32 %v182, %v970
    %v972 = vpop.f32.mrf.mxu0
    %973 = vmatprep.mubr.f32.mxu0 0.0
    %974 = vmatmul.mubr.f32.gmra.mxu0 %v390
    %v975 = vpop.f32.mrf.mxu0
    %v976 = vadd.f32 %v182, %v975
    %v977 = vpop.f32.mrf.mxu0
    %978 = vmatprep.mubr.f32.mxu0 0.0
    %979 = vmatmul.mubr.f32.gmra.mxu0 %v393
    %v980 = vpop.f32.mrf.mxu0
    %v981 = vadd.f32 %v182, %v980
    %v982 = vpop.f32.mrf.mxu0
    %983 = vmatprep.mubr.f32.mxu0 0.0
    %984 = vmatmul.mubr.f32.gmra.mxu0 %v396
    %v985 = vpop.f32.mrf.mxu0
    %v986 = vadd.f32 %v182, %v985
    %v987 = vpop.f32.mrf.mxu0
    %988 = vmatprep.mubr.f32.mxu0 0.0
    %989 = vmatmul.mubr.f32.gmra.mxu0 %v399
    %v990 = vpop.f32.mrf.mxu0
    %v991 = vadd.f32 %v182, %v990
    %v992 = vpop.f32.mrf.mxu0
    %993 = vmatprep.mubr.f32.mxu0 0.0
    %994 = vmatmul.mubr.f32.gmra.mxu0 %v402
    %v995 = vpop.f32.mrf.mxu0
    %v996 = vadd.f32 %v182, %v995
    %v997 = vpop.f32.mrf.mxu0
    %998 = vmatprep.mubr.f32.mxu0 0.0
    %999 = vmatmul.mubr.f32.gmra.mxu0 %v405
    %v1000 = vpop.f32.mrf.mxu0
    %v1001 = vadd.f32 %v182, %v1000
    %v1002 = vpop.f32.mrf.mxu0
    %1003 = vmatprep.mubr.f32.mxu0 0.0
    %1004 = vmatmul.mubr.f32.gmra.mxu0 %v408
    %v1005 = vpop.f32.mrf.mxu0
    %v1006 = vadd.f32 %v182, %v1005
    %v1007 = vpop.f32.mrf.mxu0
    %1008 = vmatprep.mubr.f32.mxu0 0.0
    %1009 = vmatmul.mubr.f32.gmra.mxu0 %v411
    %v1010 = vpop.f32.mrf.mxu0
    %v1011 = vadd.f32 %v182, %v1010
    %v1012 = vpop.f32.mrf.mxu0
    %1013 = vmatprep.mubr.f32.mxu0 0.0
    %1014 = vmatmul.mubr.f32.gmra.mxu0 %v414
    %v1015 = vpop.f32.mrf.mxu0
    %v1016 = vadd.f32 %v182, %v1015
    %v1017 = vpop.f32.mrf.mxu0
    %1018 = vmatprep.mubr.f32.mxu0 0.0
    %1019 = vmatmul.mubr.f32.gmra.mxu0 %v417
    %v1020 = vpop.f32.mrf.mxu0
    %v1021 = vadd.f32 %v182, %v1020
    %v1022 = vpop.f32.mrf.mxu0
    %1023 = vmatprep.mubr.f32.mxu0 0.0
    %1024 = vmatmul.mubr.f32.gmra.mxu0 %v420
    %v1025 = vpop.f32.mrf.mxu0
    %v1026 = vadd.f32 %v182, %v1025
    %v1027 = vpop.f32.mrf.mxu0
    %1028 = vmatprep.mubr.f32.mxu0 0.0
    %1029 = vmatmul.mubr.f32.gmra.mxu0 %v423
    %v1030 = vpop.f32.mrf.mxu0
    %v1031 = vadd.f32 %v182, %v1030
    %v1032 = vpop.f32.mrf.mxu0
    %1033 = vmatprep.mubr.f32.mxu0 0.0
    %1034 = vmatmul.mubr.f32.gmra.mxu0 %v426
    %v1035 = vpop.f32.mrf.mxu0
    %v1036 = vadd.f32 %v182, %v1035
    %v1037 = vpop.f32.mrf.mxu0
    %1038 = vmatprep.mubr.f32.mxu0 0.0
    %1039 = vmatmul.mubr.f32.gmra.mxu0 %v429
    %v1040 = vpop.f32.mrf.mxu0
    %v1041 = vadd.f32 %v182, %v1040
    %v1042 = vpop.f32.mrf.mxu0
    %1043 = vmatprep.mubr.f32.mxu0 0.0
    %1044 = vmatmul.mubr.f32.gmra.mxu0 %v432
    %v1045 = vpop.f32.mrf.mxu0
    %v1046 = vadd.f32 %v182, %v1045
    %v1047 = vpop.f32.mrf.mxu0
    %1048 = vmatprep.mubr.f32.mxu0 0.0
    %1049 = vmatmul.mubr.f32.gmra.mxu0 %v435
    %v1050 = vpop.f32.mrf.mxu0
    %v1051 = vadd.f32 %v182, %v1050
    %v1052 = vpop.f32.mrf.mxu0
    %1053 = vmatprep.mubr.f32.mxu0 0.0
    %1054 = vmatmul.mubr.f32.gmra.mxu0 %v438
    %v1055 = vpop.f32.mrf.mxu0
    %v1056 = vadd.f32 %v182, %v1055
    %v1057 = vpop.f32.mrf.mxu0
    %1058 = vmatprep.mubr.f32.mxu0 0.0
    %1059 = vmatmul.mubr.f32.gmra.mxu0 %v441
    %v1060 = vpop.f32.mrf.mxu0
    %v1061 = vadd.f32 %v182, %v1060
    %v1062 = vpop.f32.mrf.mxu0
    %1063 = vmatprep.mubr.f32.mxu0 0.0
    %1064 = vmatmul.mubr.f32.gmra.mxu0 %v444
    %v1065 = vpop.f32.mrf.mxu0
    %v1066 = vadd.f32 %v182, %v1065
    %v1067 = vpop.f32.mrf.mxu0
    %1068 = vmatprep.mubr.f32.mxu0 0.0
    %1069 = vmatmul.mubr.f32.gmra.mxu0 %v447
    %v1070 = vpop.f32.mrf.mxu0
    %v1071 = vadd.f32 %v182, %v1070
    %v1072 = vpop.f32.mrf.mxu0
    %1073 = vmatprep.mubr.f32.mxu0 0.0
    %1074 = vmatmul.mubr.f32.gmra.mxu0 %v450
    %v1075 = vpop.f32.mrf.mxu0
    %v1076 = vadd.f32 %v182, %v1075
    %v1077 = vpop.f32.mrf.mxu0
    %1078 = vmatprep.mubr.f32.mxu0 0.0
    %1079 = vmatmul.mubr.f32.gmra.mxu0 %v453
    %v1080 = vpop.f32.mrf.mxu0
    %v1081 = vadd.f32 %v182, %v1080
    %v1082 = vpop.f32.mrf.mxu0
    %1083 = vmatprep.mubr.f32.mxu0 0.0
    %1084 = vmatmul.mubr.f32.gmra.mxu0 %v456
    %v1085 = vpop.f32.mrf.mxu0
    %v1086 = vadd.f32 %v182, %v1085
    %v1087 = vpop.f32.mrf.mxu0
    %1088 = vmatprep.mubr.f32.mxu0 0.0
    %1089 = vmatmul.mubr.f32.gmra.mxu0 %v459
    %v1090 = vpop.f32.mrf.mxu0
    %v1091 = vadd.f32 %v182, %v1090
    %v1092 = vpop.f32.mrf.mxu0
    %1093 = vmatprep.mubr.f32.mxu0 0.0
    %1094 = vmatmul.mubr.f32.gmra.mxu0 %v462
    %v1095 = vpop.f32.mrf.mxu0
    %v1096 = vadd.f32 %v182, %v1095
    %v1097 = vpop.f32.mrf.mxu0
    %1098 = vmatprep.mubr.f32.mxu0 0.0
    %1099 = vmatmul.mubr.f32.gmra.mxu0 %v465
    %v1100 = vpop.f32.mrf.mxu0
    %v1101 = vadd.f32 %v182, %v1100
    %v1102 = vpop.f32.mrf.mxu0
    %1103 = vmatprep.mubr.f32.mxu0 0.0
    %1104 = vmatmul.mubr.f32.gmra.mxu0 %v468
    %v1105 = vpop.f32.mrf.mxu0
    %v1106 = vadd.f32 %v182, %v1105
    %v1107 = vpop.f32.mrf.mxu0
    %1108 = vmatprep.mubr.f32.mxu0 0.0
    %1109 = vmatmul.mubr.f32.gmra.mxu0 %v471
    %v1110 = vpop.f32.mrf.mxu0
    %v1111 = vadd.f32 %v182, %v1110
    %v1112 = vpop.f32.mrf.mxu0
    %1113 = vmatprep.mubr.f32.mxu0 0.0
    %1114 = vmatmul.mubr.f32.gmra.mxu0 %v474
    %v1115 = vpop.f32.mrf.mxu0
    %v1116 = vadd.f32 %v182, %v1115
    %v1117 = vpop.f32.mrf.mxu0
    %1118 = vmatprep.mubr.f32.mxu0 0.0
    %1119 = vmatmul.mubr.f32.gmra.mxu0 %v477
    %v1120 = vpop.f32.mrf.mxu0
    %v1121 = vadd.f32 %v182, %v1120
    %v1122 = vpop.f32.mrf.mxu0
    %1123 = vmatprep.mubr.f32.mxu0 0.0
    %1124 = vmatmul.mubr.f32.gmra.mxu0 %v480
    %v1125 = vpop.f32.mrf.mxu0
    %v1126 = vadd.f32 %v182, %v1125
    %v1127 = vpop.f32.mrf.mxu0
    %1128 = vmatprep.mubr.f32.mxu0 0.0
    %1129 = vmatmul.mubr.f32.gmra.mxu0 %v483
    %v1130 = vpop.f32.mrf.mxu0
    %v1131 = vadd.f32 %v182, %v1130
    %v1132 = vpop.f32.mrf.mxu0
    %1133 = vmatprep.mubr.f32.mxu0 0.0
    %1134 = vmatmul.mubr.f32.gmra.mxu0 %v486
    %v1135 = vpop.f32.mrf.mxu0
    %v1136 = vadd.f32 %v182, %v1135
    %v1137 = vpop.f32.mrf.mxu0
    %1138 = vmatprep.mubr.f32.mxu0 0.0
    %1139 = vmatmul.mubr.f32.gmra.mxu0 %v489
    %v1140 = vpop.f32.mrf.mxu0
    %v1141 = vadd.f32 %v182, %v1140
    %v1142 = vpop.f32.mrf.mxu0
    %1143 = vmatprep.mubr.f32.mxu0 0.0
    %1144 = vmatmul.mubr.f32.gmra.mxu0 %v492
    %v1145 = vpop.f32.mrf.mxu0
    %v1146 = vadd.f32 %v182, %v1145
    %v1147 = vpop.f32.mrf.mxu0
    %1148 = vmatprep.mubr.f32.mxu0 0.0
    %1149 = vmatmul.mubr.f32.gmra.mxu0 %v495
    %v1150 = vpop.f32.mrf.mxu0
    %v1151 = vadd.f32 %v182, %v1150
    %v1152 = vpop.f32.mrf.mxu0
    %1153 = vmatprep.mubr.f32.mxu0 0.0
    %1154 = vmatmul.mubr.f32.gmra.mxu0 %v498
    %v1155 = vpop.f32.mrf.mxu0
    %v1156 = vadd.f32 %v182, %v1155
    %v1157 = vpop.f32.mrf.mxu0
    %1158 = vmatprep.mubr.f32.mxu0 0.0
    %1159 = vmatmul.mubr.f32.gmra.mxu0 %v501
    %v1160 = vpop.f32.mrf.mxu0
    %v1161 = vadd.f32 %v182, %v1160
    %v1162 = vpop.f32.mrf.mxu0
    %1163 = vmatprep.mubr.f32.mxu0 0.0
    %1164 = vmatmul.mubr.f32.gmra.mxu0 %v504
    %v1165 = vpop.f32.mrf.mxu0
    %v1166 = vadd.f32 %v182, %v1165
    %v1167 = vpop.f32.mrf.mxu0
    %1168 = vmatprep.mubr.f32.mxu0 0.0
    %1169 = vmatmul.mubr.f32.gmra.mxu0 %v507
    %v1170 = vpop.f32.mrf.mxu0
    %v1171 = vadd.f32 %v182, %v1170
    %v1172 = vpop.f32.mrf.mxu0
    %1173 = vmatprep.mubr.f32.mxu0 0.0
    %1174 = vmatmul.mubr.f32.gmra.mxu0 %v510
    %v1175 = vpop.f32.mrf.mxu0
    %v1176 = vadd.f32 %v182, %v1175
    %v1177 = vpop.f32.mrf.mxu0
    %1178 = vmatprep.mubr.f32.mxu0 0.0
    %1179 = vmatmul.mubr.f32.gmra.mxu0 %v513
    %v1180 = vpop.f32.mrf.mxu0
    %v1181 = vadd.f32 %v182, %v1180
    %v1182 = vpop.f32.mrf.mxu0
    %1183 = vmatprep.mubr.f32.mxu0 0.0
    %1184 = vmatmul.mubr.f32.gmra.mxu0 %v516
    %v1185 = vpop.f32.mrf.mxu0
    %v1186 = vadd.f32 %v182, %v1185
    %v1187 = vpop.f32.mrf.mxu0
    %1188 = vmatprep.mubr.f32.mxu0 0.0
    %1189 = vmatmul.mubr.f32.gmra.mxu0 %v519
    %v1190 = vpop.f32.mrf.mxu0
    %v1191 = vadd.f32 %v182, %v1190
    %v1192 = vpop.f32.mrf.mxu0
    %1193 = vmatprep.mubr.f32.mxu0 0.0
    %1194 = vmatmul.mubr.f32.gmra.mxu0 %v522
    %v1195 = vpop.f32.mrf.mxu0
    %v1196 = vadd.f32 %v182, %v1195
    %v1197 = vpop.f32.mrf.mxu0
    %1198 = vmatprep.mubr.f32.mxu0 0.0
    %1199 = vmatmul.mubr.f32.gmra.mxu0 %v525
    %v1200 = vpop.f32.mrf.mxu0
    %v1201 = vadd.f32 %v182, %v1200
    %v1202 = vpop.f32.mrf.mxu0
    %1203 = vmatprep.mubr.f32.mxu0 0.0
    %1204 = vmatmul.mubr.f32.gmra.mxu0 %v528
    %v1205 = vpop.f32.mrf.mxu0
    %v1206 = vadd.f32 %v182, %v1205
    %v1207 = vpop.f32.mrf.mxu0
    %1208 = vmatprep.mubr.f32.mxu0 0.0
    %1209 = vmatmul.mubr.f32.gmra.mxu0 %v531
    %v1210 = vpop.f32.mrf.mxu0
    %v1211 = vadd.f32 %v182, %v1210
    %v1212 = vpop.f32.mrf.mxu0
    %1213 = vmatprep.mubr.f32.mxu0 0.0
    %1214 = vmatmul.mubr.f32.gmra.mxu0 %v534
    %v1215 = vpop.f32.mrf.mxu0
    %v1216 = vadd.f32 %v182, %v1215
    %v1217 = vpop.f32.mrf.mxu0
    %1218 = vmatprep.mubr.f32.mxu0 0.0
    %1219 = vmatmul.mubr.f32.gmra.mxu0 %v537
    %v1220 = vpop.f32.mrf.mxu0
    %v1221 = vadd.f32 %v182, %v1220
    %v1222 = vpop.f32.mrf.mxu0
    %1223 = vmatprep.mubr.f32.mxu0 0.0
    %1224 = vmatmul.mubr.f32.gmra.mxu0 %v540
    %v1225 = vpop.f32.mrf.mxu0
    %v1226 = vadd.f32 %v182, %v1225
    %v1227 = vpop.f32.mrf.mxu0
    %1228 = vmatprep.mubr.f32.mxu0 0.0
    %1229 = vmatmul.mubr.f32.gmra.mxu0 %v543
    %v1230 = vpop.f32.mrf.mxu0
    %v1231 = vadd.f32 %v182, %v1230
    %v1232 = vpop.f32.mrf.mxu0
    %1233 = vmatprep.mubr.f32.mxu0 0.0
    %1234 = vmatmul.mubr.f32.gmra.mxu0 %v546
    %v1235 = vpop.f32.mrf.mxu0
    %v1236 = vadd.f32 %v182, %v1235
    %v1237 = vpop.f32.mrf.mxu0
    %1238 = vmatprep.mubr.f32.mxu0 0.0
    %1239 = vmatmul.mubr.f32.gmra.mxu0 %v549
    %v1240 = vpop.f32.mrf.mxu0
    %v1241 = vadd.f32 %v182, %v1240
    %v1242 = vpop.f32.mrf.mxu0
    %1243 = vmatprep.mubr.f32.mxu0 0.0
    %1244 = vmatmul.mubr.f32.gmra.mxu0 %v552
    %v1245 = vpop.f32.mrf.mxu0
    %v1246 = vadd.f32 %v182, %v1245
    %v1247 = vpop.f32.mrf.mxu0
    %1248 = vmatprep.mubr.f32.mxu0 0.0
    %1249 = vmatmul.mubr.f32.gmra.mxu0 %v555
    %v1250 = vpop.f32.mrf.mxu0
    %v1251 = vadd.f32 %v182, %v1250
    %v1252 = vpop.f32.mrf.mxu0
    %1253 = vmatprep.mubr.f32.mxu0 0.0
    %1254 = vmatmul.mubr.f32.gmra.mxu0 %v558
    %v1255 = vpop.f32.mrf.mxu0
    %v1256 = vadd.f32 %v182, %v1255
    %v1257 = vpop.f32.mrf.mxu0
    %1258 = vmatprep.mubr.f32.mxu0 0.0
    %1259 = vmatmul.mubr.f32.gmra.mxu0 %v561
    %v1260 = vpop.f32.mrf.mxu0
    %v1261 = vadd.f32 %v182, %v1260
    %v1262 = vpop.f32.mrf.mxu0
    %1263 = vmatprep.mubr.f32.mxu0 0.0
    %1264 = vmatmul.mubr.f32.gmra.mxu0 %v564
    %v1265 = vpop.f32.mrf.mxu0
    %v1266 = vadd.f32 %v182, %v1265
    %v1267 = vpop.f32.mrf.mxu0
    %1268 = vmatprep.mubr.f32.mxu0 0.0
    %1269 = vmatmul.mubr.f32.gmra.mxu0 %v567
    %v1270 = vpop.f32.mrf.mxu0
    %v1271 = vadd.f32 %v182, %v1270
    %v1272 = vpop.f32.mrf.mxu0
    %1273 = vdwg.mxu0
    %v1274 = vmax.f32 %v636, 0.0
    %v1275 = vmax.f32 %v641, 0.0
    %v1276 = vmax.f32 %v646, 0.0
    %v1277 = vmax.f32 %v651, 0.0
    %v1278 = vmax.f32 %v656, 0.0
    %v1279 = vmax.f32 %v661, 0.0
    %v1280 = vmax.f32 %v666, 0.0
    %v1281 = vmax.f32 %v671, 0.0
    %v1282 = vmax.f32 %v676, 0.0
    %v1283 = vmax.f32 %v681, 0.0
    %v1284 = vmax.f32 %v686, 0.0
    %v1285 = vmax.f32 %v691, 0.0
    %v1286 = vmax.f32 %v696, 0.0
    %v1287 = vmax.f32 %v701, 0.0
    %v1288 = vmax.f32 %v706, 0.0
    %v1289 = vmax.f32 %v711, 0.0
    %v1290 = vmax.f32 %v716, 0.0
    %v1291 = vmax.f32 %v721, 0.0
    %v1292 = vmax.f32 %v726, 0.0
    %v1293 = vmax.f32 %v731, 0.0
    %v1294 = vmax.f32 %v736, 0.0
    %v1295 = vmax.f32 %v741, 0.0
    %v1296 = vmax.f32 %v746, 0.0
    %v1297 = vmax.f32 %v751, 0.0
    %v1298 = vmax.f32 %v756, 0.0
    %v1299 = vmax.f32 %v761, 0.0
    %v1300 = vmax.f32 %v766, 0.0
    %v1301 = vmax.f32 %v771, 0.0
    %v1302 = vmax.f32 %v776, 0.0
    %v1303 = vmax.f32 %v781, 0.0
    %v1304 = vmax.f32 %v786, 0.0
    %v1305 = vmax.f32 %v791, 0.0
    %v1306 = vmax.f32 %v796, 0.0
    %v1307 = vmax.f32 %v801, 0.0
    %v1308 = vmax.f32 %v806, 0.0
    %v1309 = vmax.f32 %v811, 0.0
    %v1310 = vmax.f32 %v816, 0.0
    %v1311 = vmax.f32 %v821, 0.0
    %v1312 = vmax.f32 %v826, 0.0
    %v1313 = vmax.f32 %v831, 0.0
    %v1314 = vmax.f32 %v836, 0.0
    %v1315 = vmax.f32 %v841, 0.0
    %v1316 = vmax.f32 %v846, 0.0
    %v1317 = vmax.f32 %v851, 0.0
    %v1318 = vmax.f32 %v856, 0.0
    %v1319 = vmax.f32 %v861, 0.0
    %v1320 = vmax.f32 %v866, 0.0
    %v1321 = vmax.f32 %v871, 0.0
    %v1322 = vmax.f32 %v876, 0.0
    %v1323 = vmax.f32 %v881, 0.0
    %v1324 = vmax.f32 %v886, 0.0
    %v1325 = vmax.f32 %v891, 0.0
    %v1326 = vmax.f32 %v896, 0.0
    %v1327 = vmax.f32 %v901, 0.0
    %v1328 = vmax.f32 %v906, 0.0
    %v1329 = vmax.f32 %v911, 0.0
    %v1330 = vmax.f32 %v916, 0.0
    %v1331 = vmax.f32 %v921, 0.0
    %v1332 = vmax.f32 %v926, 0.0
    %v1333 = vmax.f32 %v931, 0.0
    %v1334 = vmax.f32 %v936, 0.0
    %v1335 = vmax.f32 %v941, 0.0
    %v1336 = vmax.f32 %v946, 0.0
    %v1337 = vmax.f32 %v951, 0.0
    %v1338 = vmax.f32 %v956, 0.0
    %v1339 = vmax.f32 %v961, 0.0
    %v1340 = vmax.f32 %v966, 0.0
    %v1341 = vmax.f32 %v971, 0.0
    %v1342 = vmax.f32 %v976, 0.0
    %v1343 = vmax.f32 %v981, 0.0
    %v1344 = vmax.f32 %v986, 0.0
    %v1345 = vmax.f32 %v991, 0.0
    %v1346 = vmax.f32 %v996, 0.0
    %v1347 = vmax.f32 %v1001, 0.0
    %v1348 = vmax.f32 %v1006, 0.0
    %v1349 = vmax.f32 %v1011, 0.0
    %v1350 = vmax.f32 %v1016, 0.0
    %v1351 = vmax.f32 %v1021, 0.0
    %v1352 = vmax.f32 %v1026, 0.0
    %v1353 = vmax.f32 %v1031, 0.0
    %v1354 = vmax.f32 %v1036, 0.0
    %v1355 = vmax.f32 %v1041, 0.0
    %v1356 = vmax.f32 %v1046, 0.0
    %v1357 = vmax.f32 %v1051, 0.0
    %v1358 = vmax.f32 %v1056, 0.0
    %v1359 = vmax.f32 %v1061, 0.0
    %v1360 = vmax.f32 %v1066, 0.0
    %v1361 = vmax.f32 %v1071, 0.0
    %v1362 = vmax.f32 %v1076, 0.0
    %v1363 = vmax.f32 %v1081, 0.0
    %v1364 = vmax.f32 %v1086, 0.0
    %v1365 = vmax.f32 %v1091, 0.0
    %v1366 = vmax.f32 %v1096, 0.0
    %v1367 = vmax.f32 %v1101, 0.0
    %v1368 = vmax.f32 %v1106, 0.0
    %v1369 = vmax.f32 %v1111, 0.0
    %v1370 = vmax.f32 %v1116, 0.0
    %v1371 = vmax.f32 %v1121, 0.0
    %v1372 = vmax.f32 %v1126, 0.0
    %v1373 = vmax.f32 %v1131, 0.0
    %v1374 = vmax.f32 %v1136, 0.0
    %v1375 = vmax.f32 %v1141, 0.0
    %v1376 = vmax.f32 %v1146, 0.0
    %v1377 = vmax.f32 %v1151, 0.0
    %v1378 = vmax.f32 %v1156, 0.0
    %v1379 = vmax.f32 %v1161, 0.0
    %v1380 = vmax.f32 %v1166, 0.0
    %v1381 = vmax.f32 %v1171, 0.0
    %v1382 = vmax.f32 %v1176, 0.0
    %v1383 = vmax.f32 %v1181, 0.0
    %v1384 = vmax.f32 %v1186, 0.0
    %v1385 = vmax.f32 %v1191, 0.0
    %v1386 = vmax.f32 %v1196, 0.0
    %v1387 = vmax.f32 %v1201, 0.0
    %v1388 = vmax.f32 %v1206, 0.0
    %v1389 = vmax.f32 %v1211, 0.0
    %v1390 = vmax.f32 %v1216, 0.0
    %v1391 = vmax.f32 %v1221, 0.0
    %v1392 = vmax.f32 %v1226, 0.0
    %v1393 = vmax.f32 %v1231, 0.0
    %v1394 = vmax.f32 %v1236, 0.0
    %v1395 = vmax.f32 %v1241, 0.0
    %v1396 = vmax.f32 %v1246, 0.0
    %v1397 = vmax.f32 %v1251, 0.0
    %v1398 = vmax.f32 %v1256, 0.0
    %v1399 = vmax.f32 %v1261, 0.0
    %v1400 = vmax.f32 %v1266, 0.0
    %v1401 = vmax.f32 %v1271, 0.0
    %v1402 = vld [vmem:[%s4] sm:$0xff]
    %v1403 = vld [vmem:[%s4 + $0x8] sm:$0xff]
    %v1404 = vld [vmem:[%s4 + $0x10] sm:$0xff]
    %v1405 = vld [vmem:[%s4 + $0x18] sm:$0xff]
    %v1406 = vld [vmem:[%s5] sm:$0x1]
    %v1408 = vlaneseq
    %v1409 = vshrl.u32 %v1408, 7
    %v1410 = vsub.s32 0, %v1409
    %v1411 = vrot.slane %v1406, %v1410
    %v1414 = vsel %vm184, %v1274, 0
    %v1417 = vsel %vm184, %v1275, 0
    %v1420 = vsel %vm184, %v1276, 0
    %v1423 = vsel %vm184, %v1277, 0
    %v1426 = vsel %vm184, %v1278, 0
    %v1429 = vsel %vm184, %v1279, 0
    %v1432 = vsel %vm184, %v1280, 0
    %v1435 = vsel %vm184, %v1281, 0
    %v1438 = vsel %vm184, %v1282, 0
    %v1441 = vsel %vm184, %v1283, 0
    %v1444 = vsel %vm184, %v1284, 0
    %v1447 = vsel %vm184, %v1285, 0
    %v1450 = vsel %vm184, %v1286, 0
    %v1453 = vsel %vm184, %v1287, 0
    %v1456 = vsel %vm184, %v1288, 0
    %v1459 = vsel %vm184, %v1289, 0
    %v1462 = vsel %vm184, %v1290, 0
    %v1465 = vsel %vm184, %v1291, 0
    %v1468 = vsel %vm184, %v1292, 0
    %v1471 = vsel %vm184, %v1293, 0
    %v1474 = vsel %vm184, %v1294, 0
    %v1477 = vsel %vm184, %v1295, 0
    %v1480 = vsel %vm184, %v1296, 0
    %v1483 = vsel %vm184, %v1297, 0
    %v1486 = vsel %vm184, %v1298, 0
    %v1489 = vsel %vm184, %v1299, 0
    %v1492 = vsel %vm184, %v1300, 0
    %v1495 = vsel %vm184, %v1301, 0
    %v1498 = vsel %vm184, %v1302, 0
    %v1501 = vsel %vm184, %v1303, 0
    %v1504 = vsel %vm184, %v1304, 0
    %v1507 = vsel %vm184, %v1305, 0
    %v1510 = vsel %vm184, %v1306, 0
    %v1513 = vsel %vm184, %v1307, 0
    %v1516 = vsel %vm184, %v1308, 0
    %v1519 = vsel %vm184, %v1309, 0
    %v1522 = vsel %vm184, %v1310, 0
    %v1525 = vsel %vm184, %v1311, 0
    %v1528 = vsel %vm184, %v1312, 0
    %v1531 = vsel %vm184, %v1313, 0
    %v1534 = vsel %vm184, %v1314, 0
    %v1537 = vsel %vm184, %v1315, 0
    %v1540 = vsel %vm184, %v1316, 0
    %v1543 = vsel %vm184, %v1317, 0
    %v1546 = vsel %vm184, %v1318, 0
    %v1549 = vsel %vm184, %v1319, 0
    %v1552 = vsel %vm184, %v1320, 0
    %v1555 = vsel %vm184, %v1321, 0
    %v1558 = vsel %vm184, %v1322, 0
    %v1561 = vsel %vm184, %v1323, 0
    %v1564 = vsel %vm184, %v1324, 0
    %v1567 = vsel %vm184, %v1325, 0
    %v1570 = vsel %vm184, %v1326, 0
    %v1573 = vsel %vm184, %v1327, 0
    %v1576 = vsel %vm184, %v1328, 0
    %v1579 = vsel %vm184, %v1329, 0
    %v1582 = vsel %vm184, %v1330, 0
    %v1585 = vsel %vm184, %v1331, 0
    %v1588 = vsel %vm184, %v1332, 0
    %v1591 = vsel %vm184, %v1333, 0
    %v1594 = vsel %vm184, %v1334, 0
    %v1597 = vsel %vm184, %v1335, 0
    %v1600 = vsel %vm184, %v1336, 0
    %v1603 = vsel %vm184, %v1337, 0
    %v1606 = vsel %vm184, %v1338, 0
    %v1609 = vsel %vm184, %v1339, 0
    %v1612 = vsel %vm184, %v1340, 0
    %v1615 = vsel %vm184, %v1341, 0
    %v1618 = vsel %vm184, %v1342, 0
    %v1621 = vsel %vm184, %v1343, 0
    %v1624 = vsel %vm184, %v1344, 0
    %v1627 = vsel %vm184, %v1345, 0
    %v1630 = vsel %vm184, %v1346, 0
    %v1633 = vsel %vm184, %v1347, 0
    %v1636 = vsel %vm184, %v1348, 0
    %v1639 = vsel %vm184, %v1349, 0
    %v1642 = vsel %vm184, %v1350, 0
    %v1645 = vsel %vm184, %v1351, 0
    %v1648 = vsel %vm184, %v1352, 0
    %v1651 = vsel %vm184, %v1353, 0
    %v1654 = vsel %vm184, %v1354, 0
    %v1657 = vsel %vm184, %v1355, 0
    %v1660 = vsel %vm184, %v1356, 0
    %v1663 = vsel %vm184, %v1357, 0
    %v1666 = vsel %vm184, %v1358, 0
    %v1669 = vsel %vm184, %v1359, 0
    %v1672 = vsel %vm184, %v1360, 0
    %v1675 = vsel %vm184, %v1361, 0
    %v1678 = vsel %vm184, %v1362, 0
    %v1681 = vsel %vm184, %v1363, 0
    %v1684 = vsel %vm184, %v1364, 0
    %v1687 = vsel %vm184, %v1365, 0
    %v1690 = vsel %vm184, %v1366, 0
    %v1693 = vsel %vm184, %v1367, 0
    %v1696 = vsel %vm184, %v1368, 0
    %v1699 = vsel %vm184, %v1369, 0
    %v1702 = vsel %vm184, %v1370, 0
    %v1705 = vsel %vm184, %v1371, 0
    %v1708 = vsel %vm184, %v1372, 0
    %v1711 = vsel %vm184, %v1373, 0
    %v1714 = vsel %vm184, %v1374, 0
    %v1717 = vsel %vm184, %v1375, 0
    %v1720 = vsel %vm184, %v1376, 0
    %v1723 = vsel %vm184, %v1377, 0
    %v1726 = vsel %vm184, %v1378, 0
    %v1729 = vsel %vm184, %v1379, 0
    %v1732 = vsel %vm184, %v1380, 0
    %v1735 = vsel %vm184, %v1381, 0
    %v1738 = vsel %vm184, %v1382, 0
    %v1741 = vsel %vm184, %v1383, 0
    %v1744 = vsel %vm184, %v1384, 0
    %v1747 = vsel %vm184, %v1385, 0
    %v1750 = vsel %vm184, %v1386, 0
    %v1753 = vsel %vm184, %v1387, 0
    %v1756 = vsel %vm184, %v1388, 0
    %v1759 = vsel %vm184, %v1389, 0
    %v1762 = vsel %vm184, %v1390, 0
    %v1765 = vsel %vm184, %v1391, 0
    %v1768 = vsel %vm184, %v1392, 0
    %v1771 = vsel %vm184, %v1393, 0
    %v1774 = vsel %vm184, %v1394, 0
    %v1777 = vsel %vm184, %v1395, 0
    %v1780 = vsel %vm184, %v1396, 0
    %v1783 = vsel %vm184, %v1397, 0
    %v1786 = vsel %vm184, %v1398, 0
    %v1789 = vsel %vm184, %v1399, 0
    %v1792 = vsel %vm184, %v1400, 0
    %v1795 = vsel %vm184, %v1401, 0
    %1797 = vmatprep.subr.mxu0 0.0
    %1798 = vmatpush1.msra.mxu0 0.0
    %1799 = vmatprep.subr.mxu0 0.0
    %1800 = vmatpush1.msra.mxu0 0.0
    %1801 = vmatprep.subr.mxu0 0.0
    %1802 = vmatpush1.msra.mxu0 0.0
    %1803 = vmatprep.subr.mxu0 0.0
    %1804 = vmatpush1.msra.mxu0 0.0
    %1805 = vmatprep.subr.mxu0 0.0
    %1806 = vmatpush1.msra.mxu0 0.0
    %1807 = vmatprep.subr.mxu0 0.0
    %1808 = vmatpush1.msra.mxu0 0.0
    %1809 = vmatprep.subr.mxu0 0.0
    %1810 = vmatpush1.msra.mxu0 0.0
    %1811 = vmatprep.subr.mxu0 0.0
    %1812 = vmatpush1.msra.mxu0 0.0
    %1813 = vmatprep.subr.mxu0 0.0
    %1814 = vmatpush1.msra.mxu0 0.0
    %1815 = vmatprep.subr.mxu0 0.0
    %1816 = vmatpush1.msra.mxu0 0.0
    %1817 = vmatprep.subr.mxu0 0.0
    %1818 = vmatpush1.msra.mxu0 0.0
    %1819 = vmatprep.subr.mxu0 0.0
    %1820 = vmatpush1.msra.mxu0 0.0
    %1821 = vmatprep.subr.mxu0 0.0
    %1822 = vmatpush1.msra.mxu0 %v1405
    %1823 = vmatprep.subr.mxu0 0.0
    %1824 = vmatpush1.msra.mxu0 %v1404
    %1825 = vmatprep.subr.mxu0 0.0
    %1826 = vmatpush1.msra.mxu0 %v1403
    %1827 = vmatprep.subr.mxu0 0.0
    %1828 = vmatpush1.msra.mxu0 %v1402
    %1829 = vmatprep.subr.mxu0 0.0
    %1830 = vmatpush2.msra.mxu0 0.0
    %1831 = vmatprep.subr.mxu0 0.0
    %1832 = vmatpush2.msra.mxu0 0.0
    %1833 = vmatprep.subr.mxu0 0.0
    %1834 = vmatpush2.msra.mxu0 0.0
    %1835 = vmatprep.subr.mxu0 0.0
    %1836 = vmatpush2.msra.mxu0 0.0
    %1837 = vmatprep.subr.mxu0 0.0
    %1838 = vmatpush2.msra.mxu0 0.0
    %1839 = vmatprep.subr.mxu0 0.0
    %1840 = vmatpush2.msra.mxu0 0.0
    %1841 = vmatprep.subr.mxu0 0.0
    %1842 = vmatpush2.msra.mxu0 0.0
    %1843 = vmatprep.subr.mxu0 0.0
    %1844 = vmatpush2.msra.mxu0 0.0
    %1845 = vmatprep.subr.mxu0 0.0
    %1846 = vmatpush2.msra.mxu0 0.0
    %1847 = vmatprep.subr.mxu0 0.0
    %1848 = vmatpush2.msra.mxu0 0.0
    %1849 = vmatprep.subr.mxu0 0.0
    %1850 = vmatpush2.msra.mxu0 0.0
    %1851 = vmatprep.subr.mxu0 0.0
    %1852 = vmatpush2.msra.mxu0 0.0
    %1853 = vmatprep.subr.mxu0 0.0
    %1854 = vmatpush2.msra.mxu0 0.0
    %1855 = vmatprep.subr.mxu0 0.0
    %1856 = vmatpush2.msra.mxu0 0.0
    %1857 = vmatprep.subr.mxu0 0.0
    %1858 = vmatpush2.msra.mxu0 0.0
    %1859 = vmatprep.subr.mxu0 0.0
    %1860 = vmatpush2.msra.mxu0 0.0
    %1861 = vmatprep.mubr.f32.mxu0 0.0
    %1862 = vmatmul.mubr.f32.gmra.mxu0 %v1414
    %v1863 = vpop.f32.mrf.mxu0
    %v1864 = vadd.f32 %v1411, %v1863
    %v1865 = vpop.f32.mrf.mxu0
    %1866 = vmatprep.mubr.f32.mxu0 0.0
    %1867 = vmatmul.mubr.f32.gmra.mxu0 %v1417
    %v1868 = vpop.f32.mrf.mxu0
    %v1869 = vadd.f32 %v1411, %v1868
    %v1870 = vpop.f32.mrf.mxu0
    %1871 = vmatprep.mubr.f32.mxu0 0.0
    %1872 = vmatmul.mubr.f32.gmra.mxu0 %v1420
    %v1873 = vpop.f32.mrf.mxu0
    %v1874 = vadd.f32 %v1411, %v1873
    %v1875 = vpop.f32.mrf.mxu0
    %1876 = vmatprep.mubr.f32.mxu0 0.0
    %1877 = vmatmul.mubr.f32.gmra.mxu0 %v1423
    %v1878 = vpop.f32.mrf.mxu0
    %v1879 = vadd.f32 %v1411, %v1878
    %v1880 = vpop.f32.mrf.mxu0
    %1881 = vmatprep.mubr.f32.mxu0 0.0
    %1882 = vmatmul.mubr.f32.gmra.mxu0 %v1426
    %v1883 = vpop.f32.mrf.mxu0
    %v1884 = vadd.f32 %v1411, %v1883
    %v1885 = vpop.f32.mrf.mxu0
    %1886 = vmatprep.mubr.f32.mxu0 0.0
    %1887 = vmatmul.mubr.f32.gmra.mxu0 %v1429
    %v1888 = vpop.f32.mrf.mxu0
    %v1889 = vadd.f32 %v1411, %v1888
    %v1890 = vpop.f32.mrf.mxu0
    %1891 = vmatprep.mubr.f32.mxu0 0.0
    %1892 = vmatmul.mubr.f32.gmra.mxu0 %v1432
    %v1893 = vpop.f32.mrf.mxu0
    %v1894 = vadd.f32 %v1411, %v1893
    %v1895 = vpop.f32.mrf.mxu0
    %1896 = vmatprep.mubr.f32.mxu0 0.0
    %1897 = vmatmul.mubr.f32.gmra.mxu0 %v1435
    %v1898 = vpop.f32.mrf.mxu0
    %v1899 = vadd.f32 %v1411, %v1898
    %v1900 = vpop.f32.mrf.mxu0
    %1901 = vmatprep.mubr.f32.mxu0 0.0
    %1902 = vmatmul.mubr.f32.gmra.mxu0 %v1438
    %v1903 = vpop.f32.mrf.mxu0
    %v1904 = vadd.f32 %v1411, %v1903
    %v1905 = vpop.f32.mrf.mxu0
    %1906 = vmatprep.mubr.f32.mxu0 0.0
    %1907 = vmatmul.mubr.f32.gmra.mxu0 %v1441
    %v1908 = vpop.f32.mrf.mxu0
    %v1909 = vadd.f32 %v1411, %v1908
    %v1910 = vpop.f32.mrf.mxu0
    %1911 = vmatprep.mubr.f32.mxu0 0.0
    %1912 = vmatmul.mubr.f32.gmra.mxu0 %v1444
    %v1913 = vpop.f32.mrf.mxu0
    %v1914 = vadd.f32 %v1411, %v1913
    %v1915 = vpop.f32.mrf.mxu0
    %1916 = vmatprep.mubr.f32.mxu0 0.0
    %1917 = vmatmul.mubr.f32.gmra.mxu0 %v1447
    %v1918 = vpop.f32.mrf.mxu0
    %v1919 = vadd.f32 %v1411, %v1918
    %v1920 = vpop.f32.mrf.mxu0
    %1921 = vmatprep.mubr.f32.mxu0 0.0
    %1922 = vmatmul.mubr.f32.gmra.mxu0 %v1450
    %v1923 = vpop.f32.mrf.mxu0
    %v1924 = vadd.f32 %v1411, %v1923
    %v1925 = vpop.f32.mrf.mxu0
    %1926 = vmatprep.mubr.f32.mxu0 0.0
    %1927 = vmatmul.mubr.f32.gmra.mxu0 %v1453
    %v1928 = vpop.f32.mrf.mxu0
    %v1929 = vadd.f32 %v1411, %v1928
    %v1930 = vpop.f32.mrf.mxu0
    %1931 = vmatprep.mubr.f32.mxu0 0.0
    %1932 = vmatmul.mubr.f32.gmra.mxu0 %v1456
    %v1933 = vpop.f32.mrf.mxu0
    %v1934 = vadd.f32 %v1411, %v1933
    %v1935 = vpop.f32.mrf.mxu0
    %1936 = vmatprep.mubr.f32.mxu0 0.0
    %1937 = vmatmul.mubr.f32.gmra.mxu0 %v1459
    %v1938 = vpop.f32.mrf.mxu0
    %v1939 = vadd.f32 %v1411, %v1938
    %v1940 = vpop.f32.mrf.mxu0
    %1941 = vmatprep.mubr.f32.mxu0 0.0
    %1942 = vmatmul.mubr.f32.gmra.mxu0 %v1462
    %v1943 = vpop.f32.mrf.mxu0
    %v1944 = vadd.f32 %v1411, %v1943
    %v1945 = vpop.f32.mrf.mxu0
    %1946 = vmatprep.mubr.f32.mxu0 0.0
    %1947 = vmatmul.mubr.f32.gmra.mxu0 %v1465
    %v1948 = vpop.f32.mrf.mxu0
    %v1949 = vadd.f32 %v1411, %v1948
    %v1950 = vpop.f32.mrf.mxu0
    %1951 = vmatprep.mubr.f32.mxu0 0.0
    %1952 = vmatmul.mubr.f32.gmra.mxu0 %v1468
    %v1953 = vpop.f32.mrf.mxu0
    %v1954 = vadd.f32 %v1411, %v1953
    %v1955 = vpop.f32.mrf.mxu0
    %1956 = vmatprep.mubr.f32.mxu0 0.0
    %1957 = vmatmul.mubr.f32.gmra.mxu0 %v1471
    %v1958 = vpop.f32.mrf.mxu0
    %v1959 = vadd.f32 %v1411, %v1958
    %v1960 = vpop.f32.mrf.mxu0
    %1961 = vmatprep.mubr.f32.mxu0 0.0
    %1962 = vmatmul.mubr.f32.gmra.mxu0 %v1474
    %v1963 = vpop.f32.mrf.mxu0
    %v1964 = vadd.f32 %v1411, %v1963
    %v1965 = vpop.f32.mrf.mxu0
    %1966 = vmatprep.mubr.f32.mxu0 0.0
    %1967 = vmatmul.mubr.f32.gmra.mxu0 %v1477
    %v1968 = vpop.f32.mrf.mxu0
    %v1969 = vadd.f32 %v1411, %v1968
    %v1970 = vpop.f32.mrf.mxu0
    %1971 = vmatprep.mubr.f32.mxu0 0.0
    %1972 = vmatmul.mubr.f32.gmra.mxu0 %v1480
    %v1973 = vpop.f32.mrf.mxu0
    %v1974 = vadd.f32 %v1411, %v1973
    %v1975 = vpop.f32.mrf.mxu0
    %1976 = vmatprep.mubr.f32.mxu0 0.0
    %1977 = vmatmul.mubr.f32.gmra.mxu0 %v1483
    %v1978 = vpop.f32.mrf.mxu0
    %v1979 = vadd.f32 %v1411, %v1978
    %v1980 = vpop.f32.mrf.mxu0
    %1981 = vmatprep.mubr.f32.mxu0 0.0
    %1982 = vmatmul.mubr.f32.gmra.mxu0 %v1486
    %v1983 = vpop.f32.mrf.mxu0
    %v1984 = vadd.f32 %v1411, %v1983
    %v1985 = vpop.f32.mrf.mxu0
    %1986 = vmatprep.mubr.f32.mxu0 0.0
    %1987 = vmatmul.mubr.f32.gmra.mxu0 %v1489
    %v1988 = vpop.f32.mrf.mxu0
    %v1989 = vadd.f32 %v1411, %v1988
    %v1990 = vpop.f32.mrf.mxu0
    %1991 = vmatprep.mubr.f32.mxu0 0.0
    %1992 = vmatmul.mubr.f32.gmra.mxu0 %v1492
    %v1993 = vpop.f32.mrf.mxu0
    %v1994 = vadd.f32 %v1411, %v1993
    %v1995 = vpop.f32.mrf.mxu0
    %1996 = vmatprep.mubr.f32.mxu0 0.0
    %1997 = vmatmul.mubr.f32.gmra.mxu0 %v1495
    %v1998 = vpop.f32.mrf.mxu0
    %v1999 = vadd.f32 %v1411, %v1998
    %v2000 = vpop.f32.mrf.mxu0
    %2001 = vmatprep.mubr.f32.mxu0 0.0
    %2002 = vmatmul.mubr.f32.gmra.mxu0 %v1498
    %v2003 = vpop.f32.mrf.mxu0
    %v2004 = vadd.f32 %v1411, %v2003
    %v2005 = vpop.f32.mrf.mxu0
    %2006 = vmatprep.mubr.f32.mxu0 0.0
    %2007 = vmatmul.mubr.f32.gmra.mxu0 %v1501
    %v2008 = vpop.f32.mrf.mxu0
    %v2009 = vadd.f32 %v1411, %v2008
    %v2010 = vpop.f32.mrf.mxu0
    %2011 = vmatprep.mubr.f32.mxu0 0.0
    %2012 = vmatmul.mubr.f32.gmra.mxu0 %v1504
    %v2013 = vpop.f32.mrf.mxu0
    %v2014 = vadd.f32 %v1411, %v2013
    %v2015 = vpop.f32.mrf.mxu0
    %2016 = vmatprep.mubr.f32.mxu0 0.0
    %2017 = vmatmul.mubr.f32.gmra.mxu0 %v1507
    %v2018 = vpop.f32.mrf.mxu0
    %v2019 = vadd.f32 %v1411, %v2018
    %v2020 = vpop.f32.mrf.mxu0
    %2021 = vmatprep.mubr.f32.mxu0 0.0
    %2022 = vmatmul.mubr.f32.gmra.mxu0 %v1510
    %v2023 = vpop.f32.mrf.mxu0
    %v2024 = vadd.f32 %v1411, %v2023
    %v2025 = vpop.f32.mrf.mxu0
    %2026 = vmatprep.mubr.f32.mxu0 0.0
    %2027 = vmatmul.mubr.f32.gmra.mxu0 %v1513
    %v2028 = vpop.f32.mrf.mxu0
    %v2029 = vadd.f32 %v1411, %v2028
    %v2030 = vpop.f32.mrf.mxu0
    %2031 = vmatprep.mubr.f32.mxu0 0.0
    %2032 = vmatmul.mubr.f32.gmra.mxu0 %v1516
    %v2033 = vpop.f32.mrf.mxu0
    %v2034 = vadd.f32 %v1411, %v2033
    %v2035 = vpop.f32.mrf.mxu0
    %2036 = vmatprep.mubr.f32.mxu0 0.0
    %2037 = vmatmul.mubr.f32.gmra.mxu0 %v1519
    %v2038 = vpop.f32.mrf.mxu0
    %v2039 = vadd.f32 %v1411, %v2038
    %v2040 = vpop.f32.mrf.mxu0
    %2041 = vmatprep.mubr.f32.mxu0 0.0
    %2042 = vmatmul.mubr.f32.gmra.mxu0 %v1522
    %v2043 = vpop.f32.mrf.mxu0
    %v2044 = vadd.f32 %v1411, %v2043
    %v2045 = vpop.f32.mrf.mxu0
    %2046 = vmatprep.mubr.f32.mxu0 0.0
    %2047 = vmatmul.mubr.f32.gmra.mxu0 %v1525
    %v2048 = vpop.f32.mrf.mxu0
    %v2049 = vadd.f32 %v1411, %v2048
    %v2050 = vpop.f32.mrf.mxu0
    %2051 = vmatprep.mubr.f32.mxu0 0.0
    %2052 = vmatmul.mubr.f32.gmra.mxu0 %v1528
    %v2053 = vpop.f32.mrf.mxu0
    %v2054 = vadd.f32 %v1411, %v2053
    %v2055 = vpop.f32.mrf.mxu0
    %2056 = vmatprep.mubr.f32.mxu0 0.0
    %2057 = vmatmul.mubr.f32.gmra.mxu0 %v1531
    %v2058 = vpop.f32.mrf.mxu0
    %v2059 = vadd.f32 %v1411, %v2058
    %v2060 = vpop.f32.mrf.mxu0
    %2061 = vmatprep.mubr.f32.mxu0 0.0
    %2062 = vmatmul.mubr.f32.gmra.mxu0 %v1534
    %v2063 = vpop.f32.mrf.mxu0
    %v2064 = vadd.f32 %v1411, %v2063
    %v2065 = vpop.f32.mrf.mxu0
    %2066 = vmatprep.mubr.f32.mxu0 0.0
    %2067 = vmatmul.mubr.f32.gmra.mxu0 %v1537
    %v2068 = vpop.f32.mrf.mxu0
    %v2069 = vadd.f32 %v1411, %v2068
    %v2070 = vpop.f32.mrf.mxu0
    %2071 = vmatprep.mubr.f32.mxu0 0.0
    %2072 = vmatmul.mubr.f32.gmra.mxu0 %v1540
    %v2073 = vpop.f32.mrf.mxu0
    %v2074 = vadd.f32 %v1411, %v2073
    %v2075 = vpop.f32.mrf.mxu0
    %2076 = vmatprep.mubr.f32.mxu0 0.0
    %2077 = vmatmul.mubr.f32.gmra.mxu0 %v1543
    %v2078 = vpop.f32.mrf.mxu0
    %v2079 = vadd.f32 %v1411, %v2078
    %v2080 = vpop.f32.mrf.mxu0
    %2081 = vmatprep.mubr.f32.mxu0 0.0
    %2082 = vmatmul.mubr.f32.gmra.mxu0 %v1546
    %v2083 = vpop.f32.mrf.mxu0
    %v2084 = vadd.f32 %v1411, %v2083
    %v2085 = vpop.f32.mrf.mxu0
    %2086 = vmatprep.mubr.f32.mxu0 0.0
    %2087 = vmatmul.mubr.f32.gmra.mxu0 %v1549
    %v2088 = vpop.f32.mrf.mxu0
    %v2089 = vadd.f32 %v1411, %v2088
    %v2090 = vpop.f32.mrf.mxu0
    %2091 = vmatprep.mubr.f32.mxu0 0.0
    %2092 = vmatmul.mubr.f32.gmra.mxu0 %v1552
    %v2093 = vpop.f32.mrf.mxu0
    %v2094 = vadd.f32 %v1411, %v2093
    %v2095 = vpop.f32.mrf.mxu0
    %2096 = vmatprep.mubr.f32.mxu0 0.0
    %2097 = vmatmul.mubr.f32.gmra.mxu0 %v1555
    %v2098 = vpop.f32.mrf.mxu0
    %v2099 = vadd.f32 %v1411, %v2098
    %v2100 = vpop.f32.mrf.mxu0
    %2101 = vmatprep.mubr.f32.mxu0 0.0
    %2102 = vmatmul.mubr.f32.gmra.mxu0 %v1558
    %v2103 = vpop.f32.mrf.mxu0
    %v2104 = vadd.f32 %v1411, %v2103
    %v2105 = vpop.f32.mrf.mxu0
    %2106 = vmatprep.mubr.f32.mxu0 0.0
    %2107 = vmatmul.mubr.f32.gmra.mxu0 %v1561
    %v2108 = vpop.f32.mrf.mxu0
    %v2109 = vadd.f32 %v1411, %v2108
    %v2110 = vpop.f32.mrf.mxu0
    %2111 = vmatprep.mubr.f32.mxu0 0.0
    %2112 = vmatmul.mubr.f32.gmra.mxu0 %v1564
    %v2113 = vpop.f32.mrf.mxu0
    %v2114 = vadd.f32 %v1411, %v2113
    %v2115 = vpop.f32.mrf.mxu0
    %2116 = vmatprep.mubr.f32.mxu0 0.0
    %2117 = vmatmul.mubr.f32.gmra.mxu0 %v1567
    %v2118 = vpop.f32.mrf.mxu0
    %v2119 = vadd.f32 %v1411, %v2118
    %v2120 = vpop.f32.mrf.mxu0
    %2121 = vmatprep.mubr.f32.mxu0 0.0
    %2122 = vmatmul.mubr.f32.gmra.mxu0 %v1570
    %v2123 = vpop.f32.mrf.mxu0
    %v2124 = vadd.f32 %v1411, %v2123
    %v2125 = vpop.f32.mrf.mxu0
    %2126 = vmatprep.mubr.f32.mxu0 0.0
    %2127 = vmatmul.mubr.f32.gmra.mxu0 %v1573
    %v2128 = vpop.f32.mrf.mxu0
    %v2129 = vadd.f32 %v1411, %v2128
    %v2130 = vpop.f32.mrf.mxu0
    %2131 = vmatprep.mubr.f32.mxu0 0.0
    %2132 = vmatmul.mubr.f32.gmra.mxu0 %v1576
    %v2133 = vpop.f32.mrf.mxu0
    %v2134 = vadd.f32 %v1411, %v2133
    %v2135 = vpop.f32.mrf.mxu0
    %2136 = vmatprep.mubr.f32.mxu0 0.0
    %2137 = vmatmul.mubr.f32.gmra.mxu0 %v1579
    %v2138 = vpop.f32.mrf.mxu0
    %v2139 = vadd.f32 %v1411, %v2138
    %v2140 = vpop.f32.mrf.mxu0
    %2141 = vmatprep.mubr.f32.mxu0 0.0
    %2142 = vmatmul.mubr.f32.gmra.mxu0 %v1582
    %v2143 = vpop.f32.mrf.mxu0
    %v2144 = vadd.f32 %v1411, %v2143
    %v2145 = vpop.f32.mrf.mxu0
    %2146 = vmatprep.mubr.f32.mxu0 0.0
    %2147 = vmatmul.mubr.f32.gmra.mxu0 %v1585
    %v2148 = vpop.f32.mrf.mxu0
    %v2149 = vadd.f32 %v1411, %v2148
    %v2150 = vpop.f32.mrf.mxu0
    %2151 = vmatprep.mubr.f32.mxu0 0.0
    %2152 = vmatmul.mubr.f32.gmra.mxu0 %v1588
    %v2153 = vpop.f32.mrf.mxu0
    %v2154 = vadd.f32 %v1411, %v2153
    %v2155 = vpop.f32.mrf.mxu0
    %2156 = vmatprep.mubr.f32.mxu0 0.0
    %2157 = vmatmul.mubr.f32.gmra.mxu0 %v1591
    %v2158 = vpop.f32.mrf.mxu0
    %v2159 = vadd.f32 %v1411, %v2158
    %v2160 = vpop.f32.mrf.mxu0
    %2161 = vmatprep.mubr.f32.mxu0 0.0
    %2162 = vmatmul.mubr.f32.gmra.mxu0 %v1594
    %v2163 = vpop.f32.mrf.mxu0
    %v2164 = vadd.f32 %v1411, %v2163
    %v2165 = vpop.f32.mrf.mxu0
    %2166 = vmatprep.mubr.f32.mxu0 0.0
    %2167 = vmatmul.mubr.f32.gmra.mxu0 %v1597
    %v2168 = vpop.f32.mrf.mxu0
    %v2169 = vadd.f32 %v1411, %v2168
    %v2170 = vpop.f32.mrf.mxu0
    %2171 = vmatprep.mubr.f32.mxu0 0.0
    %2172 = vmatmul.mubr.f32.gmra.mxu0 %v1600
    %v2173 = vpop.f32.mrf.mxu0
    %v2174 = vadd.f32 %v1411, %v2173
    %v2175 = vpop.f32.mrf.mxu0
    %2176 = vmatprep.mubr.f32.mxu0 0.0
    %2177 = vmatmul.mubr.f32.gmra.mxu0 %v1603
    %v2178 = vpop.f32.mrf.mxu0
    %v2179 = vadd.f32 %v1411, %v2178
    %v2180 = vpop.f32.mrf.mxu0
    %2181 = vmatprep.mubr.f32.mxu0 0.0
    %2182 = vmatmul.mubr.f32.gmra.mxu0 %v1606
    %v2183 = vpop.f32.mrf.mxu0
    %v2184 = vadd.f32 %v1411, %v2183
    %v2185 = vpop.f32.mrf.mxu0
    %2186 = vmatprep.mubr.f32.mxu0 0.0
    %2187 = vmatmul.mubr.f32.gmra.mxu0 %v1609
    %v2188 = vpop.f32.mrf.mxu0
    %v2189 = vadd.f32 %v1411, %v2188
    %v2190 = vpop.f32.mrf.mxu0
    %2191 = vmatprep.mubr.f32.mxu0 0.0
    %2192 = vmatmul.mubr.f32.gmra.mxu0 %v1612
    %v2193 = vpop.f32.mrf.mxu0
    %v2194 = vadd.f32 %v1411, %v2193
    %v2195 = vpop.f32.mrf.mxu0
    %2196 = vmatprep.mubr.f32.mxu0 0.0
    %2197 = vmatmul.mubr.f32.gmra.mxu0 %v1615
    %v2198 = vpop.f32.mrf.mxu0
    %v2199 = vadd.f32 %v1411, %v2198
    %v2200 = vpop.f32.mrf.mxu0
    %2201 = vmatprep.mubr.f32.mxu0 0.0
    %2202 = vmatmul.mubr.f32.gmra.mxu0 %v1618
    %v2203 = vpop.f32.mrf.mxu0
    %v2204 = vadd.f32 %v1411, %v2203
    %v2205 = vpop.f32.mrf.mxu0
    %2206 = vmatprep.mubr.f32.mxu0 0.0
    %2207 = vmatmul.mubr.f32.gmra.mxu0 %v1621
    %v2208 = vpop.f32.mrf.mxu0
    %v2209 = vadd.f32 %v1411, %v2208
    %v2210 = vpop.f32.mrf.mxu0
    %2211 = vmatprep.mubr.f32.mxu0 0.0
    %2212 = vmatmul.mubr.f32.gmra.mxu0 %v1624
    %v2213 = vpop.f32.mrf.mxu0
    %v2214 = vadd.f32 %v1411, %v2213
    %v2215 = vpop.f32.mrf.mxu0
    %2216 = vmatprep.mubr.f32.mxu0 0.0
    %2217 = vmatmul.mubr.f32.gmra.mxu0 %v1627
    %v2218 = vpop.f32.mrf.mxu0
    %v2219 = vadd.f32 %v1411, %v2218
    %v2220 = vpop.f32.mrf.mxu0
    %2221 = vmatprep.mubr.f32.mxu0 0.0
    %2222 = vmatmul.mubr.f32.gmra.mxu0 %v1630
    %v2223 = vpop.f32.mrf.mxu0
    %v2224 = vadd.f32 %v1411, %v2223
    %v2225 = vpop.f32.mrf.mxu0
    %2226 = vmatprep.mubr.f32.mxu0 0.0
    %2227 = vmatmul.mubr.f32.gmra.mxu0 %v1633
    %v2228 = vpop.f32.mrf.mxu0
    %v2229 = vadd.f32 %v1411, %v2228
    %v2230 = vpop.f32.mrf.mxu0
    %2231 = vmatprep.mubr.f32.mxu0 0.0
    %2232 = vmatmul.mubr.f32.gmra.mxu0 %v1636
    %v2233 = vpop.f32.mrf.mxu0
    %v2234 = vadd.f32 %v1411, %v2233
    %v2235 = vpop.f32.mrf.mxu0
    %2236 = vmatprep.mubr.f32.mxu0 0.0
    %2237 = vmatmul.mubr.f32.gmra.mxu0 %v1639
    %v2238 = vpop.f32.mrf.mxu0
    %v2239 = vadd.f32 %v1411, %v2238
    %v2240 = vpop.f32.mrf.mxu0
    %2241 = vmatprep.mubr.f32.mxu0 0.0
    %2242 = vmatmul.mubr.f32.gmra.mxu0 %v1642
    %v2243 = vpop.f32.mrf.mxu0
    %v2244 = vadd.f32 %v1411, %v2243
    %v2245 = vpop.f32.mrf.mxu0
    %2246 = vmatprep.mubr.f32.mxu0 0.0
    %2247 = vmatmul.mubr.f32.gmra.mxu0 %v1645
    %v2248 = vpop.f32.mrf.mxu0
    %v2249 = vadd.f32 %v1411, %v2248
    %v2250 = vpop.f32.mrf.mxu0
    %2251 = vmatprep.mubr.f32.mxu0 0.0
    %2252 = vmatmul.mubr.f32.gmra.mxu0 %v1648
    %v2253 = vpop.f32.mrf.mxu0
    %v2254 = vadd.f32 %v1411, %v2253
    %v2255 = vpop.f32.mrf.mxu0
    %2256 = vmatprep.mubr.f32.mxu0 0.0
    %2257 = vmatmul.mubr.f32.gmra.mxu0 %v1651
    %v2258 = vpop.f32.mrf.mxu0
    %v2259 = vadd.f32 %v1411, %v2258
    %v2260 = vpop.f32.mrf.mxu0
    %2261 = vmatprep.mubr.f32.mxu0 0.0
    %2262 = vmatmul.mubr.f32.gmra.mxu0 %v1654
    %v2263 = vpop.f32.mrf.mxu0
    %v2264 = vadd.f32 %v1411, %v2263
    %v2265 = vpop.f32.mrf.mxu0
    %2266 = vmatprep.mubr.f32.mxu0 0.0
    %2267 = vmatmul.mubr.f32.gmra.mxu0 %v1657
    %v2268 = vpop.f32.mrf.mxu0
    %v2269 = vadd.f32 %v1411, %v2268
    %v2270 = vpop.f32.mrf.mxu0
    %2271 = vmatprep.mubr.f32.mxu0 0.0
    %2272 = vmatmul.mubr.f32.gmra.mxu0 %v1660
    %v2273 = vpop.f32.mrf.mxu0
    %v2274 = vadd.f32 %v1411, %v2273
    %v2275 = vpop.f32.mrf.mxu0
    %2276 = vmatprep.mubr.f32.mxu0 0.0
    %2277 = vmatmul.mubr.f32.gmra.mxu0 %v1663
    %v2278 = vpop.f32.mrf.mxu0
    %v2279 = vadd.f32 %v1411, %v2278
    %v2280 = vpop.f32.mrf.mxu0
    %2281 = vmatprep.mubr.f32.mxu0 0.0
    %2282 = vmatmul.mubr.f32.gmra.mxu0 %v1666
    %v2283 = vpop.f32.mrf.mxu0
    %v2284 = vadd.f32 %v1411, %v2283
    %v2285 = vpop.f32.mrf.mxu0
    %2286 = vmatprep.mubr.f32.mxu0 0.0
    %2287 = vmatmul.mubr.f32.gmra.mxu0 %v1669
    %v2288 = vpop.f32.mrf.mxu0
    %v2289 = vadd.f32 %v1411, %v2288
    %v2290 = vpop.f32.mrf.mxu0
    %2291 = vmatprep.mubr.f32.mxu0 0.0
    %2292 = vmatmul.mubr.f32.gmra.mxu0 %v1672
    %v2293 = vpop.f32.mrf.mxu0
    %v2294 = vadd.f32 %v1411, %v2293
    %v2295 = vpop.f32.mrf.mxu0
    %2296 = vmatprep.mubr.f32.mxu0 0.0
    %2297 = vmatmul.mubr.f32.gmra.mxu0 %v1675
    %v2298 = vpop.f32.mrf.mxu0
    %v2299 = vadd.f32 %v1411, %v2298
    %v2300 = vpop.f32.mrf.mxu0
    %2301 = vmatprep.mubr.f32.mxu0 0.0
    %2302 = vmatmul.mubr.f32.gmra.mxu0 %v1678
    %v2303 = vpop.f32.mrf.mxu0
    %v2304 = vadd.f32 %v1411, %v2303
    %v2305 = vpop.f32.mrf.mxu0
    %2306 = vmatprep.mubr.f32.mxu0 0.0
    %2307 = vmatmul.mubr.f32.gmra.mxu0 %v1681
    %v2308 = vpop.f32.mrf.mxu0
    %v2309 = vadd.f32 %v1411, %v2308
    %v2310 = vpop.f32.mrf.mxu0
    %2311 = vmatprep.mubr.f32.mxu0 0.0
    %2312 = vmatmul.mubr.f32.gmra.mxu0 %v1684
    %v2313 = vpop.f32.mrf.mxu0
    %v2314 = vadd.f32 %v1411, %v2313
    %v2315 = vpop.f32.mrf.mxu0
    %2316 = vmatprep.mubr.f32.mxu0 0.0
    %2317 = vmatmul.mubr.f32.gmra.mxu0 %v1687
    %v2318 = vpop.f32.mrf.mxu0
    %v2319 = vadd.f32 %v1411, %v2318
    %v2320 = vpop.f32.mrf.mxu0
    %2321 = vmatprep.mubr.f32.mxu0 0.0
    %2322 = vmatmul.mubr.f32.gmra.mxu0 %v1690
    %v2323 = vpop.f32.mrf.mxu0
    %v2324 = vadd.f32 %v1411, %v2323
    %v2325 = vpop.f32.mrf.mxu0
    %2326 = vmatprep.mubr.f32.mxu0 0.0
    %2327 = vmatmul.mubr.f32.gmra.mxu0 %v1693
    %v2328 = vpop.f32.mrf.mxu0
    %v2329 = vadd.f32 %v1411, %v2328
    %v2330 = vpop.f32.mrf.mxu0
    %2331 = vmatprep.mubr.f32.mxu0 0.0
    %2332 = vmatmul.mubr.f32.gmra.mxu0 %v1696
    %v2333 = vpop.f32.mrf.mxu0
    %v2334 = vadd.f32 %v1411, %v2333
    %v2335 = vpop.f32.mrf.mxu0
    %2336 = vmatprep.mubr.f32.mxu0 0.0
    %2337 = vmatmul.mubr.f32.gmra.mxu0 %v1699
    %v2338 = vpop.f32.mrf.mxu0
    %v2339 = vadd.f32 %v1411, %v2338
    %v2340 = vpop.f32.mrf.mxu0
    %2341 = vmatprep.mubr.f32.mxu0 0.0
    %2342 = vmatmul.mubr.f32.gmra.mxu0 %v1702
    %v2343 = vpop.f32.mrf.mxu0
    %v2344 = vadd.f32 %v1411, %v2343
    %v2345 = vpop.f32.mrf.mxu0
    %2346 = vmatprep.mubr.f32.mxu0 0.0
    %2347 = vmatmul.mubr.f32.gmra.mxu0 %v1705
    %v2348 = vpop.f32.mrf.mxu0
    %v2349 = vadd.f32 %v1411, %v2348
    %v2350 = vpop.f32.mrf.mxu0
    %2351 = vmatprep.mubr.f32.mxu0 0.0
    %2352 = vmatmul.mubr.f32.gmra.mxu0 %v1708
    %v2353 = vpop.f32.mrf.mxu0
    %v2354 = vadd.f32 %v1411, %v2353
    %v2355 = vpop.f32.mrf.mxu0
    %2356 = vmatprep.mubr.f32.mxu0 0.0
    %2357 = vmatmul.mubr.f32.gmra.mxu0 %v1711
    %v2358 = vpop.f32.mrf.mxu0
    %v2359 = vadd.f32 %v1411, %v2358
    %v2360 = vpop.f32.mrf.mxu0
    %2361 = vmatprep.mubr.f32.mxu0 0.0
    %2362 = vmatmul.mubr.f32.gmra.mxu0 %v1714
    %v2363 = vpop.f32.mrf.mxu0
    %v2364 = vadd.f32 %v1411, %v2363
    %v2365 = vpop.f32.mrf.mxu0
    %2366 = vmatprep.mubr.f32.mxu0 0.0
    %2367 = vmatmul.mubr.f32.gmra.mxu0 %v1717
    %v2368 = vpop.f32.mrf.mxu0
    %v2369 = vadd.f32 %v1411, %v2368
    %v2370 = vpop.f32.mrf.mxu0
    %2371 = vmatprep.mubr.f32.mxu0 0.0
    %2372 = vmatmul.mubr.f32.gmra.mxu0 %v1720
    %v2373 = vpop.f32.mrf.mxu0
    %v2374 = vadd.f32 %v1411, %v2373
    %v2375 = vpop.f32.mrf.mxu0
    %2376 = vmatprep.mubr.f32.mxu0 0.0
    %2377 = vmatmul.mubr.f32.gmra.mxu0 %v1723
    %v2378 = vpop.f32.mrf.mxu0
    %v2379 = vadd.f32 %v1411, %v2378
    %v2380 = vpop.f32.mrf.mxu0
    %2381 = vmatprep.mubr.f32.mxu0 0.0
    %2382 = vmatmul.mubr.f32.gmra.mxu0 %v1726
    %v2383 = vpop.f32.mrf.mxu0
    %v2384 = vadd.f32 %v1411, %v2383
    %v2385 = vpop.f32.mrf.mxu0
    %2386 = vmatprep.mubr.f32.mxu0 0.0
    %2387 = vmatmul.mubr.f32.gmra.mxu0 %v1729
    %v2388 = vpop.f32.mrf.mxu0
    %v2389 = vadd.f32 %v1411, %v2388
    %v2390 = vpop.f32.mrf.mxu0
    %2391 = vmatprep.mubr.f32.mxu0 0.0
    %2392 = vmatmul.mubr.f32.gmra.mxu0 %v1732
    %v2393 = vpop.f32.mrf.mxu0
    %v2394 = vadd.f32 %v1411, %v2393
    %v2395 = vpop.f32.mrf.mxu0
    %2396 = vmatprep.mubr.f32.mxu0 0.0
    %2397 = vmatmul.mubr.f32.gmra.mxu0 %v1735
    %v2398 = vpop.f32.mrf.mxu0
    %v2399 = vadd.f32 %v1411, %v2398
    %v2400 = vpop.f32.mrf.mxu0
    %2401 = vmatprep.mubr.f32.mxu0 0.0
    %2402 = vmatmul.mubr.f32.gmra.mxu0 %v1738
    %v2403 = vpop.f32.mrf.mxu0
    %v2404 = vadd.f32 %v1411, %v2403
    %v2405 = vpop.f32.mrf.mxu0
    %2406 = vmatprep.mubr.f32.mxu0 0.0
    %2407 = vmatmul.mubr.f32.gmra.mxu0 %v1741
    %v2408 = vpop.f32.mrf.mxu0
    %v2409 = vadd.f32 %v1411, %v2408
    %v2410 = vpop.f32.mrf.mxu0
    %2411 = vmatprep.mubr.f32.mxu0 0.0
    %2412 = vmatmul.mubr.f32.gmra.mxu0 %v1744
    %v2413 = vpop.f32.mrf.mxu0
    %v2414 = vadd.f32 %v1411, %v2413
    %v2415 = vpop.f32.mrf.mxu0
    %2416 = vmatprep.mubr.f32.mxu0 0.0
    %2417 = vmatmul.mubr.f32.gmra.mxu0 %v1747
    %v2418 = vpop.f32.mrf.mxu0
    %v2419 = vadd.f32 %v1411, %v2418
    %v2420 = vpop.f32.mrf.mxu0
    %2421 = vmatprep.mubr.f32.mxu0 0.0
    %2422 = vmatmul.mubr.f32.gmra.mxu0 %v1750
    %v2423 = vpop.f32.mrf.mxu0
    %v2424 = vadd.f32 %v1411, %v2423
    %v2425 = vpop.f32.mrf.mxu0
    %2426 = vmatprep.mubr.f32.mxu0 0.0
    %2427 = vmatmul.mubr.f32.gmra.mxu0 %v1753
    %v2428 = vpop.f32.mrf.mxu0
    %v2429 = vadd.f32 %v1411, %v2428
    %v2430 = vpop.f32.mrf.mxu0
    %2431 = vmatprep.mubr.f32.mxu0 0.0
    %2432 = vmatmul.mubr.f32.gmra.mxu0 %v1756
    %v2433 = vpop.f32.mrf.mxu0
    %v2434 = vadd.f32 %v1411, %v2433
    %v2435 = vpop.f32.mrf.mxu0
    %2436 = vmatprep.mubr.f32.mxu0 0.0
    %2437 = vmatmul.mubr.f32.gmra.mxu0 %v1759
    %v2438 = vpop.f32.mrf.mxu0
    %v2439 = vadd.f32 %v1411, %v2438
    %v2440 = vpop.f32.mrf.mxu0
    %2441 = vmatprep.mubr.f32.mxu0 0.0
    %2442 = vmatmul.mubr.f32.gmra.mxu0 %v1762
    %v2443 = vpop.f32.mrf.mxu0
    %v2444 = vadd.f32 %v1411, %v2443
    %v2445 = vpop.f32.mrf.mxu0
    %2446 = vmatprep.mubr.f32.mxu0 0.0
    %2447 = vmatmul.mubr.f32.gmra.mxu0 %v1765
    %v2448 = vpop.f32.mrf.mxu0
    %v2449 = vadd.f32 %v1411, %v2448
    %v2450 = vpop.f32.mrf.mxu0
    %2451 = vmatprep.mubr.f32.mxu0 0.0
    %2452 = vmatmul.mubr.f32.gmra.mxu0 %v1768
    %v2453 = vpop.f32.mrf.mxu0
    %v2454 = vadd.f32 %v1411, %v2453
    %v2455 = vpop.f32.mrf.mxu0
    %2456 = vmatprep.mubr.f32.mxu0 0.0
    %2457 = vmatmul.mubr.f32.gmra.mxu0 %v1771
    %v2458 = vpop.f32.mrf.mxu0
    %v2459 = vadd.f32 %v1411, %v2458
    %v2460 = vpop.f32.mrf.mxu0
    %2461 = vmatprep.mubr.f32.mxu0 0.0
    %2462 = vmatmul.mubr.f32.gmra.mxu0 %v1774
    %v2463 = vpop.f32.mrf.mxu0
    %v2464 = vadd.f32 %v1411, %v2463
    %v2465 = vpop.f32.mrf.mxu0
    %2466 = vmatprep.mubr.f32.mxu0 0.0
    %2467 = vmatmul.mubr.f32.gmra.mxu0 %v1777
    %v2468 = vpop.f32.mrf.mxu0
    %v2469 = vadd.f32 %v1411, %v2468
    %v2470 = vpop.f32.mrf.mxu0
    %2471 = vmatprep.mubr.f32.mxu0 0.0
    %2472 = vmatmul.mubr.f32.gmra.mxu0 %v1780
    %v2473 = vpop.f32.mrf.mxu0
    %v2474 = vadd.f32 %v1411, %v2473
    %v2475 = vpop.f32.mrf.mxu0
    %2476 = vmatprep.mubr.f32.mxu0 0.0
    %2477 = vmatmul.mubr.f32.gmra.mxu0 %v1783
    %v2478 = vpop.f32.mrf.mxu0
    %v2479 = vadd.f32 %v1411, %v2478
    %v2480 = vpop.f32.mrf.mxu0
    %2481 = vmatprep.mubr.f32.mxu0 0.0
    %2482 = vmatmul.mubr.f32.gmra.mxu0 %v1786
    %v2483 = vpop.f32.mrf.mxu0
    %v2484 = vadd.f32 %v1411, %v2483
    %v2485 = vpop.f32.mrf.mxu0
    %2486 = vmatprep.mubr.f32.mxu0 0.0
    %2487 = vmatmul.mubr.f32.gmra.mxu0 %v1789
    %v2488 = vpop.f32.mrf.mxu0
    %v2489 = vadd.f32 %v1411, %v2488
    %v2490 = vpop.f32.mrf.mxu0
    %2491 = vmatprep.mubr.f32.mxu0 0.0
    %2492 = vmatmul.mubr.f32.gmra.mxu0 %v1792
    %v2493 = vpop.f32.mrf.mxu0
    %v2494 = vadd.f32 %v1411, %v2493
    %v2495 = vpop.f32.mrf.mxu0
    %2496 = vmatprep.mubr.f32.mxu0 0.0
    %2497 = vmatmul.mubr.f32.gmra.mxu0 %v1795
    %v2498 = vpop.f32.mrf.mxu0
    %v2499 = vadd.f32 %v1411, %v2498
    %v2500 = vpop.f32.mrf.mxu0
    %2501 = vdwg.mxu0
    %v2502 = vmax.f32 %v1864, 0.0
    %v2503 = vmax.f32 %v1869, 0.0
    %v2504 = vmax.f32 %v1874, 0.0
    %v2505 = vmax.f32 %v1879, 0.0
    %v2506 = vmax.f32 %v1884, 0.0
    %v2507 = vmax.f32 %v1889, 0.0
    %v2508 = vmax.f32 %v1894, 0.0
    %v2509 = vmax.f32 %v1899, 0.0
    %v2510 = vmax.f32 %v1904, 0.0
    %v2511 = vmax.f32 %v1909, 0.0
    %v2512 = vmax.f32 %v1914, 0.0
    %v2513 = vmax.f32 %v1919, 0.0
    %v2514 = vmax.f32 %v1924, 0.0
    %v2515 = vmax.f32 %v1929, 0.0
    %v2516 = vmax.f32 %v1934, 0.0
    %v2517 = vmax.f32 %v1939, 0.0
    %v2518 = vmax.f32 %v1944, 0.0
    %v2519 = vmax.f32 %v1949, 0.0
    %v2520 = vmax.f32 %v1954, 0.0
    %v2521 = vmax.f32 %v1959, 0.0
    %v2522 = vmax.f32 %v1964, 0.0
    %v2523 = vmax.f32 %v1969, 0.0
    %v2524 = vmax.f32 %v1974, 0.0
    %v2525 = vmax.f32 %v1979, 0.0
    %v2526 = vmax.f32 %v1984, 0.0
    %v2527 = vmax.f32 %v1989, 0.0
    %v2528 = vmax.f32 %v1994, 0.0
    %v2529 = vmax.f32 %v1999, 0.0
    %v2530 = vmax.f32 %v2004, 0.0
    %v2531 = vmax.f32 %v2009, 0.0
    %v2532 = vmax.f32 %v2014, 0.0
    %v2533 = vmax.f32 %v2019, 0.0
    %v2534 = vmax.f32 %v2024, 0.0
    %v2535 = vmax.f32 %v2029, 0.0
    %v2536 = vmax.f32 %v2034, 0.0
    %v2537 = vmax.f32 %v2039, 0.0
    %v2538 = vmax.f32 %v2044, 0.0
    %v2539 = vmax.f32 %v2049, 0.0
    %v2540 = vmax.f32 %v2054, 0.0
    %v2541 = vmax.f32 %v2059, 0.0
    %v2542 = vmax.f32 %v2064, 0.0
    %v2543 = vmax.f32 %v2069, 0.0
    %v2544 = vmax.f32 %v2074, 0.0
    %v2545 = vmax.f32 %v2079, 0.0
    %v2546 = vmax.f32 %v2084, 0.0
    %v2547 = vmax.f32 %v2089, 0.0
    %v2548 = vmax.f32 %v2094, 0.0
    %v2549 = vmax.f32 %v2099, 0.0
    %v2550 = vmax.f32 %v2104, 0.0
    %v2551 = vmax.f32 %v2109, 0.0
    %v2552 = vmax.f32 %v2114, 0.0
    %v2553 = vmax.f32 %v2119, 0.0
    %v2554 = vmax.f32 %v2124, 0.0
    %v2555 = vmax.f32 %v2129, 0.0
    %v2556 = vmax.f32 %v2134, 0.0
    %v2557 = vmax.f32 %v2139, 0.0
    %v2558 = vmax.f32 %v2144, 0.0
    %v2559 = vmax.f32 %v2149, 0.0
    %v2560 = vmax.f32 %v2154, 0.0
    %v2561 = vmax.f32 %v2159, 0.0
    %v2562 = vmax.f32 %v2164, 0.0
    %v2563 = vmax.f32 %v2169, 0.0
    %v2564 = vmax.f32 %v2174, 0.0
    %v2565 = vmax.f32 %v2179, 0.0
    %v2566 = vmax.f32 %v2184, 0.0
    %v2567 = vmax.f32 %v2189, 0.0
    %v2568 = vmax.f32 %v2194, 0.0
    %v2569 = vmax.f32 %v2199, 0.0
    %v2570 = vmax.f32 %v2204, 0.0
    %v2571 = vmax.f32 %v2209, 0.0
    %v2572 = vmax.f32 %v2214, 0.0
    %v2573 = vmax.f32 %v2219, 0.0
    %v2574 = vmax.f32 %v2224, 0.0
    %v2575 = vmax.f32 %v2229, 0.0
    %v2576 = vmax.f32 %v2234, 0.0
    %v2577 = vmax.f32 %v2239, 0.0
    %v2578 = vmax.f32 %v2244, 0.0
    %v2579 = vmax.f32 %v2249, 0.0
    %v2580 = vmax.f32 %v2254, 0.0
    %v2581 = vmax.f32 %v2259, 0.0
    %v2582 = vmax.f32 %v2264, 0.0
    %v2583 = vmax.f32 %v2269, 0.0
    %v2584 = vmax.f32 %v2274, 0.0
    %v2585 = vmax.f32 %v2279, 0.0
    %v2586 = vmax.f32 %v2284, 0.0
    %v2587 = vmax.f32 %v2289, 0.0
    %v2588 = vmax.f32 %v2294, 0.0
    %v2589 = vmax.f32 %v2299, 0.0
    %v2590 = vmax.f32 %v2304, 0.0
    %v2591 = vmax.f32 %v2309, 0.0
    %v2592 = vmax.f32 %v2314, 0.0
    %v2593 = vmax.f32 %v2319, 0.0
    %v2594 = vmax.f32 %v2324, 0.0
    %v2595 = vmax.f32 %v2329, 0.0
    %v2596 = vmax.f32 %v2334, 0.0
    %v2597 = vmax.f32 %v2339, 0.0
    %v2598 = vmax.f32 %v2344, 0.0
    %v2599 = vmax.f32 %v2349, 0.0
    %v2600 = vmax.f32 %v2354, 0.0
    %v2601 = vmax.f32 %v2359, 0.0
    %v2602 = vmax.f32 %v2364, 0.0
    %v2603 = vmax.f32 %v2369, 0.0
    %v2604 = vmax.f32 %v2374, 0.0
    %v2605 = vmax.f32 %v2379, 0.0
    %v2606 = vmax.f32 %v2384, 0.0
    %v2607 = vmax.f32 %v2389, 0.0
    %v2608 = vmax.f32 %v2394, 0.0
    %v2609 = vmax.f32 %v2399, 0.0
    %v2610 = vmax.f32 %v2404, 0.0
    %v2611 = vmax.f32 %v2409, 0.0
    %v2612 = vmax.f32 %v2414, 0.0
    %v2613 = vmax.f32 %v2419, 0.0
    %v2614 = vmax.f32 %v2424, 0.0
    %v2615 = vmax.f32 %v2429, 0.0
    %v2616 = vmax.f32 %v2434, 0.0
    %v2617 = vmax.f32 %v2439, 0.0
    %v2618 = vmax.f32 %v2444, 0.0
    %v2619 = vmax.f32 %v2449, 0.0
    %v2620 = vmax.f32 %v2454, 0.0
    %v2621 = vmax.f32 %v2459, 0.0
    %v2622 = vmax.f32 %v2464, 0.0
    %v2623 = vmax.f32 %v2469, 0.0
    %v2624 = vmax.f32 %v2474, 0.0
    %v2625 = vmax.f32 %v2479, 0.0
    %v2626 = vmax.f32 %v2484, 0.0
    %v2627 = vmax.f32 %v2489, 0.0
    %v2628 = vmax.f32 %v2494, 0.0
    %v2629 = vmax.f32 %v2499, 0.0
    %v2630 = vld [vmem:[%s6] sm:$0xff]
    %v2631 = vld [vmem:[%s6 + $0x8] sm:$0xff]
    %v2632 = vld [vmem:[%s6 + $0x10] sm:$0xff]
    %v2633 = vld [vmem:[%s6 + $0x18] sm:$0xff]
    %v2634 = vld [vmem:[%s7] sm:$0x1]
    %v2636 = vlaneseq
    %v2637 = vshrl.u32 %v2636, 7
    %v2638 = vsub.s32 0, %v2637
    %v2639 = vrot.slane %v2634, %v2638
    %v2642 = vsel %vm184, %v2502, 0
    %v2645 = vsel %vm184, %v2503, 0
    %v2648 = vsel %vm184, %v2504, 0
    %v2651 = vsel %vm184, %v2505, 0
    %v2654 = vsel %vm184, %v2506, 0
    %v2657 = vsel %vm184, %v2507, 0
    %v2660 = vsel %vm184, %v2508, 0
    %v2663 = vsel %vm184, %v2509, 0
    %v2666 = vsel %vm184, %v2510, 0
    %v2669 = vsel %vm184, %v2511, 0
    %v2672 = vsel %vm184, %v2512, 0
    %v2675 = vsel %vm184, %v2513, 0
    %v2678 = vsel %vm184, %v2514, 0
    %v2681 = vsel %vm184, %v2515, 0
    %v2684 = vsel %vm184, %v2516, 0
    %v2687 = vsel %vm184, %v2517, 0
    %v2690 = vsel %vm184, %v2518, 0
    %v2693 = vsel %vm184, %v2519, 0
    %v2696 = vsel %vm184, %v2520, 0
    %v2699 = vsel %vm184, %v2521, 0
    %v2702 = vsel %vm184, %v2522, 0
    %v2705 = vsel %vm184, %v2523, 0
    %v2708 = vsel %vm184, %v2524, 0
    %v2711 = vsel %vm184, %v2525, 0
    %v2714 = vsel %vm184, %v2526, 0
    %v2717 = vsel %vm184, %v2527, 0
    %v2720 = vsel %vm184, %v2528, 0
    %v2723 = vsel %vm184, %v2529, 0
    %v2726 = vsel %vm184, %v2530, 0
    %v2729 = vsel %vm184, %v2531, 0
    %v2732 = vsel %vm184, %v2532, 0
    %v2735 = vsel %vm184, %v2533, 0
    %v2738 = vsel %vm184, %v2534, 0
    %v2741 = vsel %vm184, %v2535, 0
    %v2744 = vsel %vm184, %v2536, 0
    %v2747 = vsel %vm184, %v2537, 0
    %v2750 = vsel %vm184, %v2538, 0
    %v2753 = vsel %vm184, %v2539, 0
    %v2756 = vsel %vm184, %v2540, 0
    %v2759 = vsel %vm184, %v2541, 0
    %v2762 = vsel %vm184, %v2542, 0
    %v2765 = vsel %vm184, %v2543, 0
    %v2768 = vsel %vm184, %v2544, 0
    %v2771 = vsel %vm184, %v2545, 0
    %v2774 = vsel %vm184, %v2546, 0
    %v2777 = vsel %vm184, %v2547, 0
    %v2780 = vsel %vm184, %v2548, 0
    %v2783 = vsel %vm184, %v2549, 0
    %v2786 = vsel %vm184, %v2550, 0
    %v2789 = vsel %vm184, %v2551, 0
    %v2792 = vsel %vm184, %v2552, 0
    %v2795 = vsel %vm184, %v2553, 0
    %v2798 = vsel %vm184, %v2554, 0
    %v2801 = vsel %vm184, %v2555, 0
    %v2804 = vsel %vm184, %v2556, 0
    %v2807 = vsel %vm184, %v2557, 0
    %v2810 = vsel %vm184, %v2558, 0
    %v2813 = vsel %vm184, %v2559, 0
    %v2816 = vsel %vm184, %v2560, 0
    %v2819 = vsel %vm184, %v2561, 0
    %v2822 = vsel %vm184, %v2562, 0
    %v2825 = vsel %vm184, %v2563, 0
    %v2828 = vsel %vm184, %v2564, 0
    %v2831 = vsel %vm184, %v2565, 0
    %v2834 = vsel %vm184, %v2566, 0
    %v2837 = vsel %vm184, %v2567, 0
    %v2840 = vsel %vm184, %v2568, 0
    %v2843 = vsel %vm184, %v2569, 0
    %v2846 = vsel %vm184, %v2570, 0
    %v2849 = vsel %vm184, %v2571, 0
    %v2852 = vsel %vm184, %v2572, 0
    %v2855 = vsel %vm184, %v2573, 0
    %v2858 = vsel %vm184, %v2574, 0
    %v2861 = vsel %vm184, %v2575, 0
    %v2864 = vsel %vm184, %v2576, 0
    %v2867 = vsel %vm184, %v2577, 0
    %v2870 = vsel %vm184, %v2578, 0
    %v2873 = vsel %vm184, %v2579, 0
    %v2876 = vsel %vm184, %v2580, 0
    %v2879 = vsel %vm184, %v2581, 0
    %v2882 = vsel %vm184, %v2582, 0
    %v2885 = vsel %vm184, %v2583, 0
    %v2888 = vsel %vm184, %v2584, 0
    %v2891 = vsel %vm184, %v2585, 0
    %v2894 = vsel %vm184, %v2586, 0
    %v2897 = vsel %vm184, %v2587, 0
    %v2900 = vsel %vm184, %v2588, 0
    %v2903 = vsel %vm184, %v2589, 0
    %v2906 = vsel %vm184, %v2590, 0
    %v2909 = vsel %vm184, %v2591, 0
    %v2912 = vsel %vm184, %v2592, 0
    %v2915 = vsel %vm184, %v2593, 0
    %v2918 = vsel %vm184, %v2594, 0
    %v2921 = vsel %vm184, %v2595, 0
    %v2924 = vsel %vm184, %v2596, 0
    %v2927 = vsel %vm184, %v2597, 0
    %v2930 = vsel %vm184, %v2598, 0
    %v2933 = vsel %vm184, %v2599, 0
    %v2936 = vsel %vm184, %v2600, 0
    %v2939 = vsel %vm184, %v2601, 0
    %v2942 = vsel %vm184, %v2602, 0
    %v2945 = vsel %vm184, %v2603, 0
    %v2948 = vsel %vm184, %v2604, 0
    %v2951 = vsel %vm184, %v2605, 0
    %v2954 = vsel %vm184, %v2606, 0
    %v2957 = vsel %vm184, %v2607, 0
    %v2960 = vsel %vm184, %v2608, 0
    %v2963 = vsel %vm184, %v2609, 0
    %v2966 = vsel %vm184, %v2610, 0
    %v2969 = vsel %vm184, %v2611, 0
    %v2972 = vsel %vm184, %v2612, 0
    %v2975 = vsel %vm184, %v2613, 0
    %v2978 = vsel %vm184, %v2614, 0
    %v2981 = vsel %vm184, %v2615, 0
    %v2984 = vsel %vm184, %v2616, 0
    %v2987 = vsel %vm184, %v2617, 0
    %v2990 = vsel %vm184, %v2618, 0
    %v2993 = vsel %vm184, %v2619, 0
    %v2996 = vsel %vm184, %v2620, 0
    %v2999 = vsel %vm184, %v2621, 0
    %v3002 = vsel %vm184, %v2622, 0
    %v3005 = vsel %vm184, %v2623, 0
    %v3008 = vsel %vm184, %v2624, 0
    %v3011 = vsel %vm184, %v2625, 0
    %v3014 = vsel %vm184, %v2626, 0
    %v3017 = vsel %vm184, %v2627, 0
    %v3020 = vsel %vm184, %v2628, 0
    %v3023 = vsel %vm184, %v2629, 0
    %3025 = vmatprep.subr.mxu0 0.0
    %3026 = vmatpush1.msra.mxu0 0.0
    %3027 = vmatprep.subr.mxu0 0.0
    %3028 = vmatpush1.msra.mxu0 0.0
    %3029 = vmatprep.subr.mxu0 0.0
    %3030 = vmatpush1.msra.mxu0 0.0
    %3031 = vmatprep.subr.mxu0 0.0
    %3032 = vmatpush1.msra.mxu0 0.0
    %3033 = vmatprep.subr.mxu0 0.0
    %3034 = vmatpush1.msra.mxu0 0.0
    %3035 = vmatprep.subr.mxu0 0.0
    %3036 = vmatpush1.msra.mxu0 0.0
    %3037 = vmatprep.subr.mxu0 0.0
    %3038 = vmatpush1.msra.mxu0 0.0
    %3039 = vmatprep.subr.mxu0 0.0
    %3040 = vmatpush1.msra.mxu0 0.0
    %3041 = vmatprep.subr.mxu0 0.0
    %3042 = vmatpush1.msra.mxu0 0.0
    %3043 = vmatprep.subr.mxu0 0.0
    %3044 = vmatpush1.msra.mxu0 0.0
    %3045 = vmatprep.subr.mxu0 0.0
    %3046 = vmatpush1.msra.mxu0 0.0
    %3047 = vmatprep.subr.mxu0 0.0
    %3048 = vmatpush1.msra.mxu0 0.0
    %3049 = vmatprep.subr.mxu0 0.0
    %3050 = vmatpush1.msra.mxu0 %v2633
    %3051 = vmatprep.subr.mxu0 0.0
    %3052 = vmatpush1.msra.mxu0 %v2632
    %3053 = vmatprep.subr.mxu0 0.0
    %3054 = vmatpush1.msra.mxu0 %v2631
    %3055 = vmatprep.subr.mxu0 0.0
    %3056 = vmatpush1.msra.mxu0 %v2630
    %3057 = vmatprep.subr.mxu0 0.0
    %3058 = vmatpush2.msra.mxu0 0.0
    %3059 = vmatprep.subr.mxu0 0.0
    %3060 = vmatpush2.msra.mxu0 0.0
    %3061 = vmatprep.subr.mxu0 0.0
    %3062 = vmatpush2.msra.mxu0 0.0
    %3063 = vmatprep.subr.mxu0 0.0
    %3064 = vmatpush2.msra.mxu0 0.0
    %3065 = vmatprep.subr.mxu0 0.0
    %3066 = vmatpush2.msra.mxu0 0.0
    %3067 = vmatprep.subr.mxu0 0.0
    %3068 = vmatpush2.msra.mxu0 0.0
    %3069 = vmatprep.subr.mxu0 0.0
    %3070 = vmatpush2.msra.mxu0 0.0
    %3071 = vmatprep.subr.mxu0 0.0
    %3072 = vmatpush2.msra.mxu0 0.0
    %3073 = vmatprep.subr.mxu0 0.0
    %3074 = vmatpush2.msra.mxu0 0.0
    %3075 = vmatprep.subr.mxu0 0.0
    %3076 = vmatpush2.msra.mxu0 0.0
    %3077 = vmatprep.subr.mxu0 0.0
    %3078 = vmatpush2.msra.mxu0 0.0
    %3079 = vmatprep.subr.mxu0 0.0
    %3080 = vmatpush2.msra.mxu0 0.0
    %3081 = vmatprep.subr.mxu0 0.0
    %3082 = vmatpush2.msra.mxu0 0.0
    %3083 = vmatprep.subr.mxu0 0.0
    %3084 = vmatpush2.msra.mxu0 0.0
    %3085 = vmatprep.subr.mxu0 0.0
    %3086 = vmatpush2.msra.mxu0 0.0
    %3087 = vmatprep.subr.mxu0 0.0
    %3088 = vmatpush2.msra.mxu0 0.0
    %3089 = vmatprep.mubr.f32.mxu0 0.0
    %3090 = vmatmul.mubr.f32.gmra.mxu0 %v2642
    %v3091 = vpop.f32.mrf.mxu0
    %v3092 = vadd.f32 %v2639, %v3091
    %v3093 = vpop.f32.mrf.mxu0
    %3094 = vmatprep.mubr.f32.mxu0 0.0
    %3095 = vmatmul.mubr.f32.gmra.mxu0 %v2645
    %v3096 = vpop.f32.mrf.mxu0
    %v3097 = vadd.f32 %v2639, %v3096
    %v3098 = vpop.f32.mrf.mxu0
    %3099 = vmatprep.mubr.f32.mxu0 0.0
    %3100 = vmatmul.mubr.f32.gmra.mxu0 %v2648
    %v3101 = vpop.f32.mrf.mxu0
    %v3102 = vadd.f32 %v2639, %v3101
    %v3103 = vpop.f32.mrf.mxu0
    %3104 = vmatprep.mubr.f32.mxu0 0.0
    %3105 = vmatmul.mubr.f32.gmra.mxu0 %v2651
    %v3106 = vpop.f32.mrf.mxu0
    %v3107 = vadd.f32 %v2639, %v3106
    %v3108 = vpop.f32.mrf.mxu0
    %3109 = vmatprep.mubr.f32.mxu0 0.0
    %3110 = vmatmul.mubr.f32.gmra.mxu0 %v2654
    %v3111 = vpop.f32.mrf.mxu0
    %v3112 = vadd.f32 %v2639, %v3111
    %v3113 = vpop.f32.mrf.mxu0
    %3114 = vmatprep.mubr.f32.mxu0 0.0
    %3115 = vmatmul.mubr.f32.gmra.mxu0 %v2657
    %v3116 = vpop.f32.mrf.mxu0
    %v3117 = vadd.f32 %v2639, %v3116
    %v3118 = vpop.f32.mrf.mxu0
    %3119 = vmatprep.mubr.f32.mxu0 0.0
    %3120 = vmatmul.mubr.f32.gmra.mxu0 %v2660
    %v3121 = vpop.f32.mrf.mxu0
    %v3122 = vadd.f32 %v2639, %v3121
    %v3123 = vpop.f32.mrf.mxu0
    %3124 = vmatprep.mubr.f32.mxu0 0.0
    %3125 = vmatmul.mubr.f32.gmra.mxu0 %v2663
    %v3126 = vpop.f32.mrf.mxu0
    %v3127 = vadd.f32 %v2639, %v3126
    %v3128 = vpop.f32.mrf.mxu0
    %3129 = vmatprep.mubr.f32.mxu0 0.0
    %3130 = vmatmul.mubr.f32.gmra.mxu0 %v2666
    %v3131 = vpop.f32.mrf.mxu0
    %v3132 = vadd.f32 %v2639, %v3131
    %v3133 = vpop.f32.mrf.mxu0
    %3134 = vmatprep.mubr.f32.mxu0 0.0
    %3135 = vmatmul.mubr.f32.gmra.mxu0 %v2669
    %v3136 = vpop.f32.mrf.mxu0
    %v3137 = vadd.f32 %v2639, %v3136
    %v3138 = vpop.f32.mrf.mxu0
    %3139 = vmatprep.mubr.f32.mxu0 0.0
    %3140 = vmatmul.mubr.f32.gmra.mxu0 %v2672
    %v3141 = vpop.f32.mrf.mxu0
    %v3142 = vadd.f32 %v2639, %v3141
    %v3143 = vpop.f32.mrf.mxu0
    %3144 = vmatprep.mubr.f32.mxu0 0.0
    %3145 = vmatmul.mubr.f32.gmra.mxu0 %v2675
    %v3146 = vpop.f32.mrf.mxu0
    %v3147 = vadd.f32 %v2639, %v3146
    %v3148 = vpop.f32.mrf.mxu0
    %3149 = vmatprep.mubr.f32.mxu0 0.0
    %3150 = vmatmul.mubr.f32.gmra.mxu0 %v2678
    %v3151 = vpop.f32.mrf.mxu0
    %v3152 = vadd.f32 %v2639, %v3151
    %v3153 = vpop.f32.mrf.mxu0
    %3154 = vmatprep.mubr.f32.mxu0 0.0
    %3155 = vmatmul.mubr.f32.gmra.mxu0 %v2681
    %v3156 = vpop.f32.mrf.mxu0
    %v3157 = vadd.f32 %v2639, %v3156
    %v3158 = vpop.f32.mrf.mxu0
    %3159 = vmatprep.mubr.f32.mxu0 0.0
    %3160 = vmatmul.mubr.f32.gmra.mxu0 %v2684
    %v3161 = vpop.f32.mrf.mxu0
    %v3162 = vadd.f32 %v2639, %v3161
    %v3163 = vpop.f32.mrf.mxu0
    %3164 = vmatprep.mubr.f32.mxu0 0.0
    %3165 = vmatmul.mubr.f32.gmra.mxu0 %v2687
    %v3166 = vpop.f32.mrf.mxu0
    %v3167 = vadd.f32 %v2639, %v3166
    %v3168 = vpop.f32.mrf.mxu0
    %3169 = vmatprep.mubr.f32.mxu0 0.0
    %3170 = vmatmul.mubr.f32.gmra.mxu0 %v2690
    %v3171 = vpop.f32.mrf.mxu0
    %v3172 = vadd.f32 %v2639, %v3171
    %v3173 = vpop.f32.mrf.mxu0
    %3174 = vmatprep.mubr.f32.mxu0 0.0
    %3175 = vmatmul.mubr.f32.gmra.mxu0 %v2693
    %v3176 = vpop.f32.mrf.mxu0
    %v3177 = vadd.f32 %v2639, %v3176
    %v3178 = vpop.f32.mrf.mxu0
    %3179 = vmatprep.mubr.f32.mxu0 0.0
    %3180 = vmatmul.mubr.f32.gmra.mxu0 %v2696
    %v3181 = vpop.f32.mrf.mxu0
    %v3182 = vadd.f32 %v2639, %v3181
    %v3183 = vpop.f32.mrf.mxu0
    %3184 = vmatprep.mubr.f32.mxu0 0.0
    %3185 = vmatmul.mubr.f32.gmra.mxu0 %v2699
    %v3186 = vpop.f32.mrf.mxu0
    %v3187 = vadd.f32 %v2639, %v3186
    %v3188 = vpop.f32.mrf.mxu0
    %3189 = vmatprep.mubr.f32.mxu0 0.0
    %3190 = vmatmul.mubr.f32.gmra.mxu0 %v2702
    %v3191 = vpop.f32.mrf.mxu0
    %v3192 = vadd.f32 %v2639, %v3191
    %v3193 = vpop.f32.mrf.mxu0
    %3194 = vmatprep.mubr.f32.mxu0 0.0
    %3195 = vmatmul.mubr.f32.gmra.mxu0 %v2705
    %v3196 = vpop.f32.mrf.mxu0
    %v3197 = vadd.f32 %v2639, %v3196
    %v3198 = vpop.f32.mrf.mxu0
    %3199 = vmatprep.mubr.f32.mxu0 0.0
    %3200 = vmatmul.mubr.f32.gmra.mxu0 %v2708
    %v3201 = vpop.f32.mrf.mxu0
    %v3202 = vadd.f32 %v2639, %v3201
    %v3203 = vpop.f32.mrf.mxu0
    %3204 = vmatprep.mubr.f32.mxu0 0.0
    %3205 = vmatmul.mubr.f32.gmra.mxu0 %v2711
    %v3206 = vpop.f32.mrf.mxu0
    %v3207 = vadd.f32 %v2639, %v3206
    %v3208 = vpop.f32.mrf.mxu0
    %3209 = vmatprep.mubr.f32.mxu0 0.0
    %3210 = vmatmul.mubr.f32.gmra.mxu0 %v2714
    %v3211 = vpop.f32.mrf.mxu0
    %v3212 = vadd.f32 %v2639, %v3211
    %v3213 = vpop.f32.mrf.mxu0
    %3214 = vmatprep.mubr.f32.mxu0 0.0
    %3215 = vmatmul.mubr.f32.gmra.mxu0 %v2717
    %v3216 = vpop.f32.mrf.mxu0
    %v3217 = vadd.f32 %v2639, %v3216
    %v3218 = vpop.f32.mrf.mxu0
    %3219 = vmatprep.mubr.f32.mxu0 0.0
    %3220 = vmatmul.mubr.f32.gmra.mxu0 %v2720
    %v3221 = vpop.f32.mrf.mxu0
    %v3222 = vadd.f32 %v2639, %v3221
    %v3223 = vpop.f32.mrf.mxu0
    %3224 = vmatprep.mubr.f32.mxu0 0.0
    %3225 = vmatmul.mubr.f32.gmra.mxu0 %v2723
    %v3226 = vpop.f32.mrf.mxu0
    %v3227 = vadd.f32 %v2639, %v3226
    %v3228 = vpop.f32.mrf.mxu0
    %3229 = vmatprep.mubr.f32.mxu0 0.0
    %3230 = vmatmul.mubr.f32.gmra.mxu0 %v2726
    %v3231 = vpop.f32.mrf.mxu0
    %v3232 = vadd.f32 %v2639, %v3231
    %v3233 = vpop.f32.mrf.mxu0
    %3234 = vmatprep.mubr.f32.mxu0 0.0
    %3235 = vmatmul.mubr.f32.gmra.mxu0 %v2729
    %v3236 = vpop.f32.mrf.mxu0
    %v3237 = vadd.f32 %v2639, %v3236
    %v3238 = vpop.f32.mrf.mxu0
    %3239 = vmatprep.mubr.f32.mxu0 0.0
    %3240 = vmatmul.mubr.f32.gmra.mxu0 %v2732
    %v3241 = vpop.f32.mrf.mxu0
    %v3242 = vadd.f32 %v2639, %v3241
    %v3243 = vpop.f32.mrf.mxu0
    %3244 = vmatprep.mubr.f32.mxu0 0.0
    %3245 = vmatmul.mubr.f32.gmra.mxu0 %v2735
    %v3246 = vpop.f32.mrf.mxu0
    %v3247 = vadd.f32 %v2639, %v3246
    %v3248 = vpop.f32.mrf.mxu0
    %3249 = vmatprep.mubr.f32.mxu0 0.0
    %3250 = vmatmul.mubr.f32.gmra.mxu0 %v2738
    %v3251 = vpop.f32.mrf.mxu0
    %v3252 = vadd.f32 %v2639, %v3251
    %v3253 = vpop.f32.mrf.mxu0
    %3254 = vmatprep.mubr.f32.mxu0 0.0
    %3255 = vmatmul.mubr.f32.gmra.mxu0 %v2741
    %v3256 = vpop.f32.mrf.mxu0
    %v3257 = vadd.f32 %v2639, %v3256
    %v3258 = vpop.f32.mrf.mxu0
    %3259 = vmatprep.mubr.f32.mxu0 0.0
    %3260 = vmatmul.mubr.f32.gmra.mxu0 %v2744
    %v3261 = vpop.f32.mrf.mxu0
    %v3262 = vadd.f32 %v2639, %v3261
    %v3263 = vpop.f32.mrf.mxu0
    %3264 = vmatprep.mubr.f32.mxu0 0.0
    %3265 = vmatmul.mubr.f32.gmra.mxu0 %v2747
    %v3266 = vpop.f32.mrf.mxu0
    %v3267 = vadd.f32 %v2639, %v3266
    %v3268 = vpop.f32.mrf.mxu0
    %3269 = vmatprep.mubr.f32.mxu0 0.0
    %3270 = vmatmul.mubr.f32.gmra.mxu0 %v2750
    %v3271 = vpop.f32.mrf.mxu0
    %v3272 = vadd.f32 %v2639, %v3271
    %v3273 = vpop.f32.mrf.mxu0
    %3274 = vmatprep.mubr.f32.mxu0 0.0
    %3275 = vmatmul.mubr.f32.gmra.mxu0 %v2753
    %v3276 = vpop.f32.mrf.mxu0
    %v3277 = vadd.f32 %v2639, %v3276
    %v3278 = vpop.f32.mrf.mxu0
    %3279 = vmatprep.mubr.f32.mxu0 0.0
    %3280 = vmatmul.mubr.f32.gmra.mxu0 %v2756
    %v3281 = vpop.f32.mrf.mxu0
    %v3282 = vadd.f32 %v2639, %v3281
    %v3283 = vpop.f32.mrf.mxu0
    %3284 = vmatprep.mubr.f32.mxu0 0.0
    %3285 = vmatmul.mubr.f32.gmra.mxu0 %v2759
    %v3286 = vpop.f32.mrf.mxu0
    %v3287 = vadd.f32 %v2639, %v3286
    %v3288 = vpop.f32.mrf.mxu0
    %3289 = vmatprep.mubr.f32.mxu0 0.0
    %3290 = vmatmul.mubr.f32.gmra.mxu0 %v2762
    %v3291 = vpop.f32.mrf.mxu0
    %v3292 = vadd.f32 %v2639, %v3291
    %v3293 = vpop.f32.mrf.mxu0
    %3294 = vmatprep.mubr.f32.mxu0 0.0
    %3295 = vmatmul.mubr.f32.gmra.mxu0 %v2765
    %v3296 = vpop.f32.mrf.mxu0
    %v3297 = vadd.f32 %v2639, %v3296
    %v3298 = vpop.f32.mrf.mxu0
    %3299 = vmatprep.mubr.f32.mxu0 0.0
    %3300 = vmatmul.mubr.f32.gmra.mxu0 %v2768
    %v3301 = vpop.f32.mrf.mxu0
    %v3302 = vadd.f32 %v2639, %v3301
    %v3303 = vpop.f32.mrf.mxu0
    %3304 = vmatprep.mubr.f32.mxu0 0.0
    %3305 = vmatmul.mubr.f32.gmra.mxu0 %v2771
    %v3306 = vpop.f32.mrf.mxu0
    %v3307 = vadd.f32 %v2639, %v3306
    %v3308 = vpop.f32.mrf.mxu0
    %3309 = vmatprep.mubr.f32.mxu0 0.0
    %3310 = vmatmul.mubr.f32.gmra.mxu0 %v2774
    %v3311 = vpop.f32.mrf.mxu0
    %v3312 = vadd.f32 %v2639, %v3311
    %v3313 = vpop.f32.mrf.mxu0
    %3314 = vmatprep.mubr.f32.mxu0 0.0
    %3315 = vmatmul.mubr.f32.gmra.mxu0 %v2777
    %v3316 = vpop.f32.mrf.mxu0
    %v3317 = vadd.f32 %v2639, %v3316
    %v3318 = vpop.f32.mrf.mxu0
    %3319 = vmatprep.mubr.f32.mxu0 0.0
    %3320 = vmatmul.mubr.f32.gmra.mxu0 %v2780
    %v3321 = vpop.f32.mrf.mxu0
    %v3322 = vadd.f32 %v2639, %v3321
    %v3323 = vpop.f32.mrf.mxu0
    %3324 = vmatprep.mubr.f32.mxu0 0.0
    %3325 = vmatmul.mubr.f32.gmra.mxu0 %v2783
    %v3326 = vpop.f32.mrf.mxu0
    %v3327 = vadd.f32 %v2639, %v3326
    %v3328 = vpop.f32.mrf.mxu0
    %3329 = vmatprep.mubr.f32.mxu0 0.0
    %3330 = vmatmul.mubr.f32.gmra.mxu0 %v2786
    %v3331 = vpop.f32.mrf.mxu0
    %v3332 = vadd.f32 %v2639, %v3331
    %v3333 = vpop.f32.mrf.mxu0
    %3334 = vmatprep.mubr.f32.mxu0 0.0
    %3335 = vmatmul.mubr.f32.gmra.mxu0 %v2789
    %v3336 = vpop.f32.mrf.mxu0
    %v3337 = vadd.f32 %v2639, %v3336
    %v3338 = vpop.f32.mrf.mxu0
    %3339 = vmatprep.mubr.f32.mxu0 0.0
    %3340 = vmatmul.mubr.f32.gmra.mxu0 %v2792
    %v3341 = vpop.f32.mrf.mxu0
    %v3342 = vadd.f32 %v2639, %v3341
    %v3343 = vpop.f32.mrf.mxu0
    %3344 = vmatprep.mubr.f32.mxu0 0.0
    %3345 = vmatmul.mubr.f32.gmra.mxu0 %v2795
    %v3346 = vpop.f32.mrf.mxu0
    %v3347 = vadd.f32 %v2639, %v3346
    %v3348 = vpop.f32.mrf.mxu0
    %3349 = vmatprep.mubr.f32.mxu0 0.0
    %3350 = vmatmul.mubr.f32.gmra.mxu0 %v2798
    %v3351 = vpop.f32.mrf.mxu0
    %v3352 = vadd.f32 %v2639, %v3351
    %v3353 = vpop.f32.mrf.mxu0
    %3354 = vmatprep.mubr.f32.mxu0 0.0
    %3355 = vmatmul.mubr.f32.gmra.mxu0 %v2801
    %v3356 = vpop.f32.mrf.mxu0
    %v3357 = vadd.f32 %v2639, %v3356
    %v3358 = vpop.f32.mrf.mxu0
    %3359 = vmatprep.mubr.f32.mxu0 0.0
    %3360 = vmatmul.mubr.f32.gmra.mxu0 %v2804
    %v3361 = vpop.f32.mrf.mxu0
    %v3362 = vadd.f32 %v2639, %v3361
    %v3363 = vpop.f32.mrf.mxu0
    %3364 = vmatprep.mubr.f32.mxu0 0.0
    %3365 = vmatmul.mubr.f32.gmra.mxu0 %v2807
    %v3366 = vpop.f32.mrf.mxu0
    %v3367 = vadd.f32 %v2639, %v3366
    %v3368 = vpop.f32.mrf.mxu0
    %3369 = vmatprep.mubr.f32.mxu0 0.0
    %3370 = vmatmul.mubr.f32.gmra.mxu0 %v2810
    %v3371 = vpop.f32.mrf.mxu0
    %v3372 = vadd.f32 %v2639, %v3371
    %v3373 = vpop.f32.mrf.mxu0
    %3374 = vmatprep.mubr.f32.mxu0 0.0
    %3375 = vmatmul.mubr.f32.gmra.mxu0 %v2813
    %v3376 = vpop.f32.mrf.mxu0
    %v3377 = vadd.f32 %v2639, %v3376
    %v3378 = vpop.f32.mrf.mxu0
    %3379 = vmatprep.mubr.f32.mxu0 0.0
    %3380 = vmatmul.mubr.f32.gmra.mxu0 %v2816
    %v3381 = vpop.f32.mrf.mxu0
    %v3382 = vadd.f32 %v2639, %v3381
    %v3383 = vpop.f32.mrf.mxu0
    %3384 = vmatprep.mubr.f32.mxu0 0.0
    %3385 = vmatmul.mubr.f32.gmra.mxu0 %v2819
    %v3386 = vpop.f32.mrf.mxu0
    %v3387 = vadd.f32 %v2639, %v3386
    %v3388 = vpop.f32.mrf.mxu0
    %3389 = vmatprep.mubr.f32.mxu0 0.0
    %3390 = vmatmul.mubr.f32.gmra.mxu0 %v2822
    %v3391 = vpop.f32.mrf.mxu0
    %v3392 = vadd.f32 %v2639, %v3391
    %v3393 = vpop.f32.mrf.mxu0
    %3394 = vmatprep.mubr.f32.mxu0 0.0
    %3395 = vmatmul.mubr.f32.gmra.mxu0 %v2825
    %v3396 = vpop.f32.mrf.mxu0
    %v3397 = vadd.f32 %v2639, %v3396
    %v3398 = vpop.f32.mrf.mxu0
    %3399 = vmatprep.mubr.f32.mxu0 0.0
    %3400 = vmatmul.mubr.f32.gmra.mxu0 %v2828
    %v3401 = vpop.f32.mrf.mxu0
    %v3402 = vadd.f32 %v2639, %v3401
    %v3403 = vpop.f32.mrf.mxu0
    %3404 = vmatprep.mubr.f32.mxu0 0.0
    %3405 = vmatmul.mubr.f32.gmra.mxu0 %v2831
    %v3406 = vpop.f32.mrf.mxu0
    %v3407 = vadd.f32 %v2639, %v3406
    %v3408 = vpop.f32.mrf.mxu0
    %3409 = vmatprep.mubr.f32.mxu0 0.0
    %3410 = vmatmul.mubr.f32.gmra.mxu0 %v2834
    %v3411 = vpop.f32.mrf.mxu0
    %v3412 = vadd.f32 %v2639, %v3411
    %v3413 = vpop.f32.mrf.mxu0
    %3414 = vmatprep.mubr.f32.mxu0 0.0
    %3415 = vmatmul.mubr.f32.gmra.mxu0 %v2837
    %v3416 = vpop.f32.mrf.mxu0
    %v3417 = vadd.f32 %v2639, %v3416
    %v3418 = vpop.f32.mrf.mxu0
    %3419 = vmatprep.mubr.f32.mxu0 0.0
    %3420 = vmatmul.mubr.f32.gmra.mxu0 %v2840
    %v3421 = vpop.f32.mrf.mxu0
    %v3422 = vadd.f32 %v2639, %v3421
    %v3423 = vpop.f32.mrf.mxu0
    %3424 = vmatprep.mubr.f32.mxu0 0.0
    %3425 = vmatmul.mubr.f32.gmra.mxu0 %v2843
    %v3426 = vpop.f32.mrf.mxu0
    %v3427 = vadd.f32 %v2639, %v3426
    %v3428 = vpop.f32.mrf.mxu0
    %3429 = vmatprep.mubr.f32.mxu0 0.0
    %3430 = vmatmul.mubr.f32.gmra.mxu0 %v2846
    %v3431 = vpop.f32.mrf.mxu0
    %v3432 = vadd.f32 %v2639, %v3431
    %v3433 = vpop.f32.mrf.mxu0
    %3434 = vmatprep.mubr.f32.mxu0 0.0
    %3435 = vmatmul.mubr.f32.gmra.mxu0 %v2849
    %v3436 = vpop.f32.mrf.mxu0
    %v3437 = vadd.f32 %v2639, %v3436
    %v3438 = vpop.f32.mrf.mxu0
    %3439 = vmatprep.mubr.f32.mxu0 0.0
    %3440 = vmatmul.mubr.f32.gmra.mxu0 %v2852
    %v3441 = vpop.f32.mrf.mxu0
    %v3442 = vadd.f32 %v2639, %v3441
    %v3443 = vpop.f32.mrf.mxu0
    %3444 = vmatprep.mubr.f32.mxu0 0.0
    %3445 = vmatmul.mubr.f32.gmra.mxu0 %v2855
    %v3446 = vpop.f32.mrf.mxu0
    %v3447 = vadd.f32 %v2639, %v3446
    %v3448 = vpop.f32.mrf.mxu0
    %3449 = vmatprep.mubr.f32.mxu0 0.0
    %3450 = vmatmul.mubr.f32.gmra.mxu0 %v2858
    %v3451 = vpop.f32.mrf.mxu0
    %v3452 = vadd.f32 %v2639, %v3451
    %v3453 = vpop.f32.mrf.mxu0
    %3454 = vmatprep.mubr.f32.mxu0 0.0
    %3455 = vmatmul.mubr.f32.gmra.mxu0 %v2861
    %v3456 = vpop.f32.mrf.mxu0
    %v3457 = vadd.f32 %v2639, %v3456
    %v3458 = vpop.f32.mrf.mxu0
    %3459 = vmatprep.mubr.f32.mxu0 0.0
    %3460 = vmatmul.mubr.f32.gmra.mxu0 %v2864
    %v3461 = vpop.f32.mrf.mxu0
    %v3462 = vadd.f32 %v2639, %v3461
    %v3463 = vpop.f32.mrf.mxu0
    %3464 = vmatprep.mubr.f32.mxu0 0.0
    %3465 = vmatmul.mubr.f32.gmra.mxu0 %v2867
    %v3466 = vpop.f32.mrf.mxu0
    %v3467 = vadd.f32 %v2639, %v3466
    %v3468 = vpop.f32.mrf.mxu0
    %3469 = vmatprep.mubr.f32.mxu0 0.0
    %3470 = vmatmul.mubr.f32.gmra.mxu0 %v2870
    %v3471 = vpop.f32.mrf.mxu0
    %v3472 = vadd.f32 %v2639, %v3471
    %v3473 = vpop.f32.mrf.mxu0
    %3474 = vmatprep.mubr.f32.mxu0 0.0
    %3475 = vmatmul.mubr.f32.gmra.mxu0 %v2873
    %v3476 = vpop.f32.mrf.mxu0
    %v3477 = vadd.f32 %v2639, %v3476
    %v3478 = vpop.f32.mrf.mxu0
    %3479 = vmatprep.mubr.f32.mxu0 0.0
    %3480 = vmatmul.mubr.f32.gmra.mxu0 %v2876
    %v3481 = vpop.f32.mrf.mxu0
    %v3482 = vadd.f32 %v2639, %v3481
    %v3483 = vpop.f32.mrf.mxu0
    %3484 = vmatprep.mubr.f32.mxu0 0.0
    %3485 = vmatmul.mubr.f32.gmra.mxu0 %v2879
    %v3486 = vpop.f32.mrf.mxu0
    %v3487 = vadd.f32 %v2639, %v3486
    %v3488 = vpop.f32.mrf.mxu0
    %3489 = vmatprep.mubr.f32.mxu0 0.0
    %3490 = vmatmul.mubr.f32.gmra.mxu0 %v2882
    %v3491 = vpop.f32.mrf.mxu0
    %v3492 = vadd.f32 %v2639, %v3491
    %v3493 = vpop.f32.mrf.mxu0
    %3494 = vmatprep.mubr.f32.mxu0 0.0
    %3495 = vmatmul.mubr.f32.gmra.mxu0 %v2885
    %v3496 = vpop.f32.mrf.mxu0
    %v3497 = vadd.f32 %v2639, %v3496
    %v3498 = vpop.f32.mrf.mxu0
    %3499 = vmatprep.mubr.f32.mxu0 0.0
    %3500 = vmatmul.mubr.f32.gmra.mxu0 %v2888
    %v3501 = vpop.f32.mrf.mxu0
    %v3502 = vadd.f32 %v2639, %v3501
    %v3503 = vpop.f32.mrf.mxu0
    %3504 = vmatprep.mubr.f32.mxu0 0.0
    %3505 = vmatmul.mubr.f32.gmra.mxu0 %v2891
    %v3506 = vpop.f32.mrf.mxu0
    %v3507 = vadd.f32 %v2639, %v3506
    %v3508 = vpop.f32.mrf.mxu0
    %3509 = vmatprep.mubr.f32.mxu0 0.0
    %3510 = vmatmul.mubr.f32.gmra.mxu0 %v2894
    %v3511 = vpop.f32.mrf.mxu0
    %v3512 = vadd.f32 %v2639, %v3511
    %v3513 = vpop.f32.mrf.mxu0
    %3514 = vmatprep.mubr.f32.mxu0 0.0
    %3515 = vmatmul.mubr.f32.gmra.mxu0 %v2897
    %v3516 = vpop.f32.mrf.mxu0
    %v3517 = vadd.f32 %v2639, %v3516
    %v3518 = vpop.f32.mrf.mxu0
    %3519 = vmatprep.mubr.f32.mxu0 0.0
    %3520 = vmatmul.mubr.f32.gmra.mxu0 %v2900
    %v3521 = vpop.f32.mrf.mxu0
    %v3522 = vadd.f32 %v2639, %v3521
    %v3523 = vpop.f32.mrf.mxu0
    %3524 = vmatprep.mubr.f32.mxu0 0.0
    %3525 = vmatmul.mubr.f32.gmra.mxu0 %v2903
    %v3526 = vpop.f32.mrf.mxu0
    %v3527 = vadd.f32 %v2639, %v3526
    %v3528 = vpop.f32.mrf.mxu0
    %3529 = vmatprep.mubr.f32.mxu0 0.0
    %3530 = vmatmul.mubr.f32.gmra.mxu0 %v2906
    %v3531 = vpop.f32.mrf.mxu0
    %v3532 = vadd.f32 %v2639, %v3531
    %v3533 = vpop.f32.mrf.mxu0
    %3534 = vmatprep.mubr.f32.mxu0 0.0
    %3535 = vmatmul.mubr.f32.gmra.mxu0 %v2909
    %v3536 = vpop.f32.mrf.mxu0
    %v3537 = vadd.f32 %v2639, %v3536
    %v3538 = vpop.f32.mrf.mxu0
    %3539 = vmatprep.mubr.f32.mxu0 0.0
    %3540 = vmatmul.mubr.f32.gmra.mxu0 %v2912
    %v3541 = vpop.f32.mrf.mxu0
    %v3542 = vadd.f32 %v2639, %v3541
    %v3543 = vpop.f32.mrf.mxu0
    %3544 = vmatprep.mubr.f32.mxu0 0.0
    %3545 = vmatmul.mubr.f32.gmra.mxu0 %v2915
    %v3546 = vpop.f32.mrf.mxu0
    %v3547 = vadd.f32 %v2639, %v3546
    %v3548 = vpop.f32.mrf.mxu0
    %3549 = vmatprep.mubr.f32.mxu0 0.0
    %3550 = vmatmul.mubr.f32.gmra.mxu0 %v2918
    %v3551 = vpop.f32.mrf.mxu0
    %v3552 = vadd.f32 %v2639, %v3551
    %v3553 = vpop.f32.mrf.mxu0
    %3554 = vmatprep.mubr.f32.mxu0 0.0
    %3555 = vmatmul.mubr.f32.gmra.mxu0 %v2921
    %v3556 = vpop.f32.mrf.mxu0
    %v3557 = vadd.f32 %v2639, %v3556
    %v3558 = vpop.f32.mrf.mxu0
    %3559 = vmatprep.mubr.f32.mxu0 0.0
    %3560 = vmatmul.mubr.f32.gmra.mxu0 %v2924
    %v3561 = vpop.f32.mrf.mxu0
    %v3562 = vadd.f32 %v2639, %v3561
    %v3563 = vpop.f32.mrf.mxu0
    %3564 = vmatprep.mubr.f32.mxu0 0.0
    %3565 = vmatmul.mubr.f32.gmra.mxu0 %v2927
    %v3566 = vpop.f32.mrf.mxu0
    %v3567 = vadd.f32 %v2639, %v3566
    %v3568 = vpop.f32.mrf.mxu0
    %3569 = vmatprep.mubr.f32.mxu0 0.0
    %3570 = vmatmul.mubr.f32.gmra.mxu0 %v2930
    %v3571 = vpop.f32.mrf.mxu0
    %v3572 = vadd.f32 %v2639, %v3571
    %v3573 = vpop.f32.mrf.mxu0
    %3574 = vmatprep.mubr.f32.mxu0 0.0
    %3575 = vmatmul.mubr.f32.gmra.mxu0 %v2933
    %v3576 = vpop.f32.mrf.mxu0
    %v3577 = vadd.f32 %v2639, %v3576
    %v3578 = vpop.f32.mrf.mxu0
    %3579 = vmatprep.mubr.f32.mxu0 0.0
    %3580 = vmatmul.mubr.f32.gmra.mxu0 %v2936
    %v3581 = vpop.f32.mrf.mxu0
    %v3582 = vadd.f32 %v2639, %v3581
    %v3583 = vpop.f32.mrf.mxu0
    %3584 = vmatprep.mubr.f32.mxu0 0.0
    %3585 = vmatmul.mubr.f32.gmra.mxu0 %v2939
    %v3586 = vpop.f32.mrf.mxu0
    %v3587 = vadd.f32 %v2639, %v3586
    %v3588 = vpop.f32.mrf.mxu0
    %3589 = vmatprep.mubr.f32.mxu0 0.0
    %3590 = vmatmul.mubr.f32.gmra.mxu0 %v2942
    %v3591 = vpop.f32.mrf.mxu0
    %v3592 = vadd.f32 %v2639, %v3591
    %v3593 = vpop.f32.mrf.mxu0
    %3594 = vmatprep.mubr.f32.mxu0 0.0
    %3595 = vmatmul.mubr.f32.gmra.mxu0 %v2945
    %v3596 = vpop.f32.mrf.mxu0
    %v3597 = vadd.f32 %v2639, %v3596
    %v3598 = vpop.f32.mrf.mxu0
    %3599 = vmatprep.mubr.f32.mxu0 0.0
    %3600 = vmatmul.mubr.f32.gmra.mxu0 %v2948
    %v3601 = vpop.f32.mrf.mxu0
    %v3602 = vadd.f32 %v2639, %v3601
    %v3603 = vpop.f32.mrf.mxu0
    %3604 = vmatprep.mubr.f32.mxu0 0.0
    %3605 = vmatmul.mubr.f32.gmra.mxu0 %v2951
    %v3606 = vpop.f32.mrf.mxu0
    %v3607 = vadd.f32 %v2639, %v3606
    %v3608 = vpop.f32.mrf.mxu0
    %3609 = vmatprep.mubr.f32.mxu0 0.0
    %3610 = vmatmul.mubr.f32.gmra.mxu0 %v2954
    %v3611 = vpop.f32.mrf.mxu0
    %v3612 = vadd.f32 %v2639, %v3611
    %v3613 = vpop.f32.mrf.mxu0
    %3614 = vmatprep.mubr.f32.mxu0 0.0
    %3615 = vmatmul.mubr.f32.gmra.mxu0 %v2957
    %v3616 = vpop.f32.mrf.mxu0
    %v3617 = vadd.f32 %v2639, %v3616
    %v3618 = vpop.f32.mrf.mxu0
    %3619 = vmatprep.mubr.f32.mxu0 0.0
    %3620 = vmatmul.mubr.f32.gmra.mxu0 %v2960
    %v3621 = vpop.f32.mrf.mxu0
    %v3622 = vadd.f32 %v2639, %v3621
    %v3623 = vpop.f32.mrf.mxu0
    %3624 = vmatprep.mubr.f32.mxu0 0.0
    %3625 = vmatmul.mubr.f32.gmra.mxu0 %v2963
    %v3626 = vpop.f32.mrf.mxu0
    %v3627 = vadd.f32 %v2639, %v3626
    %v3628 = vpop.f32.mrf.mxu0
    %3629 = vmatprep.mubr.f32.mxu0 0.0
    %3630 = vmatmul.mubr.f32.gmra.mxu0 %v2966
    %v3631 = vpop.f32.mrf.mxu0
    %v3632 = vadd.f32 %v2639, %v3631
    %v3633 = vpop.f32.mrf.mxu0
    %3634 = vmatprep.mubr.f32.mxu0 0.0
    %3635 = vmatmul.mubr.f32.gmra.mxu0 %v2969
    %v3636 = vpop.f32.mrf.mxu0
    %v3637 = vadd.f32 %v2639, %v3636
    %v3638 = vpop.f32.mrf.mxu0
    %3639 = vmatprep.mubr.f32.mxu0 0.0
    %3640 = vmatmul.mubr.f32.gmra.mxu0 %v2972
    %v3641 = vpop.f32.mrf.mxu0
    %v3642 = vadd.f32 %v2639, %v3641
    %v3643 = vpop.f32.mrf.mxu0
    %3644 = vmatprep.mubr.f32.mxu0 0.0
    %3645 = vmatmul.mubr.f32.gmra.mxu0 %v2975
    %v3646 = vpop.f32.mrf.mxu0
    %v3647 = vadd.f32 %v2639, %v3646
    %v3648 = vpop.f32.mrf.mxu0
    %3649 = vmatprep.mubr.f32.mxu0 0.0
    %3650 = vmatmul.mubr.f32.gmra.mxu0 %v2978
    %v3651 = vpop.f32.mrf.mxu0
    %v3652 = vadd.f32 %v2639, %v3651
    %v3653 = vpop.f32.mrf.mxu0
    %3654 = vmatprep.mubr.f32.mxu0 0.0
    %3655 = vmatmul.mubr.f32.gmra.mxu0 %v2981
    %v3656 = vpop.f32.mrf.mxu0
    %v3657 = vadd.f32 %v2639, %v3656
    %v3658 = vpop.f32.mrf.mxu0
    %3659 = vmatprep.mubr.f32.mxu0 0.0
    %3660 = vmatmul.mubr.f32.gmra.mxu0 %v2984
    %v3661 = vpop.f32.mrf.mxu0
    %v3662 = vadd.f32 %v2639, %v3661
    %v3663 = vpop.f32.mrf.mxu0
    %3664 = vmatprep.mubr.f32.mxu0 0.0
    %3665 = vmatmul.mubr.f32.gmra.mxu0 %v2987
    %v3666 = vpop.f32.mrf.mxu0
    %v3667 = vadd.f32 %v2639, %v3666
    %v3668 = vpop.f32.mrf.mxu0
    %3669 = vmatprep.mubr.f32.mxu0 0.0
    %3670 = vmatmul.mubr.f32.gmra.mxu0 %v2990
    %v3671 = vpop.f32.mrf.mxu0
    %v3672 = vadd.f32 %v2639, %v3671
    %v3673 = vpop.f32.mrf.mxu0
    %3674 = vmatprep.mubr.f32.mxu0 0.0
    %3675 = vmatmul.mubr.f32.gmra.mxu0 %v2993
    %v3676 = vpop.f32.mrf.mxu0
    %v3677 = vadd.f32 %v2639, %v3676
    %v3678 = vpop.f32.mrf.mxu0
    %3679 = vmatprep.mubr.f32.mxu0 0.0
    %3680 = vmatmul.mubr.f32.gmra.mxu0 %v2996
    %v3681 = vpop.f32.mrf.mxu0
    %v3682 = vadd.f32 %v2639, %v3681
    %v3683 = vpop.f32.mrf.mxu0
    %3684 = vmatprep.mubr.f32.mxu0 0.0
    %3685 = vmatmul.mubr.f32.gmra.mxu0 %v2999
    %v3686 = vpop.f32.mrf.mxu0
    %v3687 = vadd.f32 %v2639, %v3686
    %v3688 = vpop.f32.mrf.mxu0
    %3689 = vmatprep.mubr.f32.mxu0 0.0
    %3690 = vmatmul.mubr.f32.gmra.mxu0 %v3002
    %v3691 = vpop.f32.mrf.mxu0
    %v3692 = vadd.f32 %v2639, %v3691
    %v3693 = vpop.f32.mrf.mxu0
    %3694 = vmatprep.mubr.f32.mxu0 0.0
    %3695 = vmatmul.mubr.f32.gmra.mxu0 %v3005
    %v3696 = vpop.f32.mrf.mxu0
    %v3697 = vadd.f32 %v2639, %v3696
    %v3698 = vpop.f32.mrf.mxu0
    %3699 = vmatprep.mubr.f32.mxu0 0.0
    %3700 = vmatmul.mubr.f32.gmra.mxu0 %v3008
    %v3701 = vpop.f32.mrf.mxu0
    %v3702 = vadd.f32 %v2639, %v3701
    %v3703 = vpop.f32.mrf.mxu0
    %3704 = vmatprep.mubr.f32.mxu0 0.0
    %3705 = vmatmul.mubr.f32.gmra.mxu0 %v3011
    %v3706 = vpop.f32.mrf.mxu0
    %v3707 = vadd.f32 %v2639, %v3706
    %v3708 = vpop.f32.mrf.mxu0
    %3709 = vmatprep.mubr.f32.mxu0 0.0
    %3710 = vmatmul.mubr.f32.gmra.mxu0 %v3014
    %v3711 = vpop.f32.mrf.mxu0
    %v3712 = vadd.f32 %v2639, %v3711
    %v3713 = vpop.f32.mrf.mxu0
    %3714 = vmatprep.mubr.f32.mxu0 0.0
    %3715 = vmatmul.mubr.f32.gmra.mxu0 %v3017
    %v3716 = vpop.f32.mrf.mxu0
    %v3717 = vadd.f32 %v2639, %v3716
    %v3718 = vpop.f32.mrf.mxu0
    %3719 = vmatprep.mubr.f32.mxu0 0.0
    %3720 = vmatmul.mubr.f32.gmra.mxu0 %v3020
    %v3721 = vpop.f32.mrf.mxu0
    %v3722 = vadd.f32 %v2639, %v3721
    %v3723 = vpop.f32.mrf.mxu0
    %3724 = vmatprep.mubr.f32.mxu0 0.0
    %3725 = vmatmul.mubr.f32.gmra.mxu0 %v3023
    %v3726 = vpop.f32.mrf.mxu0
    %v3727 = vadd.f32 %v2639, %v3726
    %v3728 = vpop.f32.mrf.mxu0
    %3729 = vdwg.mxu0
    %v3730 = vmax.f32 %v3092, 0.0
    %v3731 = vmax.f32 %v3097, 0.0
    %v3732 = vmax.f32 %v3102, 0.0
    %v3733 = vmax.f32 %v3107, 0.0
    %v3734 = vmax.f32 %v3112, 0.0
    %v3735 = vmax.f32 %v3117, 0.0
    %v3736 = vmax.f32 %v3122, 0.0
    %v3737 = vmax.f32 %v3127, 0.0
    %v3738 = vmax.f32 %v3132, 0.0
    %v3739 = vmax.f32 %v3137, 0.0
    %v3740 = vmax.f32 %v3142, 0.0
    %v3741 = vmax.f32 %v3147, 0.0
    %v3742 = vmax.f32 %v3152, 0.0
    %v3743 = vmax.f32 %v3157, 0.0
    %v3744 = vmax.f32 %v3162, 0.0
    %v3745 = vmax.f32 %v3167, 0.0
    %v3746 = vmax.f32 %v3172, 0.0
    %v3747 = vmax.f32 %v3177, 0.0
    %v3748 = vmax.f32 %v3182, 0.0
    %v3749 = vmax.f32 %v3187, 0.0
    %v3750 = vmax.f32 %v3192, 0.0
    %v3751 = vmax.f32 %v3197, 0.0
    %v3752 = vmax.f32 %v3202, 0.0
    %v3753 = vmax.f32 %v3207, 0.0
    %v3754 = vmax.f32 %v3212, 0.0
    %v3755 = vmax.f32 %v3217, 0.0
    %v3756 = vmax.f32 %v3222, 0.0
    %v3757 = vmax.f32 %v3227, 0.0
    %v3758 = vmax.f32 %v3232, 0.0
    %v3759 = vmax.f32 %v3237, 0.0
    %v3760 = vmax.f32 %v3242, 0.0
    %v3761 = vmax.f32 %v3247, 0.0
    %v3762 = vmax.f32 %v3252, 0.0
    %v3763 = vmax.f32 %v3257, 0.0
    %v3764 = vmax.f32 %v3262, 0.0
    %v3765 = vmax.f32 %v3267, 0.0
    %v3766 = vmax.f32 %v3272, 0.0
    %v3767 = vmax.f32 %v3277, 0.0
    %v3768 = vmax.f32 %v3282, 0.0
    %v3769 = vmax.f32 %v3287, 0.0
    %v3770 = vmax.f32 %v3292, 0.0
    %v3771 = vmax.f32 %v3297, 0.0
    %v3772 = vmax.f32 %v3302, 0.0
    %v3773 = vmax.f32 %v3307, 0.0
    %v3774 = vmax.f32 %v3312, 0.0
    %v3775 = vmax.f32 %v3317, 0.0
    %v3776 = vmax.f32 %v3322, 0.0
    %v3777 = vmax.f32 %v3327, 0.0
    %v3778 = vmax.f32 %v3332, 0.0
    %v3779 = vmax.f32 %v3337, 0.0
    %v3780 = vmax.f32 %v3342, 0.0
    %v3781 = vmax.f32 %v3347, 0.0
    %v3782 = vmax.f32 %v3352, 0.0
    %v3783 = vmax.f32 %v3357, 0.0
    %v3784 = vmax.f32 %v3362, 0.0
    %v3785 = vmax.f32 %v3367, 0.0
    %v3786 = vmax.f32 %v3372, 0.0
    %v3787 = vmax.f32 %v3377, 0.0
    %v3788 = vmax.f32 %v3382, 0.0
    %v3789 = vmax.f32 %v3387, 0.0
    %v3790 = vmax.f32 %v3392, 0.0
    %v3791 = vmax.f32 %v3397, 0.0
    %v3792 = vmax.f32 %v3402, 0.0
    %v3793 = vmax.f32 %v3407, 0.0
    %v3794 = vmax.f32 %v3412, 0.0
    %v3795 = vmax.f32 %v3417, 0.0
    %v3796 = vmax.f32 %v3422, 0.0
    %v3797 = vmax.f32 %v3427, 0.0
    %v3798 = vmax.f32 %v3432, 0.0
    %v3799 = vmax.f32 %v3437, 0.0
    %v3800 = vmax.f32 %v3442, 0.0
    %v3801 = vmax.f32 %v3447, 0.0
    %v3802 = vmax.f32 %v3452, 0.0
    %v3803 = vmax.f32 %v3457, 0.0
    %v3804 = vmax.f32 %v3462, 0.0
    %v3805 = vmax.f32 %v3467, 0.0
    %v3806 = vmax.f32 %v3472, 0.0
    %v3807 = vmax.f32 %v3477, 0.0
    %v3808 = vmax.f32 %v3482, 0.0
    %v3809 = vmax.f32 %v3487, 0.0
    %v3810 = vmax.f32 %v3492, 0.0
    %v3811 = vmax.f32 %v3497, 0.0
    %v3812 = vmax.f32 %v3502, 0.0
    %v3813 = vmax.f32 %v3507, 0.0
    %v3814 = vmax.f32 %v3512, 0.0
    %v3815 = vmax.f32 %v3517, 0.0
    %v3816 = vmax.f32 %v3522, 0.0
    %v3817 = vmax.f32 %v3527, 0.0
    %v3818 = vmax.f32 %v3532, 0.0
    %v3819 = vmax.f32 %v3537, 0.0
    %v3820 = vmax.f32 %v3542, 0.0
    %v3821 = vmax.f32 %v3547, 0.0
    %v3822 = vmax.f32 %v3552, 0.0
    %v3823 = vmax.f32 %v3557, 0.0
    %v3824 = vmax.f32 %v3562, 0.0
    %v3825 = vmax.f32 %v3567, 0.0
    %v3826 = vmax.f32 %v3572, 0.0
    %v3827 = vmax.f32 %v3577, 0.0
    %v3828 = vmax.f32 %v3582, 0.0
    %v3829 = vmax.f32 %v3587, 0.0
    %v3830 = vmax.f32 %v3592, 0.0
    %v3831 = vmax.f32 %v3597, 0.0
    %v3832 = vmax.f32 %v3602, 0.0
    %v3833 = vmax.f32 %v3607, 0.0
    %v3834 = vmax.f32 %v3612, 0.0
    %v3835 = vmax.f32 %v3617, 0.0
    %v3836 = vmax.f32 %v3622, 0.0
    %v3837 = vmax.f32 %v3627, 0.0
    %v3838 = vmax.f32 %v3632, 0.0
    %v3839 = vmax.f32 %v3637, 0.0
    %v3840 = vmax.f32 %v3642, 0.0
    %v3841 = vmax.f32 %v3647, 0.0
    %v3842 = vmax.f32 %v3652, 0.0
    %v3843 = vmax.f32 %v3657, 0.0
    %v3844 = vmax.f32 %v3662, 0.0
    %v3845 = vmax.f32 %v3667, 0.0
    %v3846 = vmax.f32 %v3672, 0.0
    %v3847 = vmax.f32 %v3677, 0.0
    %v3848 = vmax.f32 %v3682, 0.0
    %v3849 = vmax.f32 %v3687, 0.0
    %v3850 = vmax.f32 %v3692, 0.0
    %v3851 = vmax.f32 %v3697, 0.0
    %v3852 = vmax.f32 %v3702, 0.0
    %v3853 = vmax.f32 %v3707, 0.0
    %v3854 = vmax.f32 %v3712, 0.0
    %v3855 = vmax.f32 %v3717, 0.0
    %v3856 = vmax.f32 %v3722, 0.0
    %v3857 = vmax.f32 %v3727, 0.0
    %v3858 = vld [vmem:[%s8] sm:$0xff]
    %v3859 = vld [vmem:[%s8 + $0x8] sm:$0xff]
    %v3860 = vld [vmem:[%s8 + $0x10] sm:$0xff]
    %v3861 = vld [vmem:[%s8 + $0x18] sm:$0xff]
    %v3862 = vld [vmem:[%s9] sm:$0xff]
    %v3863 = vld [vmem:[%s9 + $0x8] sm:$0xff]
    %v3864 = vld [vmem:[%s10] sm:$0x1]
    %v3865 = vld [vmem:[%s1] sm:$0xff]
    %v3866 = vld [vmem:[%s1 + $0x8] sm:$0xff]
    %v3867 = vld [vmem:[%s1 + $0x10] sm:$0xff]
    %v3868 = vld [vmem:[%s1 + $0x18] sm:$0xff]
    %v3869 = vld [vmem:[%s1 + $0x20] sm:$0xff]
    %v3870 = vld [vmem:[%s1 + $0x28] sm:$0xff]
    %v3871 = vld [vmem:[%s1 + $0x30] sm:$0xff]
    %v3872 = vld [vmem:[%s1 + $0x38] sm:$0xff]
    %v3873 = vld [vmem:[%s1 + $0x40] sm:$0xff]
    %v3874 = vld [vmem:[%s1 + $0x48] sm:$0xff]
    %v3875 = vld [vmem:[%s1 + $0x50] sm:$0xff]
    %v3876 = vld [vmem:[%s1 + $0x58] sm:$0xff]
    %v3877 = vld [vmem:[%s1 + $0x60] sm:$0xff]
    %v3878 = vld [vmem:[%s1 + $0x68] sm:$0xff]
    %v3879 = vld [vmem:[%s1 + $0x70] sm:$0xff]
    %v3880 = vld [vmem:[%s1 + $0x78] sm:$0xff]
    %v3881 = vld [vmem:[%s1 + $0x80] sm:$0xff]
    %v3882 = vld [vmem:[%s1 + $0x88] sm:$0xff]
    %v3883 = vld [vmem:[%s1 + $0x90] sm:$0xff]
    %v3884 = vld [vmem:[%s1 + $0x98] sm:$0xff]
    %v3885 = vld [vmem:[%s1 + $0xa0] sm:$0xff]
    %v3886 = vld [vmem:[%s1 + $0xa8] sm:$0xff]
    %v3887 = vld [vmem:[%s1 + $0xb0] sm:$0xff]
    %v3888 = vld [vmem:[%s1 + $0xb8] sm:$0xff]
    %v3889 = vld [vmem:[%s1 + $0xc0] sm:$0xff]
    %v3890 = vld [vmem:[%s1 + $0xc8] sm:$0xff]
    %v3891 = vld [vmem:[%s1 + $0xd0] sm:$0xff]
    %v3892 = vld [vmem:[%s1 + $0xd8] sm:$0xff]
    %v3893 = vld [vmem:[%s1 + $0xe0] sm:$0xff]
    %v3894 = vld [vmem:[%s1 + $0xe8] sm:$0xff]
    %v3895 = vld [vmem:[%s1 + $0xf0] sm:$0xff]
    %v3896 = vld [vmem:[%s1 + $0xf8] sm:$0xff]
    %v3897 = vld [vmem:[%s1 + $0x100] sm:$0xff]
    %v3898 = vld [vmem:[%s1 + $0x108] sm:$0xff]
    %v3899 = vld [vmem:[%s1 + $0x110] sm:$0xff]
    %v3900 = vld [vmem:[%s1 + $0x118] sm:$0xff]
    %v3901 = vld [vmem:[%s1 + $0x120] sm:$0xff]
    %v3902 = vld [vmem:[%s1 + $0x128] sm:$0xff]
    %v3903 = vld [vmem:[%s1 + $0x130] sm:$0xff]
    %v3904 = vld [vmem:[%s1 + $0x138] sm:$0xff]
    %v3905 = vld [vmem:[%s1 + $0x140] sm:$0xff]
    %v3906 = vld [vmem:[%s1 + $0x148] sm:$0xff]
    %v3907 = vld [vmem:[%s1 + $0x150] sm:$0xff]
    %v3908 = vld [vmem:[%s1 + $0x158] sm:$0xff]
    %v3909 = vld [vmem:[%s1 + $0x160] sm:$0xff]
    %v3910 = vld [vmem:[%s1 + $0x168] sm:$0xff]
    %v3911 = vld [vmem:[%s1 + $0x170] sm:$0xff]
    %v3912 = vld [vmem:[%s1 + $0x178] sm:$0xff]
    %v3913 = vld [vmem:[%s1 + $0x180] sm:$0xff]
    %v3914 = vld [vmem:[%s1 + $0x188] sm:$0xff]
    %v3915 = vld [vmem:[%s1 + $0x190] sm:$0xff]
    %v3916 = vld [vmem:[%s1 + $0x198] sm:$0xff]
    %v3917 = vld [vmem:[%s1 + $0x1a0] sm:$0xff]
    %v3918 = vld [vmem:[%s1 + $0x1a8] sm:$0xff]
    %v3919 = vld [vmem:[%s1 + $0x1b0] sm:$0xff]
    %v3920 = vld [vmem:[%s1 + $0x1b8] sm:$0xff]
    %v3921 = vld [vmem:[%s1 + $0x1c0] sm:$0xff]
    %v3922 = vld [vmem:[%s1 + $0x1c8] sm:$0xff]
    %v3923 = vld [vmem:[%s1 + $0x1d0] sm:$0xff]
    %v3924 = vld [vmem:[%s1 + $0x1d8] sm:$0xff]
    %v3925 = vld [vmem:[%s1 + $0x1e0] sm:$0xff]
    %v3926 = vld [vmem:[%s1 + $0x1e8] sm:$0xff]
    %v3927 = vld [vmem:[%s1 + $0x1f0] sm:$0xff]
    %v3928 = vld [vmem:[%s1 + $0x1f8] sm:$0xff]
    %v3929 = vld [vmem:[%s1 + $0x200] sm:$0xff]
    %v3930 = vld [vmem:[%s1 + $0x208] sm:$0xff]
    %v3931 = vld [vmem:[%s1 + $0x210] sm:$0xff]
    %v3932 = vld [vmem:[%s1 + $0x218] sm:$0xff]
    %v3933 = vld [vmem:[%s1 + $0x220] sm:$0xff]
    %v3934 = vld [vmem:[%s1 + $0x228] sm:$0xff]
    %v3935 = vld [vmem:[%s1 + $0x230] sm:$0xff]
    %v3936 = vld [vmem:[%s1 + $0x238] sm:$0xff]
    %v3937 = vld [vmem:[%s1 + $0x240] sm:$0xff]
    %v3938 = vld [vmem:[%s1 + $0x248] sm:$0xff]
    %v3939 = vld [vmem:[%s1 + $0x250] sm:$0xff]
    %v3940 = vld [vmem:[%s1 + $0x258] sm:$0xff]
    %v3941 = vld [vmem:[%s1 + $0x260] sm:$0xff]
    %v3942 = vld [vmem:[%s1 + $0x268] sm:$0xff]
    %v3943 = vld [vmem:[%s1 + $0x270] sm:$0xff]
    %v3944 = vld [vmem:[%s1 + $0x278] sm:$0xff]
    %v3945 = vld [vmem:[%s1 + $0x280] sm:$0xff]
    %v3946 = vld [vmem:[%s1 + $0x288] sm:$0xff]
    %v3947 = vld [vmem:[%s1 + $0x290] sm:$0xff]
    %v3948 = vld [vmem:[%s1 + $0x298] sm:$0xff]
    %v3949 = vld [vmem:[%s1 + $0x2a0] sm:$0xff]
    %v3950 = vld [vmem:[%s1 + $0x2a8] sm:$0xff]
    %v3951 = vld [vmem:[%s1 + $0x2b0] sm:$0xff]
    %v3952 = vld [vmem:[%s1 + $0x2b8] sm:$0xff]
    %v3953 = vld [vmem:[%s1 + $0x2c0] sm:$0xff]
    %v3954 = vld [vmem:[%s1 + $0x2c8] sm:$0xff]
    %v3955 = vld [vmem:[%s1 + $0x2d0] sm:$0xff]
    %v3956 = vld [vmem:[%s1 + $0x2d8] sm:$0xff]
    %v3957 = vld [vmem:[%s1 + $0x2e0] sm:$0xff]
    %v3958 = vld [vmem:[%s1 + $0x2e8] sm:$0xff]
    %v3959 = vld [vmem:[%s1 + $0x2f0] sm:$0xff]
    %v3960 = vld [vmem:[%s1 + $0x2f8] sm:$0xff]
    %v3961 = vld [vmem:[%s1 + $0x300] sm:$0xff]
    %v3962 = vld [vmem:[%s1 + $0x308] sm:$0xff]
    %v3963 = vld [vmem:[%s1 + $0x310] sm:$0xff]
    %v3964 = vld [vmem:[%s1 + $0x318] sm:$0xff]
    %v3965 = vld [vmem:[%s1 + $0x320] sm:$0xff]
    %v3966 = vld [vmem:[%s1 + $0x328] sm:$0xff]
    %v3967 = vld [vmem:[%s1 + $0x330] sm:$0xff]
    %v3968 = vld [vmem:[%s1 + $0x338] sm:$0xff]
    %v3969 = vld [vmem:[%s1 + $0x340] sm:$0xff]
    %v3970 = vld [vmem:[%s1 + $0x348] sm:$0xff]
    %v3971 = vld [vmem:[%s1 + $0x350] sm:$0xff]
    %v3972 = vld [vmem:[%s1 + $0x358] sm:$0xff]
    %v3973 = vld [vmem:[%s1 + $0x360] sm:$0xff]
    %v3974 = vld [vmem:[%s1 + $0x368] sm:$0xff]
    %v3975 = vld [vmem:[%s1 + $0x370] sm:$0xff]
    %v3976 = vld [vmem:[%s1 + $0x378] sm:$0xff]
    %v3977 = vld [vmem:[%s1 + $0x380] sm:$0xff]
    %v3978 = vld [vmem:[%s1 + $0x388] sm:$0xff]
    %v3979 = vld [vmem:[%s1 + $0x390] sm:$0xff]
    %v3980 = vld [vmem:[%s1 + $0x398] sm:$0xff]
    %v3981 = vld [vmem:[%s1 + $0x3a0] sm:$0xff]
    %v3982 = vld [vmem:[%s1 + $0x3a8] sm:$0xff]
    %v3983 = vld [vmem:[%s1 + $0x3b0] sm:$0xff]
    %v3984 = vld [vmem:[%s1 + $0x3b8] sm:$0xff]
    %v3985 = vld [vmem:[%s1 + $0x3c0] sm:$0xff]
    %v3986 = vld [vmem:[%s1 + $0x3c8] sm:$0xff]
    %v3987 = vld [vmem:[%s1 + $0x3d0] sm:$0xff]
    %v3988 = vld [vmem:[%s1 + $0x3d8] sm:$0xff]
    %v3989 = vld [vmem:[%s1 + $0x3e0] sm:$0xff]
    %v3990 = vld [vmem:[%s1 + $0x3e8] sm:$0xff]
    %v3991 = vld [vmem:[%s1 + $0x3f0] sm:$0xff]
    %v3992 = vld [vmem:[%s1 + $0x3f8] sm:$0xff]
    %vm3993 = vcmask 130048
    %v3995 = vsel %vm3993, %v3865, 0
    %v3998 = vsel %vm3993, %v3866, 0
    %v4001 = vsel %vm3993, %v3867, 0
    %v4004 = vsel %vm3993, %v3868, 0
    %v4007 = vsel %vm3993, %v3869, 0
    %v4010 = vsel %vm3993, %v3870, 0
    %v4013 = vsel %vm3993, %v3871, 0
    %v4016 = vsel %vm3993, %v3872, 0
    %v4019 = vsel %vm3993, %v3873, 0
    %v4022 = vsel %vm3993, %v3874, 0
    %v4025 = vsel %vm3993, %v3875, 0
    %v4028 = vsel %vm3993, %v3876, 0
    %v4031 = vsel %vm3993, %v3877, 0
    %v4034 = vsel %vm3993, %v3878, 0
    %v4037 = vsel %vm3993, %v3879, 0
    %v4040 = vsel %vm3993, %v3880, 0
    %v4043 = vsel %vm3993, %v3881, 0
    %v4046 = vsel %vm3993, %v3882, 0
    %v4049 = vsel %vm3993, %v3883, 0
    %v4052 = vsel %vm3993, %v3884, 0
    %v4055 = vsel %vm3993, %v3885, 0
    %v4058 = vsel %vm3993, %v3886, 0
    %v4061 = vsel %vm3993, %v3887, 0
    %v4064 = vsel %vm3993, %v3888, 0
    %v4067 = vsel %vm3993, %v3889, 0
    %v4070 = vsel %vm3993, %v3890, 0
    %v4073 = vsel %vm3993, %v3891, 0
    %v4076 = vsel %vm3993, %v3892, 0
    %v4079 = vsel %vm3993, %v3893, 0
    %v4082 = vsel %vm3993, %v3894, 0
    %v4085 = vsel %vm3993, %v3895, 0
    %v4088 = vsel %vm3993, %v3896, 0
    %v4091 = vsel %vm3993, %v3897, 0
    %v4094 = vsel %vm3993, %v3898, 0
    %v4097 = vsel %vm3993, %v3899, 0
    %v4100 = vsel %vm3993, %v3900, 0
    %v4103 = vsel %vm3993, %v3901, 0
    %v4106 = vsel %vm3993, %v3902, 0
    %v4109 = vsel %vm3993, %v3903, 0
    %v4112 = vsel %vm3993, %v3904, 0
    %v4115 = vsel %vm3993, %v3905, 0
    %v4118 = vsel %vm3993, %v3906, 0
    %v4121 = vsel %vm3993, %v3907, 0
    %v4124 = vsel %vm3993, %v3908, 0
    %v4127 = vsel %vm3993, %v3909, 0
    %v4130 = vsel %vm3993, %v3910, 0
    %v4133 = vsel %vm3993, %v3911, 0
    %v4136 = vsel %vm3993, %v3912, 0
    %v4139 = vsel %vm3993, %v3913, 0
    %v4142 = vsel %vm3993, %v3914, 0
    %v4145 = vsel %vm3993, %v3915, 0
    %v4148 = vsel %vm3993, %v3916, 0
    %v4151 = vsel %vm3993, %v3917, 0
    %v4154 = vsel %vm3993, %v3918, 0
    %v4157 = vsel %vm3993, %v3919, 0
    %v4160 = vsel %vm3993, %v3920, 0
    %v4163 = vsel %vm3993, %v3921, 0
    %v4166 = vsel %vm3993, %v3922, 0
    %v4169 = vsel %vm3993, %v3923, 0
    %v4172 = vsel %vm3993, %v3924, 0
    %v4175 = vsel %vm3993, %v3925, 0
    %v4178 = vsel %vm3993, %v3926, 0
    %v4181 = vsel %vm3993, %v3927, 0
    %v4184 = vsel %vm3993, %v3928, 0
    %v4187 = vsel %vm3993, %v3929, 0
    %v4190 = vsel %vm3993, %v3930, 0
    %v4193 = vsel %vm3993, %v3931, 0
    %v4196 = vsel %vm3993, %v3932, 0
    %v4199 = vsel %vm3993, %v3933, 0
    %v4202 = vsel %vm3993, %v3934, 0
    %v4205 = vsel %vm3993, %v3935, 0
    %v4208 = vsel %vm3993, %v3936, 0
    %v4211 = vsel %vm3993, %v3937, 0
    %v4214 = vsel %vm3993, %v3938, 0
    %v4217 = vsel %vm3993, %v3939, 0
    %v4220 = vsel %vm3993, %v3940, 0
    %v4223 = vsel %vm3993, %v3941, 0
    %v4226 = vsel %vm3993, %v3942, 0
    %v4229 = vsel %vm3993, %v3943, 0
    %v4232 = vsel %vm3993, %v3944, 0
    %v4235 = vsel %vm3993, %v3945, 0
    %v4238 = vsel %vm3993, %v3946, 0
    %v4241 = vsel %vm3993, %v3947, 0
    %v4244 = vsel %vm3993, %v3948, 0
    %v4247 = vsel %vm3993, %v3949, 0
    %v4250 = vsel %vm3993, %v3950, 0
    %v4253 = vsel %vm3993, %v3951, 0
    %v4256 = vsel %vm3993, %v3952, 0
    %v4259 = vsel %vm3993, %v3953, 0
    %v4262 = vsel %vm3993, %v3954, 0
    %v4265 = vsel %vm3993, %v3955, 0
    %v4268 = vsel %vm3993, %v3956, 0
    %v4271 = vsel %vm3993, %v3957, 0
    %v4274 = vsel %vm3993, %v3958, 0
    %v4277 = vsel %vm3993, %v3959, 0
    %v4280 = vsel %vm3993, %v3960, 0
    %v4283 = vsel %vm3993, %v3961, 0
    %v4286 = vsel %vm3993, %v3962, 0
    %v4289 = vsel %vm3993, %v3963, 0
    %v4292 = vsel %vm3993, %v3964, 0
    %v4295 = vsel %vm3993, %v3965, 0
    %v4298 = vsel %vm3993, %v3966, 0
    %v4301 = vsel %vm3993, %v3967, 0
    %v4304 = vsel %vm3993, %v3968, 0
    %v4307 = vsel %vm3993, %v3969, 0
    %v4310 = vsel %vm3993, %v3970, 0
    %v4313 = vsel %vm3993, %v3971, 0
    %v4316 = vsel %vm3993, %v3972, 0
    %v4319 = vsel %vm3993, %v3973, 0
    %v4322 = vsel %vm3993, %v3974, 0
    %v4325 = vsel %vm3993, %v3975, 0
    %v4328 = vsel %vm3993, %v3976, 0
    %v4331 = vsel %vm3993, %v3977, 0
    %v4334 = vsel %vm3993, %v3978, 0
    %v4337 = vsel %vm3993, %v3979, 0
    %v4340 = vsel %vm3993, %v3980, 0
    %v4343 = vsel %vm3993, %v3981, 0
    %v4346 = vsel %vm3993, %v3982, 0
    %v4349 = vsel %vm3993, %v3983, 0
    %v4352 = vsel %vm3993, %v3984, 0
    %v4355 = vsel %vm3993, %v3985, 0
    %v4358 = vsel %vm3993, %v3986, 0
    %v4361 = vsel %vm3993, %v3987, 0
    %v4364 = vsel %vm3993, %v3988, 0
    %v4367 = vsel %vm3993, %v3989, 0
    %v4370 = vsel %vm3993, %v3990, 0
    %v4373 = vsel %vm3993, %v3991, 0
    %v4376 = vsel %vm3993, %v3992, 0
    %4378 = vmatprep.subr.mxu0 0.0
    %4379 = vmatpush1.msra.mxu0 0.0
    %4380 = vmatprep.subr.mxu0 0.0
    %4381 = vmatpush1.msra.mxu0 0.0
    %4382 = vmatprep.subr.mxu0 0.0
    %4383 = vmatpush1.msra.mxu0 0.0
    %4384 = vmatprep.subr.mxu0 0.0
    %4385 = vmatpush1.msra.mxu0 0.0
    %4386 = vmatprep.subr.mxu0 0.0
    %4387 = vmatpush1.msra.mxu0 0.0
    %4388 = vmatprep.subr.mxu0 0.0
    %4389 = vmatpush1.msra.mxu0 0.0
    %4390 = vmatprep.subr.mxu0 0.0
    %4391 = vmatpush1.msra.mxu0 0.0
    %4392 = vmatprep.subr.mxu0 0.0
    %4393 = vmatpush1.msra.mxu0 0.0
    %4394 = vmatprep.subr.mxu0 0.0
    %4395 = vmatpush1.msra.mxu0 0.0
    %4396 = vmatprep.subr.mxu0 0.0
    %4397 = vmatpush1.msra.mxu0 0.0
    %4398 = vmatprep.subr.mxu0 0.0
    %4399 = vmatpush1.msra.mxu0 0.0
    %4400 = vmatprep.subr.mxu0 0.0
    %4401 = vmatpush1.msra.mxu0 0.0
    %4402 = vmatprep.subr.mxu0 0.0
    %4403 = vmatpush1.msra.mxu0 0.0
    %4404 = vmatprep.subr.mxu0 0.0
    %4405 = vmatpush1.msra.mxu0 0.0
    %4406 = vmatprep.subr.mxu0 0.0
    %4407 = vmatpush1.msra.mxu0 %v3863
    %4408 = vmatprep.subr.mxu0 0.0
    %4409 = vmatpush1.msra.mxu0 %v3862
    %4410 = vmatprep.subr.mxu0 0.0
    %4411 = vmatpush2.msra.mxu0 0.0
    %4412 = vmatprep.subr.mxu0 0.0
    %4413 = vmatpush2.msra.mxu0 0.0
    %4414 = vmatprep.subr.mxu0 0.0
    %4415 = vmatpush2.msra.mxu0 0.0
    %4416 = vmatprep.subr.mxu0 0.0
    %4417 = vmatpush2.msra.mxu0 0.0
    %4418 = vmatprep.subr.mxu0 0.0
    %4419 = vmatpush2.msra.mxu0 0.0
    %4420 = vmatprep.subr.mxu0 0.0
    %4421 = vmatpush2.msra.mxu0 0.0
    %4422 = vmatprep.subr.mxu0 0.0
    %4423 = vmatpush2.msra.mxu0 0.0
    %4424 = vmatprep.subr.mxu0 0.0
    %4425 = vmatpush2.msra.mxu0 0.0
    %4426 = vmatprep.subr.mxu0 0.0
    %4427 = vmatpush2.msra.mxu0 0.0
    %4428 = vmatprep.subr.mxu0 0.0
    %4429 = vmatpush2.msra.mxu0 0.0
    %4430 = vmatprep.subr.mxu0 0.0
    %4431 = vmatpush2.msra.mxu0 0.0
    %4432 = vmatprep.subr.mxu0 0.0
    %4433 = vmatpush2.msra.mxu0 0.0
    %4434 = vmatprep.subr.mxu0 0.0
    %4435 = vmatpush2.msra.mxu0 0.0
    %4436 = vmatprep.subr.mxu0 0.0
    %4437 = vmatpush2.msra.mxu0 0.0
    %4438 = vmatprep.subr.mxu0 0.0
    %4439 = vmatpush2.msra.mxu0 0.0
    %4440 = vmatprep.subr.mxu0 0.0
    %4441 = vmatpush2.msra.mxu0 0.0
    %4442 = vmatprep.mubr.f32.mxu0 0.0
    %4443 = vmatmul.mubr.f32.gmra.mxu0 %v3995
    %v4444 = vpop.f32.mrf.mxu0
    %v4445 = vadd.f32 0.0, %v4444
    %v4446 = vpop.f32.mrf.mxu0
    %4447 = vmatprep.mubr.f32.mxu0 0.0
    %4448 = vmatmul.mubr.f32.gmra.mxu0 %v3998
    %v4449 = vpop.f32.mrf.mxu0
    %v4450 = vadd.f32 0.0, %v4449
    %v4451 = vpop.f32.mrf.mxu0
    %4452 = vmatprep.mubr.f32.mxu0 0.0
    %4453 = vmatmul.mubr.f32.gmra.mxu0 %v4001
    %v4454 = vpop.f32.mrf.mxu0
    %v4455 = vadd.f32 0.0, %v4454
    %v4456 = vpop.f32.mrf.mxu0
    %4457 = vmatprep.mubr.f32.mxu0 0.0
    %4458 = vmatmul.mubr.f32.gmra.mxu0 %v4004
    %v4459 = vpop.f32.mrf.mxu0
    %v4460 = vadd.f32 0.0, %v4459
    %v4461 = vpop.f32.mrf.mxu0
    %4462 = vmatprep.mubr.f32.mxu0 0.0
    %4463 = vmatmul.mubr.f32.gmra.mxu0 %v4007
    %v4464 = vpop.f32.mrf.mxu0
    %v4465 = vadd.f32 0.0, %v4464
    %v4466 = vpop.f32.mrf.mxu0
    %4467 = vmatprep.mubr.f32.mxu0 0.0
    %4468 = vmatmul.mubr.f32.gmra.mxu0 %v4010
    %v4469 = vpop.f32.mrf.mxu0
    %v4470 = vadd.f32 0.0, %v4469
    %v4471 = vpop.f32.mrf.mxu0
    %4472 = vmatprep.mubr.f32.mxu0 0.0
    %4473 = vmatmul.mubr.f32.gmra.mxu0 %v4013
    %v4474 = vpop.f32.mrf.mxu0
    %v4475 = vadd.f32 0.0, %v4474
    %v4476 = vpop.f32.mrf.mxu0
    %4477 = vmatprep.mubr.f32.mxu0 0.0
    %4478 = vmatmul.mubr.f32.gmra.mxu0 %v4016
    %v4479 = vpop.f32.mrf.mxu0
    %v4480 = vadd.f32 0.0, %v4479
    %v4481 = vpop.f32.mrf.mxu0
    %4482 = vmatprep.mubr.f32.mxu0 0.0
    %4483 = vmatmul.mubr.f32.gmra.mxu0 %v4019
    %v4484 = vpop.f32.mrf.mxu0
    %v4485 = vadd.f32 0.0, %v4484
    %v4486 = vpop.f32.mrf.mxu0
    %4487 = vmatprep.mubr.f32.mxu0 0.0
    %4488 = vmatmul.mubr.f32.gmra.mxu0 %v4022
    %v4489 = vpop.f32.mrf.mxu0
    %v4490 = vadd.f32 0.0, %v4489
    %v4491 = vpop.f32.mrf.mxu0
    %4492 = vmatprep.mubr.f32.mxu0 0.0
    %4493 = vmatmul.mubr.f32.gmra.mxu0 %v4025
    %v4494 = vpop.f32.mrf.mxu0
    %v4495 = vadd.f32 0.0, %v4494
    %v4496 = vpop.f32.mrf.mxu0
    %4497 = vmatprep.mubr.f32.mxu0 0.0
    %4498 = vmatmul.mubr.f32.gmra.mxu0 %v4028
    %v4499 = vpop.f32.mrf.mxu0
    %v4500 = vadd.f32 0.0, %v4499
    %v4501 = vpop.f32.mrf.mxu0
    %4502 = vmatprep.mubr.f32.mxu0 0.0
    %4503 = vmatmul.mubr.f32.gmra.mxu0 %v4031
    %v4504 = vpop.f32.mrf.mxu0
    %v4505 = vadd.f32 0.0, %v4504
    %v4506 = vpop.f32.mrf.mxu0
    %4507 = vmatprep.mubr.f32.mxu0 0.0
    %4508 = vmatmul.mubr.f32.gmra.mxu0 %v4034
    %v4509 = vpop.f32.mrf.mxu0
    %v4510 = vadd.f32 0.0, %v4509
    %v4511 = vpop.f32.mrf.mxu0
    %4512 = vmatprep.mubr.f32.mxu0 0.0
    %4513 = vmatmul.mubr.f32.gmra.mxu0 %v4037
    %v4514 = vpop.f32.mrf.mxu0
    %v4515 = vadd.f32 0.0, %v4514
    %v4516 = vpop.f32.mrf.mxu0
    %4517 = vmatprep.mubr.f32.mxu0 0.0
    %4518 = vmatmul.mubr.f32.gmra.mxu0 %v4040
    %v4519 = vpop.f32.mrf.mxu0
    %v4520 = vadd.f32 0.0, %v4519
    %v4521 = vpop.f32.mrf.mxu0
    %4522 = vmatprep.mubr.f32.mxu0 0.0
    %4523 = vmatmul.mubr.f32.gmra.mxu0 %v4043
    %v4524 = vpop.f32.mrf.mxu0
    %v4525 = vadd.f32 0.0, %v4524
    %v4526 = vpop.f32.mrf.mxu0
    %4527 = vmatprep.mubr.f32.mxu0 0.0
    %4528 = vmatmul.mubr.f32.gmra.mxu0 %v4046
    %v4529 = vpop.f32.mrf.mxu0
    %v4530 = vadd.f32 0.0, %v4529
    %v4531 = vpop.f32.mrf.mxu0
    %4532 = vmatprep.mubr.f32.mxu0 0.0
    %4533 = vmatmul.mubr.f32.gmra.mxu0 %v4049
    %v4534 = vpop.f32.mrf.mxu0
    %v4535 = vadd.f32 0.0, %v4534
    %v4536 = vpop.f32.mrf.mxu0
    %4537 = vmatprep.mubr.f32.mxu0 0.0
    %4538 = vmatmul.mubr.f32.gmra.mxu0 %v4052
    %v4539 = vpop.f32.mrf.mxu0
    %v4540 = vadd.f32 0.0, %v4539
    %v4541 = vpop.f32.mrf.mxu0
    %4542 = vmatprep.mubr.f32.mxu0 0.0
    %4543 = vmatmul.mubr.f32.gmra.mxu0 %v4055
    %v4544 = vpop.f32.mrf.mxu0
    %v4545 = vadd.f32 0.0, %v4544
    %v4546 = vpop.f32.mrf.mxu0
    %4547 = vmatprep.mubr.f32.mxu0 0.0
    %4548 = vmatmul.mubr.f32.gmra.mxu0 %v4058
    %v4549 = vpop.f32.mrf.mxu0
    %v4550 = vadd.f32 0.0, %v4549
    %v4551 = vpop.f32.mrf.mxu0
    %4552 = vmatprep.mubr.f32.mxu0 0.0
    %4553 = vmatmul.mubr.f32.gmra.mxu0 %v4061
    %v4554 = vpop.f32.mrf.mxu0
    %v4555 = vadd.f32 0.0, %v4554
    %v4556 = vpop.f32.mrf.mxu0
    %4557 = vmatprep.mubr.f32.mxu0 0.0
    %4558 = vmatmul.mubr.f32.gmra.mxu0 %v4064
    %v4559 = vpop.f32.mrf.mxu0
    %v4560 = vadd.f32 0.0, %v4559
    %v4561 = vpop.f32.mrf.mxu0
    %4562 = vmatprep.mubr.f32.mxu0 0.0
    %4563 = vmatmul.mubr.f32.gmra.mxu0 %v4067
    %v4564 = vpop.f32.mrf.mxu0
    %v4565 = vadd.f32 0.0, %v4564
    %v4566 = vpop.f32.mrf.mxu0
    %4567 = vmatprep.mubr.f32.mxu0 0.0
    %4568 = vmatmul.mubr.f32.gmra.mxu0 %v4070
    %v4569 = vpop.f32.mrf.mxu0
    %v4570 = vadd.f32 0.0, %v4569
    %v4571 = vpop.f32.mrf.mxu0
    %4572 = vmatprep.mubr.f32.mxu0 0.0
    %4573 = vmatmul.mubr.f32.gmra.mxu0 %v4073
    %v4574 = vpop.f32.mrf.mxu0
    %v4575 = vadd.f32 0.0, %v4574
    %v4576 = vpop.f32.mrf.mxu0
    %4577 = vmatprep.mubr.f32.mxu0 0.0
    %4578 = vmatmul.mubr.f32.gmra.mxu0 %v4076
    %v4579 = vpop.f32.mrf.mxu0
    %v4580 = vadd.f32 0.0, %v4579
    %v4581 = vpop.f32.mrf.mxu0
    %4582 = vmatprep.mubr.f32.mxu0 0.0
    %4583 = vmatmul.mubr.f32.gmra.mxu0 %v4079
    %v4584 = vpop.f32.mrf.mxu0
    %v4585 = vadd.f32 0.0, %v4584
    %v4586 = vpop.f32.mrf.mxu0
    %4587 = vmatprep.mubr.f32.mxu0 0.0
    %4588 = vmatmul.mubr.f32.gmra.mxu0 %v4082
    %v4589 = vpop.f32.mrf.mxu0
    %v4590 = vadd.f32 0.0, %v4589
    %v4591 = vpop.f32.mrf.mxu0
    %4592 = vmatprep.mubr.f32.mxu0 0.0
    %4593 = vmatmul.mubr.f32.gmra.mxu0 %v4085
    %v4594 = vpop.f32.mrf.mxu0
    %v4595 = vadd.f32 0.0, %v4594
    %v4596 = vpop.f32.mrf.mxu0
    %4597 = vmatprep.mubr.f32.mxu0 0.0
    %4598 = vmatmul.mubr.f32.gmra.mxu0 %v4088
    %v4599 = vpop.f32.mrf.mxu0
    %v4600 = vadd.f32 0.0, %v4599
    %v4601 = vpop.f32.mrf.mxu0
    %4602 = vmatprep.mubr.f32.mxu0 0.0
    %4603 = vmatmul.mubr.f32.gmra.mxu0 %v4091
    %v4604 = vpop.f32.mrf.mxu0
    %v4605 = vadd.f32 0.0, %v4604
    %v4606 = vpop.f32.mrf.mxu0
    %4607 = vmatprep.mubr.f32.mxu0 0.0
    %4608 = vmatmul.mubr.f32.gmra.mxu0 %v4094
    %v4609 = vpop.f32.mrf.mxu0
    %v4610 = vadd.f32 0.0, %v4609
    %v4611 = vpop.f32.mrf.mxu0
    %4612 = vmatprep.mubr.f32.mxu0 0.0
    %4613 = vmatmul.mubr.f32.gmra.mxu0 %v4097
    %v4614 = vpop.f32.mrf.mxu0
    %v4615 = vadd.f32 0.0, %v4614
    %v4616 = vpop.f32.mrf.mxu0
    %4617 = vmatprep.mubr.f32.mxu0 0.0
    %4618 = vmatmul.mubr.f32.gmra.mxu0 %v4100
    %v4619 = vpop.f32.mrf.mxu0
    %v4620 = vadd.f32 0.0, %v4619
    %v4621 = vpop.f32.mrf.mxu0
    %4622 = vmatprep.mubr.f32.mxu0 0.0
    %4623 = vmatmul.mubr.f32.gmra.mxu0 %v4103
    %v4624 = vpop.f32.mrf.mxu0
    %v4625 = vadd.f32 0.0, %v4624
    %v4626 = vpop.f32.mrf.mxu0
    %4627 = vmatprep.mubr.f32.mxu0 0.0
    %4628 = vmatmul.mubr.f32.gmra.mxu0 %v4106
    %v4629 = vpop.f32.mrf.mxu0
    %v4630 = vadd.f32 0.0, %v4629
    %v4631 = vpop.f32.mrf.mxu0
    %4632 = vmatprep.mubr.f32.mxu0 0.0
    %4633 = vmatmul.mubr.f32.gmra.mxu0 %v4109
    %v4634 = vpop.f32.mrf.mxu0
    %v4635 = vadd.f32 0.0, %v4634
    %v4636 = vpop.f32.mrf.mxu0
    %4637 = vmatprep.mubr.f32.mxu0 0.0
    %4638 = vmatmul.mubr.f32.gmra.mxu0 %v4112
    %v4639 = vpop.f32.mrf.mxu0
    %v4640 = vadd.f32 0.0, %v4639
    %v4641 = vpop.f32.mrf.mxu0
    %4642 = vmatprep.mubr.f32.mxu0 0.0
    %4643 = vmatmul.mubr.f32.gmra.mxu0 %v4115
    %v4644 = vpop.f32.mrf.mxu0
    %v4645 = vadd.f32 0.0, %v4644
    %v4646 = vpop.f32.mrf.mxu0
    %4647 = vmatprep.mubr.f32.mxu0 0.0
    %4648 = vmatmul.mubr.f32.gmra.mxu0 %v4118
    %v4649 = vpop.f32.mrf.mxu0
    %v4650 = vadd.f32 0.0, %v4649
    %v4651 = vpop.f32.mrf.mxu0
    %4652 = vmatprep.mubr.f32.mxu0 0.0
    %4653 = vmatmul.mubr.f32.gmra.mxu0 %v4121
    %v4654 = vpop.f32.mrf.mxu0
    %v4655 = vadd.f32 0.0, %v4654
    %v4656 = vpop.f32.mrf.mxu0
    %4657 = vmatprep.mubr.f32.mxu0 0.0
    %4658 = vmatmul.mubr.f32.gmra.mxu0 %v4124
    %v4659 = vpop.f32.mrf.mxu0
    %v4660 = vadd.f32 0.0, %v4659
    %v4661 = vpop.f32.mrf.mxu0
    %4662 = vmatprep.mubr.f32.mxu0 0.0
    %4663 = vmatmul.mubr.f32.gmra.mxu0 %v4127
    %v4664 = vpop.f32.mrf.mxu0
    %v4665 = vadd.f32 0.0, %v4664
    %v4666 = vpop.f32.mrf.mxu0
    %4667 = vmatprep.mubr.f32.mxu0 0.0
    %4668 = vmatmul.mubr.f32.gmra.mxu0 %v4130
    %v4669 = vpop.f32.mrf.mxu0
    %v4670 = vadd.f32 0.0, %v4669
    %v4671 = vpop.f32.mrf.mxu0
    %4672 = vmatprep.mubr.f32.mxu0 0.0
    %4673 = vmatmul.mubr.f32.gmra.mxu0 %v4133
    %v4674 = vpop.f32.mrf.mxu0
    %v4675 = vadd.f32 0.0, %v4674
    %v4676 = vpop.f32.mrf.mxu0
    %4677 = vmatprep.mubr.f32.mxu0 0.0
    %4678 = vmatmul.mubr.f32.gmra.mxu0 %v4136
    %v4679 = vpop.f32.mrf.mxu0
    %v4680 = vadd.f32 0.0, %v4679
    %v4681 = vpop.f32.mrf.mxu0
    %4682 = vmatprep.mubr.f32.mxu0 0.0
    %4683 = vmatmul.mubr.f32.gmra.mxu0 %v4139
    %v4684 = vpop.f32.mrf.mxu0
    %v4685 = vadd.f32 0.0, %v4684
    %v4686 = vpop.f32.mrf.mxu0
    %4687 = vmatprep.mubr.f32.mxu0 0.0
    %4688 = vmatmul.mubr.f32.gmra.mxu0 %v4142
    %v4689 = vpop.f32.mrf.mxu0
    %v4690 = vadd.f32 0.0, %v4689
    %v4691 = vpop.f32.mrf.mxu0
    %4692 = vmatprep.mubr.f32.mxu0 0.0
    %4693 = vmatmul.mubr.f32.gmra.mxu0 %v4145
    %v4694 = vpop.f32.mrf.mxu0
    %v4695 = vadd.f32 0.0, %v4694
    %v4696 = vpop.f32.mrf.mxu0
    %4697 = vmatprep.mubr.f32.mxu0 0.0
    %4698 = vmatmul.mubr.f32.gmra.mxu0 %v4148
    %v4699 = vpop.f32.mrf.mxu0
    %v4700 = vadd.f32 0.0, %v4699
    %v4701 = vpop.f32.mrf.mxu0
    %4702 = vmatprep.mubr.f32.mxu0 0.0
    %4703 = vmatmul.mubr.f32.gmra.mxu0 %v4151
    %v4704 = vpop.f32.mrf.mxu0
    %v4705 = vadd.f32 0.0, %v4704
    %v4706 = vpop.f32.mrf.mxu0
    %4707 = vmatprep.mubr.f32.mxu0 0.0
    %4708 = vmatmul.mubr.f32.gmra.mxu0 %v4154
    %v4709 = vpop.f32.mrf.mxu0
    %v4710 = vadd.f32 0.0, %v4709
    %v4711 = vpop.f32.mrf.mxu0
    %4712 = vmatprep.mubr.f32.mxu0 0.0
    %4713 = vmatmul.mubr.f32.gmra.mxu0 %v4157
    %v4714 = vpop.f32.mrf.mxu0
    %v4715 = vadd.f32 0.0, %v4714
    %v4716 = vpop.f32.mrf.mxu0
    %4717 = vmatprep.mubr.f32.mxu0 0.0
    %4718 = vmatmul.mubr.f32.gmra.mxu0 %v4160
    %v4719 = vpop.f32.mrf.mxu0
    %v4720 = vadd.f32 0.0, %v4719
    %v4721 = vpop.f32.mrf.mxu0
    %4722 = vmatprep.mubr.f32.mxu0 0.0
    %4723 = vmatmul.mubr.f32.gmra.mxu0 %v4163
    %v4724 = vpop.f32.mrf.mxu0
    %v4725 = vadd.f32 0.0, %v4724
    %v4726 = vpop.f32.mrf.mxu0
    %4727 = vmatprep.mubr.f32.mxu0 0.0
    %4728 = vmatmul.mubr.f32.gmra.mxu0 %v4166
    %v4729 = vpop.f32.mrf.mxu0
    %v4730 = vadd.f32 0.0, %v4729
    %v4731 = vpop.f32.mrf.mxu0
    %4732 = vmatprep.mubr.f32.mxu0 0.0
    %4733 = vmatmul.mubr.f32.gmra.mxu0 %v4169
    %v4734 = vpop.f32.mrf.mxu0
    %v4735 = vadd.f32 0.0, %v4734
    %v4736 = vpop.f32.mrf.mxu0
    %4737 = vmatprep.mubr.f32.mxu0 0.0
    %4738 = vmatmul.mubr.f32.gmra.mxu0 %v4172
    %v4739 = vpop.f32.mrf.mxu0
    %v4740 = vadd.f32 0.0, %v4739
    %v4741 = vpop.f32.mrf.mxu0
    %4742 = vmatprep.mubr.f32.mxu0 0.0
    %4743 = vmatmul.mubr.f32.gmra.mxu0 %v4175
    %v4744 = vpop.f32.mrf.mxu0
    %v4745 = vadd.f32 0.0, %v4744
    %v4746 = vpop.f32.mrf.mxu0
    %4747 = vmatprep.mubr.f32.mxu0 0.0
    %4748 = vmatmul.mubr.f32.gmra.mxu0 %v4178
    %v4749 = vpop.f32.mrf.mxu0
    %v4750 = vadd.f32 0.0, %v4749
    %v4751 = vpop.f32.mrf.mxu0
    %4752 = vmatprep.mubr.f32.mxu0 0.0
    %4753 = vmatmul.mubr.f32.gmra.mxu0 %v4181
    %v4754 = vpop.f32.mrf.mxu0
    %v4755 = vadd.f32 0.0, %v4754
    %v4756 = vpop.f32.mrf.mxu0
    %4757 = vmatprep.mubr.f32.mxu0 0.0
    %4758 = vmatmul.mubr.f32.gmra.mxu0 %v4184
    %v4759 = vpop.f32.mrf.mxu0
    %v4760 = vadd.f32 0.0, %v4759
    %v4761 = vpop.f32.mrf.mxu0
    %4762 = vmatprep.mubr.f32.mxu0 0.0
    %4763 = vmatmul.mubr.f32.gmra.mxu0 %v4187
    %v4764 = vpop.f32.mrf.mxu0
    %v4765 = vadd.f32 0.0, %v4764
    %v4766 = vpop.f32.mrf.mxu0
    %4767 = vmatprep.mubr.f32.mxu0 0.0
    %4768 = vmatmul.mubr.f32.gmra.mxu0 %v4190
    %v4769 = vpop.f32.mrf.mxu0
    %v4770 = vadd.f32 0.0, %v4769
    %v4771 = vpop.f32.mrf.mxu0
    %4772 = vmatprep.mubr.f32.mxu0 0.0
    %4773 = vmatmul.mubr.f32.gmra.mxu0 %v4193
    %v4774 = vpop.f32.mrf.mxu0
    %v4775 = vadd.f32 0.0, %v4774
    %v4776 = vpop.f32.mrf.mxu0
    %4777 = vmatprep.mubr.f32.mxu0 0.0
    %4778 = vmatmul.mubr.f32.gmra.mxu0 %v4196
    %v4779 = vpop.f32.mrf.mxu0
    %v4780 = vadd.f32 0.0, %v4779
    %v4781 = vpop.f32.mrf.mxu0
    %4782 = vmatprep.mubr.f32.mxu0 0.0
    %4783 = vmatmul.mubr.f32.gmra.mxu0 %v4199
    %v4784 = vpop.f32.mrf.mxu0
    %v4785 = vadd.f32 0.0, %v4784
    %v4786 = vpop.f32.mrf.mxu0
    %4787 = vmatprep.mubr.f32.mxu0 0.0
    %4788 = vmatmul.mubr.f32.gmra.mxu0 %v4202
    %v4789 = vpop.f32.mrf.mxu0
    %v4790 = vadd.f32 0.0, %v4789
    %v4791 = vpop.f32.mrf.mxu0
    %4792 = vmatprep.mubr.f32.mxu0 0.0
    %4793 = vmatmul.mubr.f32.gmra.mxu0 %v4205
    %v4794 = vpop.f32.mrf.mxu0
    %v4795 = vadd.f32 0.0, %v4794
    %v4796 = vpop.f32.mrf.mxu0
    %4797 = vmatprep.mubr.f32.mxu0 0.0
    %4798 = vmatmul.mubr.f32.gmra.mxu0 %v4208
    %v4799 = vpop.f32.mrf.mxu0
    %v4800 = vadd.f32 0.0, %v4799
    %v4801 = vpop.f32.mrf.mxu0
    %4802 = vmatprep.mubr.f32.mxu0 0.0
    %4803 = vmatmul.mubr.f32.gmra.mxu0 %v4211
    %v4804 = vpop.f32.mrf.mxu0
    %v4805 = vadd.f32 0.0, %v4804
    %v4806 = vpop.f32.mrf.mxu0
    %4807 = vmatprep.mubr.f32.mxu0 0.0
    %4808 = vmatmul.mubr.f32.gmra.mxu0 %v4214
    %v4809 = vpop.f32.mrf.mxu0
    %v4810 = vadd.f32 0.0, %v4809
    %v4811 = vpop.f32.mrf.mxu0
    %4812 = vmatprep.mubr.f32.mxu0 0.0
    %4813 = vmatmul.mubr.f32.gmra.mxu0 %v4217
    %v4814 = vpop.f32.mrf.mxu0
    %v4815 = vadd.f32 0.0, %v4814
    %v4816 = vpop.f32.mrf.mxu0
    %4817 = vmatprep.mubr.f32.mxu0 0.0
    %4818 = vmatmul.mubr.f32.gmra.mxu0 %v4220
    %v4819 = vpop.f32.mrf.mxu0
    %v4820 = vadd.f32 0.0, %v4819
    %v4821 = vpop.f32.mrf.mxu0
    %4822 = vmatprep.mubr.f32.mxu0 0.0
    %4823 = vmatmul.mubr.f32.gmra.mxu0 %v4223
    %v4824 = vpop.f32.mrf.mxu0
    %v4825 = vadd.f32 0.0, %v4824
    %v4826 = vpop.f32.mrf.mxu0
    %4827 = vmatprep.mubr.f32.mxu0 0.0
    %4828 = vmatmul.mubr.f32.gmra.mxu0 %v4226
    %v4829 = vpop.f32.mrf.mxu0
    %v4830 = vadd.f32 0.0, %v4829
    %v4831 = vpop.f32.mrf.mxu0
    %4832 = vmatprep.mubr.f32.mxu0 0.0
    %4833 = vmatmul.mubr.f32.gmra.mxu0 %v4229
    %v4834 = vpop.f32.mrf.mxu0
    %v4835 = vadd.f32 0.0, %v4834
    %v4836 = vpop.f32.mrf.mxu0
    %4837 = vmatprep.mubr.f32.mxu0 0.0
    %4838 = vmatmul.mubr.f32.gmra.mxu0 %v4232
    %v4839 = vpop.f32.mrf.mxu0
    %v4840 = vadd.f32 0.0, %v4839
    %v4841 = vpop.f32.mrf.mxu0
    %4842 = vmatprep.mubr.f32.mxu0 0.0
    %4843 = vmatmul.mubr.f32.gmra.mxu0 %v4235
    %v4844 = vpop.f32.mrf.mxu0
    %v4845 = vadd.f32 0.0, %v4844
    %v4846 = vpop.f32.mrf.mxu0
    %4847 = vmatprep.mubr.f32.mxu0 0.0
    %4848 = vmatmul.mubr.f32.gmra.mxu0 %v4238
    %v4849 = vpop.f32.mrf.mxu0
    %v4850 = vadd.f32 0.0, %v4849
    %v4851 = vpop.f32.mrf.mxu0
    %4852 = vmatprep.mubr.f32.mxu0 0.0
    %4853 = vmatmul.mubr.f32.gmra.mxu0 %v4241
    %v4854 = vpop.f32.mrf.mxu0
    %v4855 = vadd.f32 0.0, %v4854
    %v4856 = vpop.f32.mrf.mxu0
    %4857 = vmatprep.mubr.f32.mxu0 0.0
    %4858 = vmatmul.mubr.f32.gmra.mxu0 %v4244
    %v4859 = vpop.f32.mrf.mxu0
    %v4860 = vadd.f32 0.0, %v4859
    %v4861 = vpop.f32.mrf.mxu0
    %4862 = vmatprep.mubr.f32.mxu0 0.0
    %4863 = vmatmul.mubr.f32.gmra.mxu0 %v4247
    %v4864 = vpop.f32.mrf.mxu0
    %v4865 = vadd.f32 0.0, %v4864
    %v4866 = vpop.f32.mrf.mxu0
    %4867 = vmatprep.mubr.f32.mxu0 0.0
    %4868 = vmatmul.mubr.f32.gmra.mxu0 %v4250
    %v4869 = vpop.f32.mrf.mxu0
    %v4870 = vadd.f32 0.0, %v4869
    %v4871 = vpop.f32.mrf.mxu0
    %4872 = vmatprep.mubr.f32.mxu0 0.0
    %4873 = vmatmul.mubr.f32.gmra.mxu0 %v4253
    %v4874 = vpop.f32.mrf.mxu0
    %v4875 = vadd.f32 0.0, %v4874
    %v4876 = vpop.f32.mrf.mxu0
    %4877 = vmatprep.mubr.f32.mxu0 0.0
    %4878 = vmatmul.mubr.f32.gmra.mxu0 %v4256
    %v4879 = vpop.f32.mrf.mxu0
    %v4880 = vadd.f32 0.0, %v4879
    %v4881 = vpop.f32.mrf.mxu0
    %4882 = vmatprep.mubr.f32.mxu0 0.0
    %4883 = vmatmul.mubr.f32.gmra.mxu0 %v4259
    %v4884 = vpop.f32.mrf.mxu0
    %v4885 = vadd.f32 0.0, %v4884
    %v4886 = vpop.f32.mrf.mxu0
    %4887 = vmatprep.mubr.f32.mxu0 0.0
    %4888 = vmatmul.mubr.f32.gmra.mxu0 %v4262
    %v4889 = vpop.f32.mrf.mxu0
    %v4890 = vadd.f32 0.0, %v4889
    %v4891 = vpop.f32.mrf.mxu0
    %4892 = vmatprep.mubr.f32.mxu0 0.0
    %4893 = vmatmul.mubr.f32.gmra.mxu0 %v4265
    %v4894 = vpop.f32.mrf.mxu0
    %v4895 = vadd.f32 0.0, %v4894
    %v4896 = vpop.f32.mrf.mxu0
    %4897 = vmatprep.mubr.f32.mxu0 0.0
    %4898 = vmatmul.mubr.f32.gmra.mxu0 %v4268
    %v4899 = vpop.f32.mrf.mxu0
    %v4900 = vadd.f32 0.0, %v4899
    %v4901 = vpop.f32.mrf.mxu0
    %4902 = vmatprep.mubr.f32.mxu0 0.0
    %4903 = vmatmul.mubr.f32.gmra.mxu0 %v4271
    %v4904 = vpop.f32.mrf.mxu0
    %v4905 = vadd.f32 0.0, %v4904
    %v4906 = vpop.f32.mrf.mxu0
    %4907 = vmatprep.mubr.f32.mxu0 0.0
    %4908 = vmatmul.mubr.f32.gmra.mxu0 %v4274
    %v4909 = vpop.f32.mrf.mxu0
    %v4910 = vadd.f32 0.0, %v4909
    %v4911 = vpop.f32.mrf.mxu0
    %4912 = vmatprep.mubr.f32.mxu0 0.0
    %4913 = vmatmul.mubr.f32.gmra.mxu0 %v4277
    %v4914 = vpop.f32.mrf.mxu0
    %v4915 = vadd.f32 0.0, %v4914
    %v4916 = vpop.f32.mrf.mxu0
    %4917 = vmatprep.mubr.f32.mxu0 0.0
    %4918 = vmatmul.mubr.f32.gmra.mxu0 %v4280
    %v4919 = vpop.f32.mrf.mxu0
    %v4920 = vadd.f32 0.0, %v4919
    %v4921 = vpop.f32.mrf.mxu0
    %4922 = vmatprep.mubr.f32.mxu0 0.0
    %4923 = vmatmul.mubr.f32.gmra.mxu0 %v4283
    %v4924 = vpop.f32.mrf.mxu0
    %v4925 = vadd.f32 0.0, %v4924
    %v4926 = vpop.f32.mrf.mxu0
    %4927 = vmatprep.mubr.f32.mxu0 0.0
    %4928 = vmatmul.mubr.f32.gmra.mxu0 %v4286
    %v4929 = vpop.f32.mrf.mxu0
    %v4930 = vadd.f32 0.0, %v4929
    %v4931 = vpop.f32.mrf.mxu0
    %4932 = vmatprep.mubr.f32.mxu0 0.0
    %4933 = vmatmul.mubr.f32.gmra.mxu0 %v4289
    %v4934 = vpop.f32.mrf.mxu0
    %v4935 = vadd.f32 0.0, %v4934
    %v4936 = vpop.f32.mrf.mxu0
    %4937 = vmatprep.mubr.f32.mxu0 0.0
    %4938 = vmatmul.mubr.f32.gmra.mxu0 %v4292
    %v4939 = vpop.f32.mrf.mxu0
    %v4940 = vadd.f32 0.0, %v4939
    %v4941 = vpop.f32.mrf.mxu0
    %4942 = vmatprep.mubr.f32.mxu0 0.0
    %4943 = vmatmul.mubr.f32.gmra.mxu0 %v4295
    %v4944 = vpop.f32.mrf.mxu0
    %v4945 = vadd.f32 0.0, %v4944
    %v4946 = vpop.f32.mrf.mxu0
    %4947 = vmatprep.mubr.f32.mxu0 0.0
    %4948 = vmatmul.mubr.f32.gmra.mxu0 %v4298
    %v4949 = vpop.f32.mrf.mxu0
    %v4950 = vadd.f32 0.0, %v4949
    %v4951 = vpop.f32.mrf.mxu0
    %4952 = vmatprep.mubr.f32.mxu0 0.0
    %4953 = vmatmul.mubr.f32.gmra.mxu0 %v4301
    %v4954 = vpop.f32.mrf.mxu0
    %v4955 = vadd.f32 0.0, %v4954
    %v4956 = vpop.f32.mrf.mxu0
    %4957 = vmatprep.mubr.f32.mxu0 0.0
    %4958 = vmatmul.mubr.f32.gmra.mxu0 %v4304
    %v4959 = vpop.f32.mrf.mxu0
    %v4960 = vadd.f32 0.0, %v4959
    %v4961 = vpop.f32.mrf.mxu0
    %4962 = vmatprep.mubr.f32.mxu0 0.0
    %4963 = vmatmul.mubr.f32.gmra.mxu0 %v4307
    %v4964 = vpop.f32.mrf.mxu0
    %v4965 = vadd.f32 0.0, %v4964
    %v4966 = vpop.f32.mrf.mxu0
    %4967 = vmatprep.mubr.f32.mxu0 0.0
    %4968 = vmatmul.mubr.f32.gmra.mxu0 %v4310
    %v4969 = vpop.f32.mrf.mxu0
    %v4970 = vadd.f32 0.0, %v4969
    %v4971 = vpop.f32.mrf.mxu0
    %4972 = vmatprep.mubr.f32.mxu0 0.0
    %4973 = vmatmul.mubr.f32.gmra.mxu0 %v4313
    %v4974 = vpop.f32.mrf.mxu0
    %v4975 = vadd.f32 0.0, %v4974
    %v4976 = vpop.f32.mrf.mxu0
    %4977 = vmatprep.mubr.f32.mxu0 0.0
    %4978 = vmatmul.mubr.f32.gmra.mxu0 %v4316
    %v4979 = vpop.f32.mrf.mxu0
    %v4980 = vadd.f32 0.0, %v4979
    %v4981 = vpop.f32.mrf.mxu0
    %4982 = vmatprep.mubr.f32.mxu0 0.0
    %4983 = vmatmul.mubr.f32.gmra.mxu0 %v4319
    %v4984 = vpop.f32.mrf.mxu0
    %v4985 = vadd.f32 0.0, %v4984
    %v4986 = vpop.f32.mrf.mxu0
    %4987 = vmatprep.mubr.f32.mxu0 0.0
    %4988 = vmatmul.mubr.f32.gmra.mxu0 %v4322
    %v4989 = vpop.f32.mrf.mxu0
    %v4990 = vadd.f32 0.0, %v4989
    %v4991 = vpop.f32.mrf.mxu0
    %4992 = vmatprep.mubr.f32.mxu0 0.0
    %4993 = vmatmul.mubr.f32.gmra.mxu0 %v4325
    %v4994 = vpop.f32.mrf.mxu0
    %v4995 = vadd.f32 0.0, %v4994
    %v4996 = vpop.f32.mrf.mxu0
    %4997 = vmatprep.mubr.f32.mxu0 0.0
    %4998 = vmatmul.mubr.f32.gmra.mxu0 %v4328
    %v4999 = vpop.f32.mrf.mxu0
    %v5000 = vadd.f32 0.0, %v4999
    %v5001 = vpop.f32.mrf.mxu0
    %5002 = vmatprep.mubr.f32.mxu0 0.0
    %5003 = vmatmul.mubr.f32.gmra.mxu0 %v4331
    %v5004 = vpop.f32.mrf.mxu0
    %v5005 = vadd.f32 0.0, %v5004
    %v5006 = vpop.f32.mrf.mxu0
    %5007 = vmatprep.mubr.f32.mxu0 0.0
    %5008 = vmatmul.mubr.f32.gmra.mxu0 %v4334
    %v5009 = vpop.f32.mrf.mxu0
    %v5010 = vadd.f32 0.0, %v5009
    %v5011 = vpop.f32.mrf.mxu0
    %5012 = vmatprep.mubr.f32.mxu0 0.0
    %5013 = vmatmul.mubr.f32.gmra.mxu0 %v4337
    %v5014 = vpop.f32.mrf.mxu0
    %v5015 = vadd.f32 0.0, %v5014
    %v5016 = vpop.f32.mrf.mxu0
    %5017 = vmatprep.mubr.f32.mxu0 0.0
    %5018 = vmatmul.mubr.f32.gmra.mxu0 %v4340
    %v5019 = vpop.f32.mrf.mxu0
    %v5020 = vadd.f32 0.0, %v5019
    %v5021 = vpop.f32.mrf.mxu0
    %5022 = vmatprep.mubr.f32.mxu0 0.0
    %5023 = vmatmul.mubr.f32.gmra.mxu0 %v4343
    %v5024 = vpop.f32.mrf.mxu0
    %v5025 = vadd.f32 0.0, %v5024
    %v5026 = vpop.f32.mrf.mxu0
    %5027 = vmatprep.mubr.f32.mxu0 0.0
    %5028 = vmatmul.mubr.f32.gmra.mxu0 %v4346
    %v5029 = vpop.f32.mrf.mxu0
    %v5030 = vadd.f32 0.0, %v5029
    %v5031 = vpop.f32.mrf.mxu0
    %5032 = vmatprep.mubr.f32.mxu0 0.0
    %5033 = vmatmul.mubr.f32.gmra.mxu0 %v4349
    %v5034 = vpop.f32.mrf.mxu0
    %v5035 = vadd.f32 0.0, %v5034
    %v5036 = vpop.f32.mrf.mxu0
    %5037 = vmatprep.mubr.f32.mxu0 0.0
    %5038 = vmatmul.mubr.f32.gmra.mxu0 %v4352
    %v5039 = vpop.f32.mrf.mxu0
    %v5040 = vadd.f32 0.0, %v5039
    %v5041 = vpop.f32.mrf.mxu0
    %5042 = vmatprep.mubr.f32.mxu0 0.0
    %5043 = vmatmul.mubr.f32.gmra.mxu0 %v4355
    %v5044 = vpop.f32.mrf.mxu0
    %v5045 = vadd.f32 0.0, %v5044
    %v5046 = vpop.f32.mrf.mxu0
    %5047 = vmatprep.mubr.f32.mxu0 0.0
    %5048 = vmatmul.mubr.f32.gmra.mxu0 %v4358
    %v5049 = vpop.f32.mrf.mxu0
    %v5050 = vadd.f32 0.0, %v5049
    %v5051 = vpop.f32.mrf.mxu0
    %5052 = vmatprep.mubr.f32.mxu0 0.0
    %5053 = vmatmul.mubr.f32.gmra.mxu0 %v4361
    %v5054 = vpop.f32.mrf.mxu0
    %v5055 = vadd.f32 0.0, %v5054
    %v5056 = vpop.f32.mrf.mxu0
    %5057 = vmatprep.mubr.f32.mxu0 0.0
    %5058 = vmatmul.mubr.f32.gmra.mxu0 %v4364
    %v5059 = vpop.f32.mrf.mxu0
    %v5060 = vadd.f32 0.0, %v5059
    %v5061 = vpop.f32.mrf.mxu0
    %5062 = vmatprep.mubr.f32.mxu0 0.0
    %5063 = vmatmul.mubr.f32.gmra.mxu0 %v4367
    %v5064 = vpop.f32.mrf.mxu0
    %v5065 = vadd.f32 0.0, %v5064
    %v5066 = vpop.f32.mrf.mxu0
    %5067 = vmatprep.mubr.f32.mxu0 0.0
    %5068 = vmatmul.mubr.f32.gmra.mxu0 %v4370
    %v5069 = vpop.f32.mrf.mxu0
    %v5070 = vadd.f32 0.0, %v5069
    %v5071 = vpop.f32.mrf.mxu0
    %5072 = vmatprep.mubr.f32.mxu0 0.0
    %5073 = vmatmul.mubr.f32.gmra.mxu0 %v4373
    %v5074 = vpop.f32.mrf.mxu0
    %v5075 = vadd.f32 0.0, %v5074
    %v5076 = vpop.f32.mrf.mxu0
    %5077 = vmatprep.mubr.f32.mxu0 0.0
    %5078 = vmatmul.mubr.f32.gmra.mxu0 %v4376
    %v5079 = vpop.f32.mrf.mxu0
    %v5080 = vadd.f32 0.0, %v5079
    %v5081 = vpop.f32.mrf.mxu0
    %5082 = vdwg.mxu0
    %v5084 = vsel %vm184, %v3730, 0
    %v5087 = vsel %vm184, %v3731, 0
    %v5090 = vsel %vm184, %v3732, 0
    %v5093 = vsel %vm184, %v3733, 0
    %v5096 = vsel %vm184, %v3734, 0
    %v5099 = vsel %vm184, %v3735, 0
    %v5102 = vsel %vm184, %v3736, 0
    %v5105 = vsel %vm184, %v3737, 0
    %v5108 = vsel %vm184, %v3738, 0
    %v5111 = vsel %vm184, %v3739, 0
    %v5114 = vsel %vm184, %v3740, 0
    %v5117 = vsel %vm184, %v3741, 0
    %v5120 = vsel %vm184, %v3742, 0
    %v5123 = vsel %vm184, %v3743, 0
    %v5126 = vsel %vm184, %v3744, 0
    %v5129 = vsel %vm184, %v3745, 0
    %v5132 = vsel %vm184, %v3746, 0
    %v5135 = vsel %vm184, %v3747, 0
    %v5138 = vsel %vm184, %v3748, 0
    %v5141 = vsel %vm184, %v3749, 0
    %v5144 = vsel %vm184, %v3750, 0
    %v5147 = vsel %vm184, %v3751, 0
    %v5150 = vsel %vm184, %v3752, 0
    %v5153 = vsel %vm184, %v3753, 0
    %v5156 = vsel %vm184, %v3754, 0
    %v5159 = vsel %vm184, %v3755, 0
    %v5162 = vsel %vm184, %v3756, 0
    %v5165 = vsel %vm184, %v3757, 0
    %v5168 = vsel %vm184, %v3758, 0
    %v5171 = vsel %vm184, %v3759, 0
    %v5174 = vsel %vm184, %v3760, 0
    %v5177 = vsel %vm184, %v3761, 0
    %v5180 = vsel %vm184, %v3762, 0
    %v5183 = vsel %vm184, %v3763, 0
    %v5186 = vsel %vm184, %v3764, 0
    %v5189 = vsel %vm184, %v3765, 0
    %v5192 = vsel %vm184, %v3766, 0
    %v5195 = vsel %vm184, %v3767, 0
    %v5198 = vsel %vm184, %v3768, 0
    %v5201 = vsel %vm184, %v3769, 0
    %v5204 = vsel %vm184, %v3770, 0
    %v5207 = vsel %vm184, %v3771, 0
    %v5210 = vsel %vm184, %v3772, 0
    %v5213 = vsel %vm184, %v3773, 0
    %v5216 = vsel %vm184, %v3774, 0
    %v5219 = vsel %vm184, %v3775, 0
    %v5222 = vsel %vm184, %v3776, 0
    %v5225 = vsel %vm184, %v3777, 0
    %v5228 = vsel %vm184, %v3778, 0
    %v5231 = vsel %vm184, %v3779, 0
    %v5234 = vsel %vm184, %v3780, 0
    %v5237 = vsel %vm184, %v3781, 0
    %v5240 = vsel %vm184, %v3782, 0
    %v5243 = vsel %vm184, %v3783, 0
    %v5246 = vsel %vm184, %v3784, 0
    %v5249 = vsel %vm184, %v3785, 0
    %v5252 = vsel %vm184, %v3786, 0
    %v5255 = vsel %vm184, %v3787, 0
    %v5258 = vsel %vm184, %v3788, 0
    %v5261 = vsel %vm184, %v3789, 0
    %v5264 = vsel %vm184, %v3790, 0
    %v5267 = vsel %vm184, %v3791, 0
    %v5270 = vsel %vm184, %v3792, 0
    %v5273 = vsel %vm184, %v3793, 0
    %v5276 = vsel %vm184, %v3794, 0
    %v5279 = vsel %vm184, %v3795, 0
    %v5282 = vsel %vm184, %v3796, 0
    %v5285 = vsel %vm184, %v3797, 0
    %v5288 = vsel %vm184, %v3798, 0
    %v5291 = vsel %vm184, %v3799, 0
    %v5294 = vsel %vm184, %v3800, 0
    %v5297 = vsel %vm184, %v3801, 0
    %v5300 = vsel %vm184, %v3802, 0
    %v5303 = vsel %vm184, %v3803, 0
    %v5306 = vsel %vm184, %v3804, 0
    %v5309 = vsel %vm184, %v3805, 0
    %v5312 = vsel %vm184, %v3806, 0
    %v5315 = vsel %vm184, %v3807, 0
    %v5318 = vsel %vm184, %v3808, 0
    %v5321 = vsel %vm184, %v3809, 0
    %v5324 = vsel %vm184, %v3810, 0
    %v5327 = vsel %vm184, %v3811, 0
    %v5330 = vsel %vm184, %v3812, 0
    %v5333 = vsel %vm184, %v3813, 0
    %v5336 = vsel %vm184, %v3814, 0
    %v5339 = vsel %vm184, %v3815, 0
    %v5342 = vsel %vm184, %v3816, 0
    %v5345 = vsel %vm184, %v3817, 0
    %v5348 = vsel %vm184, %v3818, 0
    %v5351 = vsel %vm184, %v3819, 0
    %v5354 = vsel %vm184, %v3820, 0
    %v5357 = vsel %vm184, %v3821, 0
    %v5360 = vsel %vm184, %v3822, 0
    %v5363 = vsel %vm184, %v3823, 0
    %v5366 = vsel %vm184, %v3824, 0
    %v5369 = vsel %vm184, %v3825, 0
    %v5372 = vsel %vm184, %v3826, 0
    %v5375 = vsel %vm184, %v3827, 0
    %v5378 = vsel %vm184, %v3828, 0
    %v5381 = vsel %vm184, %v3829, 0
    %v5384 = vsel %vm184, %v3830, 0
    %v5387 = vsel %vm184, %v3831, 0
    %v5390 = vsel %vm184, %v3832, 0
    %v5393 = vsel %vm184, %v3833, 0
    %v5396 = vsel %vm184, %v3834, 0
    %v5399 = vsel %vm184, %v3835, 0
    %v5402 = vsel %vm184, %v3836, 0
    %v5405 = vsel %vm184, %v3837, 0
    %v5408 = vsel %vm184, %v3838, 0
    %v5411 = vsel %vm184, %v3839, 0
    %v5414 = vsel %vm184, %v3840, 0
    %v5417 = vsel %vm184, %v3841, 0
    %v5420 = vsel %vm184, %v3842, 0
    %v5423 = vsel %vm184, %v3843, 0
    %v5426 = vsel %vm184, %v3844, 0
    %v5429 = vsel %vm184, %v3845, 0
    %v5432 = vsel %vm184, %v3846, 0
    %v5435 = vsel %vm184, %v3847, 0
    %v5438 = vsel %vm184, %v3848, 0
    %v5441 = vsel %vm184, %v3849, 0
    %v5444 = vsel %vm184, %v3850, 0
    %v5447 = vsel %vm184, %v3851, 0
    %v5450 = vsel %vm184, %v3852, 0
    %v5453 = vsel %vm184, %v3853, 0
    %v5456 = vsel %vm184, %v3854, 0
    %v5459 = vsel %vm184, %v3855, 0
    %v5462 = vsel %vm184, %v3856, 0
    %v5465 = vsel %vm184, %v3857, 0
    %5467 = vmatprep.subr.mxu0 0.0
    %5468 = vmatpush1.msra.mxu0 0.0
    %5469 = vmatprep.subr.mxu0 0.0
    %5470 = vmatpush1.msra.mxu0 0.0
    %5471 = vmatprep.subr.mxu0 0.0
    %5472 = vmatpush1.msra.mxu0 0.0
    %5473 = vmatprep.subr.mxu0 0.0
    %5474 = vmatpush1.msra.mxu0 0.0
    %5475 = vmatprep.subr.mxu0 0.0
    %5476 = vmatpush1.msra.mxu0 0.0
    %5477 = vmatprep.subr.mxu0 0.0
    %5478 = vmatpush1.msra.mxu0 0.0
    %5479 = vmatprep.subr.mxu0 0.0
    %5480 = vmatpush1.msra.mxu0 0.0
    %5481 = vmatprep.subr.mxu0 0.0
    %5482 = vmatpush1.msra.mxu0 0.0
    %5483 = vmatprep.subr.mxu0 0.0
    %5484 = vmatpush1.msra.mxu0 0.0
    %5485 = vmatprep.subr.mxu0 0.0
    %5486 = vmatpush1.msra.mxu0 0.0
    %5487 = vmatprep.subr.mxu0 0.0
    %5488 = vmatpush1.msra.mxu0 0.0
    %5489 = vmatprep.subr.mxu0 0.0
    %5490 = vmatpush1.msra.mxu0 0.0
    %5491 = vmatprep.subr.mxu0 0.0
    %5492 = vmatpush1.msra.mxu0 %v3861
    %5493 = vmatprep.subr.mxu0 0.0
    %5494 = vmatpush1.msra.mxu0 %v3860
    %5495 = vmatprep.subr.mxu0 0.0
    %5496 = vmatpush1.msra.mxu0 %v3859
    %5497 = vmatprep.subr.mxu0 0.0
    %5498 = vmatpush1.msra.mxu0 %v3858
    %5499 = vmatprep.subr.mxu0 0.0
    %5500 = vmatpush2.msra.mxu0 0.0
    %5501 = vmatprep.subr.mxu0 0.0
    %5502 = vmatpush2.msra.mxu0 0.0
    %5503 = vmatprep.subr.mxu0 0.0
    %5504 = vmatpush2.msra.mxu0 0.0
    %5505 = vmatprep.subr.mxu0 0.0
    %5506 = vmatpush2.msra.mxu0 0.0
    %5507 = vmatprep.subr.mxu0 0.0
    %5508 = vmatpush2.msra.mxu0 0.0
    %5509 = vmatprep.subr.mxu0 0.0
    %5510 = vmatpush2.msra.mxu0 0.0
    %5511 = vmatprep.subr.mxu0 0.0
    %5512 = vmatpush2.msra.mxu0 0.0
    %5513 = vmatprep.subr.mxu0 0.0
    %5514 = vmatpush2.msra.mxu0 0.0
    %5515 = vmatprep.subr.mxu0 0.0
    %5516 = vmatpush2.msra.mxu0 0.0
    %5517 = vmatprep.subr.mxu0 0.0
    %5518 = vmatpush2.msra.mxu0 0.0
    %5519 = vmatprep.subr.mxu0 0.0
    %5520 = vmatpush2.msra.mxu0 0.0
    %5521 = vmatprep.subr.mxu0 0.0
    %5522 = vmatpush2.msra.mxu0 0.0
    %5523 = vmatprep.subr.mxu0 0.0
    %5524 = vmatpush2.msra.mxu0 0.0
    %5525 = vmatprep.subr.mxu0 0.0
    %5526 = vmatpush2.msra.mxu0 0.0
    %5527 = vmatprep.subr.mxu0 0.0
    %5528 = vmatpush2.msra.mxu0 0.0
    %5529 = vmatprep.subr.mxu0 0.0
    %5530 = vmatpush2.msra.mxu0 0.0
    %5531 = vmatprep.mubr.f32.mxu0 0.0
    %5532 = vmatmul.mubr.f32.gmra.mxu0 %v5084
    %v5533 = vpop.f32.mrf.mxu0
    %v5534 = vadd.f32 %v4445, %v5533
    %v5535 = vpop.f32.mrf.mxu0
    %5536 = vmatprep.mubr.f32.mxu0 0.0
    %5537 = vmatmul.mubr.f32.gmra.mxu0 %v5087
    %v5538 = vpop.f32.mrf.mxu0
    %v5539 = vadd.f32 %v4450, %v5538
    %v5540 = vpop.f32.mrf.mxu0
    %5541 = vmatprep.mubr.f32.mxu0 0.0
    %5542 = vmatmul.mubr.f32.gmra.mxu0 %v5090
    %v5543 = vpop.f32.mrf.mxu0
    %v5544 = vadd.f32 %v4455, %v5543
    %v5545 = vpop.f32.mrf.mxu0
    %5546 = vmatprep.mubr.f32.mxu0 0.0
    %5547 = vmatmul.mubr.f32.gmra.mxu0 %v5093
    %v5548 = vpop.f32.mrf.mxu0
    %v5549 = vadd.f32 %v4460, %v5548
    %v5550 = vpop.f32.mrf.mxu0
    %5551 = vmatprep.mubr.f32.mxu0 0.0
    %5552 = vmatmul.mubr.f32.gmra.mxu0 %v5096
    %v5553 = vpop.f32.mrf.mxu0
    %v5554 = vadd.f32 %v4465, %v5553
    %v5555 = vpop.f32.mrf.mxu0
    %5556 = vmatprep.mubr.f32.mxu0 0.0
    %5557 = vmatmul.mubr.f32.gmra.mxu0 %v5099
    %v5558 = vpop.f32.mrf.mxu0
    %v5559 = vadd.f32 %v4470, %v5558
    %v5560 = vpop.f32.mrf.mxu0
    %5561 = vmatprep.mubr.f32.mxu0 0.0
    %5562 = vmatmul.mubr.f32.gmra.mxu0 %v5102
    %v5563 = vpop.f32.mrf.mxu0
    %v5564 = vadd.f32 %v4475, %v5563
    %v5565 = vpop.f32.mrf.mxu0
    %5566 = vmatprep.mubr.f32.mxu0 0.0
    %5567 = vmatmul.mubr.f32.gmra.mxu0 %v5105
    %v5568 = vpop.f32.mrf.mxu0
    %v5569 = vadd.f32 %v4480, %v5568
    %v5570 = vpop.f32.mrf.mxu0
    %5571 = vmatprep.mubr.f32.mxu0 0.0
    %5572 = vmatmul.mubr.f32.gmra.mxu0 %v5108
    %v5573 = vpop.f32.mrf.mxu0
    %v5574 = vadd.f32 %v4485, %v5573
    %v5575 = vpop.f32.mrf.mxu0
    %5576 = vmatprep.mubr.f32.mxu0 0.0
    %5577 = vmatmul.mubr.f32.gmra.mxu0 %v5111
    %v5578 = vpop.f32.mrf.mxu0
    %v5579 = vadd.f32 %v4490, %v5578
    %v5580 = vpop.f32.mrf.mxu0
    %5581 = vmatprep.mubr.f32.mxu0 0.0
    %5582 = vmatmul.mubr.f32.gmra.mxu0 %v5114
    %v5583 = vpop.f32.mrf.mxu0
    %v5584 = vadd.f32 %v4495, %v5583
    %v5585 = vpop.f32.mrf.mxu0
    %5586 = vmatprep.mubr.f32.mxu0 0.0
    %5587 = vmatmul.mubr.f32.gmra.mxu0 %v5117
    %v5588 = vpop.f32.mrf.mxu0
    %v5589 = vadd.f32 %v4500, %v5588
    %v5590 = vpop.f32.mrf.mxu0
    %5591 = vmatprep.mubr.f32.mxu0 0.0
    %5592 = vmatmul.mubr.f32.gmra.mxu0 %v5120
    %v5593 = vpop.f32.mrf.mxu0
    %v5594 = vadd.f32 %v4505, %v5593
    %v5595 = vpop.f32.mrf.mxu0
    %5596 = vmatprep.mubr.f32.mxu0 0.0
    %5597 = vmatmul.mubr.f32.gmra.mxu0 %v5123
    %v5598 = vpop.f32.mrf.mxu0
    %v5599 = vadd.f32 %v4510, %v5598
    %v5600 = vpop.f32.mrf.mxu0
    %5601 = vmatprep.mubr.f32.mxu0 0.0
    %5602 = vmatmul.mubr.f32.gmra.mxu0 %v5126
    %v5603 = vpop.f32.mrf.mxu0
    %v5604 = vadd.f32 %v4515, %v5603
    %v5605 = vpop.f32.mrf.mxu0
    %5606 = vmatprep.mubr.f32.mxu0 0.0
    %5607 = vmatmul.mubr.f32.gmra.mxu0 %v5129
    %v5608 = vpop.f32.mrf.mxu0
    %v5609 = vadd.f32 %v4520, %v5608
    %v5610 = vpop.f32.mrf.mxu0
    %5611 = vmatprep.mubr.f32.mxu0 0.0
    %5612 = vmatmul.mubr.f32.gmra.mxu0 %v5132
    %v5613 = vpop.f32.mrf.mxu0
    %v5614 = vadd.f32 %v4525, %v5613
    %v5615 = vpop.f32.mrf.mxu0
    %5616 = vmatprep.mubr.f32.mxu0 0.0
    %5617 = vmatmul.mubr.f32.gmra.mxu0 %v5135
    %v5618 = vpop.f32.mrf.mxu0
    %v5619 = vadd.f32 %v4530, %v5618
    %v5620 = vpop.f32.mrf.mxu0
    %5621 = vmatprep.mubr.f32.mxu0 0.0
    %5622 = vmatmul.mubr.f32.gmra.mxu0 %v5138
    %v5623 = vpop.f32.mrf.mxu0
    %v5624 = vadd.f32 %v4535, %v5623
    %v5625 = vpop.f32.mrf.mxu0
    %5626 = vmatprep.mubr.f32.mxu0 0.0
    %5627 = vmatmul.mubr.f32.gmra.mxu0 %v5141
    %v5628 = vpop.f32.mrf.mxu0
    %v5629 = vadd.f32 %v4540, %v5628
    %v5630 = vpop.f32.mrf.mxu0
    %5631 = vmatprep.mubr.f32.mxu0 0.0
    %5632 = vmatmul.mubr.f32.gmra.mxu0 %v5144
    %v5633 = vpop.f32.mrf.mxu0
    %v5634 = vadd.f32 %v4545, %v5633
    %v5635 = vpop.f32.mrf.mxu0
    %5636 = vmatprep.mubr.f32.mxu0 0.0
    %5637 = vmatmul.mubr.f32.gmra.mxu0 %v5147
    %v5638 = vpop.f32.mrf.mxu0
    %v5639 = vadd.f32 %v4550, %v5638
    %v5640 = vpop.f32.mrf.mxu0
    %5641 = vmatprep.mubr.f32.mxu0 0.0
    %5642 = vmatmul.mubr.f32.gmra.mxu0 %v5150
    %v5643 = vpop.f32.mrf.mxu0
    %v5644 = vadd.f32 %v4555, %v5643
    %v5645 = vpop.f32.mrf.mxu0
    %5646 = vmatprep.mubr.f32.mxu0 0.0
    %5647 = vmatmul.mubr.f32.gmra.mxu0 %v5153
    %v5648 = vpop.f32.mrf.mxu0
    %v5649 = vadd.f32 %v4560, %v5648
    %v5650 = vpop.f32.mrf.mxu0
    %5651 = vmatprep.mubr.f32.mxu0 0.0
    %5652 = vmatmul.mubr.f32.gmra.mxu0 %v5156
    %v5653 = vpop.f32.mrf.mxu0
    %v5654 = vadd.f32 %v4565, %v5653
    %v5655 = vpop.f32.mrf.mxu0
    %5656 = vmatprep.mubr.f32.mxu0 0.0
    %5657 = vmatmul.mubr.f32.gmra.mxu0 %v5159
    %v5658 = vpop.f32.mrf.mxu0
    %v5659 = vadd.f32 %v4570, %v5658
    %v5660 = vpop.f32.mrf.mxu0
    %5661 = vmatprep.mubr.f32.mxu0 0.0
    %5662 = vmatmul.mubr.f32.gmra.mxu0 %v5162
    %v5663 = vpop.f32.mrf.mxu0
    %v5664 = vadd.f32 %v4575, %v5663
    %v5665 = vpop.f32.mrf.mxu0
    %5666 = vmatprep.mubr.f32.mxu0 0.0
    %5667 = vmatmul.mubr.f32.gmra.mxu0 %v5165
    %v5668 = vpop.f32.mrf.mxu0
    %v5669 = vadd.f32 %v4580, %v5668
    %v5670 = vpop.f32.mrf.mxu0
    %5671 = vmatprep.mubr.f32.mxu0 0.0
    %5672 = vmatmul.mubr.f32.gmra.mxu0 %v5168
    %v5673 = vpop.f32.mrf.mxu0
    %v5674 = vadd.f32 %v4585, %v5673
    %v5675 = vpop.f32.mrf.mxu0
    %5676 = vmatprep.mubr.f32.mxu0 0.0
    %5677 = vmatmul.mubr.f32.gmra.mxu0 %v5171
    %v5678 = vpop.f32.mrf.mxu0
    %v5679 = vadd.f32 %v4590, %v5678
    %v5680 = vpop.f32.mrf.mxu0
    %5681 = vmatprep.mubr.f32.mxu0 0.0
    %5682 = vmatmul.mubr.f32.gmra.mxu0 %v5174
    %v5683 = vpop.f32.mrf.mxu0
    %v5684 = vadd.f32 %v4595, %v5683
    %v5685 = vpop.f32.mrf.mxu0
    %5686 = vmatprep.mubr.f32.mxu0 0.0
    %5687 = vmatmul.mubr.f32.gmra.mxu0 %v5177
    %v5688 = vpop.f32.mrf.mxu0
    %v5689 = vadd.f32 %v4600, %v5688
    %v5690 = vpop.f32.mrf.mxu0
    %5691 = vmatprep.mubr.f32.mxu0 0.0
    %5692 = vmatmul.mubr.f32.gmra.mxu0 %v5180
    %v5693 = vpop.f32.mrf.mxu0
    %v5694 = vadd.f32 %v4605, %v5693
    %v5695 = vpop.f32.mrf.mxu0
    %5696 = vmatprep.mubr.f32.mxu0 0.0
    %5697 = vmatmul.mubr.f32.gmra.mxu0 %v5183
    %v5698 = vpop.f32.mrf.mxu0
    %v5699 = vadd.f32 %v4610, %v5698
    %v5700 = vpop.f32.mrf.mxu0
    %5701 = vmatprep.mubr.f32.mxu0 0.0
    %5702 = vmatmul.mubr.f32.gmra.mxu0 %v5186
    %v5703 = vpop.f32.mrf.mxu0
    %v5704 = vadd.f32 %v4615, %v5703
    %v5705 = vpop.f32.mrf.mxu0
    %5706 = vmatprep.mubr.f32.mxu0 0.0
    %5707 = vmatmul.mubr.f32.gmra.mxu0 %v5189
    %v5708 = vpop.f32.mrf.mxu0
    %v5709 = vadd.f32 %v4620, %v5708
    %v5710 = vpop.f32.mrf.mxu0
    %5711 = vmatprep.mubr.f32.mxu0 0.0
    %5712 = vmatmul.mubr.f32.gmra.mxu0 %v5192
    %v5713 = vpop.f32.mrf.mxu0
    %v5714 = vadd.f32 %v4625, %v5713
    %v5715 = vpop.f32.mrf.mxu0
    %5716 = vmatprep.mubr.f32.mxu0 0.0
    %5717 = vmatmul.mubr.f32.gmra.mxu0 %v5195
    %v5718 = vpop.f32.mrf.mxu0
    %v5719 = vadd.f32 %v4630, %v5718
    %v5720 = vpop.f32.mrf.mxu0
    %5721 = vmatprep.mubr.f32.mxu0 0.0
    %5722 = vmatmul.mubr.f32.gmra.mxu0 %v5198
    %v5723 = vpop.f32.mrf.mxu0
    %v5724 = vadd.f32 %v4635, %v5723
    %v5725 = vpop.f32.mrf.mxu0
    %5726 = vmatprep.mubr.f32.mxu0 0.0
    %5727 = vmatmul.mubr.f32.gmra.mxu0 %v5201
    %v5728 = vpop.f32.mrf.mxu0
    %v5729 = vadd.f32 %v4640, %v5728
    %v5730 = vpop.f32.mrf.mxu0
    %5731 = vmatprep.mubr.f32.mxu0 0.0
    %5732 = vmatmul.mubr.f32.gmra.mxu0 %v5204
    %v5733 = vpop.f32.mrf.mxu0
    %v5734 = vadd.f32 %v4645, %v5733
    %v5735 = vpop.f32.mrf.mxu0
    %5736 = vmatprep.mubr.f32.mxu0 0.0
    %5737 = vmatmul.mubr.f32.gmra.mxu0 %v5207
    %v5738 = vpop.f32.mrf.mxu0
    %v5739 = vadd.f32 %v4650, %v5738
    %v5740 = vpop.f32.mrf.mxu0
    %5741 = vmatprep.mubr.f32.mxu0 0.0
    %5742 = vmatmul.mubr.f32.gmra.mxu0 %v5210
    %v5743 = vpop.f32.mrf.mxu0
    %v5744 = vadd.f32 %v4655, %v5743
    %v5745 = vpop.f32.mrf.mxu0
    %5746 = vmatprep.mubr.f32.mxu0 0.0
    %5747 = vmatmul.mubr.f32.gmra.mxu0 %v5213
    %v5748 = vpop.f32.mrf.mxu0
    %v5749 = vadd.f32 %v4660, %v5748
    %v5750 = vpop.f32.mrf.mxu0
    %5751 = vmatprep.mubr.f32.mxu0 0.0
    %5752 = vmatmul.mubr.f32.gmra.mxu0 %v5216
    %v5753 = vpop.f32.mrf.mxu0
    %v5754 = vadd.f32 %v4665, %v5753
    %v5755 = vpop.f32.mrf.mxu0
    %5756 = vmatprep.mubr.f32.mxu0 0.0
    %5757 = vmatmul.mubr.f32.gmra.mxu0 %v5219
    %v5758 = vpop.f32.mrf.mxu0
    %v5759 = vadd.f32 %v4670, %v5758
    %v5760 = vpop.f32.mrf.mxu0
    %5761 = vmatprep.mubr.f32.mxu0 0.0
    %5762 = vmatmul.mubr.f32.gmra.mxu0 %v5222
    %v5763 = vpop.f32.mrf.mxu0
    %v5764 = vadd.f32 %v4675, %v5763
    %v5765 = vpop.f32.mrf.mxu0
    %5766 = vmatprep.mubr.f32.mxu0 0.0
    %5767 = vmatmul.mubr.f32.gmra.mxu0 %v5225
    %v5768 = vpop.f32.mrf.mxu0
    %v5769 = vadd.f32 %v4680, %v5768
    %v5770 = vpop.f32.mrf.mxu0
    %5771 = vmatprep.mubr.f32.mxu0 0.0
    %5772 = vmatmul.mubr.f32.gmra.mxu0 %v5228
    %v5773 = vpop.f32.mrf.mxu0
    %v5774 = vadd.f32 %v4685, %v5773
    %v5775 = vpop.f32.mrf.mxu0
    %5776 = vmatprep.mubr.f32.mxu0 0.0
    %5777 = vmatmul.mubr.f32.gmra.mxu0 %v5231
    %v5778 = vpop.f32.mrf.mxu0
    %v5779 = vadd.f32 %v4690, %v5778
    %v5780 = vpop.f32.mrf.mxu0
    %5781 = vmatprep.mubr.f32.mxu0 0.0
    %5782 = vmatmul.mubr.f32.gmra.mxu0 %v5234
    %v5783 = vpop.f32.mrf.mxu0
    %v5784 = vadd.f32 %v4695, %v5783
    %v5785 = vpop.f32.mrf.mxu0
    %5786 = vmatprep.mubr.f32.mxu0 0.0
    %5787 = vmatmul.mubr.f32.gmra.mxu0 %v5237
    %v5788 = vpop.f32.mrf.mxu0
    %v5789 = vadd.f32 %v4700, %v5788
    %v5790 = vpop.f32.mrf.mxu0
    %5791 = vmatprep.mubr.f32.mxu0 0.0
    %5792 = vmatmul.mubr.f32.gmra.mxu0 %v5240
    %v5793 = vpop.f32.mrf.mxu0
    %v5794 = vadd.f32 %v4705, %v5793
    %v5795 = vpop.f32.mrf.mxu0
    %5796 = vmatprep.mubr.f32.mxu0 0.0
    %5797 = vmatmul.mubr.f32.gmra.mxu0 %v5243
    %v5798 = vpop.f32.mrf.mxu0
    %v5799 = vadd.f32 %v4710, %v5798
    %v5800 = vpop.f32.mrf.mxu0
    %5801 = vmatprep.mubr.f32.mxu0 0.0
    %5802 = vmatmul.mubr.f32.gmra.mxu0 %v5246
    %v5803 = vpop.f32.mrf.mxu0
    %v5804 = vadd.f32 %v4715, %v5803
    %v5805 = vpop.f32.mrf.mxu0
    %5806 = vmatprep.mubr.f32.mxu0 0.0
    %5807 = vmatmul.mubr.f32.gmra.mxu0 %v5249
    %v5808 = vpop.f32.mrf.mxu0
    %v5809 = vadd.f32 %v4720, %v5808
    %v5810 = vpop.f32.mrf.mxu0
    %5811 = vmatprep.mubr.f32.mxu0 0.0
    %5812 = vmatmul.mubr.f32.gmra.mxu0 %v5252
    %v5813 = vpop.f32.mrf.mxu0
    %v5814 = vadd.f32 %v4725, %v5813
    %v5815 = vpop.f32.mrf.mxu0
    %5816 = vmatprep.mubr.f32.mxu0 0.0
    %5817 = vmatmul.mubr.f32.gmra.mxu0 %v5255
    %v5818 = vpop.f32.mrf.mxu0
    %v5819 = vadd.f32 %v4730, %v5818
    %v5820 = vpop.f32.mrf.mxu0
    %5821 = vmatprep.mubr.f32.mxu0 0.0
    %5822 = vmatmul.mubr.f32.gmra.mxu0 %v5258
    %v5823 = vpop.f32.mrf.mxu0
    %v5824 = vadd.f32 %v4735, %v5823
    %v5825 = vpop.f32.mrf.mxu0
    %5826 = vmatprep.mubr.f32.mxu0 0.0
    %5827 = vmatmul.mubr.f32.gmra.mxu0 %v5261
    %v5828 = vpop.f32.mrf.mxu0
    %v5829 = vadd.f32 %v4740, %v5828
    %v5830 = vpop.f32.mrf.mxu0
    %5831 = vmatprep.mubr.f32.mxu0 0.0
    %5832 = vmatmul.mubr.f32.gmra.mxu0 %v5264
    %v5833 = vpop.f32.mrf.mxu0
    %v5834 = vadd.f32 %v4745, %v5833
    %v5835 = vpop.f32.mrf.mxu0
    %5836 = vmatprep.mubr.f32.mxu0 0.0
    %5837 = vmatmul.mubr.f32.gmra.mxu0 %v5267
    %v5838 = vpop.f32.mrf.mxu0
    %v5839 = vadd.f32 %v4750, %v5838
    %v5840 = vpop.f32.mrf.mxu0
    %5841 = vmatprep.mubr.f32.mxu0 0.0
    %5842 = vmatmul.mubr.f32.gmra.mxu0 %v5270
    %v5843 = vpop.f32.mrf.mxu0
    %v5844 = vadd.f32 %v4755, %v5843
    %v5845 = vpop.f32.mrf.mxu0
    %5846 = vmatprep.mubr.f32.mxu0 0.0
    %5847 = vmatmul.mubr.f32.gmra.mxu0 %v5273
    %v5848 = vpop.f32.mrf.mxu0
    %v5849 = vadd.f32 %v4760, %v5848
    %v5850 = vpop.f32.mrf.mxu0
    %5851 = vmatprep.mubr.f32.mxu0 0.0
    %5852 = vmatmul.mubr.f32.gmra.mxu0 %v5276
    %v5853 = vpop.f32.mrf.mxu0
    %v5854 = vadd.f32 %v4765, %v5853
    %v5855 = vpop.f32.mrf.mxu0
    %5856 = vmatprep.mubr.f32.mxu0 0.0
    %5857 = vmatmul.mubr.f32.gmra.mxu0 %v5279
    %v5858 = vpop.f32.mrf.mxu0
    %v5859 = vadd.f32 %v4770, %v5858
    %v5860 = vpop.f32.mrf.mxu0
    %5861 = vmatprep.mubr.f32.mxu0 0.0
    %5862 = vmatmul.mubr.f32.gmra.mxu0 %v5282
    %v5863 = vpop.f32.mrf.mxu0
    %v5864 = vadd.f32 %v4775, %v5863
    %v5865 = vpop.f32.mrf.mxu0
    %5866 = vmatprep.mubr.f32.mxu0 0.0
    %5867 = vmatmul.mubr.f32.gmra.mxu0 %v5285
    %v5868 = vpop.f32.mrf.mxu0
    %v5869 = vadd.f32 %v4780, %v5868
    %v5870 = vpop.f32.mrf.mxu0
    %5871 = vmatprep.mubr.f32.mxu0 0.0
    %5872 = vmatmul.mubr.f32.gmra.mxu0 %v5288
    %v5873 = vpop.f32.mrf.mxu0
    %v5874 = vadd.f32 %v4785, %v5873
    %v5875 = vpop.f32.mrf.mxu0
    %5876 = vmatprep.mubr.f32.mxu0 0.0
    %5877 = vmatmul.mubr.f32.gmra.mxu0 %v5291
    %v5878 = vpop.f32.mrf.mxu0
    %v5879 = vadd.f32 %v4790, %v5878
    %v5880 = vpop.f32.mrf.mxu0
    %5881 = vmatprep.mubr.f32.mxu0 0.0
    %5882 = vmatmul.mubr.f32.gmra.mxu0 %v5294
    %v5883 = vpop.f32.mrf.mxu0
    %v5884 = vadd.f32 %v4795, %v5883
    %v5885 = vpop.f32.mrf.mxu0
    %5886 = vmatprep.mubr.f32.mxu0 0.0
    %5887 = vmatmul.mubr.f32.gmra.mxu0 %v5297
    %v5888 = vpop.f32.mrf.mxu0
    %v5889 = vadd.f32 %v4800, %v5888
    %v5890 = vpop.f32.mrf.mxu0
    %5891 = vmatprep.mubr.f32.mxu0 0.0
    %5892 = vmatmul.mubr.f32.gmra.mxu0 %v5300
    %v5893 = vpop.f32.mrf.mxu0
    %v5894 = vadd.f32 %v4805, %v5893
    %v5895 = vpop.f32.mrf.mxu0
    %5896 = vmatprep.mubr.f32.mxu0 0.0
    %5897 = vmatmul.mubr.f32.gmra.mxu0 %v5303
    %v5898 = vpop.f32.mrf.mxu0
    %v5899 = vadd.f32 %v4810, %v5898
    %v5900 = vpop.f32.mrf.mxu0
    %5901 = vmatprep.mubr.f32.mxu0 0.0
    %5902 = vmatmul.mubr.f32.gmra.mxu0 %v5306
    %v5903 = vpop.f32.mrf.mxu0
    %v5904 = vadd.f32 %v4815, %v5903
    %v5905 = vpop.f32.mrf.mxu0
    %5906 = vmatprep.mubr.f32.mxu0 0.0
    %5907 = vmatmul.mubr.f32.gmra.mxu0 %v5309
    %v5908 = vpop.f32.mrf.mxu0
    %v5909 = vadd.f32 %v4820, %v5908
    %v5910 = vpop.f32.mrf.mxu0
    %5911 = vmatprep.mubr.f32.mxu0 0.0
    %5912 = vmatmul.mubr.f32.gmra.mxu0 %v5312
    %v5913 = vpop.f32.mrf.mxu0
    %v5914 = vadd.f32 %v4825, %v5913
    %v5915 = vpop.f32.mrf.mxu0
    %5916 = vmatprep.mubr.f32.mxu0 0.0
    %5917 = vmatmul.mubr.f32.gmra.mxu0 %v5315
    %v5918 = vpop.f32.mrf.mxu0
    %v5919 = vadd.f32 %v4830, %v5918
    %v5920 = vpop.f32.mrf.mxu0
    %5921 = vmatprep.mubr.f32.mxu0 0.0
    %5922 = vmatmul.mubr.f32.gmra.mxu0 %v5318
    %v5923 = vpop.f32.mrf.mxu0
    %v5924 = vadd.f32 %v4835, %v5923
    %v5925 = vpop.f32.mrf.mxu0
    %5926 = vmatprep.mubr.f32.mxu0 0.0
    %5927 = vmatmul.mubr.f32.gmra.mxu0 %v5321
    %v5928 = vpop.f32.mrf.mxu0
    %v5929 = vadd.f32 %v4840, %v5928
    %v5930 = vpop.f32.mrf.mxu0
    %5931 = vmatprep.mubr.f32.mxu0 0.0
    %5932 = vmatmul.mubr.f32.gmra.mxu0 %v5324
    %v5933 = vpop.f32.mrf.mxu0
    %v5934 = vadd.f32 %v4845, %v5933
    %v5935 = vpop.f32.mrf.mxu0
    %5936 = vmatprep.mubr.f32.mxu0 0.0
    %5937 = vmatmul.mubr.f32.gmra.mxu0 %v5327
    %v5938 = vpop.f32.mrf.mxu0
    %v5939 = vadd.f32 %v4850, %v5938
    %v5940 = vpop.f32.mrf.mxu0
    %5941 = vmatprep.mubr.f32.mxu0 0.0
    %5942 = vmatmul.mubr.f32.gmra.mxu0 %v5330
    %v5943 = vpop.f32.mrf.mxu0
    %v5944 = vadd.f32 %v4855, %v5943
    %v5945 = vpop.f32.mrf.mxu0
    %5946 = vmatprep.mubr.f32.mxu0 0.0
    %5947 = vmatmul.mubr.f32.gmra.mxu0 %v5333
    %v5948 = vpop.f32.mrf.mxu0
    %v5949 = vadd.f32 %v4860, %v5948
    %v5950 = vpop.f32.mrf.mxu0
    %5951 = vmatprep.mubr.f32.mxu0 0.0
    %5952 = vmatmul.mubr.f32.gmra.mxu0 %v5336
    %v5953 = vpop.f32.mrf.mxu0
    %v5954 = vadd.f32 %v4865, %v5953
    %v5955 = vpop.f32.mrf.mxu0
    %5956 = vmatprep.mubr.f32.mxu0 0.0
    %5957 = vmatmul.mubr.f32.gmra.mxu0 %v5339
    %v5958 = vpop.f32.mrf.mxu0
    %v5959 = vadd.f32 %v4870, %v5958
    %v5960 = vpop.f32.mrf.mxu0
    %5961 = vmatprep.mubr.f32.mxu0 0.0
    %5962 = vmatmul.mubr.f32.gmra.mxu0 %v5342
    %v5963 = vpop.f32.mrf.mxu0
    %v5964 = vadd.f32 %v4875, %v5963
    %v5965 = vpop.f32.mrf.mxu0
    %5966 = vmatprep.mubr.f32.mxu0 0.0
    %5967 = vmatmul.mubr.f32.gmra.mxu0 %v5345
    %v5968 = vpop.f32.mrf.mxu0
    %v5969 = vadd.f32 %v4880, %v5968
    %v5970 = vpop.f32.mrf.mxu0
    %5971 = vmatprep.mubr.f32.mxu0 0.0
    %5972 = vmatmul.mubr.f32.gmra.mxu0 %v5348
    %v5973 = vpop.f32.mrf.mxu0
    %v5974 = vadd.f32 %v4885, %v5973
    %v5975 = vpop.f32.mrf.mxu0
    %5976 = vmatprep.mubr.f32.mxu0 0.0
    %5977 = vmatmul.mubr.f32.gmra.mxu0 %v5351
    %v5978 = vpop.f32.mrf.mxu0
    %v5979 = vadd.f32 %v4890, %v5978
    %v5980 = vpop.f32.mrf.mxu0
    %5981 = vmatprep.mubr.f32.mxu0 0.0
    %5982 = vmatmul.mubr.f32.gmra.mxu0 %v5354
    %v5983 = vpop.f32.mrf.mxu0
    %v5984 = vadd.f32 %v4895, %v5983
    %v5985 = vpop.f32.mrf.mxu0
    %5986 = vmatprep.mubr.f32.mxu0 0.0
    %5987 = vmatmul.mubr.f32.gmra.mxu0 %v5357
    %v5988 = vpop.f32.mrf.mxu0
    %v5989 = vadd.f32 %v4900, %v5988
    %v5990 = vpop.f32.mrf.mxu0
    %5991 = vmatprep.mubr.f32.mxu0 0.0
    %5992 = vmatmul.mubr.f32.gmra.mxu0 %v5360
    %v5993 = vpop.f32.mrf.mxu0
    %v5994 = vadd.f32 %v4905, %v5993
    %v5995 = vpop.f32.mrf.mxu0
    %5996 = vmatprep.mubr.f32.mxu0 0.0
    %5997 = vmatmul.mubr.f32.gmra.mxu0 %v5363
    %v5998 = vpop.f32.mrf.mxu0
    %v5999 = vadd.f32 %v4910, %v5998
    %v6000 = vpop.f32.mrf.mxu0
    %6001 = vmatprep.mubr.f32.mxu0 0.0
    %6002 = vmatmul.mubr.f32.gmra.mxu0 %v5366
    %v6003 = vpop.f32.mrf.mxu0
    %v6004 = vadd.f32 %v4915, %v6003
    %v6005 = vpop.f32.mrf.mxu0
    %6006 = vmatprep.mubr.f32.mxu0 0.0
    %6007 = vmatmul.mubr.f32.gmra.mxu0 %v5369
    %v6008 = vpop.f32.mrf.mxu0
    %v6009 = vadd.f32 %v4920, %v6008
    %v6010 = vpop.f32.mrf.mxu0
    %6011 = vmatprep.mubr.f32.mxu0 0.0
    %6012 = vmatmul.mubr.f32.gmra.mxu0 %v5372
    %v6013 = vpop.f32.mrf.mxu0
    %v6014 = vadd.f32 %v4925, %v6013
    %v6015 = vpop.f32.mrf.mxu0
    %6016 = vmatprep.mubr.f32.mxu0 0.0
    %6017 = vmatmul.mubr.f32.gmra.mxu0 %v5375
    %v6018 = vpop.f32.mrf.mxu0
    %v6019 = vadd.f32 %v4930, %v6018
    %v6020 = vpop.f32.mrf.mxu0
    %6021 = vmatprep.mubr.f32.mxu0 0.0
    %6022 = vmatmul.mubr.f32.gmra.mxu0 %v5378
    %v6023 = vpop.f32.mrf.mxu0
    %v6024 = vadd.f32 %v4935, %v6023
    %v6025 = vpop.f32.mrf.mxu0
    %6026 = vmatprep.mubr.f32.mxu0 0.0
    %6027 = vmatmul.mubr.f32.gmra.mxu0 %v5381
    %v6028 = vpop.f32.mrf.mxu0
    %v6029 = vadd.f32 %v4940, %v6028
    %v6030 = vpop.f32.mrf.mxu0
    %6031 = vmatprep.mubr.f32.mxu0 0.0
    %6032 = vmatmul.mubr.f32.gmra.mxu0 %v5384
    %v6033 = vpop.f32.mrf.mxu0
    %v6034 = vadd.f32 %v4945, %v6033
    %v6035 = vpop.f32.mrf.mxu0
    %6036 = vmatprep.mubr.f32.mxu0 0.0
    %6037 = vmatmul.mubr.f32.gmra.mxu0 %v5387
    %v6038 = vpop.f32.mrf.mxu0
    %v6039 = vadd.f32 %v4950, %v6038
    %v6040 = vpop.f32.mrf.mxu0
    %6041 = vmatprep.mubr.f32.mxu0 0.0
    %6042 = vmatmul.mubr.f32.gmra.mxu0 %v5390
    %v6043 = vpop.f32.mrf.mxu0
    %v6044 = vadd.f32 %v4955, %v6043
    %v6045 = vpop.f32.mrf.mxu0
    %6046 = vmatprep.mubr.f32.mxu0 0.0
    %6047 = vmatmul.mubr.f32.gmra.mxu0 %v5393
    %v6048 = vpop.f32.mrf.mxu0
    %v6049 = vadd.f32 %v4960, %v6048
    %v6050 = vpop.f32.mrf.mxu0
    %6051 = vmatprep.mubr.f32.mxu0 0.0
    %6052 = vmatmul.mubr.f32.gmra.mxu0 %v5396
    %v6053 = vpop.f32.mrf.mxu0
    %v6054 = vadd.f32 %v4965, %v6053
    %v6055 = vpop.f32.mrf.mxu0
    %6056 = vmatprep.mubr.f32.mxu0 0.0
    %6057 = vmatmul.mubr.f32.gmra.mxu0 %v5399
    %v6058 = vpop.f32.mrf.mxu0
    %v6059 = vadd.f32 %v4970, %v6058
    %v6060 = vpop.f32.mrf.mxu0
    %6061 = vmatprep.mubr.f32.mxu0 0.0
    %6062 = vmatmul.mubr.f32.gmra.mxu0 %v5402
    %v6063 = vpop.f32.mrf.mxu0
    %v6064 = vadd.f32 %v4975, %v6063
    %v6065 = vpop.f32.mrf.mxu0
    %6066 = vmatprep.mubr.f32.mxu0 0.0
    %6067 = vmatmul.mubr.f32.gmra.mxu0 %v5405
    %v6068 = vpop.f32.mrf.mxu0
    %v6069 = vadd.f32 %v4980, %v6068
    %v6070 = vpop.f32.mrf.mxu0
    %6071 = vmatprep.mubr.f32.mxu0 0.0
    %6072 = vmatmul.mubr.f32.gmra.mxu0 %v5408
    %v6073 = vpop.f32.mrf.mxu0
    %v6074 = vadd.f32 %v4985, %v6073
    %v6075 = vpop.f32.mrf.mxu0
    %6076 = vmatprep.mubr.f32.mxu0 0.0
    %6077 = vmatmul.mubr.f32.gmra.mxu0 %v5411
    %v6078 = vpop.f32.mrf.mxu0
    %v6079 = vadd.f32 %v4990, %v6078
    %v6080 = vpop.f32.mrf.mxu0
    %6081 = vmatprep.mubr.f32.mxu0 0.0
    %6082 = vmatmul.mubr.f32.gmra.mxu0 %v5414
    %v6083 = vpop.f32.mrf.mxu0
    %v6084 = vadd.f32 %v4995, %v6083
    %v6085 = vpop.f32.mrf.mxu0
    %6086 = vmatprep.mubr.f32.mxu0 0.0
    %6087 = vmatmul.mubr.f32.gmra.mxu0 %v5417
    %v6088 = vpop.f32.mrf.mxu0
    %v6089 = vadd.f32 %v5000, %v6088
    %v6090 = vpop.f32.mrf.mxu0
    %6091 = vmatprep.mubr.f32.mxu0 0.0
    %6092 = vmatmul.mubr.f32.gmra.mxu0 %v5420
    %v6093 = vpop.f32.mrf.mxu0
    %v6094 = vadd.f32 %v5005, %v6093
    %v6095 = vpop.f32.mrf.mxu0
    %6096 = vmatprep.mubr.f32.mxu0 0.0
    %6097 = vmatmul.mubr.f32.gmra.mxu0 %v5423
    %v6098 = vpop.f32.mrf.mxu0
    %v6099 = vadd.f32 %v5010, %v6098
    %v6100 = vpop.f32.mrf.mxu0
    %6101 = vmatprep.mubr.f32.mxu0 0.0
    %6102 = vmatmul.mubr.f32.gmra.mxu0 %v5426
    %v6103 = vpop.f32.mrf.mxu0
    %v6104 = vadd.f32 %v5015, %v6103
    %v6105 = vpop.f32.mrf.mxu0
    %6106 = vmatprep.mubr.f32.mxu0 0.0
    %6107 = vmatmul.mubr.f32.gmra.mxu0 %v5429
    %v6108 = vpop.f32.mrf.mxu0
    %v6109 = vadd.f32 %v5020, %v6108
    %v6110 = vpop.f32.mrf.mxu0
    %6111 = vmatprep.mubr.f32.mxu0 0.0
    %6112 = vmatmul.mubr.f32.gmra.mxu0 %v5432
    %v6113 = vpop.f32.mrf.mxu0
    %v6114 = vadd.f32 %v5025, %v6113
    %v6115 = vpop.f32.mrf.mxu0
    %6116 = vmatprep.mubr.f32.mxu0 0.0
    %6117 = vmatmul.mubr.f32.gmra.mxu0 %v5435
    %v6118 = vpop.f32.mrf.mxu0
    %v6119 = vadd.f32 %v5030, %v6118
    %v6120 = vpop.f32.mrf.mxu0
    %6121 = vmatprep.mubr.f32.mxu0 0.0
    %6122 = vmatmul.mubr.f32.gmra.mxu0 %v5438
    %v6123 = vpop.f32.mrf.mxu0
    %v6124 = vadd.f32 %v5035, %v6123
    %v6125 = vpop.f32.mrf.mxu0
    %6126 = vmatprep.mubr.f32.mxu0 0.0
    %6127 = vmatmul.mubr.f32.gmra.mxu0 %v5441
    %v6128 = vpop.f32.mrf.mxu0
    %v6129 = vadd.f32 %v5040, %v6128
    %v6130 = vpop.f32.mrf.mxu0
    %6131 = vmatprep.mubr.f32.mxu0 0.0
    %6132 = vmatmul.mubr.f32.gmra.mxu0 %v5444
    %v6133 = vpop.f32.mrf.mxu0
    %v6134 = vadd.f32 %v5045, %v6133
    %v6135 = vpop.f32.mrf.mxu0
    %6136 = vmatprep.mubr.f32.mxu0 0.0
    %6137 = vmatmul.mubr.f32.gmra.mxu0 %v5447
    %v6138 = vpop.f32.mrf.mxu0
    %v6139 = vadd.f32 %v5050, %v6138
    %v6140 = vpop.f32.mrf.mxu0
    %6141 = vmatprep.mubr.f32.mxu0 0.0
    %6142 = vmatmul.mubr.f32.gmra.mxu0 %v5450
    %v6143 = vpop.f32.mrf.mxu0
    %v6144 = vadd.f32 %v5055, %v6143
    %v6145 = vpop.f32.mrf.mxu0
    %6146 = vmatprep.mubr.f32.mxu0 0.0
    %6147 = vmatmul.mubr.f32.gmra.mxu0 %v5453
    %v6148 = vpop.f32.mrf.mxu0
    %v6149 = vadd.f32 %v5060, %v6148
    %v6150 = vpop.f32.mrf.mxu0
    %6151 = vmatprep.mubr.f32.mxu0 0.0
    %6152 = vmatmul.mubr.f32.gmra.mxu0 %v5456
    %v6153 = vpop.f32.mrf.mxu0
    %v6154 = vadd.f32 %v5065, %v6153
    %v6155 = vpop.f32.mrf.mxu0
    %6156 = vmatprep.mubr.f32.mxu0 0.0
    %6157 = vmatmul.mubr.f32.gmra.mxu0 %v5459
    %v6158 = vpop.f32.mrf.mxu0
    %v6159 = vadd.f32 %v5070, %v6158
    %v6160 = vpop.f32.mrf.mxu0
    %6161 = vmatprep.mubr.f32.mxu0 0.0
    %6162 = vmatmul.mubr.f32.gmra.mxu0 %v5462
    %v6163 = vpop.f32.mrf.mxu0
    %v6164 = vadd.f32 %v5075, %v6163
    %v6165 = vpop.f32.mrf.mxu0
    %6166 = vmatprep.mubr.f32.mxu0 0.0
    %6167 = vmatmul.mubr.f32.gmra.mxu0 %v5465
    %v6168 = vpop.f32.mrf.mxu0
    %v6169 = vadd.f32 %v5080, %v6168
    %v6170 = vpop.f32.mrf.mxu0
    %6171 = vdwg.mxu0
    %v6173 = vlaneseq
    %v6174 = vshrl.u32 %v6173, 7
    %v6175 = vsub.s32 0, %v6174
    %v6176 = vrot.slane %v3864, %v6175
    %v6178 = vadd.f32 %v5534, %v6176
    %v6179 = vadd.f32 %v5539, %v6176
    %v6180 = vadd.f32 %v5544, %v6176
    %v6181 = vadd.f32 %v5549, %v6176
    %v6182 = vadd.f32 %v5554, %v6176
    %v6183 = vadd.f32 %v5559, %v6176
    %v6184 = vadd.f32 %v5564, %v6176
    %v6185 = vadd.f32 %v5569, %v6176
    %v6186 = vadd.f32 %v5574, %v6176
    %v6187 = vadd.f32 %v5579, %v6176
    %v6188 = vadd.f32 %v5584, %v6176
    %v6189 = vadd.f32 %v5589, %v6176
    %v6190 = vadd.f32 %v5594, %v6176
    %v6191 = vadd.f32 %v5599, %v6176
    %v6192 = vadd.f32 %v5604, %v6176
    %v6193 = vadd.f32 %v5609, %v6176
    %v6194 = vadd.f32 %v5614, %v6176
    %v6195 = vadd.f32 %v5619, %v6176
    %v6196 = vadd.f32 %v5624, %v6176
    %v6197 = vadd.f32 %v5629, %v6176
    %v6198 = vadd.f32 %v5634, %v6176
    %v6199 = vadd.f32 %v5639, %v6176
    %v6200 = vadd.f32 %v5644, %v6176
    %v6201 = vadd.f32 %v5649, %v6176
    %v6202 = vadd.f32 %v5654, %v6176
    %v6203 = vadd.f32 %v5659, %v6176
    %v6204 = vadd.f32 %v5664, %v6176
    %v6205 = vadd.f32 %v5669, %v6176
    %v6206 = vadd.f32 %v5674, %v6176
    %v6207 = vadd.f32 %v5679, %v6176
    %v6208 = vadd.f32 %v5684, %v6176
    %v6209 = vadd.f32 %v5689, %v6176
    %v6210 = vadd.f32 %v5694, %v6176
    %v6211 = vadd.f32 %v5699, %v6176
    %v6212 = vadd.f32 %v5704, %v6176
    %v6213 = vadd.f32 %v5709, %v6176
    %v6214 = vadd.f32 %v5714, %v6176
    %v6215 = vadd.f32 %v5719, %v6176
    %v6216 = vadd.f32 %v5724, %v6176
    %v6217 = vadd.f32 %v5729, %v6176
    %v6218 = vadd.f32 %v5734, %v6176
    %v6219 = vadd.f32 %v5739, %v6176
    %v6220 = vadd.f32 %v5744, %v6176
    %v6221 = vadd.f32 %v5749, %v6176
    %v6222 = vadd.f32 %v5754, %v6176
    %v6223 = vadd.f32 %v5759, %v6176
    %v6224 = vadd.f32 %v5764, %v6176
    %v6225 = vadd.f32 %v5769, %v6176
    %v6226 = vadd.f32 %v5774, %v6176
    %v6227 = vadd.f32 %v5779, %v6176
    %v6228 = vadd.f32 %v5784, %v6176
    %v6229 = vadd.f32 %v5789, %v6176
    %v6230 = vadd.f32 %v5794, %v6176
    %v6231 = vadd.f32 %v5799, %v6176
    %v6232 = vadd.f32 %v5804, %v6176
    %v6233 = vadd.f32 %v5809, %v6176
    %v6234 = vadd.f32 %v5814, %v6176
    %v6235 = vadd.f32 %v5819, %v6176
    %v6236 = vadd.f32 %v5824, %v6176
    %v6237 = vadd.f32 %v5829, %v6176
    %v6238 = vadd.f32 %v5834, %v6176
    %v6239 = vadd.f32 %v5839, %v6176
    %v6240 = vadd.f32 %v5844, %v6176
    %v6241 = vadd.f32 %v5849, %v6176
    %v6242 = vadd.f32 %v5854, %v6176
    %v6243 = vadd.f32 %v5859, %v6176
    %v6244 = vadd.f32 %v5864, %v6176
    %v6245 = vadd.f32 %v5869, %v6176
    %v6246 = vadd.f32 %v5874, %v6176
    %v6247 = vadd.f32 %v5879, %v6176
    %v6248 = vadd.f32 %v5884, %v6176
    %v6249 = vadd.f32 %v5889, %v6176
    %v6250 = vadd.f32 %v5894, %v6176
    %v6251 = vadd.f32 %v5899, %v6176
    %v6252 = vadd.f32 %v5904, %v6176
    %v6253 = vadd.f32 %v5909, %v6176
    %v6254 = vadd.f32 %v5914, %v6176
    %v6255 = vadd.f32 %v5919, %v6176
    %v6256 = vadd.f32 %v5924, %v6176
    %v6257 = vadd.f32 %v5929, %v6176
    %v6258 = vadd.f32 %v5934, %v6176
    %v6259 = vadd.f32 %v5939, %v6176
    %v6260 = vadd.f32 %v5944, %v6176
    %v6261 = vadd.f32 %v5949, %v6176
    %v6262 = vadd.f32 %v5954, %v6176
    %v6263 = vadd.f32 %v5959, %v6176
    %v6264 = vadd.f32 %v5964, %v6176
    %v6265 = vadd.f32 %v5969, %v6176
    %v6266 = vadd.f32 %v5974, %v6176
    %v6267 = vadd.f32 %v5979, %v6176
    %v6268 = vadd.f32 %v5984, %v6176
    %v6269 = vadd.f32 %v5989, %v6176
    %v6270 = vadd.f32 %v5994, %v6176
    %v6271 = vadd.f32 %v5999, %v6176
    %v6272 = vadd.f32 %v6004, %v6176
    %v6273 = vadd.f32 %v6009, %v6176
    %v6274 = vadd.f32 %v6014, %v6176
    %v6275 = vadd.f32 %v6019, %v6176
    %v6276 = vadd.f32 %v6024, %v6176
    %v6277 = vadd.f32 %v6029, %v6176
    %v6278 = vadd.f32 %v6034, %v6176
    %v6279 = vadd.f32 %v6039, %v6176
    %v6280 = vadd.f32 %v6044, %v6176
    %v6281 = vadd.f32 %v6049, %v6176
    %v6282 = vadd.f32 %v6054, %v6176
    %v6283 = vadd.f32 %v6059, %v6176
    %v6284 = vadd.f32 %v6064, %v6176
    %v6285 = vadd.f32 %v6069, %v6176
    %v6286 = vadd.f32 %v6074, %v6176
    %v6287 = vadd.f32 %v6079, %v6176
    %v6288 = vadd.f32 %v6084, %v6176
    %v6289 = vadd.f32 %v6089, %v6176
    %v6290 = vadd.f32 %v6094, %v6176
    %v6291 = vadd.f32 %v6099, %v6176
    %v6292 = vadd.f32 %v6104, %v6176
    %v6293 = vadd.f32 %v6109, %v6176
    %v6294 = vadd.f32 %v6114, %v6176
    %v6295 = vadd.f32 %v6119, %v6176
    %v6296 = vadd.f32 %v6124, %v6176
    %v6297 = vadd.f32 %v6129, %v6176
    %v6298 = vadd.f32 %v6134, %v6176
    %v6299 = vadd.f32 %v6139, %v6176
    %v6300 = vadd.f32 %v6144, %v6176
    %v6301 = vadd.f32 %v6149, %v6176
    %v6302 = vadd.f32 %v6154, %v6176
    %v6303 = vadd.f32 %v6159, %v6176
    %v6304 = vadd.f32 %v6164, %v6176
    %v6305 = vadd.f32 %v6169, %v6176
    %v6306 = vtanh.pop %v6178
    %v6307 = vtanh.pop %v6179
    %v6308 = vtanh.pop %v6180
    %v6309 = vtanh.pop %v6181
    %v6310 = vtanh.pop %v6182
    %v6311 = vtanh.pop %v6183
    %v6312 = vtanh.pop %v6184
    %v6313 = vtanh.pop %v6185
    %v6314 = vtanh.pop %v6186
    %v6315 = vtanh.pop %v6187
    %v6316 = vtanh.pop %v6188
    %v6317 = vtanh.pop %v6189
    %v6318 = vtanh.pop %v6190
    %v6319 = vtanh.pop %v6191
    %v6320 = vtanh.pop %v6192
    %v6321 = vtanh.pop %v6193
    %v6322 = vtanh.pop %v6194
    %v6323 = vtanh.pop %v6195
    %v6324 = vtanh.pop %v6196
    %v6325 = vtanh.pop %v6197
    %v6326 = vtanh.pop %v6198
    %v6327 = vtanh.pop %v6199
    %v6328 = vtanh.pop %v6200
    %v6329 = vtanh.pop %v6201
    %v6330 = vtanh.pop %v6202
    %v6331 = vtanh.pop %v6203
    %v6332 = vtanh.pop %v6204
    %v6333 = vtanh.pop %v6205
    %v6334 = vtanh.pop %v6206
    %v6335 = vtanh.pop %v6207
    %v6336 = vtanh.pop %v6208
    %v6337 = vtanh.pop %v6209
    %v6338 = vtanh.pop %v6210
    %v6339 = vtanh.pop %v6211
    %v6340 = vtanh.pop %v6212
    %v6341 = vtanh.pop %v6213
    %v6342 = vtanh.pop %v6214
    %v6343 = vtanh.pop %v6215
    %v6344 = vtanh.pop %v6216
    %v6345 = vtanh.pop %v6217
    %v6346 = vtanh.pop %v6218
    %v6347 = vtanh.pop %v6219
    %v6348 = vtanh.pop %v6220
    %v6349 = vtanh.pop %v6221
    %v6350 = vtanh.pop %v6222
    %v6351 = vtanh.pop %v6223
    %v6352 = vtanh.pop %v6224
    %v6353 = vtanh.pop %v6225
    %v6354 = vtanh.pop %v6226
    %v6355 = vtanh.pop %v6227
    %v6356 = vtanh.pop %v6228
    %v6357 = vtanh.pop %v6229
    %v6358 = vtanh.pop %v6230
    %v6359 = vtanh.pop %v6231
    %v6360 = vtanh.pop %v6232
    %v6361 = vtanh.pop %v6233
    %v6362 = vtanh.pop %v6234
    %v6363 = vtanh.pop %v6235
    %v6364 = vtanh.pop %v6236
    %v6365 = vtanh.pop %v6237
    %v6366 = vtanh.pop %v6238
    %v6367 = vtanh.pop %v6239
    %v6368 = vtanh.pop %v6240
    %v6369 = vtanh.pop %v6241
    %v6370 = vtanh.pop %v6242
    %v6371 = vtanh.pop %v6243
    %v6372 = vtanh.pop %v6244
    %v6373 = vtanh.pop %v6245
    %v6374 = vtanh.pop %v6246
    %v6375 = vtanh.pop %v6247
    %v6376 = vtanh.pop %v6248
    %v6377 = vtanh.pop %v6249
    %v6378 = vtanh.pop %v6250
    %v6379 = vtanh.pop %v6251
    %v6380 = vtanh.pop %v6252
    %v6381 = vtanh.pop %v6253
    %v6382 = vtanh.pop %v6254
    %v6383 = vtanh.pop %v6255
    %v6384 = vtanh.pop %v6256
    %v6385 = vtanh.pop %v6257
    %v6386 = vtanh.pop %v6258
    %v6387 = vtanh.pop %v6259
    %v6388 = vtanh.pop %v6260
    %v6389 = vtanh.pop %v6261
    %v6390 = vtanh.pop %v6262
    %v6391 = vtanh.pop %v6263
    %v6392 = vtanh.pop %v6264
    %v6393 = vtanh.pop %v6265
    %v6394 = vtanh.pop %v6266
    %v6395 = vtanh.pop %v6267
    %v6396 = vtanh.pop %v6268
    %v6397 = vtanh.pop %v6269
    %v6398 = vtanh.pop %v6270
    %v6399 = vtanh.pop %v6271
    %v6400 = vtanh.pop %v6272
    %v6401 = vtanh.pop %v6273
    %v6402 = vtanh.pop %v6274
    %v6403 = vtanh.pop %v6275
    %v6404 = vtanh.pop %v6276
    %v6405 = vtanh.pop %v6277
    %v6406 = vtanh.pop %v6278
    %v6407 = vtanh.pop %v6279
    %v6408 = vtanh.pop %v6280
    %v6409 = vtanh.pop %v6281
    %v6410 = vtanh.pop %v6282
    %v6411 = vtanh.pop %v6283
    %v6412 = vtanh.pop %v6284
    %v6413 = vtanh.pop %v6285
    %v6414 = vtanh.pop %v6286
    %v6415 = vtanh.pop %v6287
    %v6416 = vtanh.pop %v6288
    %v6417 = vtanh.pop %v6289
    %v6418 = vtanh.pop %v6290
    %v6419 = vtanh.pop %v6291
    %v6420 = vtanh.pop %v6292
    %v6421 = vtanh.pop %v6293
    %v6422 = vtanh.pop %v6294
    %v6423 = vtanh.pop %v6295
    %v6424 = vtanh.pop %v6296
    %v6425 = vtanh.pop %v6297
    %v6426 = vtanh.pop %v6298
    %v6427 = vtanh.pop %v6299
    %v6428 = vtanh.pop %v6300
    %v6429 = vtanh.pop %v6301
    %v6430 = vtanh.pop %v6302
    %v6431 = vtanh.pop %v6303
    %v6432 = vtanh.pop %v6304
    %v6433 = vtanh.pop %v6305
    %v6434 = vld [vmem:[%s11] sm:$0xff]
    %v6435 = vld [vmem:[%s11 + $0x8] sm:$0x3]
    %v6436 = vld [vmem:[%s12] sm:$0x1]
    %v6438 = vlaneseq
    %v6439 = vshrl.u32 %v6438, 7
    %v6440 = vsub.s32 0, %v6439
    %v6441 = vrot.slane %v6436, %v6440
    %vm6443 = vcmask 80896
    %v6445 = vsel %vm6443, %v6306, 0
    %v6448 = vsel %vm6443, %v6307, 0
    %v6451 = vsel %vm6443, %v6308, 0
    %v6454 = vsel %vm6443, %v6309, 0
    %v6457 = vsel %vm6443, %v6310, 0
    %v6460 = vsel %vm6443, %v6311, 0
    %v6463 = vsel %vm6443, %v6312, 0
    %v6466 = vsel %vm6443, %v6313, 0
    %v6469 = vsel %vm6443, %v6314, 0
    %v6472 = vsel %vm6443, %v6315, 0
    %v6475 = vsel %vm6443, %v6316, 0
    %v6478 = vsel %vm6443, %v6317, 0
    %v6481 = vsel %vm6443, %v6318, 0
    %v6484 = vsel %vm6443, %v6319, 0
    %v6487 = vsel %vm6443, %v6320, 0
    %v6490 = vsel %vm6443, %v6321, 0
    %v6493 = vsel %vm6443, %v6322, 0
    %v6496 = vsel %vm6443, %v6323, 0
    %v6499 = vsel %vm6443, %v6324, 0
    %v6502 = vsel %vm6443, %v6325, 0
    %v6505 = vsel %vm6443, %v6326, 0
    %v6508 = vsel %vm6443, %v6327, 0
    %v6511 = vsel %vm6443, %v6328, 0
    %v6514 = vsel %vm6443, %v6329, 0
    %v6517 = vsel %vm6443, %v6330, 0
    %v6520 = vsel %vm6443, %v6331, 0
    %v6523 = vsel %vm6443, %v6332, 0
    %v6526 = vsel %vm6443, %v6333, 0
    %v6529 = vsel %vm6443, %v6334, 0
    %v6532 = vsel %vm6443, %v6335, 0
    %v6535 = vsel %vm6443, %v6336, 0
    %v6538 = vsel %vm6443, %v6337, 0
    %v6541 = vsel %vm6443, %v6338, 0
    %v6544 = vsel %vm6443, %v6339, 0
    %v6547 = vsel %vm6443, %v6340, 0
    %v6550 = vsel %vm6443, %v6341, 0
    %v6553 = vsel %vm6443, %v6342, 0
    %v6556 = vsel %vm6443, %v6343, 0
    %v6559 = vsel %vm6443, %v6344, 0
    %v6562 = vsel %vm6443, %v6345, 0
    %v6565 = vsel %vm6443, %v6346, 0
    %v6568 = vsel %vm6443, %v6347, 0
    %v6571 = vsel %vm6443, %v6348, 0
    %v6574 = vsel %vm6443, %v6349, 0
    %v6577 = vsel %vm6443, %v6350, 0
    %v6580 = vsel %vm6443, %v6351, 0
    %v6583 = vsel %vm6443, %v6352, 0
    %v6586 = vsel %vm6443, %v6353, 0
    %v6589 = vsel %vm6443, %v6354, 0
    %v6592 = vsel %vm6443, %v6355, 0
    %v6595 = vsel %vm6443, %v6356, 0
    %v6598 = vsel %vm6443, %v6357, 0
    %v6601 = vsel %vm6443, %v6358, 0
    %v6604 = vsel %vm6443, %v6359, 0
    %v6607 = vsel %vm6443, %v6360, 0
    %v6610 = vsel %vm6443, %v6361, 0
    %v6613 = vsel %vm6443, %v6362, 0
    %v6616 = vsel %vm6443, %v6363, 0
    %v6619 = vsel %vm6443, %v6364, 0
    %v6622 = vsel %vm6443, %v6365, 0
    %v6625 = vsel %vm6443, %v6366, 0
    %v6628 = vsel %vm6443, %v6367, 0
    %v6631 = vsel %vm6443, %v6368, 0
    %v6634 = vsel %vm6443, %v6369, 0
    %v6637 = vsel %vm6443, %v6370, 0
    %v6640 = vsel %vm6443, %v6371, 0
    %v6643 = vsel %vm6443, %v6372, 0
    %v6646 = vsel %vm6443, %v6373, 0
    %v6649 = vsel %vm6443, %v6374, 0
    %v6652 = vsel %vm6443, %v6375, 0
    %v6655 = vsel %vm6443, %v6376, 0
    %v6658 = vsel %vm6443, %v6377, 0
    %v6661 = vsel %vm6443, %v6378, 0
    %v6664 = vsel %vm6443, %v6379, 0
    %v6667 = vsel %vm6443, %v6380, 0
    %v6670 = vsel %vm6443, %v6381, 0
    %v6673 = vsel %vm6443, %v6382, 0
    %v6676 = vsel %vm6443, %v6383, 0
    %v6679 = vsel %vm6443, %v6384, 0
    %v6682 = vsel %vm6443, %v6385, 0
    %v6685 = vsel %vm6443, %v6386, 0
    %v6688 = vsel %vm6443, %v6387, 0
    %v6691 = vsel %vm6443, %v6388, 0
    %v6694 = vsel %vm6443, %v6389, 0
    %v6697 = vsel %vm6443, %v6390, 0
    %v6700 = vsel %vm6443, %v6391, 0
    %v6703 = vsel %vm6443, %v6392, 0
    %v6706 = vsel %vm6443, %v6393, 0
    %v6709 = vsel %vm6443, %v6394, 0
    %v6712 = vsel %vm6443, %v6395, 0
    %v6715 = vsel %vm6443, %v6396, 0
    %v6718 = vsel %vm6443, %v6397, 0
    %v6721 = vsel %vm6443, %v6398, 0
    %v6724 = vsel %vm6443, %v6399, 0
    %v6727 = vsel %vm6443, %v6400, 0
    %v6730 = vsel %vm6443, %v6401, 0
    %v6733 = vsel %vm6443, %v6402, 0
    %v6736 = vsel %vm6443, %v6403, 0
    %v6739 = vsel %vm6443, %v6404, 0
    %v6742 = vsel %vm6443, %v6405, 0
    %v6745 = vsel %vm6443, %v6406, 0
    %v6748 = vsel %vm6443, %v6407, 0
    %v6751 = vsel %vm6443, %v6408, 0
    %v6754 = vsel %vm6443, %v6409, 0
    %v6757 = vsel %vm6443, %v6410, 0
    %v6760 = vsel %vm6443, %v6411, 0
    %v6763 = vsel %vm6443, %v6412, 0
    %v6766 = vsel %vm6443, %v6413, 0
    %v6769 = vsel %vm6443, %v6414, 0
    %v6772 = vsel %vm6443, %v6415, 0
    %v6775 = vsel %vm6443, %v6416, 0
    %v6778 = vsel %vm6443, %v6417, 0
    %v6781 = vsel %vm6443, %v6418, 0
    %v6784 = vsel %vm6443, %v6419, 0
    %v6787 = vsel %vm6443, %v6420, 0
    %v6790 = vsel %vm6443, %v6421, 0
    %v6793 = vsel %vm6443, %v6422, 0
    %v6796 = vsel %vm6443, %v6423, 0
    %v6799 = vsel %vm6443, %v6424, 0
    %v6802 = vsel %vm6443, %v6425, 0
    %v6805 = vsel %vm6443, %v6426, 0
    %v6808 = vsel %vm6443, %v6427, 0
    %v6811 = vsel %vm6443, %v6428, 0
    %v6814 = vsel %vm6443, %v6429, 0
    %v6817 = vsel %vm6443, %v6430, 0
    %v6820 = vsel %vm6443, %v6431, 0
    %v6823 = vsel %vm6443, %v6432, 0
    %v6826 = vsel %vm6443, %v6433, 0
    %vm6828 = vcmask 1041408
    %v6830 = vsel %vm6828, %v6435, 0
    %6832 = vmatprep.subr.mxu0 0.0
    %6833 = vmatpush1.msra.mxu0 0.0
    %6834 = vmatprep.subr.mxu0 0.0
    %6835 = vmatpush1.msra.mxu0 0.0
    %6836 = vmatprep.subr.mxu0 0.0
    %6837 = vmatpush1.msra.mxu0 0.0
    %6838 = vmatprep.subr.mxu0 0.0
    %6839 = vmatpush1.msra.mxu0 0.0
    %6840 = vmatprep.subr.mxu0 0.0
    %6841 = vmatpush1.msra.mxu0 0.0
    %6842 = vmatprep.subr.mxu0 0.0
    %6843 = vmatpush1.msra.mxu0 0.0
    %6844 = vmatprep.subr.mxu0 0.0
    %6845 = vmatpush1.msra.mxu0 0.0
    %6846 = vmatprep.subr.mxu0 0.0
    %6847 = vmatpush1.msra.mxu0 0.0
    %6848 = vmatprep.subr.mxu0 0.0
    %6849 = vmatpush1.msra.mxu0 0.0
    %6850 = vmatprep.subr.mxu0 0.0
    %6851 = vmatpush1.msra.mxu0 0.0
    %6852 = vmatprep.subr.mxu0 0.0
    %6853 = vmatpush1.msra.mxu0 0.0
    %6854 = vmatprep.subr.mxu0 0.0
    %6855 = vmatpush1.msra.mxu0 0.0
    %6856 = vmatprep.subr.mxu0 0.0
    %6857 = vmatpush1.msra.mxu0 0.0
    %6858 = vmatprep.subr.mxu0 0.0
    %6859 = vmatpush1.msra.mxu0 0.0
    %6860 = vmatprep.subr.mxu0 0.0
    %6861 = vmatpush1.msra.mxu0 %v6830
    %6862 = vmatprep.subr.mxu0 0.0
    %6863 = vmatpush1.msra.mxu0 %v6434
    %6864 = vmatprep.subr.mxu0 0.0
    %6865 = vmatpush2.msra.mxu0 0.0
    %6866 = vmatprep.subr.mxu0 0.0
    %6867 = vmatpush2.msra.mxu0 0.0
    %6868 = vmatprep.subr.mxu0 0.0
    %6869 = vmatpush2.msra.mxu0 0.0
    %6870 = vmatprep.subr.mxu0 0.0
    %6871 = vmatpush2.msra.mxu0 0.0
    %6872 = vmatprep.subr.mxu0 0.0
    %6873 = vmatpush2.msra.mxu0 0.0
    %6874 = vmatprep.subr.mxu0 0.0
    %6875 = vmatpush2.msra.mxu0 0.0
    %6876 = vmatprep.subr.mxu0 0.0
    %6877 = vmatpush2.msra.mxu0 0.0
    %6878 = vmatprep.subr.mxu0 0.0
    %6879 = vmatpush2.msra.mxu0 0.0
    %6880 = vmatprep.subr.mxu0 0.0
    %6881 = vmatpush2.msra.mxu0 0.0
    %6882 = vmatprep.subr.mxu0 0.0
    %6883 = vmatpush2.msra.mxu0 0.0
    %6884 = vmatprep.subr.mxu0 0.0
    %6885 = vmatpush2.msra.mxu0 0.0
    %6886 = vmatprep.subr.mxu0 0.0
    %6887 = vmatpush2.msra.mxu0 0.0
    %6888 = vmatprep.subr.mxu0 0.0
    %6889 = vmatpush2.msra.mxu0 0.0
    %6890 = vmatprep.subr.mxu0 0.0
    %6891 = vmatpush2.msra.mxu0 0.0
    %6892 = vmatprep.subr.mxu0 0.0
    %6893 = vmatpush2.msra.mxu0 0.0
    %6894 = vmatprep.subr.mxu0 0.0
    %6895 = vmatpush2.msra.mxu0 0.0
    %6896 = vmatprep.mubr.f32.mxu0 0.0
    %6897 = vmatmul.mubr.f32.gmra.mxu0 %v6445
    %v6898 = vpop.f32.mrf.mxu0
    %v6899 = vadd.f32 %v6441, %v6898
    %v6900 = vpop.f32.mrf.mxu0
    %6901 = vmatprep.mubr.f32.mxu0 0.0
    %6902 = vmatmul.mubr.f32.gmra.mxu0 %v6448
    %v6903 = vpop.f32.mrf.mxu0
    %v6904 = vadd.f32 %v6441, %v6903
    %v6905 = vpop.f32.mrf.mxu0
    %6906 = vmatprep.mubr.f32.mxu0 0.0
    %6907 = vmatmul.mubr.f32.gmra.mxu0 %v6451
    %v6908 = vpop.f32.mrf.mxu0
    %v6909 = vadd.f32 %v6441, %v6908
    %v6910 = vpop.f32.mrf.mxu0
    %6911 = vmatprep.mubr.f32.mxu0 0.0
    %6912 = vmatmul.mubr.f32.gmra.mxu0 %v6454
    %v6913 = vpop.f32.mrf.mxu0
    %v6914 = vadd.f32 %v6441, %v6913
    %v6915 = vpop.f32.mrf.mxu0
    %6916 = vmatprep.mubr.f32.mxu0 0.0
    %6917 = vmatmul.mubr.f32.gmra.mxu0 %v6457
    %v6918 = vpop.f32.mrf.mxu0
    %v6919 = vadd.f32 %v6441, %v6918
    %v6920 = vpop.f32.mrf.mxu0
    %6921 = vmatprep.mubr.f32.mxu0 0.0
    %6922 = vmatmul.mubr.f32.gmra.mxu0 %v6460
    %v6923 = vpop.f32.mrf.mxu0
    %v6924 = vadd.f32 %v6441, %v6923
    %v6925 = vpop.f32.mrf.mxu0
    %6926 = vmatprep.mubr.f32.mxu0 0.0
    %6927 = vmatmul.mubr.f32.gmra.mxu0 %v6463
    %v6928 = vpop.f32.mrf.mxu0
    %v6929 = vadd.f32 %v6441, %v6928
    %v6930 = vpop.f32.mrf.mxu0
    %6931 = vmatprep.mubr.f32.mxu0 0.0
    %6932 = vmatmul.mubr.f32.gmra.mxu0 %v6466
    %v6933 = vpop.f32.mrf.mxu0
    %v6934 = vadd.f32 %v6441, %v6933
    %v6935 = vpop.f32.mrf.mxu0
    %6936 = vmatprep.mubr.f32.mxu0 0.0
    %6937 = vmatmul.mubr.f32.gmra.mxu0 %v6469
    %v6938 = vpop.f32.mrf.mxu0
    %v6939 = vadd.f32 %v6441, %v6938
    %v6940 = vpop.f32.mrf.mxu0
    %6941 = vmatprep.mubr.f32.mxu0 0.0
    %6942 = vmatmul.mubr.f32.gmra.mxu0 %v6472
    %v6943 = vpop.f32.mrf.mxu0
    %v6944 = vadd.f32 %v6441, %v6943
    %v6945 = vpop.f32.mrf.mxu0
    %6946 = vmatprep.mubr.f32.mxu0 0.0
    %6947 = vmatmul.mubr.f32.gmra.mxu0 %v6475
    %v6948 = vpop.f32.mrf.mxu0
    %v6949 = vadd.f32 %v6441, %v6948
    %v6950 = vpop.f32.mrf.mxu0
    %6951 = vmatprep.mubr.f32.mxu0 0.0
    %6952 = vmatmul.mubr.f32.gmra.mxu0 %v6478
    %v6953 = vpop.f32.mrf.mxu0
    %v6954 = vadd.f32 %v6441, %v6953
    %v6955 = vpop.f32.mrf.mxu0
    %6956 = vmatprep.mubr.f32.mxu0 0.0
    %6957 = vmatmul.mubr.f32.gmra.mxu0 %v6481
    %v6958 = vpop.f32.mrf.mxu0
    %v6959 = vadd.f32 %v6441, %v6958
    %v6960 = vpop.f32.mrf.mxu0
    %6961 = vmatprep.mubr.f32.mxu0 0.0
    %6962 = vmatmul.mubr.f32.gmra.mxu0 %v6484
    %v6963 = vpop.f32.mrf.mxu0
    %v6964 = vadd.f32 %v6441, %v6963
    %v6965 = vpop.f32.mrf.mxu0
    %6966 = vmatprep.mubr.f32.mxu0 0.0
    %6967 = vmatmul.mubr.f32.gmra.mxu0 %v6487
    %v6968 = vpop.f32.mrf.mxu0
    %v6969 = vadd.f32 %v6441, %v6968
    %v6970 = vpop.f32.mrf.mxu0
    %6971 = vmatprep.mubr.f32.mxu0 0.0
    %6972 = vmatmul.mubr.f32.gmra.mxu0 %v6490
    %v6973 = vpop.f32.mrf.mxu0
    %v6974 = vadd.f32 %v6441, %v6973
    %v6975 = vpop.f32.mrf.mxu0
    %6976 = vmatprep.mubr.f32.mxu0 0.0
    %6977 = vmatmul.mubr.f32.gmra.mxu0 %v6493
    %v6978 = vpop.f32.mrf.mxu0
    %v6979 = vadd.f32 %v6441, %v6978
    %v6980 = vpop.f32.mrf.mxu0
    %6981 = vmatprep.mubr.f32.mxu0 0.0
    %6982 = vmatmul.mubr.f32.gmra.mxu0 %v6496
    %v6983 = vpop.f32.mrf.mxu0
    %v6984 = vadd.f32 %v6441, %v6983
    %v6985 = vpop.f32.mrf.mxu0
    %6986 = vmatprep.mubr.f32.mxu0 0.0
    %6987 = vmatmul.mubr.f32.gmra.mxu0 %v6499
    %v6988 = vpop.f32.mrf.mxu0
    %v6989 = vadd.f32 %v6441, %v6988
    %v6990 = vpop.f32.mrf.mxu0
    %6991 = vmatprep.mubr.f32.mxu0 0.0
    %6992 = vmatmul.mubr.f32.gmra.mxu0 %v6502
    %v6993 = vpop.f32.mrf.mxu0
    %v6994 = vadd.f32 %v6441, %v6993
    %v6995 = vpop.f32.mrf.mxu0
    %6996 = vmatprep.mubr.f32.mxu0 0.0
    %6997 = vmatmul.mubr.f32.gmra.mxu0 %v6505
    %v6998 = vpop.f32.mrf.mxu0
    %v6999 = vadd.f32 %v6441, %v6998
    %v7000 = vpop.f32.mrf.mxu0
    %7001 = vmatprep.mubr.f32.mxu0 0.0
    %7002 = vmatmul.mubr.f32.gmra.mxu0 %v6508
    %v7003 = vpop.f32.mrf.mxu0
    %v7004 = vadd.f32 %v6441, %v7003
    %v7005 = vpop.f32.mrf.mxu0
    %7006 = vmatprep.mubr.f32.mxu0 0.0
    %7007 = vmatmul.mubr.f32.gmra.mxu0 %v6511
    %v7008 = vpop.f32.mrf.mxu0
    %v7009 = vadd.f32 %v6441, %v7008
    %v7010 = vpop.f32.mrf.mxu0
    %7011 = vmatprep.mubr.f32.mxu0 0.0
    %7012 = vmatmul.mubr.f32.gmra.mxu0 %v6514
    %v7013 = vpop.f32.mrf.mxu0
    %v7014 = vadd.f32 %v6441, %v7013
    %v7015 = vpop.f32.mrf.mxu0
    %7016 = vmatprep.mubr.f32.mxu0 0.0
    %7017 = vmatmul.mubr.f32.gmra.mxu0 %v6517
    %v7018 = vpop.f32.mrf.mxu0
    %v7019 = vadd.f32 %v6441, %v7018
    %v7020 = vpop.f32.mrf.mxu0
    %7021 = vmatprep.mubr.f32.mxu0 0.0
    %7022 = vmatmul.mubr.f32.gmra.mxu0 %v6520
    %v7023 = vpop.f32.mrf.mxu0
    %v7024 = vadd.f32 %v6441, %v7023
    %v7025 = vpop.f32.mrf.mxu0
    %7026 = vmatprep.mubr.f32.mxu0 0.0
    %7027 = vmatmul.mubr.f32.gmra.mxu0 %v6523
    %v7028 = vpop.f32.mrf.mxu0
    %v7029 = vadd.f32 %v6441, %v7028
    %v7030 = vpop.f32.mrf.mxu0
    %7031 = vmatprep.mubr.f32.mxu0 0.0
    %7032 = vmatmul.mubr.f32.gmra.mxu0 %v6526
    %v7033 = vpop.f32.mrf.mxu0
    %v7034 = vadd.f32 %v6441, %v7033
    %v7035 = vpop.f32.mrf.mxu0
    %7036 = vmatprep.mubr.f32.mxu0 0.0
    %7037 = vmatmul.mubr.f32.gmra.mxu0 %v6529
    %v7038 = vpop.f32.mrf.mxu0
    %v7039 = vadd.f32 %v6441, %v7038
    %v7040 = vpop.f32.mrf.mxu0
    %7041 = vmatprep.mubr.f32.mxu0 0.0
    %7042 = vmatmul.mubr.f32.gmra.mxu0 %v6532
    %v7043 = vpop.f32.mrf.mxu0
    %v7044 = vadd.f32 %v6441, %v7043
    %v7045 = vpop.f32.mrf.mxu0
    %7046 = vmatprep.mubr.f32.mxu0 0.0
    %7047 = vmatmul.mubr.f32.gmra.mxu0 %v6535
    %v7048 = vpop.f32.mrf.mxu0
    %v7049 = vadd.f32 %v6441, %v7048
    %v7050 = vpop.f32.mrf.mxu0
    %7051 = vmatprep.mubr.f32.mxu0 0.0
    %7052 = vmatmul.mubr.f32.gmra.mxu0 %v6538
    %v7053 = vpop.f32.mrf.mxu0
    %v7054 = vadd.f32 %v6441, %v7053
    %v7055 = vpop.f32.mrf.mxu0
    %7056 = vmatprep.mubr.f32.mxu0 0.0
    %7057 = vmatmul.mubr.f32.gmra.mxu0 %v6541
    %v7058 = vpop.f32.mrf.mxu0
    %v7059 = vadd.f32 %v6441, %v7058
    %v7060 = vpop.f32.mrf.mxu0
    %7061 = vmatprep.mubr.f32.mxu0 0.0
    %7062 = vmatmul.mubr.f32.gmra.mxu0 %v6544
    %v7063 = vpop.f32.mrf.mxu0
    %v7064 = vadd.f32 %v6441, %v7063
    %v7065 = vpop.f32.mrf.mxu0
    %7066 = vmatprep.mubr.f32.mxu0 0.0
    %7067 = vmatmul.mubr.f32.gmra.mxu0 %v6547
    %v7068 = vpop.f32.mrf.mxu0
    %v7069 = vadd.f32 %v6441, %v7068
    %v7070 = vpop.f32.mrf.mxu0
    %7071 = vmatprep.mubr.f32.mxu0 0.0
    %7072 = vmatmul.mubr.f32.gmra.mxu0 %v6550
    %v7073 = vpop.f32.mrf.mxu0
    %v7074 = vadd.f32 %v6441, %v7073
    %v7075 = vpop.f32.mrf.mxu0
    %7076 = vmatprep.mubr.f32.mxu0 0.0
    %7077 = vmatmul.mubr.f32.gmra.mxu0 %v6553
    %v7078 = vpop.f32.mrf.mxu0
    %v7079 = vadd.f32 %v6441, %v7078
    %v7080 = vpop.f32.mrf.mxu0
    %7081 = vmatprep.mubr.f32.mxu0 0.0
    %7082 = vmatmul.mubr.f32.gmra.mxu0 %v6556
    %v7083 = vpop.f32.mrf.mxu0
    %v7084 = vadd.f32 %v6441, %v7083
    %v7085 = vpop.f32.mrf.mxu0
    %7086 = vmatprep.mubr.f32.mxu0 0.0
    %7087 = vmatmul.mubr.f32.gmra.mxu0 %v6559
    %v7088 = vpop.f32.mrf.mxu0
    %v7089 = vadd.f32 %v6441, %v7088
    %v7090 = vpop.f32.mrf.mxu0
    %7091 = vmatprep.mubr.f32.mxu0 0.0
    %7092 = vmatmul.mubr.f32.gmra.mxu0 %v6562
    %v7093 = vpop.f32.mrf.mxu0
    %v7094 = vadd.f32 %v6441, %v7093
    %v7095 = vpop.f32.mrf.mxu0
    %7096 = vmatprep.mubr.f32.mxu0 0.0
    %7097 = vmatmul.mubr.f32.gmra.mxu0 %v6565
    %v7098 = vpop.f32.mrf.mxu0
    %v7099 = vadd.f32 %v6441, %v7098
    %v7100 = vpop.f32.mrf.mxu0
    %7101 = vmatprep.mubr.f32.mxu0 0.0
    %7102 = vmatmul.mubr.f32.gmra.mxu0 %v6568
    %v7103 = vpop.f32.mrf.mxu0
    %v7104 = vadd.f32 %v6441, %v7103
    %v7105 = vpop.f32.mrf.mxu0
    %7106 = vmatprep.mubr.f32.mxu0 0.0
    %7107 = vmatmul.mubr.f32.gmra.mxu0 %v6571
    %v7108 = vpop.f32.mrf.mxu0
    %v7109 = vadd.f32 %v6441, %v7108
    %v7110 = vpop.f32.mrf.mxu0
    %7111 = vmatprep.mubr.f32.mxu0 0.0
    %7112 = vmatmul.mubr.f32.gmra.mxu0 %v6574
    %v7113 = vpop.f32.mrf.mxu0
    %v7114 = vadd.f32 %v6441, %v7113
    %v7115 = vpop.f32.mrf.mxu0
    %7116 = vmatprep.mubr.f32.mxu0 0.0
    %7117 = vmatmul.mubr.f32.gmra.mxu0 %v6577
    %v7118 = vpop.f32.mrf.mxu0
    %v7119 = vadd.f32 %v6441, %v7118
    %v7120 = vpop.f32.mrf.mxu0
    %7121 = vmatprep.mubr.f32.mxu0 0.0
    %7122 = vmatmul.mubr.f32.gmra.mxu0 %v6580
    %v7123 = vpop.f32.mrf.mxu0
    %v7124 = vadd.f32 %v6441, %v7123
    %v7125 = vpop.f32.mrf.mxu0
    %7126 = vmatprep.mubr.f32.mxu0 0.0
    %7127 = vmatmul.mubr.f32.gmra.mxu0 %v6583
    %v7128 = vpop.f32.mrf.mxu0
    %v7129 = vadd.f32 %v6441, %v7128
    %v7130 = vpop.f32.mrf.mxu0
    %7131 = vmatprep.mubr.f32.mxu0 0.0
    %7132 = vmatmul.mubr.f32.gmra.mxu0 %v6586
    %v7133 = vpop.f32.mrf.mxu0
    %v7134 = vadd.f32 %v6441, %v7133
    %v7135 = vpop.f32.mrf.mxu0
    %7136 = vmatprep.mubr.f32.mxu0 0.0
    %7137 = vmatmul.mubr.f32.gmra.mxu0 %v6589
    %v7138 = vpop.f32.mrf.mxu0
    %v7139 = vadd.f32 %v6441, %v7138
    %v7140 = vpop.f32.mrf.mxu0
    %7141 = vmatprep.mubr.f32.mxu0 0.0
    %7142 = vmatmul.mubr.f32.gmra.mxu0 %v6592
    %v7143 = vpop.f32.mrf.mxu0
    %v7144 = vadd.f32 %v6441, %v7143
    %v7145 = vpop.f32.mrf.mxu0
    %7146 = vmatprep.mubr.f32.mxu0 0.0
    %7147 = vmatmul.mubr.f32.gmra.mxu0 %v6595
    %v7148 = vpop.f32.mrf.mxu0
    %v7149 = vadd.f32 %v6441, %v7148
    %v7150 = vpop.f32.mrf.mxu0
    %7151 = vmatprep.mubr.f32.mxu0 0.0
    %7152 = vmatmul.mubr.f32.gmra.mxu0 %v6598
    %v7153 = vpop.f32.mrf.mxu0
    %v7154 = vadd.f32 %v6441, %v7153
    %v7155 = vpop.f32.mrf.mxu0
    %7156 = vmatprep.mubr.f32.mxu0 0.0
    %7157 = vmatmul.mubr.f32.gmra.mxu0 %v6601
    %v7158 = vpop.f32.mrf.mxu0
    %v7159 = vadd.f32 %v6441, %v7158
    %v7160 = vpop.f32.mrf.mxu0
    %7161 = vmatprep.mubr.f32.mxu0 0.0
    %7162 = vmatmul.mubr.f32.gmra.mxu0 %v6604
    %v7163 = vpop.f32.mrf.mxu0
    %v7164 = vadd.f32 %v6441, %v7163
    %v7165 = vpop.f32.mrf.mxu0
    %7166 = vmatprep.mubr.f32.mxu0 0.0
    %7167 = vmatmul.mubr.f32.gmra.mxu0 %v6607
    %v7168 = vpop.f32.mrf.mxu0
    %v7169 = vadd.f32 %v6441, %v7168
    %v7170 = vpop.f32.mrf.mxu0
    %7171 = vmatprep.mubr.f32.mxu0 0.0
    %7172 = vmatmul.mubr.f32.gmra.mxu0 %v6610
    %v7173 = vpop.f32.mrf.mxu0
    %v7174 = vadd.f32 %v6441, %v7173
    %v7175 = vpop.f32.mrf.mxu0
    %7176 = vmatprep.mubr.f32.mxu0 0.0
    %7177 = vmatmul.mubr.f32.gmra.mxu0 %v6613
    %v7178 = vpop.f32.mrf.mxu0
    %v7179 = vadd.f32 %v6441, %v7178
    %v7180 = vpop.f32.mrf.mxu0
    %7181 = vmatprep.mubr.f32.mxu0 0.0
    %7182 = vmatmul.mubr.f32.gmra.mxu0 %v6616
    %v7183 = vpop.f32.mrf.mxu0
    %v7184 = vadd.f32 %v6441, %v7183
    %v7185 = vpop.f32.mrf.mxu0
    %7186 = vmatprep.mubr.f32.mxu0 0.0
    %7187 = vmatmul.mubr.f32.gmra.mxu0 %v6619
    %v7188 = vpop.f32.mrf.mxu0
    %v7189 = vadd.f32 %v6441, %v7188
    %v7190 = vpop.f32.mrf.mxu0
    %7191 = vmatprep.mubr.f32.mxu0 0.0
    %7192 = vmatmul.mubr.f32.gmra.mxu0 %v6622
    %v7193 = vpop.f32.mrf.mxu0
    %v7194 = vadd.f32 %v6441, %v7193
    %v7195 = vpop.f32.mrf.mxu0
    %7196 = vmatprep.mubr.f32.mxu0 0.0
    %7197 = vmatmul.mubr.f32.gmra.mxu0 %v6625
    %v7198 = vpop.f32.mrf.mxu0
    %v7199 = vadd.f32 %v6441, %v7198
    %v7200 = vpop.f32.mrf.mxu0
    %7201 = vmatprep.mubr.f32.mxu0 0.0
    %7202 = vmatmul.mubr.f32.gmra.mxu0 %v6628
    %v7203 = vpop.f32.mrf.mxu0
    %v7204 = vadd.f32 %v6441, %v7203
    %v7205 = vpop.f32.mrf.mxu0
    %7206 = vmatprep.mubr.f32.mxu0 0.0
    %7207 = vmatmul.mubr.f32.gmra.mxu0 %v6631
    %v7208 = vpop.f32.mrf.mxu0
    %v7209 = vadd.f32 %v6441, %v7208
    %v7210 = vpop.f32.mrf.mxu0
    %7211 = vmatprep.mubr.f32.mxu0 0.0
    %7212 = vmatmul.mubr.f32.gmra.mxu0 %v6634
    %v7213 = vpop.f32.mrf.mxu0
    %v7214 = vadd.f32 %v6441, %v7213
    %v7215 = vpop.f32.mrf.mxu0
    %7216 = vmatprep.mubr.f32.mxu0 0.0
    %7217 = vmatmul.mubr.f32.gmra.mxu0 %v6637
    %v7218 = vpop.f32.mrf.mxu0
    %v7219 = vadd.f32 %v6441, %v7218
    %v7220 = vpop.f32.mrf.mxu0
    %7221 = vmatprep.mubr.f32.mxu0 0.0
    %7222 = vmatmul.mubr.f32.gmra.mxu0 %v6640
    %v7223 = vpop.f32.mrf.mxu0
    %v7224 = vadd.f32 %v6441, %v7223
    %v7225 = vpop.f32.mrf.mxu0
    %7226 = vmatprep.mubr.f32.mxu0 0.0
    %7227 = vmatmul.mubr.f32.gmra.mxu0 %v6643
    %v7228 = vpop.f32.mrf.mxu0
    %v7229 = vadd.f32 %v6441, %v7228
    %v7230 = vpop.f32.mrf.mxu0
    %7231 = vmatprep.mubr.f32.mxu0 0.0
    %7232 = vmatmul.mubr.f32.gmra.mxu0 %v6646
    %v7233 = vpop.f32.mrf.mxu0
    %v7234 = vadd.f32 %v6441, %v7233
    %v7235 = vpop.f32.mrf.mxu0
    %7236 = vmatprep.mubr.f32.mxu0 0.0
    %7237 = vmatmul.mubr.f32.gmra.mxu0 %v6649
    %v7238 = vpop.f32.mrf.mxu0
    %v7239 = vadd.f32 %v6441, %v7238
    %v7240 = vpop.f32.mrf.mxu0
    %7241 = vmatprep.mubr.f32.mxu0 0.0
    %7242 = vmatmul.mubr.f32.gmra.mxu0 %v6652
    %v7243 = vpop.f32.mrf.mxu0
    %v7244 = vadd.f32 %v6441, %v7243
    %v7245 = vpop.f32.mrf.mxu0
    %7246 = vmatprep.mubr.f32.mxu0 0.0
    %7247 = vmatmul.mubr.f32.gmra.mxu0 %v6655
    %v7248 = vpop.f32.mrf.mxu0
    %v7249 = vadd.f32 %v6441, %v7248
    %v7250 = vpop.f32.mrf.mxu0
    %7251 = vmatprep.mubr.f32.mxu0 0.0
    %7252 = vmatmul.mubr.f32.gmra.mxu0 %v6658
    %v7253 = vpop.f32.mrf.mxu0
    %v7254 = vadd.f32 %v6441, %v7253
    %v7255 = vpop.f32.mrf.mxu0
    %7256 = vmatprep.mubr.f32.mxu0 0.0
    %7257 = vmatmul.mubr.f32.gmra.mxu0 %v6661
    %v7258 = vpop.f32.mrf.mxu0
    %v7259 = vadd.f32 %v6441, %v7258
    %v7260 = vpop.f32.mrf.mxu0
    %7261 = vmatprep.mubr.f32.mxu0 0.0
    %7262 = vmatmul.mubr.f32.gmra.mxu0 %v6664
    %v7263 = vpop.f32.mrf.mxu0
    %v7264 = vadd.f32 %v6441, %v7263
    %v7265 = vpop.f32.mrf.mxu0
    %7266 = vmatprep.mubr.f32.mxu0 0.0
    %7267 = vmatmul.mubr.f32.gmra.mxu0 %v6667
    %v7268 = vpop.f32.mrf.mxu0
    %v7269 = vadd.f32 %v6441, %v7268
    %v7270 = vpop.f32.mrf.mxu0
    %7271 = vmatprep.mubr.f32.mxu0 0.0
    %7272 = vmatmul.mubr.f32.gmra.mxu0 %v6670
    %v7273 = vpop.f32.mrf.mxu0
    %v7274 = vadd.f32 %v6441, %v7273
    %v7275 = vpop.f32.mrf.mxu0
    %7276 = vmatprep.mubr.f32.mxu0 0.0
    %7277 = vmatmul.mubr.f32.gmra.mxu0 %v6673
    %v7278 = vpop.f32.mrf.mxu0
    %v7279 = vadd.f32 %v6441, %v7278
    %v7280 = vpop.f32.mrf.mxu0
    %7281 = vmatprep.mubr.f32.mxu0 0.0
    %7282 = vmatmul.mubr.f32.gmra.mxu0 %v6676
    %v7283 = vpop.f32.mrf.mxu0
    %v7284 = vadd.f32 %v6441, %v7283
    %v7285 = vpop.f32.mrf.mxu0
    %7286 = vmatprep.mubr.f32.mxu0 0.0
    %7287 = vmatmul.mubr.f32.gmra.mxu0 %v6679
    %v7288 = vpop.f32.mrf.mxu0
    %v7289 = vadd.f32 %v6441, %v7288
    %v7290 = vpop.f32.mrf.mxu0
    %7291 = vmatprep.mubr.f32.mxu0 0.0
    %7292 = vmatmul.mubr.f32.gmra.mxu0 %v6682
    %v7293 = vpop.f32.mrf.mxu0
    %v7294 = vadd.f32 %v6441, %v7293
    %v7295 = vpop.f32.mrf.mxu0
    %7296 = vmatprep.mubr.f32.mxu0 0.0
    %7297 = vmatmul.mubr.f32.gmra.mxu0 %v6685
    %v7298 = vpop.f32.mrf.mxu0
    %v7299 = vadd.f32 %v6441, %v7298
    %v7300 = vpop.f32.mrf.mxu0
    %7301 = vmatprep.mubr.f32.mxu0 0.0
    %7302 = vmatmul.mubr.f32.gmra.mxu0 %v6688
    %v7303 = vpop.f32.mrf.mxu0
    %v7304 = vadd.f32 %v6441, %v7303
    %v7305 = vpop.f32.mrf.mxu0
    %7306 = vmatprep.mubr.f32.mxu0 0.0
    %7307 = vmatmul.mubr.f32.gmra.mxu0 %v6691
    %v7308 = vpop.f32.mrf.mxu0
    %v7309 = vadd.f32 %v6441, %v7308
    %v7310 = vpop.f32.mrf.mxu0
    %7311 = vmatprep.mubr.f32.mxu0 0.0
    %7312 = vmatmul.mubr.f32.gmra.mxu0 %v6694
    %v7313 = vpop.f32.mrf.mxu0
    %v7314 = vadd.f32 %v6441, %v7313
    %v7315 = vpop.f32.mrf.mxu0
    %7316 = vmatprep.mubr.f32.mxu0 0.0
    %7317 = vmatmul.mubr.f32.gmra.mxu0 %v6697
    %v7318 = vpop.f32.mrf.mxu0
    %v7319 = vadd.f32 %v6441, %v7318
    %v7320 = vpop.f32.mrf.mxu0
    %7321 = vmatprep.mubr.f32.mxu0 0.0
    %7322 = vmatmul.mubr.f32.gmra.mxu0 %v6700
    %v7323 = vpop.f32.mrf.mxu0
    %v7324 = vadd.f32 %v6441, %v7323
    %v7325 = vpop.f32.mrf.mxu0
    %7326 = vmatprep.mubr.f32.mxu0 0.0
    %7327 = vmatmul.mubr.f32.gmra.mxu0 %v6703
    %v7328 = vpop.f32.mrf.mxu0
    %v7329 = vadd.f32 %v6441, %v7328
    %v7330 = vpop.f32.mrf.mxu0
    %7331 = vmatprep.mubr.f32.mxu0 0.0
    %7332 = vmatmul.mubr.f32.gmra.mxu0 %v6706
    %v7333 = vpop.f32.mrf.mxu0
    %v7334 = vadd.f32 %v6441, %v7333
    %v7335 = vpop.f32.mrf.mxu0
    %7336 = vmatprep.mubr.f32.mxu0 0.0
    %7337 = vmatmul.mubr.f32.gmra.mxu0 %v6709
    %v7338 = vpop.f32.mrf.mxu0
    %v7339 = vadd.f32 %v6441, %v7338
    %v7340 = vpop.f32.mrf.mxu0
    %7341 = vmatprep.mubr.f32.mxu0 0.0
    %7342 = vmatmul.mubr.f32.gmra.mxu0 %v6712
    %v7343 = vpop.f32.mrf.mxu0
    %v7344 = vadd.f32 %v6441, %v7343
    %v7345 = vpop.f32.mrf.mxu0
    %7346 = vmatprep.mubr.f32.mxu0 0.0
    %7347 = vmatmul.mubr.f32.gmra.mxu0 %v6715
    %v7348 = vpop.f32.mrf.mxu0
    %v7349 = vadd.f32 %v6441, %v7348
    %v7350 = vpop.f32.mrf.mxu0
    %7351 = vmatprep.mubr.f32.mxu0 0.0
    %7352 = vmatmul.mubr.f32.gmra.mxu0 %v6718
    %v7353 = vpop.f32.mrf.mxu0
    %v7354 = vadd.f32 %v6441, %v7353
    %v7355 = vpop.f32.mrf.mxu0
    %7356 = vmatprep.mubr.f32.mxu0 0.0
    %7357 = vmatmul.mubr.f32.gmra.mxu0 %v6721
    %v7358 = vpop.f32.mrf.mxu0
    %v7359 = vadd.f32 %v6441, %v7358
    %v7360 = vpop.f32.mrf.mxu0
    %7361 = vmatprep.mubr.f32.mxu0 0.0
    %7362 = vmatmul.mubr.f32.gmra.mxu0 %v6724
    %v7363 = vpop.f32.mrf.mxu0
    %v7364 = vadd.f32 %v6441, %v7363
    %v7365 = vpop.f32.mrf.mxu0
    %7366 = vmatprep.mubr.f32.mxu0 0.0
    %7367 = vmatmul.mubr.f32.gmra.mxu0 %v6727
    %v7368 = vpop.f32.mrf.mxu0
    %v7369 = vadd.f32 %v6441, %v7368
    %v7370 = vpop.f32.mrf.mxu0
    %7371 = vmatprep.mubr.f32.mxu0 0.0
    %7372 = vmatmul.mubr.f32.gmra.mxu0 %v6730
    %v7373 = vpop.f32.mrf.mxu0
    %v7374 = vadd.f32 %v6441, %v7373
    %v7375 = vpop.f32.mrf.mxu0
    %7376 = vmatprep.mubr.f32.mxu0 0.0
    %7377 = vmatmul.mubr.f32.gmra.mxu0 %v6733
    %v7378 = vpop.f32.mrf.mxu0
    %v7379 = vadd.f32 %v6441, %v7378
    %v7380 = vpop.f32.mrf.mxu0
    %7381 = vmatprep.mubr.f32.mxu0 0.0
    %7382 = vmatmul.mubr.f32.gmra.mxu0 %v6736
    %v7383 = vpop.f32.mrf.mxu0
    %v7384 = vadd.f32 %v6441, %v7383
    %v7385 = vpop.f32.mrf.mxu0
    %7386 = vmatprep.mubr.f32.mxu0 0.0
    %7387 = vmatmul.mubr.f32.gmra.mxu0 %v6739
    %v7388 = vpop.f32.mrf.mxu0
    %v7389 = vadd.f32 %v6441, %v7388
    %v7390 = vpop.f32.mrf.mxu0
    %7391 = vmatprep.mubr.f32.mxu0 0.0
    %7392 = vmatmul.mubr.f32.gmra.mxu0 %v6742
    %v7393 = vpop.f32.mrf.mxu0
    %v7394 = vadd.f32 %v6441, %v7393
    %v7395 = vpop.f32.mrf.mxu0
    %7396 = vmatprep.mubr.f32.mxu0 0.0
    %7397 = vmatmul.mubr.f32.gmra.mxu0 %v6745
    %v7398 = vpop.f32.mrf.mxu0
    %v7399 = vadd.f32 %v6441, %v7398
    %v7400 = vpop.f32.mrf.mxu0
    %7401 = vmatprep.mubr.f32.mxu0 0.0
    %7402 = vmatmul.mubr.f32.gmra.mxu0 %v6748
    %v7403 = vpop.f32.mrf.mxu0
    %v7404 = vadd.f32 %v6441, %v7403
    %v7405 = vpop.f32.mrf.mxu0
    %7406 = vmatprep.mubr.f32.mxu0 0.0
    %7407 = vmatmul.mubr.f32.gmra.mxu0 %v6751
    %v7408 = vpop.f32.mrf.mxu0
    %v7409 = vadd.f32 %v6441, %v7408
    %v7410 = vpop.f32.mrf.mxu0
    %7411 = vmatprep.mubr.f32.mxu0 0.0
    %7412 = vmatmul.mubr.f32.gmra.mxu0 %v6754
    %v7413 = vpop.f32.mrf.mxu0
    %v7414 = vadd.f32 %v6441, %v7413
    %v7415 = vpop.f32.mrf.mxu0
    %7416 = vmatprep.mubr.f32.mxu0 0.0
    %7417 = vmatmul.mubr.f32.gmra.mxu0 %v6757
    %v7418 = vpop.f32.mrf.mxu0
    %v7419 = vadd.f32 %v6441, %v7418
    %v7420 = vpop.f32.mrf.mxu0
    %7421 = vmatprep.mubr.f32.mxu0 0.0
    %7422 = vmatmul.mubr.f32.gmra.mxu0 %v6760
    %v7423 = vpop.f32.mrf.mxu0
    %v7424 = vadd.f32 %v6441, %v7423
    %v7425 = vpop.f32.mrf.mxu0
    %7426 = vmatprep.mubr.f32.mxu0 0.0
    %7427 = vmatmul.mubr.f32.gmra.mxu0 %v6763
    %v7428 = vpop.f32.mrf.mxu0
    %v7429 = vadd.f32 %v6441, %v7428
    %v7430 = vpop.f32.mrf.mxu0
    %7431 = vmatprep.mubr.f32.mxu0 0.0
    %7432 = vmatmul.mubr.f32.gmra.mxu0 %v6766
    %v7433 = vpop.f32.mrf.mxu0
    %v7434 = vadd.f32 %v6441, %v7433
    %v7435 = vpop.f32.mrf.mxu0
    %7436 = vmatprep.mubr.f32.mxu0 0.0
    %7437 = vmatmul.mubr.f32.gmra.mxu0 %v6769
    %v7438 = vpop.f32.mrf.mxu0
    %v7439 = vadd.f32 %v6441, %v7438
    %v7440 = vpop.f32.mrf.mxu0
    %7441 = vmatprep.mubr.f32.mxu0 0.0
    %7442 = vmatmul.mubr.f32.gmra.mxu0 %v6772
    %v7443 = vpop.f32.mrf.mxu0
    %v7444 = vadd.f32 %v6441, %v7443
    %v7445 = vpop.f32.mrf.mxu0
    %7446 = vmatprep.mubr.f32.mxu0 0.0
    %7447 = vmatmul.mubr.f32.gmra.mxu0 %v6775
    %v7448 = vpop.f32.mrf.mxu0
    %v7449 = vadd.f32 %v6441, %v7448
    %v7450 = vpop.f32.mrf.mxu0
    %7451 = vmatprep.mubr.f32.mxu0 0.0
    %7452 = vmatmul.mubr.f32.gmra.mxu0 %v6778
    %v7453 = vpop.f32.mrf.mxu0
    %v7454 = vadd.f32 %v6441, %v7453
    %v7455 = vpop.f32.mrf.mxu0
    %7456 = vmatprep.mubr.f32.mxu0 0.0
    %7457 = vmatmul.mubr.f32.gmra.mxu0 %v6781
    %v7458 = vpop.f32.mrf.mxu0
    %v7459 = vadd.f32 %v6441, %v7458
    %v7460 = vpop.f32.mrf.mxu0
    %7461 = vmatprep.mubr.f32.mxu0 0.0
    %7462 = vmatmul.mubr.f32.gmra.mxu0 %v6784
    %v7463 = vpop.f32.mrf.mxu0
    %v7464 = vadd.f32 %v6441, %v7463
    %v7465 = vpop.f32.mrf.mxu0
    %7466 = vmatprep.mubr.f32.mxu0 0.0
    %7467 = vmatmul.mubr.f32.gmra.mxu0 %v6787
    %v7468 = vpop.f32.mrf.mxu0
    %v7469 = vadd.f32 %v6441, %v7468
    %v7470 = vpop.f32.mrf.mxu0
    %7471 = vmatprep.mubr.f32.mxu0 0.0
    %7472 = vmatmul.mubr.f32.gmra.mxu0 %v6790
    %v7473 = vpop.f32.mrf.mxu0
    %v7474 = vadd.f32 %v6441, %v7473
    %v7475 = vpop.f32.mrf.mxu0
    %7476 = vmatprep.mubr.f32.mxu0 0.0
    %7477 = vmatmul.mubr.f32.gmra.mxu0 %v6793
    %v7478 = vpop.f32.mrf.mxu0
    %v7479 = vadd.f32 %v6441, %v7478
    %v7480 = vpop.f32.mrf.mxu0
    %7481 = vmatprep.mubr.f32.mxu0 0.0
    %7482 = vmatmul.mubr.f32.gmra.mxu0 %v6796
    %v7483 = vpop.f32.mrf.mxu0
    %v7484 = vadd.f32 %v6441, %v7483
    %v7485 = vpop.f32.mrf.mxu0
    %7486 = vmatprep.mubr.f32.mxu0 0.0
    %7487 = vmatmul.mubr.f32.gmra.mxu0 %v6799
    %v7488 = vpop.f32.mrf.mxu0
    %v7489 = vadd.f32 %v6441, %v7488
    %v7490 = vpop.f32.mrf.mxu0
    %7491 = vmatprep.mubr.f32.mxu0 0.0
    %7492 = vmatmul.mubr.f32.gmra.mxu0 %v6802
    %v7493 = vpop.f32.mrf.mxu0
    %v7494 = vadd.f32 %v6441, %v7493
    %v7495 = vpop.f32.mrf.mxu0
    %7496 = vmatprep.mubr.f32.mxu0 0.0
    %7497 = vmatmul.mubr.f32.gmra.mxu0 %v6805
    %v7498 = vpop.f32.mrf.mxu0
    %v7499 = vadd.f32 %v6441, %v7498
    %v7500 = vpop.f32.mrf.mxu0
    %7501 = vmatprep.mubr.f32.mxu0 0.0
    %7502 = vmatmul.mubr.f32.gmra.mxu0 %v6808
    %v7503 = vpop.f32.mrf.mxu0
    %v7504 = vadd.f32 %v6441, %v7503
    %v7505 = vpop.f32.mrf.mxu0
    %7506 = vmatprep.mubr.f32.mxu0 0.0
    %7507 = vmatmul.mubr.f32.gmra.mxu0 %v6811
    %v7508 = vpop.f32.mrf.mxu0
    %v7509 = vadd.f32 %v6441, %v7508
    %v7510 = vpop.f32.mrf.mxu0
    %7511 = vmatprep.mubr.f32.mxu0 0.0
    %7512 = vmatmul.mubr.f32.gmra.mxu0 %v6814
    %v7513 = vpop.f32.mrf.mxu0
    %v7514 = vadd.f32 %v6441, %v7513
    %v7515 = vpop.f32.mrf.mxu0
    %7516 = vmatprep.mubr.f32.mxu0 0.0
    %7517 = vmatmul.mubr.f32.gmra.mxu0 %v6817
    %v7518 = vpop.f32.mrf.mxu0
    %v7519 = vadd.f32 %v6441, %v7518
    %v7520 = vpop.f32.mrf.mxu0
    %7521 = vmatprep.mubr.f32.mxu0 0.0
    %7522 = vmatmul.mubr.f32.gmra.mxu0 %v6820
    %v7523 = vpop.f32.mrf.mxu0
    %v7524 = vadd.f32 %v6441, %v7523
    %v7525 = vpop.f32.mrf.mxu0
    %7526 = vmatprep.mubr.f32.mxu0 0.0
    %7527 = vmatmul.mubr.f32.gmra.mxu0 %v6823
    %v7528 = vpop.f32.mrf.mxu0
    %v7529 = vadd.f32 %v6441, %v7528
    %v7530 = vpop.f32.mrf.mxu0
    %7531 = vmatprep.mubr.f32.mxu0 0.0
    %7532 = vmatmul.mubr.f32.gmra.mxu0 %v6826
    %v7533 = vpop.f32.mrf.mxu0
    %v7534 = vadd.f32 %v6441, %v7533
    %v7535 = vpop.f32.mrf.mxu0
    %7536 = vdwg.mxu0
    %v7537 = vpack.c.bf16 %v6904, %v6899
    %v7538 = vpack.c.bf16 %v6914, %v6909
    %v7539 = vpack.c.bf16 %v6924, %v6919
    %v7540 = vpack.c.bf16 %v6934, %v6929
    %v7541 = vpack.c.bf16 %v6944, %v6939
    %v7542 = vpack.c.bf16 %v6954, %v6949
    %v7543 = vpack.c.bf16 %v6964, %v6959
    %v7544 = vpack.c.bf16 %v6974, %v6969
    %v7545 = vpack.c.bf16 %v6984, %v6979
    %v7546 = vpack.c.bf16 %v6994, %v6989
    %v7547 = vpack.c.bf16 %v7004, %v6999
    %v7548 = vpack.c.bf16 %v7014, %v7009
    %v7549 = vpack.c.bf16 %v7024, %v7019
    %v7550 = vpack.c.bf16 %v7034, %v7029
    %v7551 = vpack.c.bf16 %v7044, %v7039
    %v7552 = vpack.c.bf16 %v7054, %v7049
    %v7553 = vpack.c.bf16 %v7064, %v7059
    %v7554 = vpack.c.bf16 %v7074, %v7069
    %v7555 = vpack.c.bf16 %v7084, %v7079
    %v7556 = vpack.c.bf16 %v7094, %v7089
    %v7557 = vpack.c.bf16 %v7104, %v7099
    %v7558 = vpack.c.bf16 %v7114, %v7109
    %v7559 = vpack.c.bf16 %v7124, %v7119
    %v7560 = vpack.c.bf16 %v7134, %v7129
    %v7561 = vpack.c.bf16 %v7144, %v7139
    %v7562 = vpack.c.bf16 %v7154, %v7149
    %v7563 = vpack.c.bf16 %v7164, %v7159
    %v7564 = vpack.c.bf16 %v7174, %v7169
    %v7565 = vpack.c.bf16 %v7184, %v7179
    %v7566 = vpack.c.bf16 %v7194, %v7189
    %v7567 = vpack.c.bf16 %v7204, %v7199
    %v7568 = vpack.c.bf16 %v7214, %v7209
    %v7569 = vpack.c.bf16 %v7224, %v7219
    %v7570 = vpack.c.bf16 %v7234, %v7229
    %v7571 = vpack.c.bf16 %v7244, %v7239
    %v7572 = vpack.c.bf16 %v7254, %v7249
    %v7573 = vpack.c.bf16 %v7264, %v7259
    %v7574 = vpack.c.bf16 %v7274, %v7269
    %v7575 = vpack.c.bf16 %v7284, %v7279
    %v7576 = vpack.c.bf16 %v7294, %v7289
    %v7577 = vpack.c.bf16 %v7304, %v7299
    %v7578 = vpack.c.bf16 %v7314, %v7309
    %v7579 = vpack.c.bf16 %v7324, %v7319
    %v7580 = vpack.c.bf16 %v7334, %v7329
    %v7581 = vpack.c.bf16 %v7344, %v7339
    %v7582 = vpack.c.bf16 %v7354, %v7349
    %v7583 = vpack.c.bf16 %v7364, %v7359
    %v7584 = vpack.c.bf16 %v7374, %v7369
    %v7585 = vpack.c.bf16 %v7384, %v7379
    %v7586 = vpack.c.bf16 %v7394, %v7389
    %v7587 = vpack.c.bf16 %v7404, %v7399
    %v7588 = vpack.c.bf16 %v7414, %v7409
    %v7589 = vpack.c.bf16 %v7424, %v7419
    %v7590 = vpack.c.bf16 %v7434, %v7429
    %v7591 = vpack.c.bf16 %v7444, %v7439
    %v7592 = vpack.c.bf16 %v7454, %v7449
    %v7593 = vpack.c.bf16 %v7464, %v7459
    %v7594 = vpack.c.bf16 %v7474, %v7469
    %v7595 = vpack.c.bf16 %v7484, %v7479
    %v7596 = vpack.c.bf16 %v7494, %v7489
    %v7597 = vpack.c.bf16 %v7504, %v7499
    %v7598 = vpack.c.bf16 %v7514, %v7509
    %v7599 = vpack.c.bf16 %v7524, %v7519
    %v7600 = vpack.c.bf16 %v7534, %v7529
    %v7665 = vunpack.c.l.b16 %v7537
    %v7666 = vunpack.c.h.b16 %v7537
    %v7667 = vunpack.c.l.b16 %v7538
    %v7668 = vunpack.c.h.b16 %v7538
    %v7669 = vunpack.c.l.b16 %v7539
    %v7670 = vunpack.c.h.b16 %v7539
    %v7671 = vunpack.c.l.b16 %v7540
    %v7672 = vunpack.c.h.b16 %v7540
    %v7673 = vunpack.c.l.b16 %v7541
    %v7674 = vunpack.c.h.b16 %v7541
    %v7675 = vunpack.c.l.b16 %v7542
    %v7676 = vunpack.c.h.b16 %v7542
    %v7677 = vunpack.c.l.b16 %v7543
    %v7678 = vunpack.c.h.b16 %v7543
    %v7679 = vunpack.c.l.b16 %v7544
    %v7680 = vunpack.c.h.b16 %v7544
    %v7681 = vunpack.c.l.b16 %v7545
    %v7682 = vunpack.c.h.b16 %v7545
    %v7683 = vunpack.c.l.b16 %v7546
    %v7684 = vunpack.c.h.b16 %v7546
    %v7685 = vunpack.c.l.b16 %v7547
    %v7686 = vunpack.c.h.b16 %v7547
    %v7687 = vunpack.c.l.b16 %v7548
    %v7688 = vunpack.c.h.b16 %v7548
    %v7689 = vunpack.c.l.b16 %v7549
    %v7690 = vunpack.c.h.b16 %v7549
    %v7691 = vunpack.c.l.b16 %v7550
    %v7692 = vunpack.c.h.b16 %v7550
    %v7693 = vunpack.c.l.b16 %v7551
    %v7694 = vunpack.c.h.b16 %v7551
    %v7695 = vunpack.c.l.b16 %v7552
    %v7696 = vunpack.c.h.b16 %v7552
    %v7697 = vunpack.c.l.b16 %v7553
    %v7698 = vunpack.c.h.b16 %v7553
    %v7699 = vunpack.c.l.b16 %v7554
    %v7700 = vunpack.c.h.b16 %v7554
    %v7701 = vunpack.c.l.b16 %v7555
    %v7702 = vunpack.c.h.b16 %v7555
    %v7703 = vunpack.c.l.b16 %v7556
    %v7704 = vunpack.c.h.b16 %v7556
    %v7705 = vunpack.c.l.b16 %v7557
    %v7706 = vunpack.c.h.b16 %v7557
    %v7707 = vunpack.c.l.b16 %v7558
    %v7708 = vunpack.c.h.b16 %v7558
    %v7709 = vunpack.c.l.b16 %v7559
    %v7710 = vunpack.c.h.b16 %v7559
    %v7711 = vunpack.c.l.b16 %v7560
    %v7712 = vunpack.c.h.b16 %v7560
    %v7713 = vunpack.c.l.b16 %v7561
    %v7714 = vunpack.c.h.b16 %v7561
    %v7715 = vunpack.c.l.b16 %v7562
    %v7716 = vunpack.c.h.b16 %v7562
    %v7717 = vunpack.c.l.b16 %v7563
    %v7718 = vunpack.c.h.b16 %v7563
    %v7719 = vunpack.c.l.b16 %v7564
    %v7720 = vunpack.c.h.b16 %v7564
    %v7721 = vunpack.c.l.b16 %v7565
    %v7722 = vunpack.c.h.b16 %v7565
    %v7723 = vunpack.c.l.b16 %v7566
    %v7724 = vunpack.c.h.b16 %v7566
    %v7725 = vunpack.c.l.b16 %v7567
    %v7726 = vunpack.c.h.b16 %v7567
    %v7727 = vunpack.c.l.b16 %v7568
    %v7728 = vunpack.c.h.b16 %v7568
    %v7729 = vunpack.c.l.b16 %v7569
    %v7730 = vunpack.c.h.b16 %v7569
    %v7731 = vunpack.c.l.b16 %v7570
    %v7732 = vunpack.c.h.b16 %v7570
    %v7733 = vunpack.c.l.b16 %v7571
    %v7734 = vunpack.c.h.b16 %v7571
    %v7735 = vunpack.c.l.b16 %v7572
    %v7736 = vunpack.c.h.b16 %v7572
    %v7737 = vunpack.c.l.b16 %v7573
    %v7738 = vunpack.c.h.b16 %v7573
    %v7739 = vunpack.c.l.b16 %v7574
    %v7740 = vunpack.c.h.b16 %v7574
    %v7741 = vunpack.c.l.b16 %v7575
    %v7742 = vunpack.c.h.b16 %v7575
    %v7743 = vunpack.c.l.b16 %v7576
    %v7744 = vunpack.c.h.b16 %v7576
    %v7745 = vunpack.c.l.b16 %v7577
    %v7746 = vunpack.c.h.b16 %v7577
    %v7747 = vunpack.c.l.b16 %v7578
    %v7748 = vunpack.c.h.b16 %v7578
    %v7749 = vunpack.c.l.b16 %v7579
    %v7750 = vunpack.c.h.b16 %v7579
    %v7751 = vunpack.c.l.b16 %v7580
    %v7752 = vunpack.c.h.b16 %v7580
    %v7753 = vunpack.c.l.b16 %v7581
    %v7754 = vunpack.c.h.b16 %v7581
    %v7755 = vunpack.c.l.b16 %v7582
    %v7756 = vunpack.c.h.b16 %v7582
    %v7757 = vunpack.c.l.b16 %v7583
    %v7758 = vunpack.c.h.b16 %v7583
    %v7759 = vunpack.c.l.b16 %v7584
    %v7760 = vunpack.c.h.b16 %v7584
    %v7761 = vunpack.c.l.b16 %v7585
    %v7762 = vunpack.c.h.b16 %v7585
    %v7763 = vunpack.c.l.b16 %v7586
    %v7764 = vunpack.c.h.b16 %v7586
    %v7765 = vunpack.c.l.b16 %v7587
    %v7766 = vunpack.c.h.b16 %v7587
    %v7767 = vunpack.c.l.b16 %v7588
    %v7768 = vunpack.c.h.b16 %v7588
    %v7769 = vunpack.c.l.b16 %v7589
    %v7770 = vunpack.c.h.b16 %v7589
    %v7771 = vunpack.c.l.b16 %v7590
    %v7772 = vunpack.c.h.b16 %v7590
    %v7773 = vunpack.c.l.b16 %v7591
    %v7774 = vunpack.c.h.b16 %v7591
    %v7775 = vunpack.c.l.b16 %v7592
    %v7776 = vunpack.c.h.b16 %v7592
    %v7777 = vunpack.c.l.b16 %v7593
    %v7778 = vunpack.c.h.b16 %v7593
    %v7779 = vunpack.c.l.b16 %v7594
    %v7780 = vunpack.c.h.b16 %v7594
    %v7781 = vunpack.c.l.b16 %v7595
    %v7782 = vunpack.c.h.b16 %v7595
    %v7783 = vunpack.c.l.b16 %v7596
    %v7784 = vunpack.c.h.b16 %v7596
    %v7785 = vunpack.c.l.b16 %v7597
    %v7786 = vunpack.c.h.b16 %v7597
    %v7787 = vunpack.c.l.b16 %v7598
    %v7788 = vunpack.c.h.b16 %v7598
    %v7789 = vunpack.c.l.b16 %v7599
    %v7790 = vunpack.c.h.b16 %v7599
    %v7791 = vunpack.c.l.b16 %v7600
    %v7792 = vunpack.c.h.b16 %v7600
    %v7793 = vpack.c.b16 %v7665, %v7665
    %v7794 = vpack.c.b16 %v7666, %v7666
    %v7795 = vpack.c.b16 %v7667, %v7667
    %v7796 = vpack.c.b16 %v7668, %v7668
    %v7797 = vpack.c.b16 %v7669, %v7669
    %v7798 = vpack.c.b16 %v7670, %v7670
    %v7799 = vpack.c.b16 %v7671, %v7671
    %v7800 = vpack.c.b16 %v7672, %v7672
    %v7801 = vpack.c.b16 %v7673, %v7673
    %v7802 = vpack.c.b16 %v7674, %v7674
    %v7803 = vpack.c.b16 %v7675, %v7675
    %v7804 = vpack.c.b16 %v7676, %v7676
    %v7805 = vpack.c.b16 %v7677, %v7677
    %v7806 = vpack.c.b16 %v7678, %v7678
    %v7807 = vpack.c.b16 %v7679, %v7679
    %v7808 = vpack.c.b16 %v7680, %v7680
    %v7809 = vpack.c.b16 %v7681, %v7681
    %v7810 = vpack.c.b16 %v7682, %v7682
    %v7811 = vpack.c.b16 %v7683, %v7683
    %v7812 = vpack.c.b16 %v7684, %v7684
    %v7813 = vpack.c.b16 %v7685, %v7685
    %v7814 = vpack.c.b16 %v7686, %v7686
    %v7815 = vpack.c.b16 %v7687, %v7687
    %v7816 = vpack.c.b16 %v7688, %v7688
    %v7817 = vpack.c.b16 %v7689, %v7689
    %v7818 = vpack.c.b16 %v7690, %v7690
    %v7819 = vpack.c.b16 %v7691, %v7691
    %v7820 = vpack.c.b16 %v7692, %v7692
    %v7821 = vpack.c.b16 %v7693, %v7693
    %v7822 = vpack.c.b16 %v7694, %v7694
    %v7823 = vpack.c.b16 %v7695, %v7695
    %v7824 = vpack.c.b16 %v7696, %v7696
    %v7825 = vpack.c.b16 %v7697, %v7697
    %v7826 = vpack.c.b16 %v7698, %v7698
    %v7827 = vpack.c.b16 %v7699, %v7699
    %v7828 = vpack.c.b16 %v7700, %v7700
    %v7829 = vpack.c.b16 %v7701, %v7701
    %v7830 = vpack.c.b16 %v7702, %v7702
    %v7831 = vpack.c.b16 %v7703, %v7703
    %v7832 = vpack.c.b16 %v7704, %v7704
    %v7833 = vpack.c.b16 %v7705, %v7705
    %v7834 = vpack.c.b16 %v7706, %v7706
    %v7835 = vpack.c.b16 %v7707, %v7707
    %v7836 = vpack.c.b16 %v7708, %v7708
    %v7837 = vpack.c.b16 %v7709, %v7709
    %v7838 = vpack.c.b16 %v7710, %v7710
    %v7839 = vpack.c.b16 %v7711, %v7711
    %v7840 = vpack.c.b16 %v7712, %v7712
    %v7841 = vpack.c.b16 %v7713, %v7713
    %v7842 = vpack.c.b16 %v7714, %v7714
    %v7843 = vpack.c.b16 %v7715, %v7715
    %v7844 = vpack.c.b16 %v7716, %v7716
    %v7845 = vpack.c.b16 %v7717, %v7717
    %v7846 = vpack.c.b16 %v7718, %v7718
    %v7847 = vpack.c.b16 %v7719, %v7719
    %v7848 = vpack.c.b16 %v7720, %v7720
    %v7849 = vpack.c.b16 %v7721, %v7721
    %v7850 = vpack.c.b16 %v7722, %v7722
    %v7851 = vpack.c.b16 %v7723, %v7723
    %v7852 = vpack.c.b16 %v7724, %v7724
    %v7853 = vpack.c.b16 %v7725, %v7725
    %v7854 = vpack.c.b16 %v7726, %v7726
    %v7855 = vpack.c.b16 %v7727, %v7727
    %v7856 = vpack.c.b16 %v7728, %v7728
    %v7857 = vpack.c.b16 %v7729, %v7729
    %v7858 = vpack.c.b16 %v7730, %v7730
    %v7859 = vpack.c.b16 %v7731, %v7731
    %v7860 = vpack.c.b16 %v7732, %v7732
    %v7861 = vpack.c.b16 %v7733, %v7733
    %v7862 = vpack.c.b16 %v7734, %v7734
    %v7863 = vpack.c.b16 %v7735, %v7735
    %v7864 = vpack.c.b16 %v7736, %v7736
    %v7865 = vpack.c.b16 %v7737, %v7737
    %v7866 = vpack.c.b16 %v7738, %v7738
    %v7867 = vpack.c.b16 %v7739, %v7739
    %v7868 = vpack.c.b16 %v7740, %v7740
    %v7869 = vpack.c.b16 %v7741, %v7741
    %v7870 = vpack.c.b16 %v7742, %v7742
    %v7871 = vpack.c.b16 %v7743, %v7743
    %v7872 = vpack.c.b16 %v7744, %v7744
    %v7873 = vpack.c.b16 %v7745, %v7745
    %v7874 = vpack.c.b16 %v7746, %v7746
    %v7875 = vpack.c.b16 %v7747, %v7747
    %v7876 = vpack.c.b16 %v7748, %v7748
    %v7877 = vpack.c.b16 %v7749, %v7749
    %v7878 = vpack.c.b16 %v7750, %v7750
    %v7879 = vpack.c.b16 %v7751, %v7751
    %v7880 = vpack.c.b16 %v7752, %v7752
    %v7881 = vpack.c.b16 %v7753, %v7753
    %v7882 = vpack.c.b16 %v7754, %v7754
    %v7883 = vpack.c.b16 %v7755, %v7755
    %v7884 = vpack.c.b16 %v7756, %v7756
    %v7885 = vpack.c.b16 %v7757, %v7757
    %v7886 = vpack.c.b16 %v7758, %v7758
    %v7887 = vpack.c.b16 %v7759, %v7759
    %v7888 = vpack.c.b16 %v7760, %v7760
    %v7889 = vpack.c.b16 %v7761, %v7761
    %v7890 = vpack.c.b16 %v7762, %v7762
    %v7891 = vpack.c.b16 %v7763, %v7763
    %v7892 = vpack.c.b16 %v7764, %v7764
    %v7893 = vpack.c.b16 %v7765, %v7765
    %v7894 = vpack.c.b16 %v7766, %v7766
    %v7895 = vpack.c.b16 %v7767, %v7767
    %v7896 = vpack.c.b16 %v7768, %v7768
    %v7897 = vpack.c.b16 %v7769, %v7769
    %v7898 = vpack.c.b16 %v7770, %v7770
    %v7899 = vpack.c.b16 %v7771, %v7771
    %v7900 = vpack.c.b16 %v7772, %v7772
    %v7901 = vpack.c.b16 %v7773, %v7773
    %v7902 = vpack.c.b16 %v7774, %v7774
    %v7903 = vpack.c.b16 %v7775, %v7775
    %v7904 = vpack.c.b16 %v7776, %v7776
    %v7905 = vpack.c.b16 %v7777, %v7777
    %v7906 = vpack.c.b16 %v7778, %v7778
    %v7907 = vpack.c.b16 %v7779, %v7779
    %v7908 = vpack.c.b16 %v7780, %v7780
    %v7909 = vpack.c.b16 %v7781, %v7781
    %v7910 = vpack.c.b16 %v7782, %v7782
    %v7911 = vpack.c.b16 %v7783, %v7783
    %v7912 = vpack.c.b16 %v7784, %v7784
    %v7913 = vpack.c.b16 %v7785, %v7785
    %v7914 = vpack.c.b16 %v7786, %v7786
    %v7915 = vpack.c.b16 %v7787, %v7787
    %v7916 = vpack.c.b16 %v7788, %v7788
    %v7917 = vpack.c.b16 %v7789, %v7789
    %v7918 = vpack.c.b16 %v7790, %v7790
    %v7919 = vpack.c.b16 %v7791, %v7791
    %v7920 = vpack.c.b16 %v7792, %v7792
    %8049 = vst [vmem:[#allocation2] sm:$0xf] %v7793
    %8050 = vst [vmem:[#allocation2 + $0x4] sm:$0xf] %v7794
    %8051 = vst [vmem:[#allocation2 + $0x8] sm:$0xf] %v7795
    %8052 = vst [vmem:[#allocation2 + $0xc] sm:$0xf] %v7796
    %8053 = vst [vmem:[#allocation2 + $0x10] sm:$0xf] %v7797
    %8054 = vst [vmem:[#allocation2 + $0x14] sm:$0xf] %v7798
    %8055 = vst [vmem:[#allocation2 + $0x18] sm:$0xf] %v7799
    %8056 = vst [vmem:[#allocation2 + $0x1c] sm:$0xf] %v7800
    %8057 = vst [vmem:[#allocation2 + $0x20] sm:$0xf] %v7801
    %8058 = vst [vmem:[#allocation2 + $0x24] sm:$0xf] %v7802
    %8059 = vst [vmem:[#allocation2 + $0x28] sm:$0xf] %v7803
    %8060 = vst [vmem:[#allocation2 + $0x2c] sm:$0xf] %v7804
    %8061 = vst [vmem:[#allocation2 + $0x30] sm:$0xf] %v7805
    %8062 = vst [vmem:[#allocation2 + $0x34] sm:$0xf] %v7806
    %8063 = vst [vmem:[#allocation2 + $0x38] sm:$0xf] %v7807
    %8064 = vst [vmem:[#allocation2 + $0x3c] sm:$0xf] %v7808
    %8065 = vst [vmem:[#allocation2 + $0x40] sm:$0xf] %v7809
    %8066 = vst [vmem:[#allocation2 + $0x44] sm:$0xf] %v7810
    %8067 = vst [vmem:[#allocation2 + $0x48] sm:$0xf] %v7811
    %8068 = vst [vmem:[#allocation2 + $0x4c] sm:$0xf] %v7812
    %8069 = vst [vmem:[#allocation2 + $0x50] sm:$0xf] %v7813
    %8070 = vst [vmem:[#allocation2 + $0x54] sm:$0xf] %v7814
    %8071 = vst [vmem:[#allocation2 + $0x58] sm:$0xf] %v7815
    %8072 = vst [vmem:[#allocation2 + $0x5c] sm:$0xf] %v7816
    %8073 = vst [vmem:[#allocation2 + $0x60] sm:$0xf] %v7817
    %8074 = vst [vmem:[#allocation2 + $0x64] sm:$0xf] %v7818
    %8075 = vst [vmem:[#allocation2 + $0x68] sm:$0xf] %v7819
    %8076 = vst [vmem:[#allocation2 + $0x6c] sm:$0xf] %v7820
    %8077 = vst [vmem:[#allocation2 + $0x70] sm:$0xf] %v7821
    %8078 = vst [vmem:[#allocation2 + $0x74] sm:$0xf] %v7822
    %8079 = vst [vmem:[#allocation2 + $0x78] sm:$0xf] %v7823
    %8080 = vst [vmem:[#allocation2 + $0x7c] sm:$0xf] %v7824
    %8081 = vst [vmem:[#allocation2 + $0x80] sm:$0xf] %v7825
    %8082 = vst [vmem:[#allocation2 + $0x84] sm:$0xf] %v7826
    %8083 = vst [vmem:[#allocation2 + $0x88] sm:$0xf] %v7827
    %8084 = vst [vmem:[#allocation2 + $0x8c] sm:$0xf] %v7828
    %8085 = vst [vmem:[#allocation2 + $0x90] sm:$0xf] %v7829
    %8086 = vst [vmem:[#allocation2 + $0x94] sm:$0xf] %v7830
    %8087 = vst [vmem:[#allocation2 + $0x98] sm:$0xf] %v7831
    %8088 = vst [vmem:[#allocation2 + $0x9c] sm:$0xf] %v7832
    %8089 = vst [vmem:[#allocation2 + $0xa0] sm:$0xf] %v7833
    %8090 = vst [vmem:[#allocation2 + $0xa4] sm:$0xf] %v7834
    %8091 = vst [vmem:[#allocation2 + $0xa8] sm:$0xf] %v7835
    %8092 = vst [vmem:[#allocation2 + $0xac] sm:$0xf] %v7836
    %8093 = vst [vmem:[#allocation2 + $0xb0] sm:$0xf] %v7837
    %8094 = vst [vmem:[#allocation2 + $0xb4] sm:$0xf] %v7838
    %8095 = vst [vmem:[#allocation2 + $0xb8] sm:$0xf] %v7839
    %8096 = vst [vmem:[#allocation2 + $0xbc] sm:$0xf] %v7840
    %8097 = vst [vmem:[#allocation2 + $0xc0] sm:$0xf] %v7841
    %8098 = vst [vmem:[#allocation2 + $0xc4] sm:$0xf] %v7842
    %8099 = vst [vmem:[#allocation2 + $0xc8] sm:$0xf] %v7843
    %8100 = vst [vmem:[#allocation2 + $0xcc] sm:$0xf] %v7844
    %8101 = vst [vmem:[#allocation2 + $0xd0] sm:$0xf] %v7845
    %8102 = vst [vmem:[#allocation2 + $0xd4] sm:$0xf] %v7846
    %8103 = vst [vmem:[#allocation2 + $0xd8] sm:$0xf] %v7847
    %8104 = vst [vmem:[#allocation2 + $0xdc] sm:$0xf] %v7848
    %8105 = vst [vmem:[#allocation2 + $0xe0] sm:$0xf] %v7849
    %8106 = vst [vmem:[#allocation2 + $0xe4] sm:$0xf] %v7850
    %8107 = vst [vmem:[#allocation2 + $0xe8] sm:$0xf] %v7851
    %8108 = vst [vmem:[#allocation2 + $0xec] sm:$0xf] %v7852
    %8109 = vst [vmem:[#allocation2 + $0xf0] sm:$0xf] %v7853
    %8110 = vst [vmem:[#allocation2 + $0xf4] sm:$0xf] %v7854
    %8111 = vst [vmem:[#allocation2 + $0xf8] sm:$0xf] %v7855
    %8112 = vst [vmem:[#allocation2 + $0xfc] sm:$0xf] %v7856
    %8113 = vst [vmem:[#allocation2 + $0x100] sm:$0xf] %v7857
    %8114 = vst [vmem:[#allocation2 + $0x104] sm:$0xf] %v7858
    %8115 = vst [vmem:[#allocation2 + $0x108] sm:$0xf] %v7859
    %8116 = vst [vmem:[#allocation2 + $0x10c] sm:$0xf] %v7860
    %8117 = vst [vmem:[#allocation2 + $0x110] sm:$0xf] %v7861
    %8118 = vst [vmem:[#allocation2 + $0x114] sm:$0xf] %v7862
    %8119 = vst [vmem:[#allocation2 + $0x118] sm:$0xf] %v7863
    %8120 = vst [vmem:[#allocation2 + $0x11c] sm:$0xf] %v7864
    %8121 = vst [vmem:[#allocation2 + $0x120] sm:$0xf] %v7865
    %8122 = vst [vmem:[#allocation2 + $0x124] sm:$0xf] %v7866
    %8123 = vst [vmem:[#allocation2 + $0x128] sm:$0xf] %v7867
    %8124 = vst [vmem:[#allocation2 + $0x12c] sm:$0xf] %v7868
    %8125 = vst [vmem:[#allocation2 + $0x130] sm:$0xf] %v7869
    %8126 = vst [vmem:[#allocation2 + $0x134] sm:$0xf] %v7870
    %8127 = vst [vmem:[#allocation2 + $0x138] sm:$0xf] %v7871
    %8128 = vst [vmem:[#allocation2 + $0x13c] sm:$0xf] %v7872
    %8129 = vst [vmem:[#allocation2 + $0x140] sm:$0xf] %v7873
    %8130 = vst [vmem:[#allocation2 + $0x144] sm:$0xf] %v7874
    %8131 = vst [vmem:[#allocation2 + $0x148] sm:$0xf] %v7875
    %8132 = vst [vmem:[#allocation2 + $0x14c] sm:$0xf] %v7876
    %8133 = vst [vmem:[#allocation2 + $0x150] sm:$0xf] %v7877
    %8134 = vst [vmem:[#allocation2 + $0x154] sm:$0xf] %v7878
    %8135 = vst [vmem:[#allocation2 + $0x158] sm:$0xf] %v7879
    %8136 = vst [vmem:[#allocation2 + $0x15c] sm:$0xf] %v7880
    %8137 = vst [vmem:[#allocation2 + $0x160] sm:$0xf] %v7881
    %8138 = vst [vmem:[#allocation2 + $0x164] sm:$0xf] %v7882
    %8139 = vst [vmem:[#allocation2 + $0x168] sm:$0xf] %v7883
    %8140 = vst [vmem:[#allocation2 + $0x16c] sm:$0xf] %v7884
    %8141 = vst [vmem:[#allocation2 + $0x170] sm:$0xf] %v7885
    %8142 = vst [vmem:[#allocation2 + $0x174] sm:$0xf] %v7886
    %8143 = vst [vmem:[#allocation2 + $0x178] sm:$0xf] %v7887
    %8144 = vst [vmem:[#allocation2 + $0x17c] sm:$0xf] %v7888
    %8145 = vst [vmem:[#allocation2 + $0x180] sm:$0xf] %v7889
    %8146 = vst [vmem:[#allocation2 + $0x184] sm:$0xf] %v7890
    %8147 = vst [vmem:[#allocation2 + $0x188] sm:$0xf] %v7891
    %8148 = vst [vmem:[#allocation2 + $0x18c] sm:$0xf] %v7892
    %8149 = vst [vmem:[#allocation2 + $0x190] sm:$0xf] %v7893
    %8150 = vst [vmem:[#allocation2 + $0x194] sm:$0xf] %v7894
    %8151 = vst [vmem:[#allocation2 + $0x198] sm:$0xf] %v7895
    %8152 = vst [vmem:[#allocation2 + $0x19c] sm:$0xf] %v7896
    %8153 = vst [vmem:[#allocation2 + $0x1a0] sm:$0xf] %v7897
    %8154 = vst [vmem:[#allocation2 + $0x1a4] sm:$0xf] %v7898
    %8155 = vst [vmem:[#allocation2 + $0x1a8] sm:$0xf] %v7899
    %8156 = vst [vmem:[#allocation2 + $0x1ac] sm:$0xf] %v7900
    %8157 = vst [vmem:[#allocation2 + $0x1b0] sm:$0xf] %v7901
    %8158 = vst [vmem:[#allocation2 + $0x1b4] sm:$0xf] %v7902
    %8159 = vst [vmem:[#allocation2 + $0x1b8] sm:$0xf] %v7903
    %8160 = vst [vmem:[#allocation2 + $0x1bc] sm:$0xf] %v7904
    %8161 = vst [vmem:[#allocation2 + $0x1c0] sm:$0xf] %v7905
    %8162 = vst [vmem:[#allocation2 + $0x1c4] sm:$0xf] %v7906
    %8163 = vst [vmem:[#allocation2 + $0x1c8] sm:$0xf] %v7907
    %8164 = vst [vmem:[#allocation2 + $0x1cc] sm:$0xf] %v7908
    %8165 = vst [vmem:[#allocation2 + $0x1d0] sm:$0xf] %v7909
    %8166 = vst [vmem:[#allocation2 + $0x1d4] sm:$0xf] %v7910
    %8167 = vst [vmem:[#allocation2 + $0x1d8] sm:$0xf] %v7911
    %8168 = vst [vmem:[#allocation2 + $0x1dc] sm:$0xf] %v7912
    %8169 = vst [vmem:[#allocation2 + $0x1e0] sm:$0xf] %v7913
    %8170 = vst [vmem:[#allocation2 + $0x1e4] sm:$0xf] %v7914
    %8171 = vst [vmem:[#allocation2 + $0x1e8] sm:$0xf] %v7915
    %8172 = vst [vmem:[#allocation2 + $0x1ec] sm:$0xf] %v7916
    %8173 = vst [vmem:[#allocation2 + $0x1f0] sm:$0xf] %v7917
    %8174 = vst [vmem:[#allocation2 + $0x1f4] sm:$0xf] %v7918
    %8175 = vst [vmem:[#allocation2 + $0x1f8] sm:$0xf] %v7919
    %8176 = vst [vmem:[#allocation2 + $0x1fc] sm:$0xf] %v7920
    // Predicated region
    $region54: #{tpu_custom_call.1} parent=1 // pred_check
      _
    $region55: #{tpu_custom_call.1} parent=1 // pred_check_branch
      %8178 = sbr.rel (0) target = $region57
    $region56: #{tpu_custom_call.1} parent=1 // pred_region
      %s8180 = ssub.s32 8192, 8192
      %8181 = vsyncadd [#allocation3], %s8180
      %s8182 = sshll.u32 [#allocation2], 4
      %s8183 = int_to_ptr.vmem [resolvable:$true] %s8182
      %8188 = dma.vmem_to_hbm [thread:$0]  %s8183, 8192, %s13, [#allocation3], 64, 64, 4
    $region57: #{tpu_custom_call.1} parent=1 // pred_fallthru
      _
    // Predicated region
    $region58: #{tpu_custom_call.1} parent=1 // pred_check
      _
    $region59: #{tpu_custom_call.1} parent=1 // pred_check_branch
      %8190 = sbr.rel (0) target = $region61
    $region60: #{tpu_custom_call.1} parent=1 // pred_region
      %8191 = dma.done [#allocation3], 8192
    $region61: #{tpu_custom_call.1} parent=1 // pred_fallthru
      _
    %8192 = vsyncpa [#allocation3], 1

</llo_original>
